<compile_context>
chip_gen: v5e
topology: v5e:2x2
jax: 0.10.0
libtpu: 0.0.40
codegen_flags: <defaults>
</compile_context>

<pallas_src>
import math
from functools import partial

import jax
import jax.numpy as jnp
from jax import lax
from jax.experimental import pallas as pl
from jax.experimental.pallas import tpu as pltpu


_LN_EPS = 1e-6


# ----------------------------------------------------------------------------
# Deterministic parameter construction (glue, plain JAX)
# ----------------------------------------------------------------------------
def _get_1d_sincos_pos_embed_from_grid(embed_dim, pos):
    omega = jnp.arange(embed_dim // 2, dtype=jnp.float32)
    omega = omega / (embed_dim / 2.0)
    omega = 1.0 / (10000.0 ** omega)
    pos = pos.reshape(-1).astype(jnp.float32)
    out = jnp.einsum("m,d->md", pos, omega)
    return jnp.concatenate([jnp.sin(out), jnp.cos(out)], axis=1)


def get_2d_sincos_pos_embed(embed_dim, grid_size):
    grid_h = jnp.arange(grid_size, dtype=jnp.float32)
    grid_w = jnp.arange(grid_size, dtype=jnp.float32)
    grid = jnp.meshgrid(grid_w, grid_h)  # w goes first (matches reference impl)
    grid = jnp.stack(grid, axis=0).reshape(2, grid_size, grid_size)
    emb_h = _get_1d_sincos_pos_embed_from_grid(embed_dim // 2, grid[0])
    emb_w = _get_1d_sincos_pos_embed_from_grid(embed_dim // 2, grid[1])
    return jnp.concatenate([emb_h, emb_w], axis=1)  # (grid_size**2, embed_dim)


def init_params(key, hidden_size, kv_dim, n_queries):
    D = hidden_size
    grid_size = int(math.sqrt(n_queries))
    pos = get_2d_sincos_pos_embed(D, grid_size)  # (n_queries, D)
    ks = jax.random.split(key, 7)
    ones = jnp.ones((1, D), jnp.float32)
    zeros = jnp.zeros((1, D), jnp.float32)
    return dict(
        # Resampler.kv_proj (Linear, no bias) + ln_kv
        wkv=jax.random.normal(ks[0], (kv_dim, D), jnp.float32) * 0.02,
        g_kv=ones, b_kv=zeros,
        # learnable queries + ln_q
        query=jax.random.normal(ks[1], (n_queries, D), jnp.float32) * 0.02,
        g_q=ones, b_q=zeros,
        # 2D sincos positional embedding (query side and key side)
        pos_q=pos, pos_k=pos,
        # nn.MultiheadAttention in_proj (split into q/k/v) and out_proj
        wq=jax.random.normal(ks[2], (D, D), jnp.float32) * (D ** -0.5), bq=zeros,
        wk=jax.random.normal(ks[3], (D, D), jnp.float32) * (D ** -0.5), bk=zeros,
        wv=jax.random.normal(ks[4], (D, D), jnp.float32) * (D ** -0.5), bv=zeros,
        wo=jax.random.normal(ks[5], (D, D), jnp.float32) * (D ** -0.5), bo=zeros,
        # ln_post + final proj
        g_post=ones, b_post=zeros,
        proj=(D ** -0.5) * jax.random.normal(ks[6], (D, D), jnp.float32),
    )


def _ln(v, g, b, eps=_LN_EPS):
    mu = v.mean(-1, keepdims=True)
    var = ((v - mu) ** 2).mean(-1, keepdims=True)
    return (v - mu) / jnp.sqrt(var + eps) * g + b


# ----------------------------------------------------------------------------
# One-time parameter preparation (hoists all batch-invariant work off the kernel)
# ----------------------------------------------------------------------------
KERNEL_PARAM_ORDER = ("q", "wkv", "wkvin", "kv_bias", "wo", "proj", "vec")


def prepare_inputs(params, num_heads):
    D = params["wkv"].shape[1]
    head_dim = D // num_heads
    scale = 1.0 / math.sqrt(head_dim)

    # Hoisted query path: Q = ((ln_q(query) + pos_q) @ wq + bq) * scale  (batch-invariant)
    q_in = _ln(params["query"], params["g_q"], params["b_q"]) + params["pos_q"]
    q_pre = ((q_in @ params["wq"] + params["bq"]) * scale).astype(jnp.bfloat16)

    # kv_proj weight (bf16 operand for the MXU; contraction dim handled natively).
    wkv = params["wkv"].astype(jnp.bfloat16)

    # Fused K|V in-projection: one (D, 2D) weight plus one (L, 2D) per-position bias
    # (K side: pos_k @ wk + bk ; V side: broadcast bv).
    wkvin = jnp.concatenate([params["wk"], params["wv"]], axis=1).astype(jnp.bfloat16)
    k_bias = params["pos_k"] @ params["wk"] + params["bk"]        # (L, D)
    v_bias = jnp.broadcast_to(params["bv"], k_bias.shape)         # (L, D)
    kv_bias = jnp.concatenate([k_bias, v_bias], axis=1).astype(jnp.float32)

    # ln_post affine folded into the final projection.
    proj2 = (params["g_post"].reshape(-1, 1) * params["proj"]).astype(jnp.bfloat16)
    bias2 = params["b_post"] @ params["proj"]                     # (1, D)

    # Remaining (1, D) vectors packed into a single (8, D) f32 input.
    vec = jnp.zeros((8, D), jnp.float32)
    vec = vec.at[0].set(params["g_kv"][0])
    vec = vec.at[1].set(params["b_kv"][0])
    vec = vec.at[2].set(params["bo"][0])
    vec = vec.at[3].set(bias2[0])

    return dict(
        q=q_pre, wkv=wkv, wkvin=wkvin, kv_bias=kv_bias,
        wo=params["wo"].astype(jnp.bfloat16), proj=proj2, vec=vec,
        kv_dim=params["wkv"].shape[0], kv_len=params["pos_k"].shape[0],
        num_heads=num_heads, head_dim=head_dim,
    )


# ----------------------------------------------------------------------------
# Pallas kernel: fused VLCrossAttention forward for `bb` batch elements per step
# ----------------------------------------------------------------------------
def _vl_cross_attn_kernel(x_ref, q_ref, wkv_ref, wkvin_ref, kvb_ref,
                          wo_ref, proj_ref, vec_ref, out_ref,
                          *, num_heads, head_dim, bb, exp_bf16):
    D = num_heads * head_dim
    L = x_ref.shape[1]
    kv_dim = x_ref.shape[2]
    Nq = q_ref.shape[0]

    vec = vec_ref[...]                                  # (8, D) f32, packed vectors
    g_kv, b_kv, bo, bias2 = vec[0:1], vec[1:2], vec[2:3], vec[3:4]

    def normalize(v):                                   # LayerNorm core (f32, biased var)
        mu = jnp.mean(v, axis=-1, keepdims=True)
        c = v - mu
        var = jnp.mean(c * c, axis=-1, keepdims=True)
        return c * lax.rsqrt(var + _LN_EPS)

    # kv_proj + ln_kv; x cast to bf16 in VMEM (no host-side pad/cast pass over x).
    x = x_ref[...].reshape(bb * L, kv_dim).astype(jnp.bfloat16)          # (bb*L, kv_dim)
    kv = jnp.dot(x, wkv_ref[...], preferred_element_type=jnp.float32)
    kv = normalize(kv) * g_kv + b_kv                                     # f32 (bb*L, D)

    # Fused K|V in-projection (positional/bias terms pre-folded into kvb), bf16 K/V.
    kvp = jnp.dot(kv.astype(jnp.bfloat16), wkvin_ref[...],
                  preferred_element_type=jnp.float32)                    # f32 (bb*L, 2D)
    slab = (kvp.reshape(bb, L, 2 * D) + kvb_ref[...][None]).astype(jnp.bfloat16)
    k_all = slab[..., :D].reshape(bb * L, D)                             # bf16 (bb*L, D)

    q = q_ref[...]                                                       # bf16 (Nq, D), pre-scaled
    outs = [[None] * num_heads for _ in range(bb)]
    # head_dim == 128 by construction (num_heads = D // 128), so head slices are
    # 128-lane aligned.  TODO(synk): switch to a head-major batched dot_general if this
    # kernel is ever used with head_dim < 128.
    for h in range(num_heads):
        lo = h * head_dim
        qh = q[:, lo:lo + head_dim]
        kh = k_all[:, lo:lo + head_dim]                                  # (bb*L, d)
        # One QK^T MXU push over all bb batch elements; contract last dims (no transpose).
        s_all = lax.dot_general(qh, kh, (((1,), (1,)), ((), ())),
                                preferred_element_type=jnp.float32)      # (Nq, bb*L)
        for b in range(bb):                                              # static unroll
            s = s_all[:, b * L:(b + 1) * L]                              # lane-aligned slab
            s = s - jnp.max(s, axis=-1, keepdims=True)
            if exp_bf16:
                p = jnp.exp(s.astype(jnp.bfloat16))                      # bf16 EUP (v6e/v7x)
            else:
                p = jnp.exp(s).astype(jnp.bfloat16)                      # f32 EUP (v5e), bf16 slab
            denom = jnp.sum(p.astype(jnp.float32), axis=-1, keepdims=True)
            vh = slab[b, :, D + lo:D + lo + head_dim]                    # bf16 (L, d)
            o = jnp.dot(p, vh, preferred_element_type=jnp.float32)       # (Nq, d)
            # deferred softmax normalization on the small resident accumulator
            outs[b][h] = o * pl.reciprocal(denom, approx=True)

    rows = [o[0] if num_heads == 1 else jnp.concatenate(o, axis=-1) for o in outs]
    attn = rows[0] if bb == 1 else jnp.concatenate(rows, axis=0)         # f32 (bb*Nq, D)

    # out-proj + ln_post (affine folded into proj/bias2) + final projection.
    y = jnp.dot(attn.astype(jnp.bfloat16), wo_ref[...],
                preferred_element_type=jnp.float32) + bo
    y = normalize(y)
    y = jnp.dot(y.astype(jnp.bfloat16), proj_ref[...],
                preferred_element_type=jnp.float32) + bias2
    out_ref[...] = y.reshape(bb, Nq, D).astype(out_ref.dtype)


# ----------------------------------------------------------------------------
# Wrapper
# ----------------------------------------------------------------------------
def _device_kind():
    try:
        return jax.devices()[0].device_kind.lower()
    except Exception:
        return ""


def _default_batch_block(B, kind):
    """Fold the batch (up to 8 per step) on 1-TC chips; on dual-TC v7x pick the largest
    fold that still leaves grid >= 2 so both TensorCores get steps."""
    dual_tc = "v7" in kind
    best = 1
    for cand in range(1, min(B, 8) + 1):
        if B % cand:
            continue
        if dual_tc and B // cand < 2:
            continue
        best = cand
    return best


def vl_cross_attention(x, prep, *, batch_block=None, out_dtype=jnp.bfloat16,
                       exp_bf16=None):
    B, L, kv_dim = x.shape
    assert kv_dim == prep["kv_dim"], (kv_dim, prep["kv_dim"])
    # TODO(synk): get_abs_pos bicubic interpolation when L != n_queries is not
    # implemented; the pre-folded (L, 2D) kv_bias requires key length L == n_queries.
    assert L == prep["kv_len"], (L, prep["kv_len"])
    D = prep["wo"].shape[1]
    Nq = prep["q"].shape[0]

    kind = _device_kind()
    bb = _default_batch_block(B, kind) if batch_block is None else batch_block
    assert B % bb == 0
    if exp_bf16 is None:
        exp_bf16 = ("v6" in kind) or ("v7" in kind)   # bf16-EUP generations

    # x goes in with its natural last dim (== full array dim, legal BlockSpec) and
    # native dtype; cast happens in-kernel in VMEM.
    in_specs = [pl.BlockSpec((bb, L, kv_dim), lambda i: (i, 0, 0))]
    args = [x]
    for name in KERNEL_PARAM_ORDER:
        arr = prep[name]
        # weights are grid-invariant: full-array block, constant index map
        in_specs.append(pl.BlockSpec(arr.shape, lambda i, n=arr.ndim: (0,) * n))
        args.append(arr)

    kernel = partial(_vl_cross_attn_kernel, num_heads=prep["num_heads"],
                     head_dim=prep["head_dim"], bb=bb, exp_bf16=bool(exp_bf16))
    return pl.pallas_call(
        kernel,
        out_shape=jax.ShapeDtypeStruct((B, Nq, D), out_dtype),
        grid_spec=pltpu.PrefetchScalarGridSpec(
            num_scalar_prefetch=0,
            grid=(B // bb,),
            in_specs=in_specs,
            out_specs=pl.BlockSpec((bb, Nq, D), lambda i: (i, 0, 0)),
        ),
        compiler_params=pltpu.CompilerParams(dimension_semantics=("parallel",)),
    )(*args)


# ----------------------------------------------------------------------------
# Pure-JAX reference (for correctness check only)
# ----------------------------------------------------------------------------
def reference(x, p, num_heads):
    B, L, _ = x.shape
    D = p["wkv"].shape[1]
    d = D // num_heads
    kv = _ln(x @ p["wkv"], p["g_kv"], p["b_kv"])                     # (B, L, D)
    q_in = _ln(p["query"], p["g_q"], p["b_q"]) + p["pos_q"]          # (Nq, D)
    k_in = kv + p["pos_k"][None]
    Q = q_in @ p["wq"] + p["bq"]
    K = k_in @ p["wk"] + p["bk"]
    V = kv @ p["wv"] + p["bv"]
    Qh = Q.reshape(-1, num_heads, d)
    Kh = K.reshape(B, L, num_heads, d)
    Vh = V.reshape(B, L, num_heads, d)
    S = jnp.einsum("qhd,blhd->bhql", Qh, Kh) / jnp.sqrt(d)
    P = jax.nn.softmax(S, axis=-1)
    O = jnp.einsum("bhql,blhd->bqhd", P, Vh).reshape(B, -1, D)
    out = O @ p["wo"] + p["bo"]
    out = _ln(out, p["g_post"], p["b_post"])
    return out @ p["proj"]


if __name__ == "__main__":
    # config.hidden_size = 128  -> num_heads = 128 // 128 = 1 (head_dim = 128)
    # vision_tower.hidden_size = 64 ; key sequence length L = n_queries = 256
    B, L, KV_DIM, HIDDEN = 2, 256, 64, 128
    N_QUERIES = 256
    num_heads = HIDDEN // 128

    key = jax.random.PRNGKey(0)
    pkey, xkey = jax.random.split(key)
    params = init_params(pkey, HIDDEN, KV_DIM, N_QUERIES)
    x = jax.random.normal(xkey, (B, L, KV_DIM), jnp.float32)

    prep = prepare_inputs(params, num_heads)           # one-time, batch-invariant
    out = jax.block_until_ready(vl_cross_attention(x, prep))
    ref = reference(x, params, num_heads)

    assert out.shape == (B, N_QUERIES, HIDDEN), out.shape
    out_f32 = out.astype(jnp.float32)
    assert bool(jnp.all(jnp.isfinite(out_f32)))
    max_abs = float(jnp.max(jnp.abs(out_f32 - ref)))
    rel = float(jnp.linalg.norm(out_f32 - ref) / jnp.linalg.norm(ref))
    # bf16 MXU matmuls with f32 accumulation + bf16 output: loose elementwise bound,
    # tight norm bound.
    assert max_abs < 2e-1 and rel < 3e-2, (max_abs, rel)
    print("KERNEL_OK")
</pallas_src>

<mosaic_0001>
module attributes {stable_mosaic.version = 11 : i64} {
  func.func @_vl_cross_attn_kernel(%arg0: i32, %arg1: memref<2x256x64xf32, #tpu.memory_space<vmem>>, %arg2: memref<256x128xbf16, #tpu.memory_space<vmem>>, %arg3: memref<64x128xbf16, #tpu.memory_space<vmem>>, %arg4: memref<128x256xbf16, #tpu.memory_space<vmem>>, %arg5: memref<256x256xf32, #tpu.memory_space<vmem>>, %arg6: memref<128x128xbf16, #tpu.memory_space<vmem>>, %arg7: memref<128x128xbf16, #tpu.memory_space<vmem>>, %arg8: memref<8x128xf32, #tpu.memory_space<vmem>>, %arg9: memref<2x256x128xbf16, #tpu.memory_space<vmem>>) attributes {dimension_semantics = [#tpu.dimension_semantics<parallel>], iteration_bounds = array<i64: 1>, scalar_prefetch = 0 : i64, scratch_operands = 0 : i64, tpu.core_type = #tpu.core_type<tc>, window_params = [{transform_indices = @transform_0, window_bounds = array<i64: 2, 256, 64>}, {pipeline_mode = #tpu.pipeline_mode<synchronous>, transform_indices = @transform_1, window_bounds = array<i64: 256, 128>}, {pipeline_mode = #tpu.pipeline_mode<synchronous>, transform_indices = @transform_2, window_bounds = array<i64: 64, 128>}, {pipeline_mode = #tpu.pipeline_mode<synchronous>, transform_indices = @transform_3, window_bounds = array<i64: 128, 256>}, {pipeline_mode = #tpu.pipeline_mode<synchronous>, transform_indices = @transform_4, window_bounds = array<i64: 256, 256>}, {pipeline_mode = #tpu.pipeline_mode<synchronous>, transform_indices = @transform_5, window_bounds = array<i64: 128, 128>}, {pipeline_mode = #tpu.pipeline_mode<synchronous>, transform_indices = @transform_6, window_bounds = array<i64: 128, 128>}, {pipeline_mode = #tpu.pipeline_mode<synchronous>, transform_indices = @transform_7, window_bounds = array<i64: 8, 128>}, {transform_indices = @transform_8, window_bounds = array<i64: 2, 256, 128>}]} {
    %c0 = arith.constant 0 : index
    %c0_0 = arith.constant 0 : index
    %0 = vector.load %arg8[%c0, %c0_0] : memref<8x128xf32, #tpu.memory_space<vmem>>, vector<8x128xf32>
    %1 = vector.extract_strided_slice %0 {offsets = [0, 0], sizes = [1, 128], strides = [1, 1]} : vector<8x128xf32> to vector<1x128xf32>
    %2 = vector.extract_strided_slice %0 {offsets = [1, 0], sizes = [1, 128], strides = [1, 1]} : vector<8x128xf32> to vector<1x128xf32>
    %3 = vector.extract_strided_slice %0 {offsets = [2, 0], sizes = [1, 128], strides = [1, 1]} : vector<8x128xf32> to vector<1x128xf32>
    %4 = vector.extract_strided_slice %0 {offsets = [3, 0], sizes = [1, 128], strides = [1, 1]} : vector<8x128xf32> to vector<1x128xf32>
    %c0_1 = arith.constant 0 : index
    %c0_2 = arith.constant 0 : index
    %c0_3 = arith.constant 0 : index
    %5 = vector.load %arg1[%c0_1, %c0_2, %c0_3] : memref<2x256x64xf32, #tpu.memory_space<vmem>>, vector<2x256x64xf32>
    %6 = vector.shape_cast %5 : vector<2x256x64xf32> to vector<512x64xf32>
    %7 = arith.truncf %6 : vector<512x64xf32> to vector<512x64xbf16>
    %c0_4 = arith.constant 0 : index
    %c0_5 = arith.constant 0 : index
    %8 = vector.load %arg3[%c0_4, %c0_5] : memref<64x128xbf16, #tpu.memory_space<vmem>>, vector<64x128xbf16>
    %cst = arith.constant dense<0.000000e+00> : vector<512x128xf32>
    %9 = tpu.matmul %7, %8, %cst {dimension_numbers = #tpu.dot_dimension_numbers<[1], [0], [0], [1], [0, 0, 1, 1], [], []>} : vector<512x64xbf16>, vector<64x128xbf16>, vector<512x128xf32> -> vector<512x128xf32>
    %cst_6 = arith.constant dense<0.000000e+00> : vector<512xf32>
    %10 = vector.multi_reduction <add>, %9, %cst_6 [1] : vector<512x128xf32> to vector<512xf32>
    %11 = vector.shape_cast %10 : vector<512xf32> to vector<512x1xf32>
    %cst_7 = arith.constant 1.280000e+02 : f32
    %12 = vector.broadcast %cst_7 : f32 to vector<512x1xf32>
    %13 = arith.divf %11, %12 : vector<512x1xf32>
    %14 = vector.broadcast %13 : vector<512x1xf32> to vector<512x128xf32>
    %15 = arith.subf %9, %14 : vector<512x128xf32>
    %16 = arith.mulf %15, %15 : vector<512x128xf32>
    %cst_8 = arith.constant dense<0.000000e+00> : vector<512xf32>
    %17 = vector.multi_reduction <add>, %16, %cst_8 [1] : vector<512x128xf32> to vector<512xf32>
    %18 = vector.shape_cast %17 : vector<512xf32> to vector<512x1xf32>
    %cst_9 = arith.constant 1.280000e+02 : f32
    %19 = vector.broadcast %cst_9 : f32 to vector<512x1xf32>
    %20 = arith.divf %18, %19 : vector<512x1xf32>
    %cst_10 = arith.constant 9.99999997E-7 : f32
    %21 = vector.broadcast %cst_10 : f32 to vector<512x1xf32>
    %22 = arith.addf %20, %21 : vector<512x1xf32>
    %23 = math.rsqrt %22 : vector<512x1xf32>
    %24 = vector.broadcast %23 : vector<512x1xf32> to vector<512x128xf32>
    %25 = arith.mulf %15, %24 : vector<512x128xf32>
    %26 = vector.broadcast %1 : vector<1x128xf32> to vector<512x128xf32>
    %27 = arith.mulf %25, %26 : vector<512x128xf32>
    %28 = vector.broadcast %2 : vector<1x128xf32> to vector<512x128xf32>
    %29 = arith.addf %27, %28 : vector<512x128xf32>
    %30 = arith.truncf %29 : vector<512x128xf32> to vector<512x128xbf16>
    %c0_11 = arith.constant 0 : index
    %c0_12 = arith.constant 0 : index
    %31 = vector.load %arg4[%c0_11, %c0_12] : memref<128x256xbf16, #tpu.memory_space<vmem>>, vector<128x256xbf16>
    %cst_13 = arith.constant dense<0.000000e+00> : vector<512x256xf32>
    %32 = tpu.matmul %30, %31, %cst_13 {dimension_numbers = #tpu.dot_dimension_numbers<[1], [0], [0], [1], [0, 0, 1, 1], [], []>} : vector<512x128xbf16>, vector<128x256xbf16>, vector<512x256xf32> -> vector<512x256xf32>
    %33 = vector.shape_cast %32 : vector<512x256xf32> to vector<2x256x256xf32>
    %c0_14 = arith.constant 0 : index
    %c0_15 = arith.constant 0 : index
    %34 = vector.load %arg5[%c0_14, %c0_15] : memref<256x256xf32, #tpu.memory_space<vmem>>, vector<256x256xf32>
    %35 = vector.shape_cast %34 : vector<256x256xf32> to vector<1x256x256xf32>
    %36 = vector.broadcast %35 : vector<1x256x256xf32> to vector<2x256x256xf32>
    %37 = arith.addf %33, %36 : vector<2x256x256xf32>
    %38 = arith.truncf %37 : vector<2x256x256xf32> to vector<2x256x256xbf16>
    %39 = vector.extract_strided_slice %38 {offsets = [0, 0, 0], sizes = [2, 256, 128], strides = [1, 1, 1]} : vector<2x256x256xbf16> to vector<2x256x128xbf16>
    %40 = vector.shape_cast %39 : vector<2x256x128xbf16> to vector<512x128xbf16>
    %c0_16 = arith.constant 0 : index
    %c0_17 = arith.constant 0 : index
    %41 = vector.load %arg2[%c0_16, %c0_17] : memref<256x128xbf16, #tpu.memory_space<vmem>>, vector<256x128xbf16>
    %cst_18 = arith.constant dense<0.000000e+00> : vector<256x512xf32>
    %42 = tpu.matmul %41, %40, %cst_18 {dimension_numbers = #tpu.dot_dimension_numbers<[1], [1], [0], [0], [0, 0, 1, 0], [], []>} : vector<256x128xbf16>, vector<512x128xbf16>, vector<256x512xf32> -> vector<256x512xf32>
    %43 = vector.extract_strided_slice %42 {offsets = [0, 0], sizes = [256, 256], strides = [1, 1]} : vector<256x512xf32> to vector<256x256xf32>
    %cst_19 = arith.constant dense<0xFF800000> : vector<256xf32>
    %44 = vector.multi_reduction <maximumf>, %43, %cst_19 [1] : vector<256x256xf32> to vector<256xf32>
    %45 = vector.shape_cast %44 : vector<256xf32> to vector<256x1xf32>
    %46 = vector.broadcast %45 : vector<256x1xf32> to vector<256x256xf32>
    %47 = arith.subf %43, %46 : vector<256x256xf32>
    %48 = math.exp %47 : vector<256x256xf32>
    %49 = arith.truncf %48 : vector<256x256xf32> to vector<256x256xbf16>
    %50 = arith.extf %49 : vector<256x256xbf16> to vector<256x256xf32>
    %cst_20 = arith.constant dense<0.000000e+00> : vector<256xf32>
    %51 = vector.multi_reduction <add>, %50, %cst_20 [1] : vector<256x256xf32> to vector<256xf32>
    %52 = vector.shape_cast %51 : vector<256xf32> to vector<256x1xf32>
    %53 = vector.extract_strided_slice %38 {offsets = [0, 0, 128], sizes = [1, 256, 128], strides = [1, 1, 1]} : vector<2x256x256xbf16> to vector<1x256x128xbf16>
    %54 = vector.shape_cast %53 : vector<1x256x128xbf16> to vector<256x128xbf16>
    %cst_21 = arith.constant dense<0.000000e+00> : vector<256x128xf32>
    %55 = tpu.matmul %49, %54, %cst_21 {dimension_numbers = #tpu.dot_dimension_numbers<[1], [0], [0], [1], [0, 0, 1, 1], [], []>} : vector<256x256xbf16>, vector<256x128xbf16>, vector<256x128xf32> -> vector<256x128xf32>
    %56 = tpu.reciprocal %52 {approx = true} : vector<256x1xf32> -> vector<256x1xf32>
    %57 = vector.broadcast %56 : vector<256x1xf32> to vector<256x128xf32>
    %58 = arith.mulf %55, %57 : vector<256x128xf32>
    %59 = vector.extract_strided_slice %42 {offsets = [0, 256], sizes = [256, 256], strides = [1, 1]} : vector<256x512xf32> to vector<256x256xf32>
    %cst_22 = arith.constant dense<0xFF800000> : vector<256xf32>
    %60 = vector.multi_reduction <maximumf>, %59, %cst_22 [1] : vector<256x256xf32> to vector<256xf32>
    %61 = vector.shape_cast %60 : vector<256xf32> to vector<256x1xf32>
    %62 = vector.broadcast %61 : vector<256x1xf32> to vector<256x256xf32>
    %63 = arith.subf %59, %62 : vector<256x256xf32>
    %64 = math.exp %63 : vector<256x256xf32>
    %65 = arith.truncf %64 : vector<256x256xf32> to vector<256x256xbf16>
    %66 = arith.extf %65 : vector<256x256xbf16> to vector<256x256xf32>
    %cst_23 = arith.constant dense<0.000000e+00> : vector<256xf32>
    %67 = vector.multi_reduction <add>, %66, %cst_23 [1] : vector<256x256xf32> to vector<256xf32>
    %68 = vector.shape_cast %67 : vector<256xf32> to vector<256x1xf32>
    %69 = vector.extract_strided_slice %38 {offsets = [1, 0, 128], sizes = [1, 256, 128], strides = [1, 1, 1]} : vector<2x256x256xbf16> to vector<1x256x128xbf16>
    %70 = vector.shape_cast %69 : vector<1x256x128xbf16> to vector<256x128xbf16>
    %cst_24 = arith.constant dense<0.000000e+00> : vector<256x128xf32>
    %71 = tpu.matmul %65, %70, %cst_24 {dimension_numbers = #tpu.dot_dimension_numbers<[1], [0], [0], [1], [0, 0, 1, 1], [], []>} : vector<256x256xbf16>, vector<256x128xbf16>, vector<256x128xf32> -> vector<256x128xf32>
    %72 = tpu.reciprocal %68 {approx = true} : vector<256x1xf32> -> vector<256x1xf32>
    %73 = vector.broadcast %72 : vector<256x1xf32> to vector<256x128xf32>
    %74 = arith.mulf %71, %73 : vector<256x128xf32>
    %75 = tpu.concatenate %58, %74 in 0 : vector<256x128xf32>, vector<256x128xf32> -> vector<512x128xf32>
    %76 = arith.truncf %75 : vector<512x128xf32> to vector<512x128xbf16>
    %c0_25 = arith.constant 0 : index
    %c0_26 = arith.constant 0 : index
    %77 = vector.load %arg6[%c0_25, %c0_26] : memref<128x128xbf16, #tpu.memory_space<vmem>>, vector<128x128xbf16>
    %cst_27 = arith.constant dense<0.000000e+00> : vector<512x128xf32>
    %78 = tpu.matmul %76, %77, %cst_27 {dimension_numbers = #tpu.dot_dimension_numbers<[1], [0], [0], [1], [0, 0, 1, 1], [], []>} : vector<512x128xbf16>, vector<128x128xbf16>, vector<512x128xf32> -> vector<512x128xf32>
    %79 = vector.broadcast %3 : vector<1x128xf32> to vector<512x128xf32>
    %80 = arith.addf %78, %79 : vector<512x128xf32>
    %cst_28 = arith.constant dense<0.000000e+00> : vector<512xf32>
    %81 = vector.multi_reduction <add>, %80, %cst_28 [1] : vector<512x128xf32> to vector<512xf32>
    %82 = vector.shape_cast %81 : vector<512xf32> to vector<512x1xf32>
    %cst_29 = arith.constant 1.280000e+02 : f32
    %83 = vector.broadcast %cst_29 : f32 to vector<512x1xf32>
    %84 = arith.divf %82, %83 : vector<512x1xf32>
    %85 = vector.broadcast %84 : vector<512x1xf32> to vector<512x128xf32>
    %86 = arith.subf %80, %85 : vector<512x128xf32>
    %87 = arith.mulf %86, %86 : vector<512x128xf32>
    %cst_30 = arith.constant dense<0.000000e+00> : vector<512xf32>
    %88 = vector.multi_reduction <add>, %87, %cst_30 [1] : vector<512x128xf32> to vector<512xf32>
    %89 = vector.shape_cast %88 : vector<512xf32> to vector<512x1xf32>
    %cst_31 = arith.constant 1.280000e+02 : f32
    %90 = vector.broadcast %cst_31 : f32 to vector<512x1xf32>
    %91 = arith.divf %89, %90 : vector<512x1xf32>
    %cst_32 = arith.constant 9.99999997E-7 : f32
    %92 = vector.broadcast %cst_32 : f32 to vector<512x1xf32>
    %93 = arith.addf %91, %92 : vector<512x1xf32>
    %94 = math.rsqrt %93 : vector<512x1xf32>
    %95 = vector.broadcast %94 : vector<512x1xf32> to vector<512x128xf32>
    %96 = arith.mulf %86, %95 : vector<512x128xf32>
    %97 = arith.truncf %96 : vector<512x128xf32> to vector<512x128xbf16>
    %c0_33 = arith.constant 0 : index
    %c0_34 = arith.constant 0 : index
    %98 = vector.load %arg7[%c0_33, %c0_34] : memref<128x128xbf16, #tpu.memory_space<vmem>>, vector<128x128xbf16>
    %cst_35 = arith.constant dense<0.000000e+00> : vector<512x128xf32>
    %99 = tpu.matmul %97, %98, %cst_35 {dimension_numbers = #tpu.dot_dimension_numbers<[1], [0], [0], [1], [0, 0, 1, 1], [], []>} : vector<512x128xbf16>, vector<128x128xbf16>, vector<512x128xf32> -> vector<512x128xf32>
    %100 = vector.broadcast %4 : vector<1x128xf32> to vector<512x128xf32>
    %101 = arith.addf %99, %100 : vector<512x128xf32>
    %102 = vector.shape_cast %101 : vector<512x128xf32> to vector<2x256x128xf32>
    %103 = arith.truncf %102 : vector<2x256x128xf32> to vector<2x256x128xbf16>
    %c0_36 = arith.constant 0 : index
    %c0_37 = arith.constant 0 : index
    %c0_38 = arith.constant 0 : index
    %104 = vector.load %arg9[%c0_36, %c0_37, %c0_38] : memref<2x256x128xbf16, #tpu.memory_space<vmem>>, vector<2x256x128xbf16>
    tpu.vector_store %arg9[%c0_36, %c0_37, %c0_38], %103 {strides = array<i32>} : memref<2x256x128xbf16, #tpu.memory_space<vmem>>, vector<2x256x128xbf16>,
    return
  }
  func.func @transform_0(%arg0: i32) -> (i32, i32, i32) {
    %c0_i32 = arith.constant 0 : i32
    %c0_i32_0 = arith.constant 0 : i32
    %c0_i32_1 = arith.constant 0 : i32
    return %arg0, %c0_i32, %c0_i32_0 : i32, i32, i32
  }
  func.func @transform_1(%arg0: i32) -> (i32, i32) {
    %c0_i32 = arith.constant 0 : i32
    %c0_i32_0 = arith.constant 0 : i32
    %c0_i32_1 = arith.constant 0 : i32
    return %c0_i32, %c0_i32_0 : i32, i32
  }
  func.func @transform_2(%arg0: i32) -> (i32, i32) {
    %c0_i32 = arith.constant 0 : i32
    %c0_i32_0 = arith.constant 0 : i32
    %c0_i32_1 = arith.constant 0 : i32
    return %c0_i32, %c0_i32_0 : i32, i32
  }
  func.func @transform_3(%arg0: i32) -> (i32, i32) {
    %c0_i32 = arith.constant 0 : i32
    %c0_i32_0 = arith.constant 0 : i32
    %c0_i32_1 = arith.constant 0 : i32
    return %c0_i32, %c0_i32_0 : i32, i32
  }
  func.func @transform_4(%arg0: i32) -> (i32, i32) {
    %c0_i32 = arith.constant 0 : i32
    %c0_i32_0 = arith.constant 0 : i32
    %c0_i32_1 = arith.constant 0 : i32
    return %c0_i32, %c0_i32_0 : i32, i32
  }
  func.func @transform_5(%arg0: i32) -> (i32, i32) {
    %c0_i32 = arith.constant 0 : i32
    %c0_i32_0 = arith.constant 0 : i32
    %c0_i32_1 = arith.constant 0 : i32
    return %c0_i32, %c0_i32_0 : i32, i32
  }
  func.func @transform_6(%arg0: i32) -> (i32, i32) {
    %c0_i32 = arith.constant 0 : i32
    %c0_i32_0 = arith.constant 0 : i32
    %c0_i32_1 = arith.constant 0 : i32
    return %c0_i32, %c0_i32_0 : i32, i32
  }
  func.func @transform_7(%arg0: i32) -> (i32, i32) {
    %c0_i32 = arith.constant 0 : i32
    %c0_i32_0 = arith.constant 0 : i32
    %c0_i32_1 = arith.constant 0 : i32
    return %c0_i32, %c0_i32_0 : i32, i32
  }
  func.func @transform_8(%arg0: i32) -> (i32, i32, i32) {
    %c0_i32 = arith.constant 0 : i32
    %c0_i32_0 = arith.constant 0 : i32
    %c0_i32_1 = arith.constant 0 : i32
    return %arg0, %c0_i32, %c0_i32_0 : i32, i32, i32
  }
}

</mosaic_0001>

<llo_original>
// kernel: tpu_custom_call.1
$region0: #{tpu_custom_call.1}
  #allocation0 [shape = 'u32[]', space=smem, size = 0x4, offset = 0x4, fixed_abs, tag = 'smem constant byte address 0x4 - core index']
  #allocation1 [shape = 'u32[72,128]{1,0:T(1,128)}', space=vmem, size = 0x9000, scoped, tag = 'internal scratch']
  %s0 = inlined_call_operand.vmem [shape: f32[2,256,64], index: 0, kind: input, shape index: {}]
  %s1 = inlined_call_operand.vmem [shape: bf16[256,128], index: 1, kind: input, shape index: {}]
  %s2 = inlined_call_operand.hbm [shape: bf16[64,128], index: 2, kind: input, shape index: {}]
  %s3 = inlined_call_operand.vmem [shape: bf16[128,256], index: 3, kind: input, shape index: {}]
  %s4 = inlined_call_operand.vmem [shape: f32[256,256], index: 4, kind: input, shape index: {}]
  %s5 = inlined_call_operand.hbm [shape: bf16[128,128], index: 5, kind: input, shape index: {}]
  %s6 = inlined_call_operand.hbm [shape: bf16[128,128], index: 6, kind: input, shape index: {}]
  %s7 = inlined_call_operand.hbm [shape: f32[8,128], index: 7, kind: input, shape index: {}]
  %s8 = inlined_call_operand.hbm [shape: bf16[2,256,128], index: 8, kind: output, shape index: {}]
  %s9 = sld [smem:[#allocation0]]
  $region58: #{tpu_custom_call.1} parent=0
    _
  %s11 = ssub.s32 1, %s9
  %s12 = scalar_select 0, %s11, %s9
  $region1: #{tpu_custom_call.1} parent=0
    #allocation2 [shape = 'u8[16384]{0}', space=vmem, size = 0x4000, scoped, tag = 'input window, operand 2, single buffered']
    #allocation3 [shape = 's32[1]{0}', space=sflag, size = 0x4, scoped, tag = 'scoped memory for tpu_custom_call.1']
    #allocation4 [shape = 's32[1]{0}', space=sflag, size = 0x4, scoped, tag = 'scoped memory for tpu_custom_call.1']
    #allocation5 [shape = 'u8[32768]{0}', space=vmem, size = 0x8000, scoped, tag = 'input window, operand 5, single buffered']
    #allocation6 [shape = 's32[1]{0}', space=sflag, size = 0x4, scoped, tag = 'scoped memory for tpu_custom_call.1']
    #allocation7 [shape = 'u8[32768]{0}', space=vmem, size = 0x8000, scoped, tag = 'input window, operand 6, single buffered']
    #allocation8 [shape = 'u8[4096]{0}', space=vmem, size = 0x1000, scoped, tag = 'input window, operand 7, single buffered']
    #allocation9 [shape = 's32[1]{0}', space=sflag, size = 0x4, scoped, tag = 'scoped memory for tpu_custom_call.1']
    #allocation10 [shape = 'u8[131072]{0}', space=vmem, size = 0x20000, scoped, tag = 'output window, operand 0, single buffered']
    %13 = vsyncpa [#allocation3], 0
    %14 = vsyncpa [#allocation6], 0
    %15 = vsyncpa [#allocation9], 0
    %16 = vsyncpa [#allocation4], 0
    // Predicated region
    $region2: #{tpu_custom_call.1} parent=1 // pred_check
      _
    $region3: #{tpu_custom_call.1} parent=1 // pred_check_branch
      %18 = sbr.rel (0) target = $region5
    $region4: #{tpu_custom_call.1} parent=1 // pred_region
      _
    $region5: #{tpu_custom_call.1} parent=1 // pred_fallthru
      _
    // Predicated region
    $region6: #{tpu_custom_call.1} parent=1 // pred_check
      _
    $region7: #{tpu_custom_call.1} parent=1 // pred_check_branch
      %20 = sbr.rel (0) target = $region9
    $region8: #{tpu_custom_call.1} parent=1 // pred_region
      _
    $region9: #{tpu_custom_call.1} parent=1 // pred_fallthru
      _
    // Predicated region
    $region10: #{tpu_custom_call.1} parent=1 // pred_check
      _
    $region11: #{tpu_custom_call.1} parent=1 // pred_check_branch
      %22 = sbr.rel (0) target = $region13
    $region12: #{tpu_custom_call.1} parent=1 // pred_region
      %24 = vsyncadd [#allocation3], 0
      %s25 = sshll.u32 %s2, 4
      %s26 = int_to_ptr.hbm [resolvable:$true] %s25
      %s27 = sshll.u32 [#allocation2], 4
      %s28 = int_to_ptr.vmem [resolvable:$true] %s27
      %33 = dma.hbm_to_vmem [thread:$0]  %s26, 512, %s28, [#allocation3], 64, 64, 4
    $region13: #{tpu_custom_call.1} parent=1 // pred_fallthru
      _
    // Predicated region
    $region14: #{tpu_custom_call.1} parent=1 // pred_check
      _
    $region15: #{tpu_custom_call.1} parent=1 // pred_check_branch
      %35 = sbr.rel (0) target = $region17
    $region16: #{tpu_custom_call.1} parent=1 // pred_region
      _
    $region17: #{tpu_custom_call.1} parent=1 // pred_fallthru
      _
    // Predicated region
    $region18: #{tpu_custom_call.1} parent=1 // pred_check
      _
    $region19: #{tpu_custom_call.1} parent=1 // pred_check_branch
      %37 = sbr.rel (0) target = $region21
    $region20: #{tpu_custom_call.1} parent=1 // pred_region
      _
    $region21: #{tpu_custom_call.1} parent=1 // pred_fallthru
      _
    // Predicated region
    $region22: #{tpu_custom_call.1} parent=1 // pred_check
      _
    $region23: #{tpu_custom_call.1} parent=1 // pred_check_branch
      %39 = sbr.rel (0) target = $region25
    $region24: #{tpu_custom_call.1} parent=1 // pred_region
      %41 = vsyncadd [#allocation6], 0
      %s42 = sshll.u32 %s5, 4
      %s43 = int_to_ptr.hbm [resolvable:$true] %s42
      %s44 = sshll.u32 [#allocation5], 4
      %s45 = int_to_ptr.vmem [resolvable:$true] %s44
      %50 = dma.hbm_to_vmem [thread:$0]  %s43, 1024, %s45, [#allocation6], 64, 64, 4
    $region25: #{tpu_custom_call.1} parent=1 // pred_fallthru
      _
    // Predicated region
    $region26: #{tpu_custom_call.1} parent=1 // pred_check
      _
    $region27: #{tpu_custom_call.1} parent=1 // pred_check_branch
      %52 = sbr.rel (0) target = $region29
    $region28: #{tpu_custom_call.1} parent=1 // pred_region
      %54 = vsyncadd [#allocation6], 0
      %s55 = sshll.u32 %s6, 4
      %s56 = int_to_ptr.hbm [resolvable:$true] %s55
      %s57 = sshll.u32 [#allocation7], 4
      %s58 = int_to_ptr.vmem [resolvable:$true] %s57
      %63 = dma.hbm_to_vmem [thread:$0]  %s56, 1024, %s58, [#allocation6], 64, 64, 4
    $region29: #{tpu_custom_call.1} parent=1 // pred_fallthru
      _
    // Predicated region
    $region30: #{tpu_custom_call.1} parent=1 // pred_check
      _
    $region31: #{tpu_custom_call.1} parent=1 // pred_check_branch
      %65 = sbr.rel (0) target = $region33
    $region32: #{tpu_custom_call.1} parent=1 // pred_region
      %67 = vsyncadd [#allocation9], 0
      %s69 = sshll.u32 %s7, 4
      %s70 = int_to_ptr.hbm [resolvable:$true] %s69
      %s71 = sshll.u32 [#allocation8], 4
      %s72 = int_to_ptr.vmem [resolvable:$true] %s71
      %74 = dma.hbm_to_vmem [thread:$0]  %s70, 128, %s72, [#allocation9]
    $region33: #{tpu_custom_call.1} parent=1 // pred_fallthru
      _
    // Predicated region
    $region34: #{tpu_custom_call.1} parent=1 // pred_check
      _
    $region35: #{tpu_custom_call.1} parent=1 // pred_check_branch
      %76 = sbr.rel (0) target = $region37
    $region36: #{tpu_custom_call.1} parent=1 // pred_region
      %78 = dma.done [#allocation3], 512
    $region37: #{tpu_custom_call.1} parent=1 // pred_fallthru
      _
    // Predicated region
    $region38: #{tpu_custom_call.1} parent=1 // pred_check
      _
    $region39: #{tpu_custom_call.1} parent=1 // pred_check_branch
      %80 = sbr.rel (0) target = $region41
    $region40: #{tpu_custom_call.1} parent=1 // pred_region
      %82 = dma.done [#allocation6], 1024
    $region41: #{tpu_custom_call.1} parent=1 // pred_fallthru
      _
    // Predicated region
    $region42: #{tpu_custom_call.1} parent=1 // pred_check
      _
    $region43: #{tpu_custom_call.1} parent=1 // pred_check_branch
      %84 = sbr.rel (0) target = $region45
    $region44: #{tpu_custom_call.1} parent=1 // pred_region
      %86 = dma.done [#allocation6], 1024
    $region45: #{tpu_custom_call.1} parent=1 // pred_fallthru
      _
    // Predicated region
    $region46: #{tpu_custom_call.1} parent=1 // pred_check
      _
    $region47: #{tpu_custom_call.1} parent=1 // pred_check_branch
      %88 = sbr.rel (0) target = $region49
    $region48: #{tpu_custom_call.1} parent=1 // pred_region
      %90 = dma.done [#allocation9], 128
    $region49: #{tpu_custom_call.1} parent=1 // pred_fallthru
      _
    %v92 = vld [vmem:[#allocation8] sm:$0xff]
    %v93 = vld [vmem:[%s0] sm:$0xff]
    %v94 = vld [vmem:[%s0 + $0x8] sm:$0xff]
    %v95 = vld [vmem:[%s0 + $0x10] sm:$0xff]
    %v96 = vld [vmem:[%s0 + $0x18] sm:$0xff]
    %v97 = vld [vmem:[%s0 + $0x20] sm:$0xff]
    %v98 = vld [vmem:[%s0 + $0x28] sm:$0xff]
    %v99 = vld [vmem:[%s0 + $0x30] sm:$0xff]
    %v100 = vld [vmem:[%s0 + $0x38] sm:$0xff]
    %v101 = vld [vmem:[%s0 + $0x40] sm:$0xff]
    %v102 = vld [vmem:[%s0 + $0x48] sm:$0xff]
    %v103 = vld [vmem:[%s0 + $0x50] sm:$0xff]
    %v104 = vld [vmem:[%s0 + $0x58] sm:$0xff]
    %v105 = vld [vmem:[%s0 + $0x60] sm:$0xff]
    %v106 = vld [vmem:[%s0 + $0x68] sm:$0xff]
    %v107 = vld [vmem:[%s0 + $0x70] sm:$0xff]
    %v108 = vld [vmem:[%s0 + $0x78] sm:$0xff]
    %v109 = vld [vmem:[%s0 + $0x80] sm:$0xff]
    %v110 = vld [vmem:[%s0 + $0x88] sm:$0xff]
    %v111 = vld [vmem:[%s0 + $0x90] sm:$0xff]
    %v112 = vld [vmem:[%s0 + $0x98] sm:$0xff]
    %v113 = vld [vmem:[%s0 + $0xa0] sm:$0xff]
    %v114 = vld [vmem:[%s0 + $0xa8] sm:$0xff]
    %v115 = vld [vmem:[%s0 + $0xb0] sm:$0xff]
    %v116 = vld [vmem:[%s0 + $0xb8] sm:$0xff]
    %v117 = vld [vmem:[%s0 + $0xc0] sm:$0xff]
    %v118 = vld [vmem:[%s0 + $0xc8] sm:$0xff]
    %v119 = vld [vmem:[%s0 + $0xd0] sm:$0xff]
    %v120 = vld [vmem:[%s0 + $0xd8] sm:$0xff]
    %v121 = vld [vmem:[%s0 + $0xe0] sm:$0xff]
    %v122 = vld [vmem:[%s0 + $0xe8] sm:$0xff]
    %v123 = vld [vmem:[%s0 + $0xf0] sm:$0xff]
    %v124 = vld [vmem:[%s0 + $0xf8] sm:$0xff]
    %v125 = vld [vmem:[%s0 + $0x100] sm:$0xff]
    %v126 = vld [vmem:[%s0 + $0x108] sm:$0xff]
    %v127 = vld [vmem:[%s0 + $0x110] sm:$0xff]
    %v128 = vld [vmem:[%s0 + $0x118] sm:$0xff]
    %v129 = vld [vmem:[%s0 + $0x120] sm:$0xff]
    %v130 = vld [vmem:[%s0 + $0x128] sm:$0xff]
    %v131 = vld [vmem:[%s0 + $0x130] sm:$0xff]
    %v132 = vld [vmem:[%s0 + $0x138] sm:$0xff]
    %v133 = vld [vmem:[%s0 + $0x140] sm:$0xff]
    %v134 = vld [vmem:[%s0 + $0x148] sm:$0xff]
    %v135 = vld [vmem:[%s0 + $0x150] sm:$0xff]
    %v136 = vld [vmem:[%s0 + $0x158] sm:$0xff]
    %v137 = vld [vmem:[%s0 + $0x160] sm:$0xff]
    %v138 = vld [vmem:[%s0 + $0x168] sm:$0xff]
    %v139 = vld [vmem:[%s0 + $0x170] sm:$0xff]
    %v140 = vld [vmem:[%s0 + $0x178] sm:$0xff]
    %v141 = vld [vmem:[%s0 + $0x180] sm:$0xff]
    %v142 = vld [vmem:[%s0 + $0x188] sm:$0xff]
    %v143 = vld [vmem:[%s0 + $0x190] sm:$0xff]
    %v144 = vld [vmem:[%s0 + $0x198] sm:$0xff]
    %v145 = vld [vmem:[%s0 + $0x1a0] sm:$0xff]
    %v146 = vld [vmem:[%s0 + $0x1a8] sm:$0xff]
    %v147 = vld [vmem:[%s0 + $0x1b0] sm:$0xff]
    %v148 = vld [vmem:[%s0 + $0x1b8] sm:$0xff]
    %v149 = vld [vmem:[%s0 + $0x1c0] sm:$0xff]
    %v150 = vld [vmem:[%s0 + $0x1c8] sm:$0xff]
    %v151 = vld [vmem:[%s0 + $0x1d0] sm:$0xff]
    %v152 = vld [vmem:[%s0 + $0x1d8] sm:$0xff]
    %v153 = vld [vmem:[%s0 + $0x1e0] sm:$0xff]
    %v154 = vld [vmem:[%s0 + $0x1e8] sm:$0xff]
    %v155 = vld [vmem:[%s0 + $0x1f0] sm:$0xff]
    %v156 = vld [vmem:[%s0 + $0x1f8] sm:$0xff]
    %v157 = vpack.c.bf16 %v94, %v93
    %v158 = vpack.c.bf16 %v96, %v95
    %v159 = vpack.c.bf16 %v98, %v97
    %v160 = vpack.c.bf16 %v100, %v99
    %v161 = vpack.c.bf16 %v102, %v101
    %v162 = vpack.c.bf16 %v104, %v103
    %v163 = vpack.c.bf16 %v106, %v105
    %v164 = vpack.c.bf16 %v108, %v107
    %v165 = vpack.c.bf16 %v110, %v109
    %v166 = vpack.c.bf16 %v112, %v111
    %v167 = vpack.c.bf16 %v114, %v113
    %v168 = vpack.c.bf16 %v116, %v115
    %v169 = vpack.c.bf16 %v118, %v117
    %v170 = vpack.c.bf16 %v120, %v119
    %v171 = vpack.c.bf16 %v122, %v121
    %v172 = vpack.c.bf16 %v124, %v123
    %v173 = vpack.c.bf16 %v126, %v125
    %v174 = vpack.c.bf16 %v128, %v127
    %v175 = vpack.c.bf16 %v130, %v129
    %v176 = vpack.c.bf16 %v132, %v131
    %v177 = vpack.c.bf16 %v134, %v133
    %v178 = vpack.c.bf16 %v136, %v135
    %v179 = vpack.c.bf16 %v138, %v137
    %v180 = vpack.c.bf16 %v140, %v139
    %v181 = vpack.c.bf16 %v142, %v141
    %v182 = vpack.c.bf16 %v144, %v143
    %v183 = vpack.c.bf16 %v146, %v145
    %v184 = vpack.c.bf16 %v148, %v147
    %v185 = vpack.c.bf16 %v150, %v149
    %v186 = vpack.c.bf16 %v152, %v151
    %v187 = vpack.c.bf16 %v154, %v153
    %v188 = vpack.c.bf16 %v156, %v155
    %v189 = vld [vmem:[#allocation2] sm:$0xf]
    %v190 = vld [vmem:[#allocation2 + $0x4] sm:$0xf]
    %v191 = vld [vmem:[#allocation2 + $0x8] sm:$0xf]
    %v192 = vld [vmem:[#allocation2 + $0xc] sm:$0xf]
    %v193 = vld [vmem:[#allocation2 + $0x10] sm:$0xf]
    %v194 = vld [vmem:[#allocation2 + $0x14] sm:$0xf]
    %v195 = vld [vmem:[#allocation2 + $0x18] sm:$0xf]
    %v196 = vld [vmem:[#allocation2 + $0x1c] sm:$0xf]
    %v205 = vunpack.c.l.b16 %v189
    %v206 = vunpack.c.l.b16 %v190
    %v207 = vunpack.c.l.b16 %v191
    %v208 = vunpack.c.l.b16 %v192
    %v209 = vunpack.c.l.b16 %v193
    %v210 = vunpack.c.l.b16 %v194
    %v211 = vunpack.c.l.b16 %v195
    %v212 = vunpack.c.l.b16 %v196
    %v213 = vpack.c.b16 %v206, %v205
    %v214 = vpack.c.b16 %v208, %v207
    %v215 = vpack.c.b16 %v210, %v209
    %v216 = vpack.c.b16 %v212, %v211
    %vm221 = vcmask 523264
    %v223 = vsel %vm221, %v157, 0
    %v226 = vsel %vm221, %v158, 0
    %v229 = vsel %vm221, %v159, 0
    %v232 = vsel %vm221, %v160, 0
    %v235 = vsel %vm221, %v161, 0
    %v238 = vsel %vm221, %v162, 0
    %v241 = vsel %vm221, %v163, 0
    %v244 = vsel %vm221, %v164, 0
    %v247 = vsel %vm221, %v165, 0
    %v250 = vsel %vm221, %v166, 0
    %v253 = vsel %vm221, %v167, 0
    %v256 = vsel %vm221, %v168, 0
    %v259 = vsel %vm221, %v169, 0
    %v262 = vsel %vm221, %v170, 0
    %v265 = vsel %vm221, %v171, 0
    %v268 = vsel %vm221, %v172, 0
    %v271 = vsel %vm221, %v173, 0
    %v274 = vsel %vm221, %v174, 0
    %v277 = vsel %vm221, %v175, 0
    %v280 = vsel %vm221, %v176, 0
    %v283 = vsel %vm221, %v177, 0
    %v286 = vsel %vm221, %v178, 0
    %v289 = vsel %vm221, %v179, 0
    %v292 = vsel %vm221, %v180, 0
    %v295 = vsel %vm221, %v181, 0
    %v298 = vsel %vm221, %v182, 0
    %v301 = vsel %vm221, %v183, 0
    %v304 = vsel %vm221, %v184, 0
    %v307 = vsel %vm221, %v185, 0
    %v310 = vsel %vm221, %v186, 0
    %v313 = vsel %vm221, %v187, 0
    %v316 = vsel %vm221, %v188, 0
    %318 = vmatpush.bf16.msra.mxu0 0
    %319 = vmatpush.bf16.msra.mxu0 0
    %320 = vmatpush.bf16.msra.mxu0 0
    %321 = vmatpush.bf16.msra.mxu0 0
    %322 = vmatpush.bf16.msra.mxu0 %v216
    %323 = vmatpush.bf16.msra.mxu0 %v215
    %324 = vmatpush.bf16.msra.mxu0 %v214
    %325 = vmatpush.bf16.msra.mxu0 %v213
    %326 = vmatmul.bf16.gmra.mxu0 %v223
    %v327 = vpop.f32.mrf.mxu0
    %v328 = vadd.f32 0.0, %v327
    %v329 = vpop.f32.mrf.mxu0
    %v330 = vadd.f32 0.0, %v329
    %331 = vmatmul.bf16.gmra.mxu0 %v226
    %v332 = vpop.f32.mrf.mxu0
    %v333 = vadd.f32 0.0, %v332
    %v334 = vpop.f32.mrf.mxu0
    %v335 = vadd.f32 0.0, %v334
    %336 = vmatmul.bf16.gmra.mxu0 %v229
    %v337 = vpop.f32.mrf.mxu0
    %v338 = vadd.f32 0.0, %v337
    %v339 = vpop.f32.mrf.mxu0
    %v340 = vadd.f32 0.0, %v339
    %341 = vmatmul.bf16.gmra.mxu0 %v232
    %v342 = vpop.f32.mrf.mxu0
    %v343 = vadd.f32 0.0, %v342
    %v344 = vpop.f32.mrf.mxu0
    %v345 = vadd.f32 0.0, %v344
    %346 = vmatmul.bf16.gmra.mxu0 %v235
    %v347 = vpop.f32.mrf.mxu0
    %v348 = vadd.f32 0.0, %v347
    %v349 = vpop.f32.mrf.mxu0
    %v350 = vadd.f32 0.0, %v349
    %351 = vmatmul.bf16.gmra.mxu0 %v238
    %v352 = vpop.f32.mrf.mxu0
    %v353 = vadd.f32 0.0, %v352
    %v354 = vpop.f32.mrf.mxu0
    %v355 = vadd.f32 0.0, %v354
    %356 = vmatmul.bf16.gmra.mxu0 %v241
    %v357 = vpop.f32.mrf.mxu0
    %v358 = vadd.f32 0.0, %v357
    %v359 = vpop.f32.mrf.mxu0
    %v360 = vadd.f32 0.0, %v359
    %361 = vmatmul.bf16.gmra.mxu0 %v244
    %v362 = vpop.f32.mrf.mxu0
    %v363 = vadd.f32 0.0, %v362
    %v364 = vpop.f32.mrf.mxu0
    %v365 = vadd.f32 0.0, %v364
    %366 = vmatmul.bf16.gmra.mxu0 %v247
    %v367 = vpop.f32.mrf.mxu0
    %v368 = vadd.f32 0.0, %v367
    %v369 = vpop.f32.mrf.mxu0
    %v370 = vadd.f32 0.0, %v369
    %371 = vmatmul.bf16.gmra.mxu0 %v250
    %v372 = vpop.f32.mrf.mxu0
    %v373 = vadd.f32 0.0, %v372
    %v374 = vpop.f32.mrf.mxu0
    %v375 = vadd.f32 0.0, %v374
    %376 = vmatmul.bf16.gmra.mxu0 %v253
    %v377 = vpop.f32.mrf.mxu0
    %v378 = vadd.f32 0.0, %v377
    %v379 = vpop.f32.mrf.mxu0
    %v380 = vadd.f32 0.0, %v379
    %381 = vmatmul.bf16.gmra.mxu0 %v256
    %v382 = vpop.f32.mrf.mxu0
    %v383 = vadd.f32 0.0, %v382
    %v384 = vpop.f32.mrf.mxu0
    %v385 = vadd.f32 0.0, %v384
    %386 = vmatmul.bf16.gmra.mxu0 %v259
    %v387 = vpop.f32.mrf.mxu0
    %v388 = vadd.f32 0.0, %v387
    %v389 = vpop.f32.mrf.mxu0
    %v390 = vadd.f32 0.0, %v389
    %391 = vmatmul.bf16.gmra.mxu0 %v262
    %v392 = vpop.f32.mrf.mxu0
    %v393 = vadd.f32 0.0, %v392
    %v394 = vpop.f32.mrf.mxu0
    %v395 = vadd.f32 0.0, %v394
    %396 = vmatmul.bf16.gmra.mxu0 %v265
    %v397 = vpop.f32.mrf.mxu0
    %v398 = vadd.f32 0.0, %v397
    %v399 = vpop.f32.mrf.mxu0
    %v400 = vadd.f32 0.0, %v399
    %401 = vmatmul.bf16.gmra.mxu0 %v268
    %v402 = vpop.f32.mrf.mxu0
    %v403 = vadd.f32 0.0, %v402
    %v404 = vpop.f32.mrf.mxu0
    %v405 = vadd.f32 0.0, %v404
    %406 = vmatmul.bf16.gmra.mxu0 %v271
    %v407 = vpop.f32.mrf.mxu0
    %v408 = vadd.f32 0.0, %v407
    %v409 = vpop.f32.mrf.mxu0
    %v410 = vadd.f32 0.0, %v409
    %411 = vmatmul.bf16.gmra.mxu0 %v274
    %v412 = vpop.f32.mrf.mxu0
    %v413 = vadd.f32 0.0, %v412
    %v414 = vpop.f32.mrf.mxu0
    %v415 = vadd.f32 0.0, %v414
    %416 = vmatmul.bf16.gmra.mxu0 %v277
    %v417 = vpop.f32.mrf.mxu0
    %v418 = vadd.f32 0.0, %v417
    %v419 = vpop.f32.mrf.mxu0
    %v420 = vadd.f32 0.0, %v419
    %421 = vmatmul.bf16.gmra.mxu0 %v280
    %v422 = vpop.f32.mrf.mxu0
    %v423 = vadd.f32 0.0, %v422
    %v424 = vpop.f32.mrf.mxu0
    %v425 = vadd.f32 0.0, %v424
    %426 = vmatmul.bf16.gmra.mxu0 %v283
    %v427 = vpop.f32.mrf.mxu0
    %v428 = vadd.f32 0.0, %v427
    %v429 = vpop.f32.mrf.mxu0
    %v430 = vadd.f32 0.0, %v429
    %431 = vmatmul.bf16.gmra.mxu0 %v286
    %v432 = vpop.f32.mrf.mxu0
    %v433 = vadd.f32 0.0, %v432
    %v434 = vpop.f32.mrf.mxu0
    %v435 = vadd.f32 0.0, %v434
    %436 = vmatmul.bf16.gmra.mxu0 %v289
    %v437 = vpop.f32.mrf.mxu0
    %v438 = vadd.f32 0.0, %v437
    %v439 = vpop.f32.mrf.mxu0
    %v440 = vadd.f32 0.0, %v439
    %441 = vmatmul.bf16.gmra.mxu0 %v292
    %v442 = vpop.f32.mrf.mxu0
    %v443 = vadd.f32 0.0, %v442
    %v444 = vpop.f32.mrf.mxu0
    %v445 = vadd.f32 0.0, %v444
    %446 = vmatmul.bf16.gmra.mxu0 %v295
    %v447 = vpop.f32.mrf.mxu0
    %v448 = vadd.f32 0.0, %v447
    %v449 = vpop.f32.mrf.mxu0
    %v450 = vadd.f32 0.0, %v449
    %451 = vmatmul.bf16.gmra.mxu0 %v298
    %v452 = vpop.f32.mrf.mxu0
    %v453 = vadd.f32 0.0, %v452
    %v454 = vpop.f32.mrf.mxu0
    %v455 = vadd.f32 0.0, %v454
    %456 = vmatmul.bf16.gmra.mxu0 %v301
    %v457 = vpop.f32.mrf.mxu0
    %v458 = vadd.f32 0.0, %v457
    %v459 = vpop.f32.mrf.mxu0
    %v460 = vadd.f32 0.0, %v459
    %461 = vmatmul.bf16.gmra.mxu0 %v304
    %v462 = vpop.f32.mrf.mxu0
    %v463 = vadd.f32 0.0, %v462
    %v464 = vpop.f32.mrf.mxu0
    %v465 = vadd.f32 0.0, %v464
    %466 = vmatmul.bf16.gmra.mxu0 %v307
    %v467 = vpop.f32.mrf.mxu0
    %v468 = vadd.f32 0.0, %v467
    %v469 = vpop.f32.mrf.mxu0
    %v470 = vadd.f32 0.0, %v469
    %471 = vmatmul.bf16.gmra.mxu0 %v310
    %v472 = vpop.f32.mrf.mxu0
    %v473 = vadd.f32 0.0, %v472
    %v474 = vpop.f32.mrf.mxu0
    %v475 = vadd.f32 0.0, %v474
    %476 = vmatmul.bf16.gmra.mxu0 %v313
    %v477 = vpop.f32.mrf.mxu0
    %v478 = vadd.f32 0.0, %v477
    %v479 = vpop.f32.mrf.mxu0
    %v480 = vadd.f32 0.0, %v479
    %481 = vmatmul.bf16.gmra.mxu0 %v316
    %v482 = vpop.f32.mrf.mxu0
    %v483 = vadd.f32 0.0, %v482
    %v484 = vpop.f32.mrf.mxu0
    %v485 = vadd.f32 0.0, %v484
    %486 = vdwg.mxu0
    %487 = vadd.xlane.f32.xlu0 %v328
    %v488 = vpop.xlane.xlu0 %487
    %489 = vadd.xlane.f32.xlu0 %v330
    %v490 = vpop.xlane.xlu0 %489
    %491 = vadd.xlane.f32.xlu0 %v333
    %v492 = vpop.xlane.xlu0 %491
    %493 = vadd.xlane.f32.xlu0 %v335
    %v494 = vpop.xlane.xlu0 %493
    %495 = vadd.xlane.f32.xlu0 %v338
    %v496 = vpop.xlane.xlu0 %495
    %497 = vadd.xlane.f32.xlu0 %v340
    %v498 = vpop.xlane.xlu0 %497
    %499 = vadd.xlane.f32.xlu0 %v343
    %v500 = vpop.xlane.xlu0 %499
    %501 = vadd.xlane.f32.xlu0 %v345
    %v502 = vpop.xlane.xlu0 %501
    %503 = vadd.xlane.f32.xlu0 %v348
    %v504 = vpop.xlane.xlu0 %503
    %505 = vadd.xlane.f32.xlu0 %v350
    %v506 = vpop.xlane.xlu0 %505
    %507 = vadd.xlane.f32.xlu0 %v353
    %v508 = vpop.xlane.xlu0 %507
    %509 = vadd.xlane.f32.xlu0 %v355
    %v510 = vpop.xlane.xlu0 %509
    %511 = vadd.xlane.f32.xlu0 %v358
    %v512 = vpop.xlane.xlu0 %511
    %513 = vadd.xlane.f32.xlu0 %v360
    %v514 = vpop.xlane.xlu0 %513
    %515 = vadd.xlane.f32.xlu0 %v363
    %v516 = vpop.xlane.xlu0 %515
    %517 = vadd.xlane.f32.xlu0 %v365
    %v518 = vpop.xlane.xlu0 %517
    %519 = vadd.xlane.f32.xlu0 %v368
    %v520 = vpop.xlane.xlu0 %519
    %521 = vadd.xlane.f32.xlu0 %v370
    %v522 = vpop.xlane.xlu0 %521
    %523 = vadd.xlane.f32.xlu0 %v373
    %v524 = vpop.xlane.xlu0 %523
    %525 = vadd.xlane.f32.xlu0 %v375
    %v526 = vpop.xlane.xlu0 %525
    %527 = vadd.xlane.f32.xlu0 %v378
    %v528 = vpop.xlane.xlu0 %527
    %529 = vadd.xlane.f32.xlu0 %v380
    %v530 = vpop.xlane.xlu0 %529
    %531 = vadd.xlane.f32.xlu0 %v383
    %v532 = vpop.xlane.xlu0 %531
    %533 = vadd.xlane.f32.xlu0 %v385
    %v534 = vpop.xlane.xlu0 %533
    %535 = vadd.xlane.f32.xlu0 %v388
    %v536 = vpop.xlane.xlu0 %535
    %537 = vadd.xlane.f32.xlu0 %v390
    %v538 = vpop.xlane.xlu0 %537
    %539 = vadd.xlane.f32.xlu0 %v393
    %v540 = vpop.xlane.xlu0 %539
    %541 = vadd.xlane.f32.xlu0 %v395
    %v542 = vpop.xlane.xlu0 %541
    %543 = vadd.xlane.f32.xlu0 %v398
    %v544 = vpop.xlane.xlu0 %543
    %545 = vadd.xlane.f32.xlu0 %v400
    %v546 = vpop.xlane.xlu0 %545
    %547 = vadd.xlane.f32.xlu0 %v403
    %v548 = vpop.xlane.xlu0 %547
    %549 = vadd.xlane.f32.xlu0 %v405
    %v550 = vpop.xlane.xlu0 %549
    %551 = vadd.xlane.f32.xlu0 %v408
    %v552 = vpop.xlane.xlu0 %551
    %553 = vadd.xlane.f32.xlu0 %v410
    %v554 = vpop.xlane.xlu0 %553
    %555 = vadd.xlane.f32.xlu0 %v413
    %v556 = vpop.xlane.xlu0 %555
    %557 = vadd.xlane.f32.xlu0 %v415
    %v558 = vpop.xlane.xlu0 %557
    %559 = vadd.xlane.f32.xlu0 %v418
    %v560 = vpop.xlane.xlu0 %559
    %561 = vadd.xlane.f32.xlu0 %v420
    %v562 = vpop.xlane.xlu0 %561
    %563 = vadd.xlane.f32.xlu0 %v423
    %v564 = vpop.xlane.xlu0 %563
    %565 = vadd.xlane.f32.xlu0 %v425
    %v566 = vpop.xlane.xlu0 %565
    %567 = vadd.xlane.f32.xlu0 %v428
    %v568 = vpop.xlane.xlu0 %567
    %569 = vadd.xlane.f32.xlu0 %v430
    %v570 = vpop.xlane.xlu0 %569
    %571 = vadd.xlane.f32.xlu0 %v433
    %v572 = vpop.xlane.xlu0 %571
    %573 = vadd.xlane.f32.xlu0 %v435
    %v574 = vpop.xlane.xlu0 %573
    %575 = vadd.xlane.f32.xlu0 %v438
    %v576 = vpop.xlane.xlu0 %575
    %577 = vadd.xlane.f32.xlu0 %v440
    %v578 = vpop.xlane.xlu0 %577
    %579 = vadd.xlane.f32.xlu0 %v443
    %v580 = vpop.xlane.xlu0 %579
    %581 = vadd.xlane.f32.xlu0 %v445
    %v582 = vpop.xlane.xlu0 %581
    %583 = vadd.xlane.f32.xlu0 %v448
    %v584 = vpop.xlane.xlu0 %583
    %585 = vadd.xlane.f32.xlu0 %v450
    %v586 = vpop.xlane.xlu0 %585
    %587 = vadd.xlane.f32.xlu0 %v453
    %v588 = vpop.xlane.xlu0 %587
    %589 = vadd.xlane.f32.xlu0 %v455
    %v590 = vpop.xlane.xlu0 %589
    %591 = vadd.xlane.f32.xlu0 %v458
    %v592 = vpop.xlane.xlu0 %591
    %593 = vadd.xlane.f32.xlu0 %v460
    %v594 = vpop.xlane.xlu0 %593
    %595 = vadd.xlane.f32.xlu0 %v463
    %v596 = vpop.xlane.xlu0 %595
    %597 = vadd.xlane.f32.xlu0 %v465
    %v598 = vpop.xlane.xlu0 %597
    %599 = vadd.xlane.f32.xlu0 %v468
    %v600 = vpop.xlane.xlu0 %599
    %601 = vadd.xlane.f32.xlu0 %v470
    %v602 = vpop.xlane.xlu0 %601
    %603 = vadd.xlane.f32.xlu0 %v473
    %v604 = vpop.xlane.xlu0 %603
    %605 = vadd.xlane.f32.xlu0 %v475
    %v606 = vpop.xlane.xlu0 %605
    %607 = vadd.xlane.f32.xlu0 %v478
    %v608 = vpop.xlane.xlu0 %607
    %609 = vadd.xlane.f32.xlu0 %v480
    %v610 = vpop.xlane.xlu0 %609
    %611 = vadd.xlane.f32.xlu0 %v483
    %v612 = vpop.xlane.xlu0 %611
    %613 = vadd.xlane.f32.xlu0 %v485
    %v614 = vpop.xlane.xlu0 %613
    %v615 = vrcp.pop 128.0
    %v616 = vmul.f32 128.0, %v615
    %v617 = vsub.f32 1.0, %v616
    %v618 = vmul.f32 %v615, %v617
    %v619 = vadd.f32 %v615, %v618
    %vm620 = vweird.f32 %v615
    %v621 = vsel %vm620, %v615, %v619
    %v622 = vmul.f32 %v488, %v621
    %v623 = vmul.f32 %v490, %v621
    %v624 = vmul.f32 %v492, %v621
    %v625 = vmul.f32 %v494, %v621
    %v626 = vmul.f32 %v496, %v621
    %v627 = vmul.f32 %v498, %v621
    %v628 = vmul.f32 %v500, %v621
    %v629 = vmul.f32 %v502, %v621
    %v630 = vmul.f32 %v504, %v621
    %v631 = vmul.f32 %v506, %v621
    %v632 = vmul.f32 %v508, %v621
    %v633 = vmul.f32 %v510, %v621
    %v634 = vmul.f32 %v512, %v621
    %v635 = vmul.f32 %v514, %v621
    %v636 = vmul.f32 %v516, %v621
    %v637 = vmul.f32 %v518, %v621
    %v638 = vmul.f32 %v520, %v621
    %v639 = vmul.f32 %v522, %v621
    %v640 = vmul.f32 %v524, %v621
    %v641 = vmul.f32 %v526, %v621
    %v642 = vmul.f32 %v528, %v621
    %v643 = vmul.f32 %v530, %v621
    %v644 = vmul.f32 %v532, %v621
    %v645 = vmul.f32 %v534, %v621
    %v646 = vmul.f32 %v536, %v621
    %v647 = vmul.f32 %v538, %v621
    %v648 = vmul.f32 %v540, %v621
    %v649 = vmul.f32 %v542, %v621
    %v650 = vmul.f32 %v544, %v621
    %v651 = vmul.f32 %v546, %v621
    %v652 = vmul.f32 %v548, %v621
    %v653 = vmul.f32 %v550, %v621
    %v654 = vmul.f32 %v552, %v621
    %v655 = vmul.f32 %v554, %v621
    %v656 = vmul.f32 %v556, %v621
    %v657 = vmul.f32 %v558, %v621
    %v658 = vmul.f32 %v560, %v621
    %v659 = vmul.f32 %v562, %v621
    %v660 = vmul.f32 %v564, %v621
    %v661 = vmul.f32 %v566, %v621
    %v662 = vmul.f32 %v568, %v621
    %v663 = vmul.f32 %v570, %v621
    %v664 = vmul.f32 %v572, %v621
    %v665 = vmul.f32 %v574, %v621
    %v666 = vmul.f32 %v576, %v621
    %v667 = vmul.f32 %v578, %v621
    %v668 = vmul.f32 %v580, %v621
    %v669 = vmul.f32 %v582, %v621
    %v670 = vmul.f32 %v584, %v621
    %v671 = vmul.f32 %v586, %v621
    %v672 = vmul.f32 %v588, %v621
    %v673 = vmul.f32 %v590, %v621
    %v674 = vmul.f32 %v592, %v621
    %v675 = vmul.f32 %v594, %v621
    %v676 = vmul.f32 %v596, %v621
    %v677 = vmul.f32 %v598, %v621
    %v678 = vmul.f32 %v600, %v621
    %v679 = vmul.f32 %v602, %v621
    %v680 = vmul.f32 %v604, %v621
    %v681 = vmul.f32 %v606, %v621
    %v682 = vmul.f32 %v608, %v621
    %v683 = vmul.f32 %v610, %v621
    %v684 = vmul.f32 %v612, %v621
    %v685 = vmul.f32 %v614, %v621
    %v686 = vsub.f32 %v328, %v622
    %v687 = vsub.f32 %v330, %v623
    %v688 = vsub.f32 %v333, %v624
    %v689 = vsub.f32 %v335, %v625
    %v690 = vsub.f32 %v338, %v626
    %v691 = vsub.f32 %v340, %v627
    %v692 = vsub.f32 %v343, %v628
    %v693 = vsub.f32 %v345, %v629
    %v694 = vsub.f32 %v348, %v630
    %v695 = vsub.f32 %v350, %v631
    %v696 = vsub.f32 %v353, %v632
    %v697 = vsub.f32 %v355, %v633
    %v698 = vsub.f32 %v358, %v634
    %v699 = vsub.f32 %v360, %v635
    %v700 = vsub.f32 %v363, %v636
    %v701 = vsub.f32 %v365, %v637
    %v702 = vsub.f32 %v368, %v638
    %v703 = vsub.f32 %v370, %v639
    %v704 = vsub.f32 %v373, %v640
    %v705 = vsub.f32 %v375, %v641
    %v706 = vsub.f32 %v378, %v642
    %v707 = vsub.f32 %v380, %v643
    %v708 = vsub.f32 %v383, %v644
    %v709 = vsub.f32 %v385, %v645
    %v710 = vsub.f32 %v388, %v646
    %v711 = vsub.f32 %v390, %v647
    %v712 = vsub.f32 %v393, %v648
    %v713 = vsub.f32 %v395, %v649
    %v714 = vsub.f32 %v398, %v650
    %v715 = vsub.f32 %v400, %v651
    %v716 = vsub.f32 %v403, %v652
    %v717 = vsub.f32 %v405, %v653
    %v718 = vsub.f32 %v408, %v654
    %v719 = vsub.f32 %v410, %v655
    %v720 = vsub.f32 %v413, %v656
    %v721 = vsub.f32 %v415, %v657
    %v722 = vsub.f32 %v418, %v658
    %v723 = vsub.f32 %v420, %v659
    %v724 = vsub.f32 %v423, %v660
    %v725 = vsub.f32 %v425, %v661
    %v726 = vsub.f32 %v428, %v662
    %v727 = vsub.f32 %v430, %v663
    %v728 = vsub.f32 %v433, %v664
    %v729 = vsub.f32 %v435, %v665
    %v730 = vsub.f32 %v438, %v666
    %v731 = vsub.f32 %v440, %v667
    %v732 = vsub.f32 %v443, %v668
    %v733 = vsub.f32 %v445, %v669
    %v734 = vsub.f32 %v448, %v670
    %v735 = vsub.f32 %v450, %v671
    %v736 = vsub.f32 %v453, %v672
    %v737 = vsub.f32 %v455, %v673
    %v738 = vsub.f32 %v458, %v674
    %v739 = vsub.f32 %v460, %v675
    %v740 = vsub.f32 %v463, %v676
    %v741 = vsub.f32 %v465, %v677
    %v742 = vsub.f32 %v468, %v678
    %v743 = vsub.f32 %v470, %v679
    %v744 = vsub.f32 %v473, %v680
    %v745 = vsub.f32 %v475, %v681
    %v746 = vsub.f32 %v478, %v682
    %v747 = vsub.f32 %v480, %v683
    %v748 = vsub.f32 %v483, %v684
    %v749 = vsub.f32 %v485, %v685
    %v750 = vmul.f32 %v686, %v686
    %v751 = vmul.f32 %v687, %v687
    %v752 = vmul.f32 %v688, %v688
    %v753 = vmul.f32 %v689, %v689
    %v754 = vmul.f32 %v690, %v690
    %v755 = vmul.f32 %v691, %v691
    %v756 = vmul.f32 %v692, %v692
    %v757 = vmul.f32 %v693, %v693
    %v758 = vmul.f32 %v694, %v694
    %v759 = vmul.f32 %v695, %v695
    %v760 = vmul.f32 %v696, %v696
    %v761 = vmul.f32 %v697, %v697
    %v762 = vmul.f32 %v698, %v698
    %v763 = vmul.f32 %v699, %v699
    %v764 = vmul.f32 %v700, %v700
    %v765 = vmul.f32 %v701, %v701
    %v766 = vmul.f32 %v702, %v702
    %v767 = vmul.f32 %v703, %v703
    %v768 = vmul.f32 %v704, %v704
    %v769 = vmul.f32 %v705, %v705
    %v770 = vmul.f32 %v706, %v706
    %v771 = vmul.f32 %v707, %v707
    %v772 = vmul.f32 %v708, %v708
    %v773 = vmul.f32 %v709, %v709
    %v774 = vmul.f32 %v710, %v710
    %v775 = vmul.f32 %v711, %v711
    %v776 = vmul.f32 %v712, %v712
    %v777 = vmul.f32 %v713, %v713
    %v778 = vmul.f32 %v714, %v714
    %v779 = vmul.f32 %v715, %v715
    %v780 = vmul.f32 %v716, %v716
    %v781 = vmul.f32 %v717, %v717
    %v782 = vmul.f32 %v718, %v718
    %v783 = vmul.f32 %v719, %v719
    %v784 = vmul.f32 %v720, %v720
    %v785 = vmul.f32 %v721, %v721
    %v786 = vmul.f32 %v722, %v722
    %v787 = vmul.f32 %v723, %v723
    %v788 = vmul.f32 %v724, %v724
    %v789 = vmul.f32 %v725, %v725
    %v790 = vmul.f32 %v726, %v726
    %v791 = vmul.f32 %v727, %v727
    %v792 = vmul.f32 %v728, %v728
    %v793 = vmul.f32 %v729, %v729
    %v794 = vmul.f32 %v730, %v730
    %v795 = vmul.f32 %v731, %v731
    %v796 = vmul.f32 %v732, %v732
    %v797 = vmul.f32 %v733, %v733
    %v798 = vmul.f32 %v734, %v734
    %v799 = vmul.f32 %v735, %v735
    %v800 = vmul.f32 %v736, %v736
    %v801 = vmul.f32 %v737, %v737
    %v802 = vmul.f32 %v738, %v738
    %v803 = vmul.f32 %v739, %v739
    %v804 = vmul.f32 %v740, %v740
    %v805 = vmul.f32 %v741, %v741
    %v806 = vmul.f32 %v742, %v742
    %v807 = vmul.f32 %v743, %v743
    %v808 = vmul.f32 %v744, %v744
    %v809 = vmul.f32 %v745, %v745
    %v810 = vmul.f32 %v746, %v746
    %v811 = vmul.f32 %v747, %v747
    %v812 = vmul.f32 %v748, %v748
    %v813 = vmul.f32 %v749, %v749
    %814 = vadd.xlane.f32.xlu0 %v750
    %v815 = vpop.xlane.xlu0 %814
    %816 = vadd.xlane.f32.xlu0 %v751
    %v817 = vpop.xlane.xlu0 %816
    %818 = vadd.xlane.f32.xlu0 %v752
    %v819 = vpop.xlane.xlu0 %818
    %820 = vadd.xlane.f32.xlu0 %v753
    %v821 = vpop.xlane.xlu0 %820
    %822 = vadd.xlane.f32.xlu0 %v754
    %v823 = vpop.xlane.xlu0 %822
    %824 = vadd.xlane.f32.xlu0 %v755
    %v825 = vpop.xlane.xlu0 %824
    %826 = vadd.xlane.f32.xlu0 %v756
    %v827 = vpop.xlane.xlu0 %826
    %828 = vadd.xlane.f32.xlu0 %v757
    %v829 = vpop.xlane.xlu0 %828
    %830 = vadd.xlane.f32.xlu0 %v758
    %v831 = vpop.xlane.xlu0 %830
    %832 = vadd.xlane.f32.xlu0 %v759
    %v833 = vpop.xlane.xlu0 %832
    %834 = vadd.xlane.f32.xlu0 %v760
    %v835 = vpop.xlane.xlu0 %834
    %836 = vadd.xlane.f32.xlu0 %v761
    %v837 = vpop.xlane.xlu0 %836
    %838 = vadd.xlane.f32.xlu0 %v762
    %v839 = vpop.xlane.xlu0 %838
    %840 = vadd.xlane.f32.xlu0 %v763
    %v841 = vpop.xlane.xlu0 %840
    %842 = vadd.xlane.f32.xlu0 %v764
    %v843 = vpop.xlane.xlu0 %842
    %844 = vadd.xlane.f32.xlu0 %v765
    %v845 = vpop.xlane.xlu0 %844
    %846 = vadd.xlane.f32.xlu0 %v766
    %v847 = vpop.xlane.xlu0 %846
    %848 = vadd.xlane.f32.xlu0 %v767
    %v849 = vpop.xlane.xlu0 %848
    %850 = vadd.xlane.f32.xlu0 %v768
    %v851 = vpop.xlane.xlu0 %850
    %852 = vadd.xlane.f32.xlu0 %v769
    %v853 = vpop.xlane.xlu0 %852
    %854 = vadd.xlane.f32.xlu0 %v770
    %v855 = vpop.xlane.xlu0 %854
    %856 = vadd.xlane.f32.xlu0 %v771
    %v857 = vpop.xlane.xlu0 %856
    %858 = vadd.xlane.f32.xlu0 %v772
    %v859 = vpop.xlane.xlu0 %858
    %860 = vadd.xlane.f32.xlu0 %v773
    %v861 = vpop.xlane.xlu0 %860
    %862 = vadd.xlane.f32.xlu0 %v774
    %v863 = vpop.xlane.xlu0 %862
    %864 = vadd.xlane.f32.xlu0 %v775
    %v865 = vpop.xlane.xlu0 %864
    %866 = vadd.xlane.f32.xlu0 %v776
    %v867 = vpop.xlane.xlu0 %866
    %868 = vadd.xlane.f32.xlu0 %v777
    %v869 = vpop.xlane.xlu0 %868
    %870 = vadd.xlane.f32.xlu0 %v778
    %v871 = vpop.xlane.xlu0 %870
    %872 = vadd.xlane.f32.xlu0 %v779
    %v873 = vpop.xlane.xlu0 %872
    %874 = vadd.xlane.f32.xlu0 %v780
    %v875 = vpop.xlane.xlu0 %874
    %876 = vadd.xlane.f32.xlu0 %v781
    %v877 = vpop.xlane.xlu0 %876
    %878 = vadd.xlane.f32.xlu0 %v782
    %v879 = vpop.xlane.xlu0 %878
    %880 = vadd.xlane.f32.xlu0 %v783
    %v881 = vpop.xlane.xlu0 %880
    %882 = vadd.xlane.f32.xlu0 %v784
    %v883 = vpop.xlane.xlu0 %882
    %884 = vadd.xlane.f32.xlu0 %v785
    %v885 = vpop.xlane.xlu0 %884
    %886 = vadd.xlane.f32.xlu0 %v786
    %v887 = vpop.xlane.xlu0 %886
    %888 = vadd.xlane.f32.xlu0 %v787
    %v889 = vpop.xlane.xlu0 %888
    %890 = vadd.xlane.f32.xlu0 %v788
    %v891 = vpop.xlane.xlu0 %890
    %892 = vadd.xlane.f32.xlu0 %v789
    %v893 = vpop.xlane.xlu0 %892
    %894 = vadd.xlane.f32.xlu0 %v790
    %v895 = vpop.xlane.xlu0 %894
    %896 = vadd.xlane.f32.xlu0 %v791
    %v897 = vpop.xlane.xlu0 %896
    %898 = vadd.xlane.f32.xlu0 %v792
    %v899 = vpop.xlane.xlu0 %898
    %900 = vadd.xlane.f32.xlu0 %v793
    %v901 = vpop.xlane.xlu0 %900
    %902 = vadd.xlane.f32.xlu0 %v794
    %v903 = vpop.xlane.xlu0 %902
    %904 = vadd.xlane.f32.xlu0 %v795
    %v905 = vpop.xlane.xlu0 %904
    %906 = vadd.xlane.f32.xlu0 %v796
    %v907 = vpop.xlane.xlu0 %906
    %908 = vadd.xlane.f32.xlu0 %v797
    %v909 = vpop.xlane.xlu0 %908
    %910 = vadd.xlane.f32.xlu0 %v798
    %v911 = vpop.xlane.xlu0 %910
    %912 = vadd.xlane.f32.xlu0 %v799
    %v913 = vpop.xlane.xlu0 %912
    %914 = vadd.xlane.f32.xlu0 %v800
    %v915 = vpop.xlane.xlu0 %914
    %916 = vadd.xlane.f32.xlu0 %v801
    %v917 = vpop.xlane.xlu0 %916
    %918 = vadd.xlane.f32.xlu0 %v802
    %v919 = vpop.xlane.xlu0 %918
    %920 = vadd.xlane.f32.xlu0 %v803
    %v921 = vpop.xlane.xlu0 %920
    %922 = vadd.xlane.f32.xlu0 %v804
    %v923 = vpop.xlane.xlu0 %922
    %924 = vadd.xlane.f32.xlu0 %v805
    %v925 = vpop.xlane.xlu0 %924
    %926 = vadd.xlane.f32.xlu0 %v806
    %v927 = vpop.xlane.xlu0 %926
    %928 = vadd.xlane.f32.xlu0 %v807
    %v929 = vpop.xlane.xlu0 %928
    %930 = vadd.xlane.f32.xlu0 %v808
    %v931 = vpop.xlane.xlu0 %930
    %932 = vadd.xlane.f32.xlu0 %v809
    %v933 = vpop.xlane.xlu0 %932
    %934 = vadd.xlane.f32.xlu0 %v810
    %v935 = vpop.xlane.xlu0 %934
    %936 = vadd.xlane.f32.xlu0 %v811
    %v937 = vpop.xlane.xlu0 %936
    %938 = vadd.xlane.f32.xlu0 %v812
    %v939 = vpop.xlane.xlu0 %938
    %940 = vadd.xlane.f32.xlu0 %v813
    %v941 = vpop.xlane.xlu0 %940
    %v942 = vmul.f32 %v815, %v621
    %v943 = vmul.f32 %v817, %v621
    %v944 = vmul.f32 %v819, %v621
    %v945 = vmul.f32 %v821, %v621
    %v946 = vmul.f32 %v823, %v621
    %v947 = vmul.f32 %v825, %v621
    %v948 = vmul.f32 %v827, %v621
    %v949 = vmul.f32 %v829, %v621
    %v950 = vmul.f32 %v831, %v621
    %v951 = vmul.f32 %v833, %v621
    %v952 = vmul.f32 %v835, %v621
    %v953 = vmul.f32 %v837, %v621
    %v954 = vmul.f32 %v839, %v621
    %v955 = vmul.f32 %v841, %v621
    %v956 = vmul.f32 %v843, %v621
    %v957 = vmul.f32 %v845, %v621
    %v958 = vmul.f32 %v847, %v621
    %v959 = vmul.f32 %v849, %v621
    %v960 = vmul.f32 %v851, %v621
    %v961 = vmul.f32 %v853, %v621
    %v962 = vmul.f32 %v855, %v621
    %v963 = vmul.f32 %v857, %v621
    %v964 = vmul.f32 %v859, %v621
    %v965 = vmul.f32 %v861, %v621
    %v966 = vmul.f32 %v863, %v621
    %v967 = vmul.f32 %v865, %v621
    %v968 = vmul.f32 %v867, %v621
    %v969 = vmul.f32 %v869, %v621
    %v970 = vmul.f32 %v871, %v621
    %v971 = vmul.f32 %v873, %v621
    %v972 = vmul.f32 %v875, %v621
    %v973 = vmul.f32 %v877, %v621
    %v974 = vmul.f32 %v879, %v621
    %v975 = vmul.f32 %v881, %v621
    %v976 = vmul.f32 %v883, %v621
    %v977 = vmul.f32 %v885, %v621
    %v978 = vmul.f32 %v887, %v621
    %v979 = vmul.f32 %v889, %v621
    %v980 = vmul.f32 %v891, %v621
    %v981 = vmul.f32 %v893, %v621
    %v982 = vmul.f32 %v895, %v621
    %v983 = vmul.f32 %v897, %v621
    %v984 = vmul.f32 %v899, %v621
    %v985 = vmul.f32 %v901, %v621
    %v986 = vmul.f32 %v903, %v621
    %v987 = vmul.f32 %v905, %v621
    %v988 = vmul.f32 %v907, %v621
    %v989 = vmul.f32 %v909, %v621
    %v990 = vmul.f32 %v911, %v621
    %v991 = vmul.f32 %v913, %v621
    %v992 = vmul.f32 %v915, %v621
    %v993 = vmul.f32 %v917, %v621
    %v994 = vmul.f32 %v919, %v621
    %v995 = vmul.f32 %v921, %v621
    %v996 = vmul.f32 %v923, %v621
    %v997 = vmul.f32 %v925, %v621
    %v998 = vmul.f32 %v927, %v621
    %v999 = vmul.f32 %v929, %v621
    %v1000 = vmul.f32 %v931, %v621
    %v1001 = vmul.f32 %v933, %v621
    %v1002 = vmul.f32 %v935, %v621
    %v1003 = vmul.f32 %v937, %v621
    %v1004 = vmul.f32 %v939, %v621
    %v1005 = vmul.f32 %v941, %v621
    %v1006 = vadd.f32 %v942, 1e-06
    %v1007 = vadd.f32 %v943, 1e-06
    %v1008 = vadd.f32 %v944, 1e-06
    %v1009 = vadd.f32 %v945, 1e-06
    %v1010 = vadd.f32 %v946, 1e-06
    %v1011 = vadd.f32 %v947, 1e-06
    %v1012 = vadd.f32 %v948, 1e-06
    %v1013 = vadd.f32 %v949, 1e-06
    %v1014 = vadd.f32 %v950, 1e-06
    %v1015 = vadd.f32 %v951, 1e-06
    %v1016 = vadd.f32 %v952, 1e-06
    %v1017 = vadd.f32 %v953, 1e-06
    %v1018 = vadd.f32 %v954, 1e-06
    %v1019 = vadd.f32 %v955, 1e-06
    %v1020 = vadd.f32 %v956, 1e-06
    %v1021 = vadd.f32 %v957, 1e-06
    %v1022 = vadd.f32 %v958, 1e-06
    %v1023 = vadd.f32 %v959, 1e-06
    %v1024 = vadd.f32 %v960, 1e-06
    %v1025 = vadd.f32 %v961, 1e-06
    %v1026 = vadd.f32 %v962, 1e-06
    %v1027 = vadd.f32 %v963, 1e-06
    %v1028 = vadd.f32 %v964, 1e-06
    %v1029 = vadd.f32 %v965, 1e-06
    %v1030 = vadd.f32 %v966, 1e-06
    %v1031 = vadd.f32 %v967, 1e-06
    %v1032 = vadd.f32 %v968, 1e-06
    %v1033 = vadd.f32 %v969, 1e-06
    %v1034 = vadd.f32 %v970, 1e-06
    %v1035 = vadd.f32 %v971, 1e-06
    %v1036 = vadd.f32 %v972, 1e-06
    %v1037 = vadd.f32 %v973, 1e-06
    %v1038 = vadd.f32 %v974, 1e-06
    %v1039 = vadd.f32 %v975, 1e-06
    %v1040 = vadd.f32 %v976, 1e-06
    %v1041 = vadd.f32 %v977, 1e-06
    %v1042 = vadd.f32 %v978, 1e-06
    %v1043 = vadd.f32 %v979, 1e-06
    %v1044 = vadd.f32 %v980, 1e-06
    %v1045 = vadd.f32 %v981, 1e-06
    %v1046 = vadd.f32 %v982, 1e-06
    %v1047 = vadd.f32 %v983, 1e-06
    %v1048 = vadd.f32 %v984, 1e-06
    %v1049 = vadd.f32 %v985, 1e-06
    %v1050 = vadd.f32 %v986, 1e-06
    %v1051 = vadd.f32 %v987, 1e-06
    %v1052 = vadd.f32 %v988, 1e-06
    %v1053 = vadd.f32 %v989, 1e-06
    %v1054 = vadd.f32 %v990, 1e-06
    %v1055 = vadd.f32 %v991, 1e-06
    %v1056 = vadd.f32 %v992, 1e-06
    %v1057 = vadd.f32 %v993, 1e-06
    %v1058 = vadd.f32 %v994, 1e-06
    %v1059 = vadd.f32 %v995, 1e-06
    %v1060 = vadd.f32 %v996, 1e-06
    %v1061 = vadd.f32 %v997, 1e-06
    %v1062 = vadd.f32 %v998, 1e-06
    %v1063 = vadd.f32 %v999, 1e-06
    %v1064 = vadd.f32 %v1000, 1e-06
    %v1065 = vadd.f32 %v1001, 1e-06
    %v1066 = vadd.f32 %v1002, 1e-06
    %v1067 = vadd.f32 %v1003, 1e-06
    %v1068 = vadd.f32 %v1004, 1e-06
    %v1069 = vadd.f32 %v1005, 1e-06
    %v1070 = vrsqrt.pop %v1006
    %v1071 = vmul.f32 %v1070, %v1006
    %v1072 = vmul.f32 %v1071, %v1070
    %v1073 = vmul.f32 0.5, %v1072
    %v1074 = vsub.f32 1.5, %v1073
    %v1075 = vmul.f32 %v1070, %v1074
    %vm1076 = vweird.f32 %v1006
    %vm1077 = vweird.f32 %v1070
    %vm1078 = vmor %vm1076, %vm1077
    %v1079 = vsel %vm1078, %v1070, %v1075
    %v1080 = vrsqrt.pop %v1007
    %v1081 = vmul.f32 %v1080, %v1007
    %v1082 = vmul.f32 %v1081, %v1080
    %v1083 = vmul.f32 0.5, %v1082
    %v1084 = vsub.f32 1.5, %v1083
    %v1085 = vmul.f32 %v1080, %v1084
    %vm1086 = vweird.f32 %v1007
    %vm1087 = vweird.f32 %v1080
    %vm1088 = vmor %vm1086, %vm1087
    %v1089 = vsel %vm1088, %v1080, %v1085
    %v1090 = vrsqrt.pop %v1008
    %v1091 = vmul.f32 %v1090, %v1008
    %v1092 = vmul.f32 %v1091, %v1090
    %v1093 = vmul.f32 0.5, %v1092
    %v1094 = vsub.f32 1.5, %v1093
    %v1095 = vmul.f32 %v1090, %v1094
    %vm1096 = vweird.f32 %v1008
    %vm1097 = vweird.f32 %v1090
    %vm1098 = vmor %vm1096, %vm1097
    %v1099 = vsel %vm1098, %v1090, %v1095
    %v1100 = vrsqrt.pop %v1009
    %v1101 = vmul.f32 %v1100, %v1009
    %v1102 = vmul.f32 %v1101, %v1100
    %v1103 = vmul.f32 0.5, %v1102
    %v1104 = vsub.f32 1.5, %v1103
    %v1105 = vmul.f32 %v1100, %v1104
    %vm1106 = vweird.f32 %v1009
    %vm1107 = vweird.f32 %v1100
    %vm1108 = vmor %vm1106, %vm1107
    %v1109 = vsel %vm1108, %v1100, %v1105
    %v1110 = vrsqrt.pop %v1010
    %v1111 = vmul.f32 %v1110, %v1010
    %v1112 = vmul.f32 %v1111, %v1110
    %v1113 = vmul.f32 0.5, %v1112
    %v1114 = vsub.f32 1.5, %v1113
    %v1115 = vmul.f32 %v1110, %v1114
    %vm1116 = vweird.f32 %v1010
    %vm1117 = vweird.f32 %v1110
    %vm1118 = vmor %vm1116, %vm1117
    %v1119 = vsel %vm1118, %v1110, %v1115
    %v1120 = vrsqrt.pop %v1011
    %v1121 = vmul.f32 %v1120, %v1011
    %v1122 = vmul.f32 %v1121, %v1120
    %v1123 = vmul.f32 0.5, %v1122
    %v1124 = vsub.f32 1.5, %v1123
    %v1125 = vmul.f32 %v1120, %v1124
    %vm1126 = vweird.f32 %v1011
    %vm1127 = vweird.f32 %v1120
    %vm1128 = vmor %vm1126, %vm1127
    %v1129 = vsel %vm1128, %v1120, %v1125
    %v1130 = vrsqrt.pop %v1012
    %v1131 = vmul.f32 %v1130, %v1012
    %v1132 = vmul.f32 %v1131, %v1130
    %v1133 = vmul.f32 0.5, %v1132
    %v1134 = vsub.f32 1.5, %v1133
    %v1135 = vmul.f32 %v1130, %v1134
    %vm1136 = vweird.f32 %v1012
    %vm1137 = vweird.f32 %v1130
    %vm1138 = vmor %vm1136, %vm1137
    %v1139 = vsel %vm1138, %v1130, %v1135
    %v1140 = vrsqrt.pop %v1013
    %v1141 = vmul.f32 %v1140, %v1013
    %v1142 = vmul.f32 %v1141, %v1140
    %v1143 = vmul.f32 0.5, %v1142
    %v1144 = vsub.f32 1.5, %v1143
    %v1145 = vmul.f32 %v1140, %v1144
    %vm1146 = vweird.f32 %v1013
    %vm1147 = vweird.f32 %v1140
    %vm1148 = vmor %vm1146, %vm1147
    %v1149 = vsel %vm1148, %v1140, %v1145
    %v1150 = vrsqrt.pop %v1014
    %v1151 = vmul.f32 %v1150, %v1014
    %v1152 = vmul.f32 %v1151, %v1150
    %v1153 = vmul.f32 0.5, %v1152
    %v1154 = vsub.f32 1.5, %v1153
    %v1155 = vmul.f32 %v1150, %v1154
    %vm1156 = vweird.f32 %v1014
    %vm1157 = vweird.f32 %v1150
    %vm1158 = vmor %vm1156, %vm1157
    %v1159 = vsel %vm1158, %v1150, %v1155
    %v1160 = vrsqrt.pop %v1015
    %v1161 = vmul.f32 %v1160, %v1015
    %v1162 = vmul.f32 %v1161, %v1160
    %v1163 = vmul.f32 0.5, %v1162
    %v1164 = vsub.f32 1.5, %v1163
    %v1165 = vmul.f32 %v1160, %v1164
    %vm1166 = vweird.f32 %v1015
    %vm1167 = vweird.f32 %v1160
    %vm1168 = vmor %vm1166, %vm1167
    %v1169 = vsel %vm1168, %v1160, %v1165
    %v1170 = vrsqrt.pop %v1016
    %v1171 = vmul.f32 %v1170, %v1016
    %v1172 = vmul.f32 %v1171, %v1170
    %v1173 = vmul.f32 0.5, %v1172
    %v1174 = vsub.f32 1.5, %v1173
    %v1175 = vmul.f32 %v1170, %v1174
    %vm1176 = vweird.f32 %v1016
    %vm1177 = vweird.f32 %v1170
    %vm1178 = vmor %vm1176, %vm1177
    %v1179 = vsel %vm1178, %v1170, %v1175
    %v1180 = vrsqrt.pop %v1017
    %v1181 = vmul.f32 %v1180, %v1017
    %v1182 = vmul.f32 %v1181, %v1180
    %v1183 = vmul.f32 0.5, %v1182
    %v1184 = vsub.f32 1.5, %v1183
    %v1185 = vmul.f32 %v1180, %v1184
    %vm1186 = vweird.f32 %v1017
    %vm1187 = vweird.f32 %v1180
    %vm1188 = vmor %vm1186, %vm1187
    %v1189 = vsel %vm1188, %v1180, %v1185
    %v1190 = vrsqrt.pop %v1018
    %v1191 = vmul.f32 %v1190, %v1018
    %v1192 = vmul.f32 %v1191, %v1190
    %v1193 = vmul.f32 0.5, %v1192
    %v1194 = vsub.f32 1.5, %v1193
    %v1195 = vmul.f32 %v1190, %v1194
    %vm1196 = vweird.f32 %v1018
    %vm1197 = vweird.f32 %v1190
    %vm1198 = vmor %vm1196, %vm1197
    %v1199 = vsel %vm1198, %v1190, %v1195
    %v1200 = vrsqrt.pop %v1019
    %v1201 = vmul.f32 %v1200, %v1019
    %v1202 = vmul.f32 %v1201, %v1200
    %v1203 = vmul.f32 0.5, %v1202
    %v1204 = vsub.f32 1.5, %v1203
    %v1205 = vmul.f32 %v1200, %v1204
    %vm1206 = vweird.f32 %v1019
    %vm1207 = vweird.f32 %v1200
    %vm1208 = vmor %vm1206, %vm1207
    %v1209 = vsel %vm1208, %v1200, %v1205
    %v1210 = vrsqrt.pop %v1020
    %v1211 = vmul.f32 %v1210, %v1020
    %v1212 = vmul.f32 %v1211, %v1210
    %v1213 = vmul.f32 0.5, %v1212
    %v1214 = vsub.f32 1.5, %v1213
    %v1215 = vmul.f32 %v1210, %v1214
    %vm1216 = vweird.f32 %v1020
    %vm1217 = vweird.f32 %v1210
    %vm1218 = vmor %vm1216, %vm1217
    %v1219 = vsel %vm1218, %v1210, %v1215
    %v1220 = vrsqrt.pop %v1021
    %v1221 = vmul.f32 %v1220, %v1021
    %v1222 = vmul.f32 %v1221, %v1220
    %v1223 = vmul.f32 0.5, %v1222
    %v1224 = vsub.f32 1.5, %v1223
    %v1225 = vmul.f32 %v1220, %v1224
    %vm1226 = vweird.f32 %v1021
    %vm1227 = vweird.f32 %v1220
    %vm1228 = vmor %vm1226, %vm1227
    %v1229 = vsel %vm1228, %v1220, %v1225
    %v1230 = vrsqrt.pop %v1022
    %v1231 = vmul.f32 %v1230, %v1022
    %v1232 = vmul.f32 %v1231, %v1230
    %v1233 = vmul.f32 0.5, %v1232
    %v1234 = vsub.f32 1.5, %v1233
    %v1235 = vmul.f32 %v1230, %v1234
    %vm1236 = vweird.f32 %v1022
    %vm1237 = vweird.f32 %v1230
    %vm1238 = vmor %vm1236, %vm1237
    %v1239 = vsel %vm1238, %v1230, %v1235
    %v1240 = vrsqrt.pop %v1023
    %v1241 = vmul.f32 %v1240, %v1023
    %v1242 = vmul.f32 %v1241, %v1240
    %v1243 = vmul.f32 0.5, %v1242
    %v1244 = vsub.f32 1.5, %v1243
    %v1245 = vmul.f32 %v1240, %v1244
    %vm1246 = vweird.f32 %v1023
    %vm1247 = vweird.f32 %v1240
    %vm1248 = vmor %vm1246, %vm1247
    %v1249 = vsel %vm1248, %v1240, %v1245
    %v1250 = vrsqrt.pop %v1024
    %v1251 = vmul.f32 %v1250, %v1024
    %v1252 = vmul.f32 %v1251, %v1250
    %v1253 = vmul.f32 0.5, %v1252
    %v1254 = vsub.f32 1.5, %v1253
    %v1255 = vmul.f32 %v1250, %v1254
    %vm1256 = vweird.f32 %v1024
    %vm1257 = vweird.f32 %v1250
    %vm1258 = vmor %vm1256, %vm1257
    %v1259 = vsel %vm1258, %v1250, %v1255
    %v1260 = vrsqrt.pop %v1025
    %v1261 = vmul.f32 %v1260, %v1025
    %v1262 = vmul.f32 %v1261, %v1260
    %v1263 = vmul.f32 0.5, %v1262
    %v1264 = vsub.f32 1.5, %v1263
    %v1265 = vmul.f32 %v1260, %v1264
    %vm1266 = vweird.f32 %v1025
    %vm1267 = vweird.f32 %v1260
    %vm1268 = vmor %vm1266, %vm1267
    %v1269 = vsel %vm1268, %v1260, %v1265
    %v1270 = vrsqrt.pop %v1026
    %v1271 = vmul.f32 %v1270, %v1026
    %v1272 = vmul.f32 %v1271, %v1270
    %v1273 = vmul.f32 0.5, %v1272
    %v1274 = vsub.f32 1.5, %v1273
    %v1275 = vmul.f32 %v1270, %v1274
    %vm1276 = vweird.f32 %v1026
    %vm1277 = vweird.f32 %v1270
    %vm1278 = vmor %vm1276, %vm1277
    %v1279 = vsel %vm1278, %v1270, %v1275
    %v1280 = vrsqrt.pop %v1027
    %v1281 = vmul.f32 %v1280, %v1027
    %v1282 = vmul.f32 %v1281, %v1280
    %v1283 = vmul.f32 0.5, %v1282
    %v1284 = vsub.f32 1.5, %v1283
    %v1285 = vmul.f32 %v1280, %v1284
    %vm1286 = vweird.f32 %v1027
    %vm1287 = vweird.f32 %v1280
    %vm1288 = vmor %vm1286, %vm1287
    %v1289 = vsel %vm1288, %v1280, %v1285
    %v1290 = vrsqrt.pop %v1028
    %v1291 = vmul.f32 %v1290, %v1028
    %v1292 = vmul.f32 %v1291, %v1290
    %v1293 = vmul.f32 0.5, %v1292
    %v1294 = vsub.f32 1.5, %v1293
    %v1295 = vmul.f32 %v1290, %v1294
    %vm1296 = vweird.f32 %v1028
    %vm1297 = vweird.f32 %v1290
    %vm1298 = vmor %vm1296, %vm1297
    %v1299 = vsel %vm1298, %v1290, %v1295
    %v1300 = vrsqrt.pop %v1029
    %v1301 = vmul.f32 %v1300, %v1029
    %v1302 = vmul.f32 %v1301, %v1300
    %v1303 = vmul.f32 0.5, %v1302
    %v1304 = vsub.f32 1.5, %v1303
    %v1305 = vmul.f32 %v1300, %v1304
    %vm1306 = vweird.f32 %v1029
    %vm1307 = vweird.f32 %v1300
    %vm1308 = vmor %vm1306, %vm1307
    %v1309 = vsel %vm1308, %v1300, %v1305
    %v1310 = vrsqrt.pop %v1030
    %v1311 = vmul.f32 %v1310, %v1030
    %v1312 = vmul.f32 %v1311, %v1310
    %v1313 = vmul.f32 0.5, %v1312
    %v1314 = vsub.f32 1.5, %v1313
    %v1315 = vmul.f32 %v1310, %v1314
    %vm1316 = vweird.f32 %v1030
    %vm1317 = vweird.f32 %v1310
    %vm1318 = vmor %vm1316, %vm1317
    %v1319 = vsel %vm1318, %v1310, %v1315
    %v1320 = vrsqrt.pop %v1031
    %v1321 = vmul.f32 %v1320, %v1031
    %v1322 = vmul.f32 %v1321, %v1320
    %v1323 = vmul.f32 0.5, %v1322
    %v1324 = vsub.f32 1.5, %v1323
    %v1325 = vmul.f32 %v1320, %v1324
    %vm1326 = vweird.f32 %v1031
    %vm1327 = vweird.f32 %v1320
    %vm1328 = vmor %vm1326, %vm1327
    %v1329 = vsel %vm1328, %v1320, %v1325
    %v1330 = vrsqrt.pop %v1032
    %v1331 = vmul.f32 %v1330, %v1032
    %v1332 = vmul.f32 %v1331, %v1330
    %v1333 = vmul.f32 0.5, %v1332
    %v1334 = vsub.f32 1.5, %v1333
    %v1335 = vmul.f32 %v1330, %v1334
    %vm1336 = vweird.f32 %v1032
    %vm1337 = vweird.f32 %v1330
    %vm1338 = vmor %vm1336, %vm1337
    %v1339 = vsel %vm1338, %v1330, %v1335
    %v1340 = vrsqrt.pop %v1033
    %v1341 = vmul.f32 %v1340, %v1033
    %v1342 = vmul.f32 %v1341, %v1340
    %v1343 = vmul.f32 0.5, %v1342
    %v1344 = vsub.f32 1.5, %v1343
    %v1345 = vmul.f32 %v1340, %v1344
    %vm1346 = vweird.f32 %v1033
    %vm1347 = vweird.f32 %v1340
    %vm1348 = vmor %vm1346, %vm1347
    %v1349 = vsel %vm1348, %v1340, %v1345
    %v1350 = vrsqrt.pop %v1034
    %v1351 = vmul.f32 %v1350, %v1034
    %v1352 = vmul.f32 %v1351, %v1350
    %v1353 = vmul.f32 0.5, %v1352
    %v1354 = vsub.f32 1.5, %v1353
    %v1355 = vmul.f32 %v1350, %v1354
    %vm1356 = vweird.f32 %v1034
    %vm1357 = vweird.f32 %v1350
    %vm1358 = vmor %vm1356, %vm1357
    %v1359 = vsel %vm1358, %v1350, %v1355
    %v1360 = vrsqrt.pop %v1035
    %v1361 = vmul.f32 %v1360, %v1035
    %v1362 = vmul.f32 %v1361, %v1360
    %v1363 = vmul.f32 0.5, %v1362
    %v1364 = vsub.f32 1.5, %v1363
    %v1365 = vmul.f32 %v1360, %v1364
    %vm1366 = vweird.f32 %v1035
    %vm1367 = vweird.f32 %v1360
    %vm1368 = vmor %vm1366, %vm1367
    %v1369 = vsel %vm1368, %v1360, %v1365
    %v1370 = vrsqrt.pop %v1036
    %v1371 = vmul.f32 %v1370, %v1036
    %v1372 = vmul.f32 %v1371, %v1370
    %v1373 = vmul.f32 0.5, %v1372
    %v1374 = vsub.f32 1.5, %v1373
    %v1375 = vmul.f32 %v1370, %v1374
    %vm1376 = vweird.f32 %v1036
    %vm1377 = vweird.f32 %v1370
    %vm1378 = vmor %vm1376, %vm1377
    %v1379 = vsel %vm1378, %v1370, %v1375
    %v1380 = vrsqrt.pop %v1037
    %v1381 = vmul.f32 %v1380, %v1037
    %v1382 = vmul.f32 %v1381, %v1380
    %v1383 = vmul.f32 0.5, %v1382
    %v1384 = vsub.f32 1.5, %v1383
    %v1385 = vmul.f32 %v1380, %v1384
    %vm1386 = vweird.f32 %v1037
    %vm1387 = vweird.f32 %v1380
    %vm1388 = vmor %vm1386, %vm1387
    %v1389 = vsel %vm1388, %v1380, %v1385
    %v1390 = vrsqrt.pop %v1038
    %v1391 = vmul.f32 %v1390, %v1038
    %v1392 = vmul.f32 %v1391, %v1390
    %v1393 = vmul.f32 0.5, %v1392
    %v1394 = vsub.f32 1.5, %v1393
    %v1395 = vmul.f32 %v1390, %v1394
    %vm1396 = vweird.f32 %v1038
    %vm1397 = vweird.f32 %v1390
    %vm1398 = vmor %vm1396, %vm1397
    %v1399 = vsel %vm1398, %v1390, %v1395
    %v1400 = vrsqrt.pop %v1039
    %v1401 = vmul.f32 %v1400, %v1039
    %v1402 = vmul.f32 %v1401, %v1400
    %v1403 = vmul.f32 0.5, %v1402
    %v1404 = vsub.f32 1.5, %v1403
    %v1405 = vmul.f32 %v1400, %v1404
    %vm1406 = vweird.f32 %v1039
    %vm1407 = vweird.f32 %v1400
    %vm1408 = vmor %vm1406, %vm1407
    %v1409 = vsel %vm1408, %v1400, %v1405
    %v1410 = vrsqrt.pop %v1040
    %v1411 = vmul.f32 %v1410, %v1040
    %v1412 = vmul.f32 %v1411, %v1410
    %v1413 = vmul.f32 0.5, %v1412
    %v1414 = vsub.f32 1.5, %v1413
    %v1415 = vmul.f32 %v1410, %v1414
    %vm1416 = vweird.f32 %v1040
    %vm1417 = vweird.f32 %v1410
    %vm1418 = vmor %vm1416, %vm1417
    %v1419 = vsel %vm1418, %v1410, %v1415
    %v1420 = vrsqrt.pop %v1041
    %v1421 = vmul.f32 %v1420, %v1041
    %v1422 = vmul.f32 %v1421, %v1420
    %v1423 = vmul.f32 0.5, %v1422
    %v1424 = vsub.f32 1.5, %v1423
    %v1425 = vmul.f32 %v1420, %v1424
    %vm1426 = vweird.f32 %v1041
    %vm1427 = vweird.f32 %v1420
    %vm1428 = vmor %vm1426, %vm1427
    %v1429 = vsel %vm1428, %v1420, %v1425
    %v1430 = vrsqrt.pop %v1042
    %v1431 = vmul.f32 %v1430, %v1042
    %v1432 = vmul.f32 %v1431, %v1430
    %v1433 = vmul.f32 0.5, %v1432
    %v1434 = vsub.f32 1.5, %v1433
    %v1435 = vmul.f32 %v1430, %v1434
    %vm1436 = vweird.f32 %v1042
    %vm1437 = vweird.f32 %v1430
    %vm1438 = vmor %vm1436, %vm1437
    %v1439 = vsel %vm1438, %v1430, %v1435
    %v1440 = vrsqrt.pop %v1043
    %v1441 = vmul.f32 %v1440, %v1043
    %v1442 = vmul.f32 %v1441, %v1440
    %v1443 = vmul.f32 0.5, %v1442
    %v1444 = vsub.f32 1.5, %v1443
    %v1445 = vmul.f32 %v1440, %v1444
    %vm1446 = vweird.f32 %v1043
    %vm1447 = vweird.f32 %v1440
    %vm1448 = vmor %vm1446, %vm1447
    %v1449 = vsel %vm1448, %v1440, %v1445
    %v1450 = vrsqrt.pop %v1044
    %v1451 = vmul.f32 %v1450, %v1044
    %v1452 = vmul.f32 %v1451, %v1450
    %v1453 = vmul.f32 0.5, %v1452
    %v1454 = vsub.f32 1.5, %v1453
    %v1455 = vmul.f32 %v1450, %v1454
    %vm1456 = vweird.f32 %v1044
    %vm1457 = vweird.f32 %v1450
    %vm1458 = vmor %vm1456, %vm1457
    %v1459 = vsel %vm1458, %v1450, %v1455
    %v1460 = vrsqrt.pop %v1045
    %v1461 = vmul.f32 %v1460, %v1045
    %v1462 = vmul.f32 %v1461, %v1460
    %v1463 = vmul.f32 0.5, %v1462
    %v1464 = vsub.f32 1.5, %v1463
    %v1465 = vmul.f32 %v1460, %v1464
    %vm1466 = vweird.f32 %v1045
    %vm1467 = vweird.f32 %v1460
    %vm1468 = vmor %vm1466, %vm1467
    %v1469 = vsel %vm1468, %v1460, %v1465
    %v1470 = vrsqrt.pop %v1046
    %v1471 = vmul.f32 %v1470, %v1046
    %v1472 = vmul.f32 %v1471, %v1470
    %v1473 = vmul.f32 0.5, %v1472
    %v1474 = vsub.f32 1.5, %v1473
    %v1475 = vmul.f32 %v1470, %v1474
    %vm1476 = vweird.f32 %v1046
    %vm1477 = vweird.f32 %v1470
    %vm1478 = vmor %vm1476, %vm1477
    %v1479 = vsel %vm1478, %v1470, %v1475
    %v1480 = vrsqrt.pop %v1047
    %v1481 = vmul.f32 %v1480, %v1047
    %v1482 = vmul.f32 %v1481, %v1480
    %v1483 = vmul.f32 0.5, %v1482
    %v1484 = vsub.f32 1.5, %v1483
    %v1485 = vmul.f32 %v1480, %v1484
    %vm1486 = vweird.f32 %v1047
    %vm1487 = vweird.f32 %v1480
    %vm1488 = vmor %vm1486, %vm1487
    %v1489 = vsel %vm1488, %v1480, %v1485
    %v1490 = vrsqrt.pop %v1048
    %v1491 = vmul.f32 %v1490, %v1048
    %v1492 = vmul.f32 %v1491, %v1490
    %v1493 = vmul.f32 0.5, %v1492
    %v1494 = vsub.f32 1.5, %v1493
    %v1495 = vmul.f32 %v1490, %v1494
    %vm1496 = vweird.f32 %v1048
    %vm1497 = vweird.f32 %v1490
    %vm1498 = vmor %vm1496, %vm1497
    %v1499 = vsel %vm1498, %v1490, %v1495
    %v1500 = vrsqrt.pop %v1049
    %v1501 = vmul.f32 %v1500, %v1049
    %v1502 = vmul.f32 %v1501, %v1500
    %v1503 = vmul.f32 0.5, %v1502
    %v1504 = vsub.f32 1.5, %v1503
    %v1505 = vmul.f32 %v1500, %v1504
    %vm1506 = vweird.f32 %v1049
    %vm1507 = vweird.f32 %v1500
    %vm1508 = vmor %vm1506, %vm1507
    %v1509 = vsel %vm1508, %v1500, %v1505
    %v1510 = vrsqrt.pop %v1050
    %v1511 = vmul.f32 %v1510, %v1050
    %v1512 = vmul.f32 %v1511, %v1510
    %v1513 = vmul.f32 0.5, %v1512
    %v1514 = vsub.f32 1.5, %v1513
    %v1515 = vmul.f32 %v1510, %v1514
    %vm1516 = vweird.f32 %v1050
    %vm1517 = vweird.f32 %v1510
    %vm1518 = vmor %vm1516, %vm1517
    %v1519 = vsel %vm1518, %v1510, %v1515
    %v1520 = vrsqrt.pop %v1051
    %v1521 = vmul.f32 %v1520, %v1051
    %v1522 = vmul.f32 %v1521, %v1520
    %v1523 = vmul.f32 0.5, %v1522
    %v1524 = vsub.f32 1.5, %v1523
    %v1525 = vmul.f32 %v1520, %v1524
    %vm1526 = vweird.f32 %v1051
    %vm1527 = vweird.f32 %v1520
    %vm1528 = vmor %vm1526, %vm1527
    %v1529 = vsel %vm1528, %v1520, %v1525
    %v1530 = vrsqrt.pop %v1052
    %v1531 = vmul.f32 %v1530, %v1052
    %v1532 = vmul.f32 %v1531, %v1530
    %v1533 = vmul.f32 0.5, %v1532
    %v1534 = vsub.f32 1.5, %v1533
    %v1535 = vmul.f32 %v1530, %v1534
    %vm1536 = vweird.f32 %v1052
    %vm1537 = vweird.f32 %v1530
    %vm1538 = vmor %vm1536, %vm1537
    %v1539 = vsel %vm1538, %v1530, %v1535
    %v1540 = vrsqrt.pop %v1053
    %v1541 = vmul.f32 %v1540, %v1053
    %v1542 = vmul.f32 %v1541, %v1540
    %v1543 = vmul.f32 0.5, %v1542
    %v1544 = vsub.f32 1.5, %v1543
    %v1545 = vmul.f32 %v1540, %v1544
    %vm1546 = vweird.f32 %v1053
    %vm1547 = vweird.f32 %v1540
    %vm1548 = vmor %vm1546, %vm1547
    %v1549 = vsel %vm1548, %v1540, %v1545
    %v1550 = vrsqrt.pop %v1054
    %v1551 = vmul.f32 %v1550, %v1054
    %v1552 = vmul.f32 %v1551, %v1550
    %v1553 = vmul.f32 0.5, %v1552
    %v1554 = vsub.f32 1.5, %v1553
    %v1555 = vmul.f32 %v1550, %v1554
    %vm1556 = vweird.f32 %v1054
    %vm1557 = vweird.f32 %v1550
    %vm1558 = vmor %vm1556, %vm1557
    %v1559 = vsel %vm1558, %v1550, %v1555
    %v1560 = vrsqrt.pop %v1055
    %v1561 = vmul.f32 %v1560, %v1055
    %v1562 = vmul.f32 %v1561, %v1560
    %v1563 = vmul.f32 0.5, %v1562
    %v1564 = vsub.f32 1.5, %v1563
    %v1565 = vmul.f32 %v1560, %v1564
    %vm1566 = vweird.f32 %v1055
    %vm1567 = vweird.f32 %v1560
    %vm1568 = vmor %vm1566, %vm1567
    %v1569 = vsel %vm1568, %v1560, %v1565
    %v1570 = vrsqrt.pop %v1056
    %v1571 = vmul.f32 %v1570, %v1056
    %v1572 = vmul.f32 %v1571, %v1570
    %v1573 = vmul.f32 0.5, %v1572
    %v1574 = vsub.f32 1.5, %v1573
    %v1575 = vmul.f32 %v1570, %v1574
    %vm1576 = vweird.f32 %v1056
    %vm1577 = vweird.f32 %v1570
    %vm1578 = vmor %vm1576, %vm1577
    %v1579 = vsel %vm1578, %v1570, %v1575
    %v1580 = vrsqrt.pop %v1057
    %v1581 = vmul.f32 %v1580, %v1057
    %v1582 = vmul.f32 %v1581, %v1580
    %v1583 = vmul.f32 0.5, %v1582
    %v1584 = vsub.f32 1.5, %v1583
    %v1585 = vmul.f32 %v1580, %v1584
    %vm1586 = vweird.f32 %v1057
    %vm1587 = vweird.f32 %v1580
    %vm1588 = vmor %vm1586, %vm1587
    %v1589 = vsel %vm1588, %v1580, %v1585
    %v1590 = vrsqrt.pop %v1058
    %v1591 = vmul.f32 %v1590, %v1058
    %v1592 = vmul.f32 %v1591, %v1590
    %v1593 = vmul.f32 0.5, %v1592
    %v1594 = vsub.f32 1.5, %v1593
    %v1595 = vmul.f32 %v1590, %v1594
    %vm1596 = vweird.f32 %v1058
    %vm1597 = vweird.f32 %v1590
    %vm1598 = vmor %vm1596, %vm1597
    %v1599 = vsel %vm1598, %v1590, %v1595
    %v1600 = vrsqrt.pop %v1059
    %v1601 = vmul.f32 %v1600, %v1059
    %v1602 = vmul.f32 %v1601, %v1600
    %v1603 = vmul.f32 0.5, %v1602
    %v1604 = vsub.f32 1.5, %v1603
    %v1605 = vmul.f32 %v1600, %v1604
    %vm1606 = vweird.f32 %v1059
    %vm1607 = vweird.f32 %v1600
    %vm1608 = vmor %vm1606, %vm1607
    %v1609 = vsel %vm1608, %v1600, %v1605
    %v1610 = vrsqrt.pop %v1060
    %v1611 = vmul.f32 %v1610, %v1060
    %v1612 = vmul.f32 %v1611, %v1610
    %v1613 = vmul.f32 0.5, %v1612
    %v1614 = vsub.f32 1.5, %v1613
    %v1615 = vmul.f32 %v1610, %v1614
    %vm1616 = vweird.f32 %v1060
    %vm1617 = vweird.f32 %v1610
    %vm1618 = vmor %vm1616, %vm1617
    %v1619 = vsel %vm1618, %v1610, %v1615
    %v1620 = vrsqrt.pop %v1061
    %v1621 = vmul.f32 %v1620, %v1061
    %v1622 = vmul.f32 %v1621, %v1620
    %v1623 = vmul.f32 0.5, %v1622
    %v1624 = vsub.f32 1.5, %v1623
    %v1625 = vmul.f32 %v1620, %v1624
    %vm1626 = vweird.f32 %v1061
    %vm1627 = vweird.f32 %v1620
    %vm1628 = vmor %vm1626, %vm1627
    %v1629 = vsel %vm1628, %v1620, %v1625
    %v1630 = vrsqrt.pop %v1062
    %v1631 = vmul.f32 %v1630, %v1062
    %v1632 = vmul.f32 %v1631, %v1630
    %v1633 = vmul.f32 0.5, %v1632
    %v1634 = vsub.f32 1.5, %v1633
    %v1635 = vmul.f32 %v1630, %v1634
    %vm1636 = vweird.f32 %v1062
    %vm1637 = vweird.f32 %v1630
    %vm1638 = vmor %vm1636, %vm1637
    %v1639 = vsel %vm1638, %v1630, %v1635
    %v1640 = vrsqrt.pop %v1063
    %v1641 = vmul.f32 %v1640, %v1063
    %v1642 = vmul.f32 %v1641, %v1640
    %v1643 = vmul.f32 0.5, %v1642
    %v1644 = vsub.f32 1.5, %v1643
    %v1645 = vmul.f32 %v1640, %v1644
    %vm1646 = vweird.f32 %v1063
    %vm1647 = vweird.f32 %v1640
    %vm1648 = vmor %vm1646, %vm1647
    %v1649 = vsel %vm1648, %v1640, %v1645
    %v1650 = vrsqrt.pop %v1064
    %v1651 = vmul.f32 %v1650, %v1064
    %v1652 = vmul.f32 %v1651, %v1650
    %v1653 = vmul.f32 0.5, %v1652
    %v1654 = vsub.f32 1.5, %v1653
    %v1655 = vmul.f32 %v1650, %v1654
    %vm1656 = vweird.f32 %v1064
    %vm1657 = vweird.f32 %v1650
    %vm1658 = vmor %vm1656, %vm1657
    %v1659 = vsel %vm1658, %v1650, %v1655
    %v1660 = vrsqrt.pop %v1065
    %v1661 = vmul.f32 %v1660, %v1065
    %v1662 = vmul.f32 %v1661, %v1660
    %v1663 = vmul.f32 0.5, %v1662
    %v1664 = vsub.f32 1.5, %v1663
    %v1665 = vmul.f32 %v1660, %v1664
    %vm1666 = vweird.f32 %v1065
    %vm1667 = vweird.f32 %v1660
    %vm1668 = vmor %vm1666, %vm1667
    %v1669 = vsel %vm1668, %v1660, %v1665
    %v1670 = vrsqrt.pop %v1066
    %v1671 = vmul.f32 %v1670, %v1066
    %v1672 = vmul.f32 %v1671, %v1670
    %v1673 = vmul.f32 0.5, %v1672
    %v1674 = vsub.f32 1.5, %v1673
    %v1675 = vmul.f32 %v1670, %v1674
    %vm1676 = vweird.f32 %v1066
    %vm1677 = vweird.f32 %v1670
    %vm1678 = vmor %vm1676, %vm1677
    %v1679 = vsel %vm1678, %v1670, %v1675
    %v1680 = vrsqrt.pop %v1067
    %v1681 = vmul.f32 %v1680, %v1067
    %v1682 = vmul.f32 %v1681, %v1680
    %v1683 = vmul.f32 0.5, %v1682
    %v1684 = vsub.f32 1.5, %v1683
    %v1685 = vmul.f32 %v1680, %v1684
    %vm1686 = vweird.f32 %v1067
    %vm1687 = vweird.f32 %v1680
    %vm1688 = vmor %vm1686, %vm1687
    %v1689 = vsel %vm1688, %v1680, %v1685
    %v1690 = vrsqrt.pop %v1068
    %v1691 = vmul.f32 %v1690, %v1068
    %v1692 = vmul.f32 %v1691, %v1690
    %v1693 = vmul.f32 0.5, %v1692
    %v1694 = vsub.f32 1.5, %v1693
    %v1695 = vmul.f32 %v1690, %v1694
    %vm1696 = vweird.f32 %v1068
    %vm1697 = vweird.f32 %v1690
    %vm1698 = vmor %vm1696, %vm1697
    %v1699 = vsel %vm1698, %v1690, %v1695
    %v1700 = vrsqrt.pop %v1069
    %v1701 = vmul.f32 %v1700, %v1069
    %v1702 = vmul.f32 %v1701, %v1700
    %v1703 = vmul.f32 0.5, %v1702
    %v1704 = vsub.f32 1.5, %v1703
    %v1705 = vmul.f32 %v1700, %v1704
    %vm1706 = vweird.f32 %v1069
    %vm1707 = vweird.f32 %v1700
    %vm1708 = vmor %vm1706, %vm1707
    %v1709 = vsel %vm1708, %v1700, %v1705
    %v1710 = vmul.f32 %v686, %v1079
    %v1711 = vmul.f32 %v687, %v1089
    %v1712 = vmul.f32 %v688, %v1099
    %v1713 = vmul.f32 %v689, %v1109
    %v1714 = vmul.f32 %v690, %v1119
    %v1715 = vmul.f32 %v691, %v1129
    %v1716 = vmul.f32 %v692, %v1139
    %v1717 = vmul.f32 %v693, %v1149
    %v1718 = vmul.f32 %v694, %v1159
    %v1719 = vmul.f32 %v695, %v1169
    %v1720 = vmul.f32 %v696, %v1179
    %v1721 = vmul.f32 %v697, %v1189
    %v1722 = vmul.f32 %v698, %v1199
    %v1723 = vmul.f32 %v699, %v1209
    %v1724 = vmul.f32 %v700, %v1219
    %v1725 = vmul.f32 %v701, %v1229
    %v1726 = vmul.f32 %v702, %v1239
    %v1727 = vmul.f32 %v703, %v1249
    %v1728 = vmul.f32 %v704, %v1259
    %v1729 = vmul.f32 %v705, %v1269
    %v1730 = vmul.f32 %v706, %v1279
    %v1731 = vmul.f32 %v707, %v1289
    %v1732 = vmul.f32 %v708, %v1299
    %v1733 = vmul.f32 %v709, %v1309
    %v1734 = vmul.f32 %v710, %v1319
    %v1735 = vmul.f32 %v711, %v1329
    %v1736 = vmul.f32 %v712, %v1339
    %v1737 = vmul.f32 %v713, %v1349
    %v1738 = vmul.f32 %v714, %v1359
    %v1739 = vmul.f32 %v715, %v1369
    %v1740 = vmul.f32 %v716, %v1379
    %v1741 = vmul.f32 %v717, %v1389
    %v1742 = vmul.f32 %v718, %v1399
    %v1743 = vmul.f32 %v719, %v1409
    %v1744 = vmul.f32 %v720, %v1419
    %v1745 = vmul.f32 %v721, %v1429
    %v1746 = vmul.f32 %v722, %v1439
    %v1747 = vmul.f32 %v723, %v1449
    %v1748 = vmul.f32 %v724, %v1459
    %v1749 = vmul.f32 %v725, %v1469
    %v1750 = vmul.f32 %v726, %v1479
    %v1751 = vmul.f32 %v727, %v1489
    %v1752 = vmul.f32 %v728, %v1499
    %v1753 = vmul.f32 %v729, %v1509
    %v1754 = vmul.f32 %v730, %v1519
    %v1755 = vmul.f32 %v731, %v1529
    %v1756 = vmul.f32 %v732, %v1539
    %v1757 = vmul.f32 %v733, %v1549
    %v1758 = vmul.f32 %v734, %v1559
    %v1759 = vmul.f32 %v735, %v1569
    %v1760 = vmul.f32 %v736, %v1579
    %v1761 = vmul.f32 %v737, %v1589
    %v1762 = vmul.f32 %v738, %v1599
    %v1763 = vmul.f32 %v739, %v1609
    %v1764 = vmul.f32 %v740, %v1619
    %v1765 = vmul.f32 %v741, %v1629
    %v1766 = vmul.f32 %v742, %v1639
    %v1767 = vmul.f32 %v743, %v1649
    %v1768 = vmul.f32 %v744, %v1659
    %v1769 = vmul.f32 %v745, %v1669
    %v1770 = vmul.f32 %v746, %v1679
    %v1771 = vmul.f32 %v747, %v1689
    %v1772 = vmul.f32 %v748, %v1699
    %v1773 = vmul.f32 %v749, %v1709
    %v1774 = vperm.slane %v92, 0
    %v1775 = vmul.f32 %v1710, %v1774
    %v1776 = vmul.f32 %v1711, %v1774
    %v1777 = vmul.f32 %v1712, %v1774
    %v1778 = vmul.f32 %v1713, %v1774
    %v1779 = vmul.f32 %v1714, %v1774
    %v1780 = vmul.f32 %v1715, %v1774
    %v1781 = vmul.f32 %v1716, %v1774
    %v1782 = vmul.f32 %v1717, %v1774
    %v1783 = vmul.f32 %v1718, %v1774
    %v1784 = vmul.f32 %v1719, %v1774
    %v1785 = vmul.f32 %v1720, %v1774
    %v1786 = vmul.f32 %v1721, %v1774
    %v1787 = vmul.f32 %v1722, %v1774
    %v1788 = vmul.f32 %v1723, %v1774
    %v1789 = vmul.f32 %v1724, %v1774
    %v1790 = vmul.f32 %v1725, %v1774
    %v1791 = vmul.f32 %v1726, %v1774
    %v1792 = vmul.f32 %v1727, %v1774
    %v1793 = vmul.f32 %v1728, %v1774
    %v1794 = vmul.f32 %v1729, %v1774
    %v1795 = vmul.f32 %v1730, %v1774
    %v1796 = vmul.f32 %v1731, %v1774
    %v1797 = vmul.f32 %v1732, %v1774
    %v1798 = vmul.f32 %v1733, %v1774
    %v1799 = vmul.f32 %v1734, %v1774
    %v1800 = vmul.f32 %v1735, %v1774
    %v1801 = vmul.f32 %v1736, %v1774
    %v1802 = vmul.f32 %v1737, %v1774
    %v1803 = vmul.f32 %v1738, %v1774
    %v1804 = vmul.f32 %v1739, %v1774
    %v1805 = vmul.f32 %v1740, %v1774
    %v1806 = vmul.f32 %v1741, %v1774
    %v1807 = vmul.f32 %v1742, %v1774
    %v1808 = vmul.f32 %v1743, %v1774
    %v1809 = vmul.f32 %v1744, %v1774
    %v1810 = vmul.f32 %v1745, %v1774
    %v1811 = vmul.f32 %v1746, %v1774
    %v1812 = vmul.f32 %v1747, %v1774
    %v1813 = vmul.f32 %v1748, %v1774
    %v1814 = vmul.f32 %v1749, %v1774
    %v1815 = vmul.f32 %v1750, %v1774
    %v1816 = vmul.f32 %v1751, %v1774
    %v1817 = vmul.f32 %v1752, %v1774
    %v1818 = vmul.f32 %v1753, %v1774
    %v1819 = vmul.f32 %v1754, %v1774
    %v1820 = vmul.f32 %v1755, %v1774
    %v1821 = vmul.f32 %v1756, %v1774
    %v1822 = vmul.f32 %v1757, %v1774
    %v1823 = vmul.f32 %v1758, %v1774
    %v1824 = vmul.f32 %v1759, %v1774
    %v1825 = vmul.f32 %v1760, %v1774
    %v1826 = vmul.f32 %v1761, %v1774
    %v1827 = vmul.f32 %v1762, %v1774
    %v1828 = vmul.f32 %v1763, %v1774
    %v1829 = vmul.f32 %v1764, %v1774
    %v1830 = vmul.f32 %v1765, %v1774
    %v1831 = vmul.f32 %v1766, %v1774
    %v1832 = vmul.f32 %v1767, %v1774
    %v1833 = vmul.f32 %v1768, %v1774
    %v1834 = vmul.f32 %v1769, %v1774
    %v1835 = vmul.f32 %v1770, %v1774
    %v1836 = vmul.f32 %v1771, %v1774
    %v1837 = vmul.f32 %v1772, %v1774
    %v1838 = vmul.f32 %v1773, %v1774
    %v1839 = vperm.slane %v92, 1
    %v1840 = vadd.f32 %v1775, %v1839
    %v1841 = vadd.f32 %v1776, %v1839
    %v1842 = vadd.f32 %v1777, %v1839
    %v1843 = vadd.f32 %v1778, %v1839
    %v1844 = vadd.f32 %v1779, %v1839
    %v1845 = vadd.f32 %v1780, %v1839
    %v1846 = vadd.f32 %v1781, %v1839
    %v1847 = vadd.f32 %v1782, %v1839
    %v1848 = vadd.f32 %v1783, %v1839
    %v1849 = vadd.f32 %v1784, %v1839
    %v1850 = vadd.f32 %v1785, %v1839
    %v1851 = vadd.f32 %v1786, %v1839
    %v1852 = vadd.f32 %v1787, %v1839
    %v1853 = vadd.f32 %v1788, %v1839
    %v1854 = vadd.f32 %v1789, %v1839
    %v1855 = vadd.f32 %v1790, %v1839
    %v1856 = vadd.f32 %v1791, %v1839
    %v1857 = vadd.f32 %v1792, %v1839
    %v1858 = vadd.f32 %v1793, %v1839
    %v1859 = vadd.f32 %v1794, %v1839
    %v1860 = vadd.f32 %v1795, %v1839
    %v1861 = vadd.f32 %v1796, %v1839
    %v1862 = vadd.f32 %v1797, %v1839
    %v1863 = vadd.f32 %v1798, %v1839
    %v1864 = vadd.f32 %v1799, %v1839
    %v1865 = vadd.f32 %v1800, %v1839
    %v1866 = vadd.f32 %v1801, %v1839
    %v1867 = vadd.f32 %v1802, %v1839
    %v1868 = vadd.f32 %v1803, %v1839
    %v1869 = vadd.f32 %v1804, %v1839
    %v1870 = vadd.f32 %v1805, %v1839
    %v1871 = vadd.f32 %v1806, %v1839
    %v1872 = vadd.f32 %v1807, %v1839
    %v1873 = vadd.f32 %v1808, %v1839
    %v1874 = vadd.f32 %v1809, %v1839
    %v1875 = vadd.f32 %v1810, %v1839
    %v1876 = vadd.f32 %v1811, %v1839
    %v1877 = vadd.f32 %v1812, %v1839
    %v1878 = vadd.f32 %v1813, %v1839
    %v1879 = vadd.f32 %v1814, %v1839
    %v1880 = vadd.f32 %v1815, %v1839
    %v1881 = vadd.f32 %v1816, %v1839
    %v1882 = vadd.f32 %v1817, %v1839
    %v1883 = vadd.f32 %v1818, %v1839
    %v1884 = vadd.f32 %v1819, %v1839
    %v1885 = vadd.f32 %v1820, %v1839
    %v1886 = vadd.f32 %v1821, %v1839
    %v1887 = vadd.f32 %v1822, %v1839
    %v1888 = vadd.f32 %v1823, %v1839
    %v1889 = vadd.f32 %v1824, %v1839
    %v1890 = vadd.f32 %v1825, %v1839
    %v1891 = vadd.f32 %v1826, %v1839
    %v1892 = vadd.f32 %v1827, %v1839
    %v1893 = vadd.f32 %v1828, %v1839
    %v1894 = vadd.f32 %v1829, %v1839
    %v1895 = vadd.f32 %v1830, %v1839
    %v1896 = vadd.f32 %v1831, %v1839
    %v1897 = vadd.f32 %v1832, %v1839
    %v1898 = vadd.f32 %v1833, %v1839
    %v1899 = vadd.f32 %v1834, %v1839
    %v1900 = vadd.f32 %v1835, %v1839
    %v1901 = vadd.f32 %v1836, %v1839
    %v1902 = vadd.f32 %v1837, %v1839
    %v1903 = vadd.f32 %v1838, %v1839
    %v1904 = vpack.c.bf16 %v1841, %v1840
    %v1905 = vpack.c.bf16 %v1843, %v1842
    %v1906 = vpack.c.bf16 %v1845, %v1844
    %v1907 = vpack.c.bf16 %v1847, %v1846
    %v1908 = vpack.c.bf16 %v1849, %v1848
    %v1909 = vpack.c.bf16 %v1851, %v1850
    %v1910 = vpack.c.bf16 %v1853, %v1852
    %v1911 = vpack.c.bf16 %v1855, %v1854
    %v1912 = vpack.c.bf16 %v1857, %v1856
    %v1913 = vpack.c.bf16 %v1859, %v1858
    %v1914 = vpack.c.bf16 %v1861, %v1860
    %v1915 = vpack.c.bf16 %v1863, %v1862
    %v1916 = vpack.c.bf16 %v1865, %v1864
    %v1917 = vpack.c.bf16 %v1867, %v1866
    %v1918 = vpack.c.bf16 %v1869, %v1868
    %v1919 = vpack.c.bf16 %v1871, %v1870
    %v1920 = vpack.c.bf16 %v1873, %v1872
    %v1921 = vpack.c.bf16 %v1875, %v1874
    %v1922 = vpack.c.bf16 %v1877, %v1876
    %v1923 = vpack.c.bf16 %v1879, %v1878
    %v1924 = vpack.c.bf16 %v1881, %v1880
    %v1925 = vpack.c.bf16 %v1883, %v1882
    %v1926 = vpack.c.bf16 %v1885, %v1884
    %v1927 = vpack.c.bf16 %v1887, %v1886
    %v1928 = vpack.c.bf16 %v1889, %v1888
    %v1929 = vpack.c.bf16 %v1891, %v1890
    %v1930 = vpack.c.bf16 %v1893, %v1892
    %v1931 = vpack.c.bf16 %v1895, %v1894
    %v1932 = vpack.c.bf16 %v1897, %v1896
    %v1933 = vpack.c.bf16 %v1899, %v1898
    %v1934 = vpack.c.bf16 %v1901, %v1900
    %v1935 = vpack.c.bf16 %v1903, %v1902
    %v1936 = vld [vmem:[%s3] sm:$0xff]
    %v1937 = vld [vmem:[%s3 + $0x8] sm:$0xff]
    %v1938 = vld [vmem:[%s3 + $0x10] sm:$0xff]
    %v1939 = vld [vmem:[%s3 + $0x18] sm:$0xff]
    %v1940 = vld [vmem:[%s3 + $0x20] sm:$0xff]
    %v1941 = vld [vmem:[%s3 + $0x28] sm:$0xff]
    %v1942 = vld [vmem:[%s3 + $0x30] sm:$0xff]
    %v1943 = vld [vmem:[%s3 + $0x38] sm:$0xff]
    %v1944 = vld [vmem:[%s3 + $0x40] sm:$0xff]
    %v1945 = vld [vmem:[%s3 + $0x48] sm:$0xff]
    %v1946 = vld [vmem:[%s3 + $0x50] sm:$0xff]
    %v1947 = vld [vmem:[%s3 + $0x58] sm:$0xff]
    %v1948 = vld [vmem:[%s3 + $0x60] sm:$0xff]
    %v1949 = vld [vmem:[%s3 + $0x68] sm:$0xff]
    %v1950 = vld [vmem:[%s3 + $0x70] sm:$0xff]
    %v1951 = vld [vmem:[%s3 + $0x78] sm:$0xff]
    %v1968 = vunpack.c.l.b16 %v1936
    %v1969 = vunpack.c.h.b16 %v1936
    %v1970 = vunpack.c.l.b16 %v1937
    %v1971 = vunpack.c.h.b16 %v1937
    %v1972 = vunpack.c.l.b16 %v1938
    %v1973 = vunpack.c.h.b16 %v1938
    %v1974 = vunpack.c.l.b16 %v1939
    %v1975 = vunpack.c.h.b16 %v1939
    %v1976 = vunpack.c.l.b16 %v1940
    %v1977 = vunpack.c.h.b16 %v1940
    %v1978 = vunpack.c.l.b16 %v1941
    %v1979 = vunpack.c.h.b16 %v1941
    %v1980 = vunpack.c.l.b16 %v1942
    %v1981 = vunpack.c.h.b16 %v1942
    %v1982 = vunpack.c.l.b16 %v1943
    %v1983 = vunpack.c.h.b16 %v1943
    %v1984 = vunpack.c.l.b16 %v1944
    %v1985 = vunpack.c.h.b16 %v1944
    %v1986 = vunpack.c.l.b16 %v1945
    %v1987 = vunpack.c.h.b16 %v1945
    %v1988 = vunpack.c.l.b16 %v1946
    %v1989 = vunpack.c.h.b16 %v1946
    %v1990 = vunpack.c.l.b16 %v1947
    %v1991 = vunpack.c.h.b16 %v1947
    %v1992 = vunpack.c.l.b16 %v1948
    %v1993 = vunpack.c.h.b16 %v1948
    %v1994 = vunpack.c.l.b16 %v1949
    %v1995 = vunpack.c.h.b16 %v1949
    %v1996 = vunpack.c.l.b16 %v1950
    %v1997 = vunpack.c.h.b16 %v1950
    %v1998 = vunpack.c.l.b16 %v1951
    %v1999 = vunpack.c.h.b16 %v1951
    %v2000 = vpack.c.b16 %v1970, %v1968
    %v2001 = vpack.c.b16 %v1971, %v1969
    %v2002 = vpack.c.b16 %v1974, %v1972
    %v2003 = vpack.c.b16 %v1975, %v1973
    %v2004 = vpack.c.b16 %v1978, %v1976
    %v2005 = vpack.c.b16 %v1979, %v1977
    %v2006 = vpack.c.b16 %v1982, %v1980
    %v2007 = vpack.c.b16 %v1983, %v1981
    %v2008 = vpack.c.b16 %v1986, %v1984
    %v2009 = vpack.c.b16 %v1987, %v1985
    %v2010 = vpack.c.b16 %v1990, %v1988
    %v2011 = vpack.c.b16 %v1991, %v1989
    %v2012 = vpack.c.b16 %v1994, %v1992
    %v2013 = vpack.c.b16 %v1995, %v1993
    %v2014 = vpack.c.b16 %v1998, %v1996
    %v2015 = vpack.c.b16 %v1999, %v1997
    %2032 = vmatpush.bf16.msra.mxu0 %v2014
    %2033 = vmatpush.bf16.msra.mxu0 %v2012
    %2034 = vmatpush.bf16.msra.mxu0 %v2010
    %2035 = vmatpush.bf16.msra.mxu0 %v2008
    %2036 = vmatpush.bf16.msra.mxu0 %v2006
    %2037 = vmatpush.bf16.msra.mxu0 %v2004
    %2038 = vmatpush.bf16.msra.mxu0 %v2002
    %2039 = vmatpush.bf16.msra.mxu0 %v2000
    %2040 = vmatmul.bf16.gmra.mxu0 %v1904
    %v2041 = vpop.f32.mrf.mxu0
    %v2042 = vadd.f32 0.0, %v2041
    %v2043 = vpop.f32.mrf.mxu0
    %v2044 = vadd.f32 0.0, %v2043
    %2045 = vmatmul.bf16.gmra.mxu0 %v1905
    %v2046 = vpop.f32.mrf.mxu0
    %v2047 = vadd.f32 0.0, %v2046
    %v2048 = vpop.f32.mrf.mxu0
    %v2049 = vadd.f32 0.0, %v2048
    %2050 = vmatmul.bf16.gmra.mxu0 %v1906
    %v2051 = vpop.f32.mrf.mxu0
    %v2052 = vadd.f32 0.0, %v2051
    %v2053 = vpop.f32.mrf.mxu0
    %v2054 = vadd.f32 0.0, %v2053
    %2055 = vmatmul.bf16.gmra.mxu0 %v1907
    %v2056 = vpop.f32.mrf.mxu0
    %v2057 = vadd.f32 0.0, %v2056
    %v2058 = vpop.f32.mrf.mxu0
    %v2059 = vadd.f32 0.0, %v2058
    %2060 = vmatmul.bf16.gmra.mxu0 %v1908
    %v2061 = vpop.f32.mrf.mxu0
    %v2062 = vadd.f32 0.0, %v2061
    %v2063 = vpop.f32.mrf.mxu0
    %v2064 = vadd.f32 0.0, %v2063
    %2065 = vmatmul.bf16.gmra.mxu0 %v1909
    %v2066 = vpop.f32.mrf.mxu0
    %v2067 = vadd.f32 0.0, %v2066
    %v2068 = vpop.f32.mrf.mxu0
    %v2069 = vadd.f32 0.0, %v2068
    %2070 = vmatmul.bf16.gmra.mxu0 %v1910
    %v2071 = vpop.f32.mrf.mxu0
    %v2072 = vadd.f32 0.0, %v2071
    %v2073 = vpop.f32.mrf.mxu0
    %v2074 = vadd.f32 0.0, %v2073
    %2075 = vmatmul.bf16.gmra.mxu0 %v1911
    %v2076 = vpop.f32.mrf.mxu0
    %v2077 = vadd.f32 0.0, %v2076
    %v2078 = vpop.f32.mrf.mxu0
    %v2079 = vadd.f32 0.0, %v2078
    %2080 = vmatmul.bf16.gmra.mxu0 %v1912
    %v2081 = vpop.f32.mrf.mxu0
    %v2082 = vadd.f32 0.0, %v2081
    %v2083 = vpop.f32.mrf.mxu0
    %v2084 = vadd.f32 0.0, %v2083
    %2085 = vmatmul.bf16.gmra.mxu0 %v1913
    %v2086 = vpop.f32.mrf.mxu0
    %v2087 = vadd.f32 0.0, %v2086
    %v2088 = vpop.f32.mrf.mxu0
    %v2089 = vadd.f32 0.0, %v2088
    %2090 = vmatmul.bf16.gmra.mxu0 %v1914
    %v2091 = vpop.f32.mrf.mxu0
    %v2092 = vadd.f32 0.0, %v2091
    %v2093 = vpop.f32.mrf.mxu0
    %v2094 = vadd.f32 0.0, %v2093
    %2095 = vmatmul.bf16.gmra.mxu0 %v1915
    %v2096 = vpop.f32.mrf.mxu0
    %v2097 = vadd.f32 0.0, %v2096
    %v2098 = vpop.f32.mrf.mxu0
    %v2099 = vadd.f32 0.0, %v2098
    %2100 = vmatmul.bf16.gmra.mxu0 %v1916
    %v2101 = vpop.f32.mrf.mxu0
    %v2102 = vadd.f32 0.0, %v2101
    %v2103 = vpop.f32.mrf.mxu0
    %v2104 = vadd.f32 0.0, %v2103
    %2105 = vmatmul.bf16.gmra.mxu0 %v1917
    %v2106 = vpop.f32.mrf.mxu0
    %v2107 = vadd.f32 0.0, %v2106
    %v2108 = vpop.f32.mrf.mxu0
    %v2109 = vadd.f32 0.0, %v2108
    %2110 = vmatmul.bf16.gmra.mxu0 %v1918
    %v2111 = vpop.f32.mrf.mxu0
    %v2112 = vadd.f32 0.0, %v2111
    %v2113 = vpop.f32.mrf.mxu0
    %v2114 = vadd.f32 0.0, %v2113
    %2115 = vmatmul.bf16.gmra.mxu0 %v1919
    %v2116 = vpop.f32.mrf.mxu0
    %v2117 = vadd.f32 0.0, %v2116
    %v2118 = vpop.f32.mrf.mxu0
    %v2119 = vadd.f32 0.0, %v2118
    %2120 = vmatmul.bf16.gmra.mxu0 %v1920
    %v2121 = vpop.f32.mrf.mxu0
    %v2122 = vadd.f32 0.0, %v2121
    %v2123 = vpop.f32.mrf.mxu0
    %v2124 = vadd.f32 0.0, %v2123
    %2125 = vmatmul.bf16.gmra.mxu0 %v1921
    %v2126 = vpop.f32.mrf.mxu0
    %v2127 = vadd.f32 0.0, %v2126
    %v2128 = vpop.f32.mrf.mxu0
    %v2129 = vadd.f32 0.0, %v2128
    %2130 = vmatmul.bf16.gmra.mxu0 %v1922
    %v2131 = vpop.f32.mrf.mxu0
    %v2132 = vadd.f32 0.0, %v2131
    %v2133 = vpop.f32.mrf.mxu0
    %v2134 = vadd.f32 0.0, %v2133
    %2135 = vmatmul.bf16.gmra.mxu0 %v1923
    %v2136 = vpop.f32.mrf.mxu0
    %v2137 = vadd.f32 0.0, %v2136
    %v2138 = vpop.f32.mrf.mxu0
    %v2139 = vadd.f32 0.0, %v2138
    %2140 = vmatmul.bf16.gmra.mxu0 %v1924
    %v2141 = vpop.f32.mrf.mxu0
    %v2142 = vadd.f32 0.0, %v2141
    %v2143 = vpop.f32.mrf.mxu0
    %v2144 = vadd.f32 0.0, %v2143
    %2145 = vmatmul.bf16.gmra.mxu0 %v1925
    %v2146 = vpop.f32.mrf.mxu0
    %v2147 = vadd.f32 0.0, %v2146
    %v2148 = vpop.f32.mrf.mxu0
    %v2149 = vadd.f32 0.0, %v2148
    %2150 = vmatmul.bf16.gmra.mxu0 %v1926
    %v2151 = vpop.f32.mrf.mxu0
    %v2152 = vadd.f32 0.0, %v2151
    %v2153 = vpop.f32.mrf.mxu0
    %v2154 = vadd.f32 0.0, %v2153
    %2155 = vmatmul.bf16.gmra.mxu0 %v1927
    %v2156 = vpop.f32.mrf.mxu0
    %v2157 = vadd.f32 0.0, %v2156
    %v2158 = vpop.f32.mrf.mxu0
    %v2159 = vadd.f32 0.0, %v2158
    %2160 = vmatmul.bf16.gmra.mxu0 %v1928
    %v2161 = vpop.f32.mrf.mxu0
    %v2162 = vadd.f32 0.0, %v2161
    %v2163 = vpop.f32.mrf.mxu0
    %v2164 = vadd.f32 0.0, %v2163
    %2165 = vmatmul.bf16.gmra.mxu0 %v1929
    %v2166 = vpop.f32.mrf.mxu0
    %v2167 = vadd.f32 0.0, %v2166
    %v2168 = vpop.f32.mrf.mxu0
    %v2169 = vadd.f32 0.0, %v2168
    %2170 = vmatmul.bf16.gmra.mxu0 %v1930
    %v2171 = vpop.f32.mrf.mxu0
    %v2172 = vadd.f32 0.0, %v2171
    %v2173 = vpop.f32.mrf.mxu0
    %v2174 = vadd.f32 0.0, %v2173
    %2175 = vmatmul.bf16.gmra.mxu0 %v1931
    %v2176 = vpop.f32.mrf.mxu0
    %v2177 = vadd.f32 0.0, %v2176
    %v2178 = vpop.f32.mrf.mxu0
    %v2179 = vadd.f32 0.0, %v2178
    %2180 = vmatmul.bf16.gmra.mxu0 %v1932
    %v2181 = vpop.f32.mrf.mxu0
    %v2182 = vadd.f32 0.0, %v2181
    %v2183 = vpop.f32.mrf.mxu0
    %v2184 = vadd.f32 0.0, %v2183
    %2185 = vmatmul.bf16.gmra.mxu0 %v1933
    %v2186 = vpop.f32.mrf.mxu0
    %v2187 = vadd.f32 0.0, %v2186
    %v2188 = vpop.f32.mrf.mxu0
    %v2189 = vadd.f32 0.0, %v2188
    %2190 = vmatmul.bf16.gmra.mxu0 %v1934
    %v2191 = vpop.f32.mrf.mxu0
    %v2192 = vadd.f32 0.0, %v2191
    %v2193 = vpop.f32.mrf.mxu0
    %v2194 = vadd.f32 0.0, %v2193
    %2195 = vmatmul.bf16.gmra.mxu0 %v1935
    %v2196 = vpop.f32.mrf.mxu0
    %v2197 = vadd.f32 0.0, %v2196
    %v2198 = vpop.f32.mrf.mxu0
    %v2199 = vadd.f32 0.0, %v2198
    %2200 = vdwg.mxu0
    %2201 = vmatpush.bf16.msra.mxu0 %v2015
    %2202 = vmatpush.bf16.msra.mxu0 %v2013
    %2203 = vmatpush.bf16.msra.mxu0 %v2011
    %2204 = vmatpush.bf16.msra.mxu0 %v2009
    %2205 = vmatpush.bf16.msra.mxu0 %v2007
    %2206 = vmatpush.bf16.msra.mxu0 %v2005
    %2207 = vmatpush.bf16.msra.mxu0 %v2003
    %2208 = vmatpush.bf16.msra.mxu0 %v2001
    %2209 = vmatmul.bf16.gmra.mxu0 %v1904
    %v2210 = vpop.f32.mrf.mxu0
    %v2211 = vadd.f32 0.0, %v2210
    %v2212 = vpop.f32.mrf.mxu0
    %v2213 = vadd.f32 0.0, %v2212
    %2214 = vmatmul.bf16.gmra.mxu0 %v1905
    %v2215 = vpop.f32.mrf.mxu0
    %v2216 = vadd.f32 0.0, %v2215
    %v2217 = vpop.f32.mrf.mxu0
    %v2218 = vadd.f32 0.0, %v2217
    %2219 = vmatmul.bf16.gmra.mxu0 %v1906
    %v2220 = vpop.f32.mrf.mxu0
    %v2221 = vadd.f32 0.0, %v2220
    %v2222 = vpop.f32.mrf.mxu0
    %v2223 = vadd.f32 0.0, %v2222
    %2224 = vmatmul.bf16.gmra.mxu0 %v1907
    %v2225 = vpop.f32.mrf.mxu0
    %v2226 = vadd.f32 0.0, %v2225
    %v2227 = vpop.f32.mrf.mxu0
    %v2228 = vadd.f32 0.0, %v2227
    %2229 = vmatmul.bf16.gmra.mxu0 %v1908
    %v2230 = vpop.f32.mrf.mxu0
    %v2231 = vadd.f32 0.0, %v2230
    %v2232 = vpop.f32.mrf.mxu0
    %v2233 = vadd.f32 0.0, %v2232
    %2234 = vmatmul.bf16.gmra.mxu0 %v1909
    %v2235 = vpop.f32.mrf.mxu0
    %v2236 = vadd.f32 0.0, %v2235
    %v2237 = vpop.f32.mrf.mxu0
    %v2238 = vadd.f32 0.0, %v2237
    %2239 = vmatmul.bf16.gmra.mxu0 %v1910
    %v2240 = vpop.f32.mrf.mxu0
    %v2241 = vadd.f32 0.0, %v2240
    %v2242 = vpop.f32.mrf.mxu0
    %v2243 = vadd.f32 0.0, %v2242
    %2244 = vmatmul.bf16.gmra.mxu0 %v1911
    %v2245 = vpop.f32.mrf.mxu0
    %v2246 = vadd.f32 0.0, %v2245
    %v2247 = vpop.f32.mrf.mxu0
    %v2248 = vadd.f32 0.0, %v2247
    %2249 = vmatmul.bf16.gmra.mxu0 %v1912
    %v2250 = vpop.f32.mrf.mxu0
    %v2251 = vadd.f32 0.0, %v2250
    %v2252 = vpop.f32.mrf.mxu0
    %v2253 = vadd.f32 0.0, %v2252
    %2254 = vmatmul.bf16.gmra.mxu0 %v1913
    %v2255 = vpop.f32.mrf.mxu0
    %v2256 = vadd.f32 0.0, %v2255
    %v2257 = vpop.f32.mrf.mxu0
    %v2258 = vadd.f32 0.0, %v2257
    %2259 = vmatmul.bf16.gmra.mxu0 %v1914
    %v2260 = vpop.f32.mrf.mxu0
    %v2261 = vadd.f32 0.0, %v2260
    %v2262 = vpop.f32.mrf.mxu0
    %v2263 = vadd.f32 0.0, %v2262
    %2264 = vmatmul.bf16.gmra.mxu0 %v1915
    %v2265 = vpop.f32.mrf.mxu0
    %v2266 = vadd.f32 0.0, %v2265
    %v2267 = vpop.f32.mrf.mxu0
    %v2268 = vadd.f32 0.0, %v2267
    %2269 = vmatmul.bf16.gmra.mxu0 %v1916
    %v2270 = vpop.f32.mrf.mxu0
    %v2271 = vadd.f32 0.0, %v2270
    %v2272 = vpop.f32.mrf.mxu0
    %v2273 = vadd.f32 0.0, %v2272
    %2274 = vmatmul.bf16.gmra.mxu0 %v1917
    %v2275 = vpop.f32.mrf.mxu0
    %v2276 = vadd.f32 0.0, %v2275
    %v2277 = vpop.f32.mrf.mxu0
    %v2278 = vadd.f32 0.0, %v2277
    %2279 = vmatmul.bf16.gmra.mxu0 %v1918
    %v2280 = vpop.f32.mrf.mxu0
    %v2281 = vadd.f32 0.0, %v2280
    %v2282 = vpop.f32.mrf.mxu0
    %v2283 = vadd.f32 0.0, %v2282
    %2284 = vmatmul.bf16.gmra.mxu0 %v1919
    %v2285 = vpop.f32.mrf.mxu0
    %v2286 = vadd.f32 0.0, %v2285
    %v2287 = vpop.f32.mrf.mxu0
    %v2288 = vadd.f32 0.0, %v2287
    %2289 = vmatmul.bf16.gmra.mxu0 %v1920
    %v2290 = vpop.f32.mrf.mxu0
    %v2291 = vadd.f32 0.0, %v2290
    %v2292 = vpop.f32.mrf.mxu0
    %v2293 = vadd.f32 0.0, %v2292
    %2294 = vmatmul.bf16.gmra.mxu0 %v1921
    %v2295 = vpop.f32.mrf.mxu0
    %v2296 = vadd.f32 0.0, %v2295
    %v2297 = vpop.f32.mrf.mxu0
    %v2298 = vadd.f32 0.0, %v2297
    %2299 = vmatmul.bf16.gmra.mxu0 %v1922
    %v2300 = vpop.f32.mrf.mxu0
    %v2301 = vadd.f32 0.0, %v2300
    %v2302 = vpop.f32.mrf.mxu0
    %v2303 = vadd.f32 0.0, %v2302
    %2304 = vmatmul.bf16.gmra.mxu0 %v1923
    %v2305 = vpop.f32.mrf.mxu0
    %v2306 = vadd.f32 0.0, %v2305
    %v2307 = vpop.f32.mrf.mxu0
    %v2308 = vadd.f32 0.0, %v2307
    %2309 = vmatmul.bf16.gmra.mxu0 %v1924
    %v2310 = vpop.f32.mrf.mxu0
    %v2311 = vadd.f32 0.0, %v2310
    %v2312 = vpop.f32.mrf.mxu0
    %v2313 = vadd.f32 0.0, %v2312
    %2314 = vmatmul.bf16.gmra.mxu0 %v1925
    %v2315 = vpop.f32.mrf.mxu0
    %v2316 = vadd.f32 0.0, %v2315
    %v2317 = vpop.f32.mrf.mxu0
    %v2318 = vadd.f32 0.0, %v2317
    %2319 = vmatmul.bf16.gmra.mxu0 %v1926
    %v2320 = vpop.f32.mrf.mxu0
    %v2321 = vadd.f32 0.0, %v2320
    %v2322 = vpop.f32.mrf.mxu0
    %v2323 = vadd.f32 0.0, %v2322
    %2324 = vmatmul.bf16.gmra.mxu0 %v1927
    %v2325 = vpop.f32.mrf.mxu0
    %v2326 = vadd.f32 0.0, %v2325
    %v2327 = vpop.f32.mrf.mxu0
    %v2328 = vadd.f32 0.0, %v2327
    %2329 = vmatmul.bf16.gmra.mxu0 %v1928
    %v2330 = vpop.f32.mrf.mxu0
    %v2331 = vadd.f32 0.0, %v2330
    %v2332 = vpop.f32.mrf.mxu0
    %v2333 = vadd.f32 0.0, %v2332
    %2334 = vmatmul.bf16.gmra.mxu0 %v1929
    %v2335 = vpop.f32.mrf.mxu0
    %v2336 = vadd.f32 0.0, %v2335
    %v2337 = vpop.f32.mrf.mxu0
    %v2338 = vadd.f32 0.0, %v2337
    %2339 = vmatmul.bf16.gmra.mxu0 %v1930
    %v2340 = vpop.f32.mrf.mxu0
    %v2341 = vadd.f32 0.0, %v2340
    %v2342 = vpop.f32.mrf.mxu0
    %v2343 = vadd.f32 0.0, %v2342
    %2344 = vmatmul.bf16.gmra.mxu0 %v1931
    %v2345 = vpop.f32.mrf.mxu0
    %v2346 = vadd.f32 0.0, %v2345
    %v2347 = vpop.f32.mrf.mxu0
    %v2348 = vadd.f32 0.0, %v2347
    %2349 = vmatmul.bf16.gmra.mxu0 %v1932
    %v2350 = vpop.f32.mrf.mxu0
    %v2351 = vadd.f32 0.0, %v2350
    %v2352 = vpop.f32.mrf.mxu0
    %v2353 = vadd.f32 0.0, %v2352
    %2354 = vmatmul.bf16.gmra.mxu0 %v1933
    %v2355 = vpop.f32.mrf.mxu0
    %v2356 = vadd.f32 0.0, %v2355
    %v2357 = vpop.f32.mrf.mxu0
    %v2358 = vadd.f32 0.0, %v2357
    %2359 = vmatmul.bf16.gmra.mxu0 %v1934
    %v2360 = vpop.f32.mrf.mxu0
    %v2361 = vadd.f32 0.0, %v2360
    %v2362 = vpop.f32.mrf.mxu0
    %v2363 = vadd.f32 0.0, %v2362
    %2364 = vmatmul.bf16.gmra.mxu0 %v1935
    %v2365 = vpop.f32.mrf.mxu0
    %v2366 = vadd.f32 0.0, %v2365
    %v2367 = vpop.f32.mrf.mxu0
    %v2368 = vadd.f32 0.0, %v2367
    %2369 = vdwg.mxu0
    %v2370 = vld [vmem:[%s4] sm:$0xff]
    %v2371 = vld [vmem:[%s4 + $0x8] sm:$0xff]
    %v2372 = vld [vmem:[%s4 + $0x10] sm:$0xff]
    %v2373 = vld [vmem:[%s4 + $0x18] sm:$0xff]
    %v2374 = vld [vmem:[%s4 + $0x20] sm:$0xff]
    %v2375 = vld [vmem:[%s4 + $0x28] sm:$0xff]
    %v2376 = vld [vmem:[%s4 + $0x30] sm:$0xff]
    %v2377 = vld [vmem:[%s4 + $0x38] sm:$0xff]
    %v2378 = vld [vmem:[%s4 + $0x40] sm:$0xff]
    %v2379 = vld [vmem:[%s4 + $0x48] sm:$0xff]
    %v2380 = vld [vmem:[%s4 + $0x50] sm:$0xff]
    %v2381 = vld [vmem:[%s4 + $0x58] sm:$0xff]
    %v2382 = vld [vmem:[%s4 + $0x60] sm:$0xff]
    %v2383 = vld [vmem:[%s4 + $0x68] sm:$0xff]
    %v2384 = vld [vmem:[%s4 + $0x70] sm:$0xff]
    %v2385 = vld [vmem:[%s4 + $0x78] sm:$0xff]
    %v2386 = vld [vmem:[%s4 + $0x80] sm:$0xff]
    %v2387 = vld [vmem:[%s4 + $0x88] sm:$0xff]
    %v2388 = vld [vmem:[%s4 + $0x90] sm:$0xff]
    %v2389 = vld [vmem:[%s4 + $0x98] sm:$0xff]
    %v2390 = vld [vmem:[%s4 + $0xa0] sm:$0xff]
    %v2391 = vld [vmem:[%s4 + $0xa8] sm:$0xff]
    %v2392 = vld [vmem:[%s4 + $0xb0] sm:$0xff]
    %v2393 = vld [vmem:[%s4 + $0xb8] sm:$0xff]
    %v2394 = vld [vmem:[%s4 + $0xc0] sm:$0xff]
    %v2395 = vld [vmem:[%s4 + $0xc8] sm:$0xff]
    %v2396 = vld [vmem:[%s4 + $0xd0] sm:$0xff]
    %v2397 = vld [vmem:[%s4 + $0xd8] sm:$0xff]
    %v2398 = vld [vmem:[%s4 + $0xe0] sm:$0xff]
    %v2399 = vld [vmem:[%s4 + $0xe8] sm:$0xff]
    %v2400 = vld [vmem:[%s4 + $0xf0] sm:$0xff]
    %v2401 = vld [vmem:[%s4 + $0xf8] sm:$0xff]
    %v2402 = vld [vmem:[%s4 + $0x100] sm:$0xff]
    %v2403 = vld [vmem:[%s4 + $0x108] sm:$0xff]
    %v2404 = vld [vmem:[%s4 + $0x110] sm:$0xff]
    %v2405 = vld [vmem:[%s4 + $0x118] sm:$0xff]
    %v2406 = vld [vmem:[%s4 + $0x120] sm:$0xff]
    %v2407 = vld [vmem:[%s4 + $0x128] sm:$0xff]
    %v2408 = vld [vmem:[%s4 + $0x130] sm:$0xff]
    %v2409 = vld [vmem:[%s4 + $0x138] sm:$0xff]
    %v2410 = vld [vmem:[%s4 + $0x140] sm:$0xff]
    %v2411 = vld [vmem:[%s4 + $0x148] sm:$0xff]
    %v2412 = vld [vmem:[%s4 + $0x150] sm:$0xff]
    %v2413 = vld [vmem:[%s4 + $0x158] sm:$0xff]
    %v2414 = vld [vmem:[%s4 + $0x160] sm:$0xff]
    %v2415 = vld [vmem:[%s4 + $0x168] sm:$0xff]
    %v2416 = vld [vmem:[%s4 + $0x170] sm:$0xff]
    %v2417 = vld [vmem:[%s4 + $0x178] sm:$0xff]
    %v2418 = vld [vmem:[%s4 + $0x180] sm:$0xff]
    %v2419 = vld [vmem:[%s4 + $0x188] sm:$0xff]
    %v2420 = vld [vmem:[%s4 + $0x190] sm:$0xff]
    %v2421 = vld [vmem:[%s4 + $0x198] sm:$0xff]
    %v2422 = vld [vmem:[%s4 + $0x1a0] sm:$0xff]
    %v2423 = vld [vmem:[%s4 + $0x1a8] sm:$0xff]
    %v2424 = vld [vmem:[%s4 + $0x1b0] sm:$0xff]
    %v2425 = vld [vmem:[%s4 + $0x1b8] sm:$0xff]
    %v2426 = vld [vmem:[%s4 + $0x1c0] sm:$0xff]
    %v2427 = vld [vmem:[%s4 + $0x1c8] sm:$0xff]
    %v2428 = vld [vmem:[%s4 + $0x1d0] sm:$0xff]
    %v2429 = vld [vmem:[%s4 + $0x1d8] sm:$0xff]
    %v2430 = vld [vmem:[%s4 + $0x1e0] sm:$0xff]
    %v2431 = vld [vmem:[%s4 + $0x1e8] sm:$0xff]
    %v2432 = vld [vmem:[%s4 + $0x1f0] sm:$0xff]
    %v2433 = vld [vmem:[%s4 + $0x1f8] sm:$0xff]
    %v2434 = vadd.f32 %v2042, %v2370
    %v2435 = vadd.f32 %v2211, %v2371
    %v2436 = vadd.f32 %v2044, %v2372
    %v2437 = vadd.f32 %v2213, %v2373
    %v2438 = vadd.f32 %v2047, %v2374
    %v2439 = vadd.f32 %v2216, %v2375
    %v2440 = vadd.f32 %v2049, %v2376
    %v2441 = vadd.f32 %v2218, %v2377
    %v2442 = vadd.f32 %v2052, %v2378
    %v2443 = vadd.f32 %v2221, %v2379
    %v2444 = vadd.f32 %v2054, %v2380
    %v2445 = vadd.f32 %v2223, %v2381
    %v2446 = vadd.f32 %v2057, %v2382
    %v2447 = vadd.f32 %v2226, %v2383
    %v2448 = vadd.f32 %v2059, %v2384
    %v2449 = vadd.f32 %v2228, %v2385
    %v2450 = vadd.f32 %v2062, %v2386
    %v2451 = vadd.f32 %v2231, %v2387
    %v2452 = vadd.f32 %v2064, %v2388
    %v2453 = vadd.f32 %v2233, %v2389
    %v2454 = vadd.f32 %v2067, %v2390
    %v2455 = vadd.f32 %v2236, %v2391
    %v2456 = vadd.f32 %v2069, %v2392
    %v2457 = vadd.f32 %v2238, %v2393
    %v2458 = vadd.f32 %v2072, %v2394
    %v2459 = vadd.f32 %v2241, %v2395
    %v2460 = vadd.f32 %v2074, %v2396
    %v2461 = vadd.f32 %v2243, %v2397
    %v2462 = vadd.f32 %v2077, %v2398
    %v2463 = vadd.f32 %v2246, %v2399
    %v2464 = vadd.f32 %v2079, %v2400
    %v2465 = vadd.f32 %v2248, %v2401
    %v2466 = vadd.f32 %v2082, %v2402
    %v2467 = vadd.f32 %v2251, %v2403
    %v2468 = vadd.f32 %v2084, %v2404
    %v2469 = vadd.f32 %v2253, %v2405
    %v2470 = vadd.f32 %v2087, %v2406
    %v2471 = vadd.f32 %v2256, %v2407
    %v2472 = vadd.f32 %v2089, %v2408
    %v2473 = vadd.f32 %v2258, %v2409
    %v2474 = vadd.f32 %v2092, %v2410
    %v2475 = vadd.f32 %v2261, %v2411
    %v2476 = vadd.f32 %v2094, %v2412
    %v2477 = vadd.f32 %v2263, %v2413
    %v2478 = vadd.f32 %v2097, %v2414
    %v2479 = vadd.f32 %v2266, %v2415
    %v2480 = vadd.f32 %v2099, %v2416
    %v2481 = vadd.f32 %v2268, %v2417
    %v2482 = vadd.f32 %v2102, %v2418
    %v2483 = vadd.f32 %v2271, %v2419
    %v2484 = vadd.f32 %v2104, %v2420
    %v2485 = vadd.f32 %v2273, %v2421
    %v2486 = vadd.f32 %v2107, %v2422
    %v2487 = vadd.f32 %v2276, %v2423
    %v2488 = vadd.f32 %v2109, %v2424
    %v2489 = vadd.f32 %v2278, %v2425
    %v2490 = vadd.f32 %v2112, %v2426
    %v2491 = vadd.f32 %v2281, %v2427
    %v2492 = vadd.f32 %v2114, %v2428
    %v2493 = vadd.f32 %v2283, %v2429
    %v2494 = vadd.f32 %v2117, %v2430
    %v2495 = vadd.f32 %v2286, %v2431
    %v2496 = vadd.f32 %v2119, %v2432
    %v2497 = vadd.f32 %v2288, %v2433
    %v2498 = vadd.f32 %v2122, %v2370
    %v2499 = vadd.f32 %v2291, %v2371
    %v2500 = vadd.f32 %v2124, %v2372
    %v2501 = vadd.f32 %v2293, %v2373
    %v2502 = vadd.f32 %v2127, %v2374
    %v2503 = vadd.f32 %v2296, %v2375
    %v2504 = vadd.f32 %v2129, %v2376
    %v2505 = vadd.f32 %v2298, %v2377
    %v2506 = vadd.f32 %v2132, %v2378
    %v2507 = vadd.f32 %v2301, %v2379
    %v2508 = vadd.f32 %v2134, %v2380
    %v2509 = vadd.f32 %v2303, %v2381
    %v2510 = vadd.f32 %v2137, %v2382
    %v2511 = vadd.f32 %v2306, %v2383
    %v2512 = vadd.f32 %v2139, %v2384
    %v2513 = vadd.f32 %v2308, %v2385
    %v2514 = vadd.f32 %v2142, %v2386
    %v2515 = vadd.f32 %v2311, %v2387
    %v2516 = vadd.f32 %v2144, %v2388
    %v2517 = vadd.f32 %v2313, %v2389
    %v2518 = vadd.f32 %v2147, %v2390
    %v2519 = vadd.f32 %v2316, %v2391
    %v2520 = vadd.f32 %v2149, %v2392
    %v2521 = vadd.f32 %v2318, %v2393
    %v2522 = vadd.f32 %v2152, %v2394
    %v2523 = vadd.f32 %v2321, %v2395
    %v2524 = vadd.f32 %v2154, %v2396
    %v2525 = vadd.f32 %v2323, %v2397
    %v2526 = vadd.f32 %v2157, %v2398
    %v2527 = vadd.f32 %v2326, %v2399
    %v2528 = vadd.f32 %v2159, %v2400
    %v2529 = vadd.f32 %v2328, %v2401
    %v2530 = vadd.f32 %v2162, %v2402
    %v2531 = vadd.f32 %v2331, %v2403
    %v2532 = vadd.f32 %v2164, %v2404
    %v2533 = vadd.f32 %v2333, %v2405
    %v2534 = vadd.f32 %v2167, %v2406
    %v2535 = vadd.f32 %v2336, %v2407
    %v2536 = vadd.f32 %v2169, %v2408
    %v2537 = vadd.f32 %v2338, %v2409
    %v2538 = vadd.f32 %v2172, %v2410
    %v2539 = vadd.f32 %v2341, %v2411
    %v2540 = vadd.f32 %v2174, %v2412
    %v2541 = vadd.f32 %v2343, %v2413
    %v2542 = vadd.f32 %v2177, %v2414
    %v2543 = vadd.f32 %v2346, %v2415
    %v2544 = vadd.f32 %v2179, %v2416
    %v2545 = vadd.f32 %v2348, %v2417
    %v2546 = vadd.f32 %v2182, %v2418
    %v2547 = vadd.f32 %v2351, %v2419
    %v2548 = vadd.f32 %v2184, %v2420
    %v2549 = vadd.f32 %v2353, %v2421
    %v2550 = vadd.f32 %v2187, %v2422
    %v2551 = vadd.f32 %v2356, %v2423
    %v2552 = vadd.f32 %v2189, %v2424
    %v2553 = vadd.f32 %v2358, %v2425
    %v2554 = vadd.f32 %v2192, %v2426
    %v2555 = vadd.f32 %v2361, %v2427
    %v2556 = vadd.f32 %v2194, %v2428
    %v2557 = vadd.f32 %v2363, %v2429
    %v2558 = vadd.f32 %v2197, %v2430
    %v2559 = vadd.f32 %v2366, %v2431
    %v2560 = vadd.f32 %v2199, %v2432
    %v2561 = vadd.f32 %v2368, %v2433
    %v2562 = vpack.c.bf16 %v2435, %v2434
    %v2563 = vpack.c.bf16 %v2437, %v2436
    %v2564 = vpack.c.bf16 %v2439, %v2438
    %v2565 = vpack.c.bf16 %v2441, %v2440
    %v2566 = vpack.c.bf16 %v2443, %v2442
    %v2567 = vpack.c.bf16 %v2445, %v2444
    %v2568 = vpack.c.bf16 %v2447, %v2446
    %v2569 = vpack.c.bf16 %v2449, %v2448
    %v2570 = vpack.c.bf16 %v2451, %v2450
    %v2571 = vpack.c.bf16 %v2453, %v2452
    %v2572 = vpack.c.bf16 %v2455, %v2454
    %v2573 = vpack.c.bf16 %v2457, %v2456
    %v2574 = vpack.c.bf16 %v2459, %v2458
    %v2575 = vpack.c.bf16 %v2461, %v2460
    %v2576 = vpack.c.bf16 %v2463, %v2462
    %v2577 = vpack.c.bf16 %v2465, %v2464
    %v2578 = vpack.c.bf16 %v2467, %v2466
    %v2579 = vpack.c.bf16 %v2469, %v2468
    %v2580 = vpack.c.bf16 %v2471, %v2470
    %v2581 = vpack.c.bf16 %v2473, %v2472
    %v2582 = vpack.c.bf16 %v2475, %v2474
    %v2583 = vpack.c.bf16 %v2477, %v2476
    %v2584 = vpack.c.bf16 %v2479, %v2478
    %v2585 = vpack.c.bf16 %v2481, %v2480
    %v2586 = vpack.c.bf16 %v2483, %v2482
    %v2587 = vpack.c.bf16 %v2485, %v2484
    %v2588 = vpack.c.bf16 %v2487, %v2486
    %v2589 = vpack.c.bf16 %v2489, %v2488
    %v2590 = vpack.c.bf16 %v2491, %v2490
    %v2591 = vpack.c.bf16 %v2493, %v2492
    %v2592 = vpack.c.bf16 %v2495, %v2494
    %v2593 = vpack.c.bf16 %v2497, %v2496
    %v2594 = vpack.c.bf16 %v2499, %v2498
    %v2595 = vpack.c.bf16 %v2501, %v2500
    %v2596 = vpack.c.bf16 %v2503, %v2502
    %v2597 = vpack.c.bf16 %v2505, %v2504
    %v2598 = vpack.c.bf16 %v2507, %v2506
    %v2599 = vpack.c.bf16 %v2509, %v2508
    %v2600 = vpack.c.bf16 %v2511, %v2510
    %v2601 = vpack.c.bf16 %v2513, %v2512
    %v2602 = vpack.c.bf16 %v2515, %v2514
    %v2603 = vpack.c.bf16 %v2517, %v2516
    %v2604 = vpack.c.bf16 %v2519, %v2518
    %v2605 = vpack.c.bf16 %v2521, %v2520
    %v2606 = vpack.c.bf16 %v2523, %v2522
    %v2607 = vpack.c.bf16 %v2525, %v2524
    %v2608 = vpack.c.bf16 %v2527, %v2526
    %v2609 = vpack.c.bf16 %v2529, %v2528
    %v2610 = vpack.c.bf16 %v2531, %v2530
    %v2611 = vpack.c.bf16 %v2533, %v2532
    %v2612 = vpack.c.bf16 %v2535, %v2534
    %v2613 = vpack.c.bf16 %v2537, %v2536
    %v2614 = vpack.c.bf16 %v2539, %v2538
    %v2615 = vpack.c.bf16 %v2541, %v2540
    %v2616 = vpack.c.bf16 %v2543, %v2542
    %v2617 = vpack.c.bf16 %v2545, %v2544
    %v2618 = vpack.c.bf16 %v2547, %v2546
    %v2619 = vpack.c.bf16 %v2549, %v2548
    %v2620 = vpack.c.bf16 %v2551, %v2550
    %v2621 = vpack.c.bf16 %v2553, %v2552
    %v2622 = vpack.c.bf16 %v2555, %v2554
    %v2623 = vpack.c.bf16 %v2557, %v2556
    %v2624 = vpack.c.bf16 %v2559, %v2558
    %v2625 = vpack.c.bf16 %v2561, %v2560
    %v2626 = vld [vmem:[%s1] sm:$0xf]
    %v2627 = vld [vmem:[%s1 + $0x4] sm:$0xf]
    %v2628 = vld [vmem:[%s1 + $0x8] sm:$0xf]
    %v2629 = vld [vmem:[%s1 + $0xc] sm:$0xf]
    %v2630 = vld [vmem:[%s1 + $0x10] sm:$0xf]
    %v2631 = vld [vmem:[%s1 + $0x14] sm:$0xf]
    %v2632 = vld [vmem:[%s1 + $0x18] sm:$0xf]
    %v2633 = vld [vmem:[%s1 + $0x1c] sm:$0xf]
    %v2634 = vld [vmem:[%s1 + $0x20] sm:$0xf]
    %v2635 = vld [vmem:[%s1 + $0x24] sm:$0xf]
    %v2636 = vld [vmem:[%s1 + $0x28] sm:$0xf]
    %v2637 = vld [vmem:[%s1 + $0x2c] sm:$0xf]
    %v2638 = vld [vmem:[%s1 + $0x30] sm:$0xf]
    %v2639 = vld [vmem:[%s1 + $0x34] sm:$0xf]
    %v2640 = vld [vmem:[%s1 + $0x38] sm:$0xf]
    %v2641 = vld [vmem:[%s1 + $0x3c] sm:$0xf]
    %v2642 = vld [vmem:[%s1 + $0x40] sm:$0xf]
    %v2643 = vld [vmem:[%s1 + $0x44] sm:$0xf]
    %v2644 = vld [vmem:[%s1 + $0x48] sm:$0xf]
    %v2645 = vld [vmem:[%s1 + $0x4c] sm:$0xf]
    %v2646 = vld [vmem:[%s1 + $0x50] sm:$0xf]
    %v2647 = vld [vmem:[%s1 + $0x54] sm:$0xf]
    %v2648 = vld [vmem:[%s1 + $0x58] sm:$0xf]
    %v2649 = vld [vmem:[%s1 + $0x5c] sm:$0xf]
    %v2650 = vld [vmem:[%s1 + $0x60] sm:$0xf]
    %v2651 = vld [vmem:[%s1 + $0x64] sm:$0xf]
    %v2652 = vld [vmem:[%s1 + $0x68] sm:$0xf]
    %v2653 = vld [vmem:[%s1 + $0x6c] sm:$0xf]
    %v2654 = vld [vmem:[%s1 + $0x70] sm:$0xf]
    %v2655 = vld [vmem:[%s1 + $0x74] sm:$0xf]
    %v2656 = vld [vmem:[%s1 + $0x78] sm:$0xf]
    %v2657 = vld [vmem:[%s1 + $0x7c] sm:$0xf]
    %v2690 = vunpack.c.l.b16 %v2626
    %v2691 = vunpack.c.l.b16 %v2627
    %v2692 = vunpack.c.l.b16 %v2628
    %v2693 = vunpack.c.l.b16 %v2629
    %v2694 = vunpack.c.l.b16 %v2630
    %v2695 = vunpack.c.l.b16 %v2631
    %v2696 = vunpack.c.l.b16 %v2632
    %v2697 = vunpack.c.l.b16 %v2633
    %v2698 = vunpack.c.l.b16 %v2634
    %v2699 = vunpack.c.l.b16 %v2635
    %v2700 = vunpack.c.l.b16 %v2636
    %v2701 = vunpack.c.l.b16 %v2637
    %v2702 = vunpack.c.l.b16 %v2638
    %v2703 = vunpack.c.l.b16 %v2639
    %v2704 = vunpack.c.l.b16 %v2640
    %v2705 = vunpack.c.l.b16 %v2641
    %v2706 = vunpack.c.l.b16 %v2642
    %v2707 = vunpack.c.l.b16 %v2643
    %v2708 = vunpack.c.l.b16 %v2644
    %v2709 = vunpack.c.l.b16 %v2645
    %v2710 = vunpack.c.l.b16 %v2646
    %v2711 = vunpack.c.l.b16 %v2647
    %v2712 = vunpack.c.l.b16 %v2648
    %v2713 = vunpack.c.l.b16 %v2649
    %v2714 = vunpack.c.l.b16 %v2650
    %v2715 = vunpack.c.l.b16 %v2651
    %v2716 = vunpack.c.l.b16 %v2652
    %v2717 = vunpack.c.l.b16 %v2653
    %v2718 = vunpack.c.l.b16 %v2654
    %v2719 = vunpack.c.l.b16 %v2655
    %v2720 = vunpack.c.l.b16 %v2656
    %v2721 = vunpack.c.l.b16 %v2657
    %v2722 = vpack.c.b16 %v2691, %v2690
    %v2723 = vpack.c.b16 %v2693, %v2692
    %v2724 = vpack.c.b16 %v2695, %v2694
    %v2725 = vpack.c.b16 %v2697, %v2696
    %v2726 = vpack.c.b16 %v2699, %v2698
    %v2727 = vpack.c.b16 %v2701, %v2700
    %v2728 = vpack.c.b16 %v2703, %v2702
    %v2729 = vpack.c.b16 %v2705, %v2704
    %v2730 = vpack.c.b16 %v2707, %v2706
    %v2731 = vpack.c.b16 %v2709, %v2708
    %v2732 = vpack.c.b16 %v2711, %v2710
    %v2733 = vpack.c.b16 %v2713, %v2712
    %v2734 = vpack.c.b16 %v2715, %v2714
    %v2735 = vpack.c.b16 %v2717, %v2716
    %v2736 = vpack.c.b16 %v2719, %v2718
    %v2737 = vpack.c.b16 %v2721, %v2720
    %v2818 = vunpack.c.l.b16 %v2562
    %v2819 = vunpack.c.l.b16 %v2563
    %v2820 = vunpack.c.l.b16 %v2564
    %v2821 = vunpack.c.l.b16 %v2565
    %v2822 = vunpack.c.l.b16 %v2566
    %v2823 = vunpack.c.l.b16 %v2567
    %v2824 = vunpack.c.l.b16 %v2568
    %v2825 = vunpack.c.l.b16 %v2569
    %v2826 = vunpack.c.l.b16 %v2570
    %v2827 = vunpack.c.l.b16 %v2571
    %v2828 = vunpack.c.l.b16 %v2572
    %v2829 = vunpack.c.l.b16 %v2573
    %v2830 = vunpack.c.l.b16 %v2574
    %v2831 = vunpack.c.l.b16 %v2575
    %v2832 = vunpack.c.l.b16 %v2576
    %v2833 = vunpack.c.l.b16 %v2577
    %v2834 = vunpack.c.l.b16 %v2578
    %v2835 = vunpack.c.l.b16 %v2579
    %v2836 = vunpack.c.l.b16 %v2580
    %v2837 = vunpack.c.l.b16 %v2581
    %v2838 = vunpack.c.l.b16 %v2582
    %v2839 = vunpack.c.l.b16 %v2583
    %v2840 = vunpack.c.l.b16 %v2584
    %v2841 = vunpack.c.l.b16 %v2585
    %v2842 = vunpack.c.l.b16 %v2586
    %v2843 = vunpack.c.l.b16 %v2587
    %v2844 = vunpack.c.l.b16 %v2588
    %v2845 = vunpack.c.l.b16 %v2589
    %v2846 = vunpack.c.l.b16 %v2590
    %v2847 = vunpack.c.l.b16 %v2591
    %v2848 = vunpack.c.l.b16 %v2592
    %v2849 = vunpack.c.l.b16 %v2593
    %v2850 = vunpack.c.l.b16 %v2594
    %v2851 = vunpack.c.l.b16 %v2595
    %v2852 = vunpack.c.l.b16 %v2596
    %v2853 = vunpack.c.l.b16 %v2597
    %v2854 = vunpack.c.l.b16 %v2598
    %v2855 = vunpack.c.l.b16 %v2599
    %v2856 = vunpack.c.l.b16 %v2600
    %v2857 = vunpack.c.l.b16 %v2601
    %v2858 = vunpack.c.l.b16 %v2602
    %v2859 = vunpack.c.l.b16 %v2603
    %v2860 = vunpack.c.l.b16 %v2604
    %v2861 = vunpack.c.l.b16 %v2605
    %v2862 = vunpack.c.l.b16 %v2606
    %v2863 = vunpack.c.l.b16 %v2607
    %v2864 = vunpack.c.l.b16 %v2608
    %v2865 = vunpack.c.l.b16 %v2609
    %v2866 = vunpack.c.l.b16 %v2610
    %v2867 = vunpack.c.l.b16 %v2611
    %v2868 = vunpack.c.l.b16 %v2612
    %v2869 = vunpack.c.l.b16 %v2613
    %v2870 = vunpack.c.l.b16 %v2614
    %v2871 = vunpack.c.l.b16 %v2615
    %v2872 = vunpack.c.l.b16 %v2616
    %v2873 = vunpack.c.l.b16 %v2617
    %v2874 = vunpack.c.l.b16 %v2618
    %v2875 = vunpack.c.l.b16 %v2619
    %v2876 = vunpack.c.l.b16 %v2620
    %v2877 = vunpack.c.l.b16 %v2621
    %v2878 = vunpack.c.l.b16 %v2622
    %v2879 = vunpack.c.l.b16 %v2623
    %v2880 = vunpack.c.l.b16 %v2624
    %v2881 = vunpack.c.l.b16 %v2625
    %v2882 = vpack.c.b16 %v2819, %v2818
    %v2883 = vpack.c.b16 %v2821, %v2820
    %v2884 = vpack.c.b16 %v2823, %v2822
    %v2885 = vpack.c.b16 %v2825, %v2824
    %v2886 = vpack.c.b16 %v2827, %v2826
    %v2887 = vpack.c.b16 %v2829, %v2828
    %v2888 = vpack.c.b16 %v2831, %v2830
    %v2889 = vpack.c.b16 %v2833, %v2832
    %v2890 = vpack.c.b16 %v2835, %v2834
    %v2891 = vpack.c.b16 %v2837, %v2836
    %v2892 = vpack.c.b16 %v2839, %v2838
    %v2893 = vpack.c.b16 %v2841, %v2840
    %v2894 = vpack.c.b16 %v2843, %v2842
    %v2895 = vpack.c.b16 %v2845, %v2844
    %v2896 = vpack.c.b16 %v2847, %v2846
    %v2897 = vpack.c.b16 %v2849, %v2848
    %v2898 = vpack.c.b16 %v2851, %v2850
    %v2899 = vpack.c.b16 %v2853, %v2852
    %v2900 = vpack.c.b16 %v2855, %v2854
    %v2901 = vpack.c.b16 %v2857, %v2856
    %v2902 = vpack.c.b16 %v2859, %v2858
    %v2903 = vpack.c.b16 %v2861, %v2860
    %v2904 = vpack.c.b16 %v2863, %v2862
    %v2905 = vpack.c.b16 %v2865, %v2864
    %v2906 = vpack.c.b16 %v2867, %v2866
    %v2907 = vpack.c.b16 %v2869, %v2868
    %v2908 = vpack.c.b16 %v2871, %v2870
    %v2909 = vpack.c.b16 %v2873, %v2872
    %v2910 = vpack.c.b16 %v2875, %v2874
    %v2911 = vpack.c.b16 %v2877, %v2876
    %v2912 = vpack.c.b16 %v2879, %v2878
    %v2913 = vpack.c.b16 %v2881, %v2880
    %2946 = vmatpush.bf16.xpose.msra.mxu0 %v2889
    %2947 = vmatpush.bf16.xpose.msra.mxu0 %v2888
    %2948 = vmatpush.bf16.xpose.msra.mxu0 %v2887
    %2949 = vmatpush.bf16.xpose.msra.mxu0 %v2886
    %2950 = vmatpush.bf16.xpose.msra.mxu0 %v2885
    %2951 = vmatpush.bf16.xpose.msra.mxu0 %v2884
    %2952 = vmatpush.bf16.xpose.msra.mxu0 %v2883
    %2953 = vmatpush.bf16.xpose.msra.mxu0 %v2882
    %2954 = vmatmul.bf16.gmra.mxu0 %v2722
    %v2955 = vpop.f32.mrf.mxu0
    %v2956 = vadd.f32 0.0, %v2955
    %v2957 = vpop.f32.mrf.mxu0
    %v2958 = vadd.f32 0.0, %v2957
    %2959 = vmatmul.bf16.gmra.mxu0 %v2723
    %v2960 = vpop.f32.mrf.mxu0
    %v2961 = vadd.f32 0.0, %v2960
    %v2962 = vpop.f32.mrf.mxu0
    %v2963 = vadd.f32 0.0, %v2962
    %2964 = vmatmul.bf16.gmra.mxu0 %v2724
    %v2965 = vpop.f32.mrf.mxu0
    %v2966 = vadd.f32 0.0, %v2965
    %v2967 = vpop.f32.mrf.mxu0
    %v2968 = vadd.f32 0.0, %v2967
    %2969 = vmatmul.bf16.gmra.mxu0 %v2725
    %v2970 = vpop.f32.mrf.mxu0
    %v2971 = vadd.f32 0.0, %v2970
    %v2972 = vpop.f32.mrf.mxu0
    %v2973 = vadd.f32 0.0, %v2972
    %2974 = vmatmul.bf16.gmra.mxu0 %v2726
    %v2975 = vpop.f32.mrf.mxu0
    %v2976 = vadd.f32 0.0, %v2975
    %v2977 = vpop.f32.mrf.mxu0
    %v2978 = vadd.f32 0.0, %v2977
    %2979 = vmatmul.bf16.gmra.mxu0 %v2727
    %v2980 = vpop.f32.mrf.mxu0
    %v2981 = vadd.f32 0.0, %v2980
    %v2982 = vpop.f32.mrf.mxu0
    %v2983 = vadd.f32 0.0, %v2982
    %2984 = vmatmul.bf16.gmra.mxu0 %v2728
    %v2985 = vpop.f32.mrf.mxu0
    %v2986 = vadd.f32 0.0, %v2985
    %v2987 = vpop.f32.mrf.mxu0
    %v2988 = vadd.f32 0.0, %v2987
    %2989 = vmatmul.bf16.gmra.mxu0 %v2729
    %v2990 = vpop.f32.mrf.mxu0
    %v2991 = vadd.f32 0.0, %v2990
    %v2992 = vpop.f32.mrf.mxu0
    %v2993 = vadd.f32 0.0, %v2992
    %2994 = vmatmul.bf16.gmra.mxu0 %v2730
    %v2995 = vpop.f32.mrf.mxu0
    %v2996 = vadd.f32 0.0, %v2995
    %v2997 = vpop.f32.mrf.mxu0
    %v2998 = vadd.f32 0.0, %v2997
    %2999 = vmatmul.bf16.gmra.mxu0 %v2731
    %v3000 = vpop.f32.mrf.mxu0
    %v3001 = vadd.f32 0.0, %v3000
    %v3002 = vpop.f32.mrf.mxu0
    %v3003 = vadd.f32 0.0, %v3002
    %3004 = vmatmul.bf16.gmra.mxu0 %v2732
    %v3005 = vpop.f32.mrf.mxu0
    %v3006 = vadd.f32 0.0, %v3005
    %v3007 = vpop.f32.mrf.mxu0
    %v3008 = vadd.f32 0.0, %v3007
    %3009 = vmatmul.bf16.gmra.mxu0 %v2733
    %v3010 = vpop.f32.mrf.mxu0
    %v3011 = vadd.f32 0.0, %v3010
    %v3012 = vpop.f32.mrf.mxu0
    %v3013 = vadd.f32 0.0, %v3012
    %3014 = vmatmul.bf16.gmra.mxu0 %v2734
    %v3015 = vpop.f32.mrf.mxu0
    %v3016 = vadd.f32 0.0, %v3015
    %v3017 = vpop.f32.mrf.mxu0
    %v3018 = vadd.f32 0.0, %v3017
    %3019 = vmatmul.bf16.gmra.mxu0 %v2735
    %v3020 = vpop.f32.mrf.mxu0
    %v3021 = vadd.f32 0.0, %v3020
    %v3022 = vpop.f32.mrf.mxu0
    %v3023 = vadd.f32 0.0, %v3022
    %3024 = vmatmul.bf16.gmra.mxu0 %v2736
    %v3025 = vpop.f32.mrf.mxu0
    %v3026 = vadd.f32 0.0, %v3025
    %v3027 = vpop.f32.mrf.mxu0
    %v3028 = vadd.f32 0.0, %v3027
    %3029 = vmatmul.bf16.gmra.mxu0 %v2737
    %v3030 = vpop.f32.mrf.mxu0
    %v3031 = vadd.f32 0.0, %v3030
    %v3032 = vpop.f32.mrf.mxu0
    %v3033 = vadd.f32 0.0, %v3032
    %3034 = vdwg.mxu0
    %3035 = vmatpush.bf16.xpose.msra.mxu0 %v2897
    %3036 = vmatpush.bf16.xpose.msra.mxu0 %v2896
    %3037 = vmatpush.bf16.xpose.msra.mxu0 %v2895
    %3038 = vmatpush.bf16.xpose.msra.mxu0 %v2894
    %3039 = vmatpush.bf16.xpose.msra.mxu0 %v2893
    %3040 = vmatpush.bf16.xpose.msra.mxu0 %v2892
    %3041 = vmatpush.bf16.xpose.msra.mxu0 %v2891
    %3042 = vmatpush.bf16.xpose.msra.mxu0 %v2890
    %3043 = vmatmul.bf16.gmra.mxu0 %v2722
    %v3044 = vpop.f32.mrf.mxu0
    %v3045 = vadd.f32 0.0, %v3044
    %v3046 = vpop.f32.mrf.mxu0
    %v3047 = vadd.f32 0.0, %v3046
    %3048 = vmatmul.bf16.gmra.mxu0 %v2723
    %v3049 = vpop.f32.mrf.mxu0
    %v3050 = vadd.f32 0.0, %v3049
    %v3051 = vpop.f32.mrf.mxu0
    %v3052 = vadd.f32 0.0, %v3051
    %3053 = vmatmul.bf16.gmra.mxu0 %v2724
    %v3054 = vpop.f32.mrf.mxu0
    %v3055 = vadd.f32 0.0, %v3054
    %v3056 = vpop.f32.mrf.mxu0
    %v3057 = vadd.f32 0.0, %v3056
    %3058 = vmatmul.bf16.gmra.mxu0 %v2725
    %v3059 = vpop.f32.mrf.mxu0
    %v3060 = vadd.f32 0.0, %v3059
    %v3061 = vpop.f32.mrf.mxu0
    %v3062 = vadd.f32 0.0, %v3061
    %3063 = vmatmul.bf16.gmra.mxu0 %v2726
    %v3064 = vpop.f32.mrf.mxu0
    %v3065 = vadd.f32 0.0, %v3064
    %v3066 = vpop.f32.mrf.mxu0
    %v3067 = vadd.f32 0.0, %v3066
    %3068 = vmatmul.bf16.gmra.mxu0 %v2727
    %v3069 = vpop.f32.mrf.mxu0
    %v3070 = vadd.f32 0.0, %v3069
    %v3071 = vpop.f32.mrf.mxu0
    %v3072 = vadd.f32 0.0, %v3071
    %3073 = vmatmul.bf16.gmra.mxu0 %v2728
    %v3074 = vpop.f32.mrf.mxu0
    %v3075 = vadd.f32 0.0, %v3074
    %v3076 = vpop.f32.mrf.mxu0
    %v3077 = vadd.f32 0.0, %v3076
    %3078 = vmatmul.bf16.gmra.mxu0 %v2729
    %v3079 = vpop.f32.mrf.mxu0
    %v3080 = vadd.f32 0.0, %v3079
    %v3081 = vpop.f32.mrf.mxu0
    %v3082 = vadd.f32 0.0, %v3081
    %3083 = vmatmul.bf16.gmra.mxu0 %v2730
    %v3084 = vpop.f32.mrf.mxu0
    %v3085 = vadd.f32 0.0, %v3084
    %v3086 = vpop.f32.mrf.mxu0
    %v3087 = vadd.f32 0.0, %v3086
    %3088 = vmatmul.bf16.gmra.mxu0 %v2731
    %v3089 = vpop.f32.mrf.mxu0
    %v3090 = vadd.f32 0.0, %v3089
    %v3091 = vpop.f32.mrf.mxu0
    %v3092 = vadd.f32 0.0, %v3091
    %3093 = vmatmul.bf16.gmra.mxu0 %v2732
    %v3094 = vpop.f32.mrf.mxu0
    %v3095 = vadd.f32 0.0, %v3094
    %v3096 = vpop.f32.mrf.mxu0
    %v3097 = vadd.f32 0.0, %v3096
    %3098 = vmatmul.bf16.gmra.mxu0 %v2733
    %v3099 = vpop.f32.mrf.mxu0
    %v3100 = vadd.f32 0.0, %v3099
    %v3101 = vpop.f32.mrf.mxu0
    %v3102 = vadd.f32 0.0, %v3101
    %3103 = vmatmul.bf16.gmra.mxu0 %v2734
    %v3104 = vpop.f32.mrf.mxu0
    %v3105 = vadd.f32 0.0, %v3104
    %v3106 = vpop.f32.mrf.mxu0
    %v3107 = vadd.f32 0.0, %v3106
    %3108 = vmatmul.bf16.gmra.mxu0 %v2735
    %v3109 = vpop.f32.mrf.mxu0
    %v3110 = vadd.f32 0.0, %v3109
    %v3111 = vpop.f32.mrf.mxu0
    %v3112 = vadd.f32 0.0, %v3111
    %3113 = vmatmul.bf16.gmra.mxu0 %v2736
    %v3114 = vpop.f32.mrf.mxu0
    %v3115 = vadd.f32 0.0, %v3114
    %v3116 = vpop.f32.mrf.mxu0
    %v3117 = vadd.f32 0.0, %v3116
    %3118 = vmatmul.bf16.gmra.mxu0 %v2737
    %v3119 = vpop.f32.mrf.mxu0
    %v3120 = vadd.f32 0.0, %v3119
    %v3121 = vpop.f32.mrf.mxu0
    %v3122 = vadd.f32 0.0, %v3121
    %3123 = vdwg.mxu0
    %3124 = vmatpush.bf16.xpose.msra.mxu0 %v2905
    %3125 = vmatpush.bf16.xpose.msra.mxu0 %v2904
    %3126 = vmatpush.bf16.xpose.msra.mxu0 %v2903
    %3127 = vmatpush.bf16.xpose.msra.mxu0 %v2902
    %3128 = vmatpush.bf16.xpose.msra.mxu0 %v2901
    %3129 = vmatpush.bf16.xpose.msra.mxu0 %v2900
    %3130 = vmatpush.bf16.xpose.msra.mxu0 %v2899
    %3131 = vmatpush.bf16.xpose.msra.mxu0 %v2898
    %3132 = vmatmul.bf16.gmra.mxu0 %v2722
    %v3133 = vpop.f32.mrf.mxu0
    %v3134 = vadd.f32 0.0, %v3133
    %v3135 = vpop.f32.mrf.mxu0
    %v3136 = vadd.f32 0.0, %v3135
    %3137 = vmatmul.bf16.gmra.mxu0 %v2723
    %v3138 = vpop.f32.mrf.mxu0
    %v3139 = vadd.f32 0.0, %v3138
    %v3140 = vpop.f32.mrf.mxu0
    %v3141 = vadd.f32 0.0, %v3140
    %3142 = vmatmul.bf16.gmra.mxu0 %v2724
    %v3143 = vpop.f32.mrf.mxu0
    %v3144 = vadd.f32 0.0, %v3143
    %v3145 = vpop.f32.mrf.mxu0
    %v3146 = vadd.f32 0.0, %v3145
    %3147 = vmatmul.bf16.gmra.mxu0 %v2725
    %v3148 = vpop.f32.mrf.mxu0
    %v3149 = vadd.f32 0.0, %v3148
    %v3150 = vpop.f32.mrf.mxu0
    %v3151 = vadd.f32 0.0, %v3150
    %3152 = vmatmul.bf16.gmra.mxu0 %v2726
    %v3153 = vpop.f32.mrf.mxu0
    %v3154 = vadd.f32 0.0, %v3153
    %v3155 = vpop.f32.mrf.mxu0
    %v3156 = vadd.f32 0.0, %v3155
    %3157 = vmatmul.bf16.gmra.mxu0 %v2727
    %v3158 = vpop.f32.mrf.mxu0
    %v3159 = vadd.f32 0.0, %v3158
    %v3160 = vpop.f32.mrf.mxu0
    %v3161 = vadd.f32 0.0, %v3160
    %3162 = vmatmul.bf16.gmra.mxu0 %v2728
    %v3163 = vpop.f32.mrf.mxu0
    %v3164 = vadd.f32 0.0, %v3163
    %v3165 = vpop.f32.mrf.mxu0
    %v3166 = vadd.f32 0.0, %v3165
    %3167 = vmatmul.bf16.gmra.mxu0 %v2729
    %v3168 = vpop.f32.mrf.mxu0
    %v3169 = vadd.f32 0.0, %v3168
    %v3170 = vpop.f32.mrf.mxu0
    %v3171 = vadd.f32 0.0, %v3170
    %3172 = vmatmul.bf16.gmra.mxu0 %v2730
    %v3173 = vpop.f32.mrf.mxu0
    %v3174 = vadd.f32 0.0, %v3173
    %v3175 = vpop.f32.mrf.mxu0
    %v3176 = vadd.f32 0.0, %v3175
    %3177 = vmatmul.bf16.gmra.mxu0 %v2731
    %v3178 = vpop.f32.mrf.mxu0
    %v3179 = vadd.f32 0.0, %v3178
    %v3180 = vpop.f32.mrf.mxu0
    %v3181 = vadd.f32 0.0, %v3180
    %3182 = vmatmul.bf16.gmra.mxu0 %v2732
    %v3183 = vpop.f32.mrf.mxu0
    %v3184 = vadd.f32 0.0, %v3183
    %v3185 = vpop.f32.mrf.mxu0
    %v3186 = vadd.f32 0.0, %v3185
    %3187 = vmatmul.bf16.gmra.mxu0 %v2733
    %v3188 = vpop.f32.mrf.mxu0
    %v3189 = vadd.f32 0.0, %v3188
    %v3190 = vpop.f32.mrf.mxu0
    %v3191 = vadd.f32 0.0, %v3190
    %3192 = vmatmul.bf16.gmra.mxu0 %v2734
    %v3193 = vpop.f32.mrf.mxu0
    %v3194 = vadd.f32 0.0, %v3193
    %v3195 = vpop.f32.mrf.mxu0
    %v3196 = vadd.f32 0.0, %v3195
    %3197 = vmatmul.bf16.gmra.mxu0 %v2735
    %v3198 = vpop.f32.mrf.mxu0
    %v3199 = vadd.f32 0.0, %v3198
    %v3200 = vpop.f32.mrf.mxu0
    %v3201 = vadd.f32 0.0, %v3200
    %3202 = vmatmul.bf16.gmra.mxu0 %v2736
    %v3203 = vpop.f32.mrf.mxu0
    %v3204 = vadd.f32 0.0, %v3203
    %v3205 = vpop.f32.mrf.mxu0
    %v3206 = vadd.f32 0.0, %v3205
    %3207 = vmatmul.bf16.gmra.mxu0 %v2737
    %v3208 = vpop.f32.mrf.mxu0
    %v3209 = vadd.f32 0.0, %v3208
    %v3210 = vpop.f32.mrf.mxu0
    %v3211 = vadd.f32 0.0, %v3210
    %3212 = vdwg.mxu0
    %3213 = vmatpush.bf16.xpose.msra.mxu0 %v2913
    %3214 = vmatpush.bf16.xpose.msra.mxu0 %v2912
    %3215 = vmatpush.bf16.xpose.msra.mxu0 %v2911
    %3216 = vmatpush.bf16.xpose.msra.mxu0 %v2910
    %3217 = vmatpush.bf16.xpose.msra.mxu0 %v2909
    %3218 = vmatpush.bf16.xpose.msra.mxu0 %v2908
    %3219 = vmatpush.bf16.xpose.msra.mxu0 %v2907
    %3220 = vmatpush.bf16.xpose.msra.mxu0 %v2906
    %3221 = vmatmul.bf16.gmra.mxu0 %v2722
    %v3222 = vpop.f32.mrf.mxu0
    %v3223 = vadd.f32 0.0, %v3222
    %v3224 = vpop.f32.mrf.mxu0
    %v3225 = vadd.f32 0.0, %v3224
    %3226 = vmatmul.bf16.gmra.mxu0 %v2723
    %v3227 = vpop.f32.mrf.mxu0
    %v3228 = vadd.f32 0.0, %v3227
    %v3229 = vpop.f32.mrf.mxu0
    %v3230 = vadd.f32 0.0, %v3229
    %3231 = vmatmul.bf16.gmra.mxu0 %v2724
    %v3232 = vpop.f32.mrf.mxu0
    %v3233 = vadd.f32 0.0, %v3232
    %v3234 = vpop.f32.mrf.mxu0
    %v3235 = vadd.f32 0.0, %v3234
    %3236 = vmatmul.bf16.gmra.mxu0 %v2725
    %v3237 = vpop.f32.mrf.mxu0
    %v3238 = vadd.f32 0.0, %v3237
    %v3239 = vpop.f32.mrf.mxu0
    %v3240 = vadd.f32 0.0, %v3239
    %3241 = vmatmul.bf16.gmra.mxu0 %v2726
    %v3242 = vpop.f32.mrf.mxu0
    %v3243 = vadd.f32 0.0, %v3242
    %v3244 = vpop.f32.mrf.mxu0
    %v3245 = vadd.f32 0.0, %v3244
    %3246 = vmatmul.bf16.gmra.mxu0 %v2727
    %v3247 = vpop.f32.mrf.mxu0
    %v3248 = vadd.f32 0.0, %v3247
    %v3249 = vpop.f32.mrf.mxu0
    %v3250 = vadd.f32 0.0, %v3249
    %3251 = vmatmul.bf16.gmra.mxu0 %v2728
    %v3252 = vpop.f32.mrf.mxu0
    %v3253 = vadd.f32 0.0, %v3252
    %v3254 = vpop.f32.mrf.mxu0
    %v3255 = vadd.f32 0.0, %v3254
    %3256 = vmatmul.bf16.gmra.mxu0 %v2729
    %v3257 = vpop.f32.mrf.mxu0
    %v3258 = vadd.f32 0.0, %v3257
    %v3259 = vpop.f32.mrf.mxu0
    %v3260 = vadd.f32 0.0, %v3259
    %3261 = vmatmul.bf16.gmra.mxu0 %v2730
    %v3262 = vpop.f32.mrf.mxu0
    %v3263 = vadd.f32 0.0, %v3262
    %v3264 = vpop.f32.mrf.mxu0
    %v3265 = vadd.f32 0.0, %v3264
    %3266 = vmatmul.bf16.gmra.mxu0 %v2731
    %v3267 = vpop.f32.mrf.mxu0
    %v3268 = vadd.f32 0.0, %v3267
    %v3269 = vpop.f32.mrf.mxu0
    %v3270 = vadd.f32 0.0, %v3269
    %3271 = vmatmul.bf16.gmra.mxu0 %v2732
    %v3272 = vpop.f32.mrf.mxu0
    %v3273 = vadd.f32 0.0, %v3272
    %v3274 = vpop.f32.mrf.mxu0
    %v3275 = vadd.f32 0.0, %v3274
    %3276 = vmatmul.bf16.gmra.mxu0 %v2733
    %v3277 = vpop.f32.mrf.mxu0
    %v3278 = vadd.f32 0.0, %v3277
    %v3279 = vpop.f32.mrf.mxu0
    %v3280 = vadd.f32 0.0, %v3279
    %3281 = vmatmul.bf16.gmra.mxu0 %v2734
    %v3282 = vpop.f32.mrf.mxu0
    %v3283 = vadd.f32 0.0, %v3282
    %v3284 = vpop.f32.mrf.mxu0
    %v3285 = vadd.f32 0.0, %v3284
    %3286 = vmatmul.bf16.gmra.mxu0 %v2735
    %v3287 = vpop.f32.mrf.mxu0
    %v3288 = vadd.f32 0.0, %v3287
    %v3289 = vpop.f32.mrf.mxu0
    %v3290 = vadd.f32 0.0, %v3289
    %3291 = vmatmul.bf16.gmra.mxu0 %v2736
    %v3292 = vpop.f32.mrf.mxu0
    %v3293 = vadd.f32 0.0, %v3292
    %v3294 = vpop.f32.mrf.mxu0
    %v3295 = vadd.f32 0.0, %v3294
    %3296 = vmatmul.bf16.gmra.mxu0 %v2737
    %v3297 = vpop.f32.mrf.mxu0
    %v3298 = vadd.f32 0.0, %v3297
    %v3299 = vpop.f32.mrf.mxu0
    %v3300 = vadd.f32 0.0, %v3299
    %3301 = vdwg.mxu0
    %v3302 = vmax.f32 %v2956, %v3045
    %3303 = vmax.xlane.f32.xlu0 %v3302
    %v3304 = vpop.xlane.xlu0 %3303
    %v3305 = vmax.f32 %v2958, %v3047
    %3306 = vmax.xlane.f32.xlu0 %v3305
    %v3307 = vpop.xlane.xlu0 %3306
    %v3308 = vmax.f32 %v2961, %v3050
    %3309 = vmax.xlane.f32.xlu0 %v3308
    %v3310 = vpop.xlane.xlu0 %3309
    %v3311 = vmax.f32 %v2963, %v3052
    %3312 = vmax.xlane.f32.xlu0 %v3311
    %v3313 = vpop.xlane.xlu0 %3312
    %v3314 = vmax.f32 %v2966, %v3055
    %3315 = vmax.xlane.f32.xlu0 %v3314
    %v3316 = vpop.xlane.xlu0 %3315
    %v3317 = vmax.f32 %v2968, %v3057
    %3318 = vmax.xlane.f32.xlu0 %v3317
    %v3319 = vpop.xlane.xlu0 %3318
    %v3320 = vmax.f32 %v2971, %v3060
    %3321 = vmax.xlane.f32.xlu0 %v3320
    %v3322 = vpop.xlane.xlu0 %3321
    %v3323 = vmax.f32 %v2973, %v3062
    %3324 = vmax.xlane.f32.xlu0 %v3323
    %v3325 = vpop.xlane.xlu0 %3324
    %v3326 = vmax.f32 %v2976, %v3065
    %3327 = vmax.xlane.f32.xlu0 %v3326
    %v3328 = vpop.xlane.xlu0 %3327
    %v3329 = vmax.f32 %v2978, %v3067
    %3330 = vmax.xlane.f32.xlu0 %v3329
    %v3331 = vpop.xlane.xlu0 %3330
    %v3332 = vmax.f32 %v2981, %v3070
    %3333 = vmax.xlane.f32.xlu0 %v3332
    %v3334 = vpop.xlane.xlu0 %3333
    %v3335 = vmax.f32 %v2983, %v3072
    %3336 = vmax.xlane.f32.xlu0 %v3335
    %v3337 = vpop.xlane.xlu0 %3336
    %v3338 = vmax.f32 %v2986, %v3075
    %3339 = vmax.xlane.f32.xlu0 %v3338
    %v3340 = vpop.xlane.xlu0 %3339
    %v3341 = vmax.f32 %v2988, %v3077
    %3342 = vmax.xlane.f32.xlu0 %v3341
    %v3343 = vpop.xlane.xlu0 %3342
    %v3344 = vmax.f32 %v2991, %v3080
    %3345 = vmax.xlane.f32.xlu0 %v3344
    %v3346 = vpop.xlane.xlu0 %3345
    %v3347 = vmax.f32 %v2993, %v3082
    %3348 = vmax.xlane.f32.xlu0 %v3347
    %v3349 = vpop.xlane.xlu0 %3348
    %v3350 = vmax.f32 %v2996, %v3085
    %3351 = vmax.xlane.f32.xlu0 %v3350
    %v3352 = vpop.xlane.xlu0 %3351
    %v3353 = vmax.f32 %v2998, %v3087
    %3354 = vmax.xlane.f32.xlu0 %v3353
    %v3355 = vpop.xlane.xlu0 %3354
    %v3356 = vmax.f32 %v3001, %v3090
    %3357 = vmax.xlane.f32.xlu0 %v3356
    %v3358 = vpop.xlane.xlu0 %3357
    %v3359 = vmax.f32 %v3003, %v3092
    %3360 = vmax.xlane.f32.xlu0 %v3359
    %v3361 = vpop.xlane.xlu0 %3360
    %v3362 = vmax.f32 %v3006, %v3095
    %3363 = vmax.xlane.f32.xlu0 %v3362
    %v3364 = vpop.xlane.xlu0 %3363
    %v3365 = vmax.f32 %v3008, %v3097
    %3366 = vmax.xlane.f32.xlu0 %v3365
    %v3367 = vpop.xlane.xlu0 %3366
    %v3368 = vmax.f32 %v3011, %v3100
    %3369 = vmax.xlane.f32.xlu0 %v3368
    %v3370 = vpop.xlane.xlu0 %3369
    %v3371 = vmax.f32 %v3013, %v3102
    %3372 = vmax.xlane.f32.xlu0 %v3371
    %v3373 = vpop.xlane.xlu0 %3372
    %v3374 = vmax.f32 %v3016, %v3105
    %3375 = vmax.xlane.f32.xlu0 %v3374
    %v3376 = vpop.xlane.xlu0 %3375
    %v3377 = vmax.f32 %v3018, %v3107
    %3378 = vmax.xlane.f32.xlu0 %v3377
    %v3379 = vpop.xlane.xlu0 %3378
    %v3380 = vmax.f32 %v3021, %v3110
    %3381 = vmax.xlane.f32.xlu0 %v3380
    %v3382 = vpop.xlane.xlu0 %3381
    %v3383 = vmax.f32 %v3023, %v3112
    %3384 = vmax.xlane.f32.xlu0 %v3383
    %v3385 = vpop.xlane.xlu0 %3384
    %v3386 = vmax.f32 %v3026, %v3115
    %3387 = vmax.xlane.f32.xlu0 %v3386
    %v3388 = vpop.xlane.xlu0 %3387
    %v3389 = vmax.f32 %v3028, %v3117
    %3390 = vmax.xlane.f32.xlu0 %v3389
    %v3391 = vpop.xlane.xlu0 %3390
    %v3392 = vmax.f32 %v3031, %v3120
    %3393 = vmax.xlane.f32.xlu0 %v3392
    %v3394 = vpop.xlane.xlu0 %3393
    %v3395 = vmax.f32 %v3033, %v3122
    %3396 = vmax.xlane.f32.xlu0 %v3395
    %v3397 = vpop.xlane.xlu0 %3396
    %v3398 = vsub.f32 %v2956, %v3304
    %v3399 = vsub.f32 %v3045, %v3304
    %v3400 = vsub.f32 %v2958, %v3307
    %v3401 = vsub.f32 %v3047, %v3307
    %v3402 = vsub.f32 %v2961, %v3310
    %v3403 = vsub.f32 %v3050, %v3310
    %v3404 = vsub.f32 %v2963, %v3313
    %v3405 = vsub.f32 %v3052, %v3313
    %v3406 = vsub.f32 %v2966, %v3316
    %v3407 = vsub.f32 %v3055, %v3316
    %v3408 = vsub.f32 %v2968, %v3319
    %v3409 = vsub.f32 %v3057, %v3319
    %v3410 = vsub.f32 %v2971, %v3322
    %v3411 = vsub.f32 %v3060, %v3322
    %v3412 = vsub.f32 %v2973, %v3325
    %v3413 = vsub.f32 %v3062, %v3325
    %v3414 = vsub.f32 %v2976, %v3328
    %v3415 = vsub.f32 %v3065, %v3328
    %v3416 = vsub.f32 %v2978, %v3331
    %v3417 = vsub.f32 %v3067, %v3331
    %v3418 = vsub.f32 %v2981, %v3334
    %v3419 = vsub.f32 %v3070, %v3334
    %v3420 = vsub.f32 %v2983, %v3337
    %v3421 = vsub.f32 %v3072, %v3337
    %v3422 = vsub.f32 %v2986, %v3340
    %v3423 = vsub.f32 %v3075, %v3340
    %v3424 = vsub.f32 %v2988, %v3343
    %v3425 = vsub.f32 %v3077, %v3343
    %v3426 = vsub.f32 %v2991, %v3346
    %v3427 = vsub.f32 %v3080, %v3346
    %v3428 = vsub.f32 %v2993, %v3349
    %v3429 = vsub.f32 %v3082, %v3349
    %v3430 = vsub.f32 %v2996, %v3352
    %v3431 = vsub.f32 %v3085, %v3352
    %v3432 = vsub.f32 %v2998, %v3355
    %v3433 = vsub.f32 %v3087, %v3355
    %v3434 = vsub.f32 %v3001, %v3358
    %v3435 = vsub.f32 %v3090, %v3358
    %v3436 = vsub.f32 %v3003, %v3361
    %v3437 = vsub.f32 %v3092, %v3361
    %v3438 = vsub.f32 %v3006, %v3364
    %v3439 = vsub.f32 %v3095, %v3364
    %v3440 = vsub.f32 %v3008, %v3367
    %v3441 = vsub.f32 %v3097, %v3367
    %v3442 = vsub.f32 %v3011, %v3370
    %v3443 = vsub.f32 %v3100, %v3370
    %v3444 = vsub.f32 %v3013, %v3373
    %v3445 = vsub.f32 %v3102, %v3373
    %v3446 = vsub.f32 %v3016, %v3376
    %v3447 = vsub.f32 %v3105, %v3376
    %v3448 = vsub.f32 %v3018, %v3379
    %v3449 = vsub.f32 %v3107, %v3379
    %v3450 = vsub.f32 %v3021, %v3382
    %v3451 = vsub.f32 %v3110, %v3382
    %v3452 = vsub.f32 %v3023, %v3385
    %v3453 = vsub.f32 %v3112, %v3385
    %v3454 = vsub.f32 %v3026, %v3388
    %v3455 = vsub.f32 %v3115, %v3388
    %v3456 = vsub.f32 %v3028, %v3391
    %v3457 = vsub.f32 %v3117, %v3391
    %v3458 = vsub.f32 %v3031, %v3394
    %v3459 = vsub.f32 %v3120, %v3394
    %v3460 = vsub.f32 %v3033, %v3397
    %v3461 = vsub.f32 %v3122, %v3397
    %v3462 = vmul.f32 %v3398, 1.442695
    %v3463 = vpow.pop %v3462
    %v3464 = vmul.f32 %v3399, 1.442695
    %v3465 = vpow.pop %v3464
    %v3466 = vmul.f32 %v3400, 1.442695
    %v3467 = vpow.pop %v3466
    %v3468 = vmul.f32 %v3401, 1.442695
    %v3469 = vpow.pop %v3468
    %v3470 = vmul.f32 %v3402, 1.442695
    %v3471 = vpow.pop %v3470
    %v3472 = vmul.f32 %v3403, 1.442695
    %v3473 = vpow.pop %v3472
    %v3474 = vmul.f32 %v3404, 1.442695
    %v3475 = vpow.pop %v3474
    %v3476 = vmul.f32 %v3405, 1.442695
    %v3477 = vpow.pop %v3476
    %v3478 = vmul.f32 %v3406, 1.442695
    %v3479 = vpow.pop %v3478
    %v3480 = vmul.f32 %v3407, 1.442695
    %v3481 = vpow.pop %v3480
    %v3482 = vmul.f32 %v3408, 1.442695
    %v3483 = vpow.pop %v3482
    %v3484 = vmul.f32 %v3409, 1.442695
    %v3485 = vpow.pop %v3484
    %v3486 = vmul.f32 %v3410, 1.442695
    %v3487 = vpow.pop %v3486
    %v3488 = vmul.f32 %v3411, 1.442695
    %v3489 = vpow.pop %v3488
    %v3490 = vmul.f32 %v3412, 1.442695
    %v3491 = vpow.pop %v3490
    %v3492 = vmul.f32 %v3413, 1.442695
    %v3493 = vpow.pop %v3492
    %v3494 = vmul.f32 %v3414, 1.442695
    %v3495 = vpow.pop %v3494
    %v3496 = vmul.f32 %v3415, 1.442695
    %v3497 = vpow.pop %v3496
    %v3498 = vmul.f32 %v3416, 1.442695
    %v3499 = vpow.pop %v3498
    %v3500 = vmul.f32 %v3417, 1.442695
    %v3501 = vpow.pop %v3500
    %v3502 = vmul.f32 %v3418, 1.442695
    %v3503 = vpow.pop %v3502
    %v3504 = vmul.f32 %v3419, 1.442695
    %v3505 = vpow.pop %v3504
    %v3506 = vmul.f32 %v3420, 1.442695
    %v3507 = vpow.pop %v3506
    %v3508 = vmul.f32 %v3421, 1.442695
    %v3509 = vpow.pop %v3508
    %v3510 = vmul.f32 %v3422, 1.442695
    %v3511 = vpow.pop %v3510
    %v3512 = vmul.f32 %v3423, 1.442695
    %v3513 = vpow.pop %v3512
    %v3514 = vmul.f32 %v3424, 1.442695
    %v3515 = vpow.pop %v3514
    %v3516 = vmul.f32 %v3425, 1.442695
    %v3517 = vpow.pop %v3516
    %v3518 = vmul.f32 %v3426, 1.442695
    %v3519 = vpow.pop %v3518
    %v3520 = vmul.f32 %v3427, 1.442695
    %v3521 = vpow.pop %v3520
    %v3522 = vmul.f32 %v3428, 1.442695
    %v3523 = vpow.pop %v3522
    %v3524 = vmul.f32 %v3429, 1.442695
    %v3525 = vpow.pop %v3524
    %v3526 = vmul.f32 %v3430, 1.442695
    %v3527 = vpow.pop %v3526
    %v3528 = vmul.f32 %v3431, 1.442695
    %v3529 = vpow.pop %v3528
    %v3530 = vmul.f32 %v3432, 1.442695
    %v3531 = vpow.pop %v3530
    %v3532 = vmul.f32 %v3433, 1.442695
    %v3533 = vpow.pop %v3532
    %v3534 = vmul.f32 %v3434, 1.442695
    %v3535 = vpow.pop %v3534
    %v3536 = vmul.f32 %v3435, 1.442695
    %v3537 = vpow.pop %v3536
    %v3538 = vmul.f32 %v3436, 1.442695
    %v3539 = vpow.pop %v3538
    %v3540 = vmul.f32 %v3437, 1.442695
    %v3541 = vpow.pop %v3540
    %v3542 = vmul.f32 %v3438, 1.442695
    %v3543 = vpow.pop %v3542
    %v3544 = vmul.f32 %v3439, 1.442695
    %v3545 = vpow.pop %v3544
    %v3546 = vmul.f32 %v3440, 1.442695
    %v3547 = vpow.pop %v3546
    %v3548 = vmul.f32 %v3441, 1.442695
    %v3549 = vpow.pop %v3548
    %v3550 = vmul.f32 %v3442, 1.442695
    %v3551 = vpow.pop %v3550
    %v3552 = vmul.f32 %v3443, 1.442695
    %v3553 = vpow.pop %v3552
    %v3554 = vmul.f32 %v3444, 1.442695
    %v3555 = vpow.pop %v3554
    %v3556 = vmul.f32 %v3445, 1.442695
    %v3557 = vpow.pop %v3556
    %v3558 = vmul.f32 %v3446, 1.442695
    %v3559 = vpow.pop %v3558
    %v3560 = vmul.f32 %v3447, 1.442695
    %v3561 = vpow.pop %v3560
    %v3562 = vmul.f32 %v3448, 1.442695
    %v3563 = vpow.pop %v3562
    %v3564 = vmul.f32 %v3449, 1.442695
    %v3565 = vpow.pop %v3564
    %v3566 = vmul.f32 %v3450, 1.442695
    %v3567 = vpow.pop %v3566
    %v3568 = vmul.f32 %v3451, 1.442695
    %v3569 = vpow.pop %v3568
    %v3570 = vmul.f32 %v3452, 1.442695
    %v3571 = vpow.pop %v3570
    %v3572 = vmul.f32 %v3453, 1.442695
    %v3573 = vpow.pop %v3572
    %v3574 = vmul.f32 %v3454, 1.442695
    %v3575 = vpow.pop %v3574
    %v3576 = vmul.f32 %v3455, 1.442695
    %v3577 = vpow.pop %v3576
    %v3578 = vmul.f32 %v3456, 1.442695
    %v3579 = vpow.pop %v3578
    %v3580 = vmul.f32 %v3457, 1.442695
    %v3581 = vpow.pop %v3580
    %v3582 = vmul.f32 %v3458, 1.442695
    %v3583 = vpow.pop %v3582
    %v3584 = vmul.f32 %v3459, 1.442695
    %v3585 = vpow.pop %v3584
    %v3586 = vmul.f32 %v3460, 1.442695
    %v3587 = vpow.pop %v3586
    %v3588 = vmul.f32 %v3461, 1.442695
    %v3589 = vpow.pop %v3588
    %v3590 = vpack.c.bf16 %v3467, %v3463
    %v3591 = vpack.c.bf16 %v3469, %v3465
    %v3592 = vpack.c.bf16 %v3475, %v3471
    %v3593 = vpack.c.bf16 %v3477, %v3473
    %v3594 = vpack.c.bf16 %v3483, %v3479
    %v3595 = vpack.c.bf16 %v3485, %v3481
    %v3596 = vpack.c.bf16 %v3491, %v3487
    %v3597 = vpack.c.bf16 %v3493, %v3489
    %v3598 = vpack.c.bf16 %v3499, %v3495
    %v3599 = vpack.c.bf16 %v3501, %v3497
    %v3600 = vpack.c.bf16 %v3507, %v3503
    %v3601 = vpack.c.bf16 %v3509, %v3505
    %v3602 = vpack.c.bf16 %v3515, %v3511
    %v3603 = vpack.c.bf16 %v3517, %v3513
    %v3604 = vpack.c.bf16 %v3523, %v3519
    %v3605 = vpack.c.bf16 %v3525, %v3521
    %v3606 = vpack.c.bf16 %v3531, %v3527
    %v3607 = vpack.c.bf16 %v3533, %v3529
    %v3608 = vpack.c.bf16 %v3539, %v3535
    %v3609 = vpack.c.bf16 %v3541, %v3537
    %v3610 = vpack.c.bf16 %v3547, %v3543
    %v3611 = vpack.c.bf16 %v3549, %v3545
    %v3612 = vpack.c.bf16 %v3555, %v3551
    %v3613 = vpack.c.bf16 %v3557, %v3553
    %v3614 = vpack.c.bf16 %v3563, %v3559
    %v3615 = vpack.c.bf16 %v3565, %v3561
    %v3616 = vpack.c.bf16 %v3571, %v3567
    %v3617 = vpack.c.bf16 %v3573, %v3569
    %v3618 = vpack.c.bf16 %v3579, %v3575
    %v3619 = vpack.c.bf16 %v3581, %v3577
    %v3620 = vpack.c.bf16 %v3587, %v3583
    %v3621 = vpack.c.bf16 %v3589, %v3585
    %v3622 = vunpack.c.l.bf16 %v3590
    %v3623 = vunpack.c.l.bf16 %v3591
    %v3624 = vunpack.c.h.bf16 %v3590
    %v3625 = vunpack.c.h.bf16 %v3591
    %v3626 = vunpack.c.l.bf16 %v3592
    %v3627 = vunpack.c.l.bf16 %v3593
    %v3628 = vunpack.c.h.bf16 %v3592
    %v3629 = vunpack.c.h.bf16 %v3593
    %v3630 = vunpack.c.l.bf16 %v3594
    %v3631 = vunpack.c.l.bf16 %v3595
    %v3632 = vunpack.c.h.bf16 %v3594
    %v3633 = vunpack.c.h.bf16 %v3595
    %v3634 = vunpack.c.l.bf16 %v3596
    %v3635 = vunpack.c.l.bf16 %v3597
    %v3636 = vunpack.c.h.bf16 %v3596
    %v3637 = vunpack.c.h.bf16 %v3597
    %v3638 = vunpack.c.l.bf16 %v3598
    %v3639 = vunpack.c.l.bf16 %v3599
    %v3640 = vunpack.c.h.bf16 %v3598
    %v3641 = vunpack.c.h.bf16 %v3599
    %v3642 = vunpack.c.l.bf16 %v3600
    %v3643 = vunpack.c.l.bf16 %v3601
    %v3644 = vunpack.c.h.bf16 %v3600
    %v3645 = vunpack.c.h.bf16 %v3601
    %v3646 = vunpack.c.l.bf16 %v3602
    %v3647 = vunpack.c.l.bf16 %v3603
    %v3648 = vunpack.c.h.bf16 %v3602
    %v3649 = vunpack.c.h.bf16 %v3603
    %v3650 = vunpack.c.l.bf16 %v3604
    %v3651 = vunpack.c.l.bf16 %v3605
    %v3652 = vunpack.c.h.bf16 %v3604
    %v3653 = vunpack.c.h.bf16 %v3605
    %v3654 = vunpack.c.l.bf16 %v3606
    %v3655 = vunpack.c.l.bf16 %v3607
    %v3656 = vunpack.c.h.bf16 %v3606
    %v3657 = vunpack.c.h.bf16 %v3607
    %v3658 = vunpack.c.l.bf16 %v3608
    %v3659 = vunpack.c.l.bf16 %v3609
    %v3660 = vunpack.c.h.bf16 %v3608
    %v3661 = vunpack.c.h.bf16 %v3609
    %v3662 = vunpack.c.l.bf16 %v3610
    %v3663 = vunpack.c.l.bf16 %v3611
    %v3664 = vunpack.c.h.bf16 %v3610
    %v3665 = vunpack.c.h.bf16 %v3611
    %v3666 = vunpack.c.l.bf16 %v3612
    %v3667 = vunpack.c.l.bf16 %v3613
    %v3668 = vunpack.c.h.bf16 %v3612
    %v3669 = vunpack.c.h.bf16 %v3613
    %v3670 = vunpack.c.l.bf16 %v3614
    %v3671 = vunpack.c.l.bf16 %v3615
    %v3672 = vunpack.c.h.bf16 %v3614
    %v3673 = vunpack.c.h.bf16 %v3615
    %v3674 = vunpack.c.l.bf16 %v3616
    %v3675 = vunpack.c.l.bf16 %v3617
    %v3676 = vunpack.c.h.bf16 %v3616
    %v3677 = vunpack.c.h.bf16 %v3617
    %v3678 = vunpack.c.l.bf16 %v3618
    %v3679 = vunpack.c.l.bf16 %v3619
    %v3680 = vunpack.c.h.bf16 %v3618
    %v3681 = vunpack.c.h.bf16 %v3619
    %v3682 = vunpack.c.l.bf16 %v3620
    %v3683 = vunpack.c.l.bf16 %v3621
    %v3684 = vunpack.c.h.bf16 %v3620
    %v3685 = vunpack.c.h.bf16 %v3621
    %v3686 = vadd.f32 %v3622, %v3623
    %3687 = vadd.xlane.f32.xlu0 %v3686
    %v3688 = vpop.xlane.xlu0 %3687
    %v3689 = vadd.f32 %v3624, %v3625
    %3690 = vadd.xlane.f32.xlu0 %v3689
    %v3691 = vpop.xlane.xlu0 %3690
    %v3692 = vadd.f32 %v3626, %v3627
    %3693 = vadd.xlane.f32.xlu0 %v3692
    %v3694 = vpop.xlane.xlu0 %3693
    %v3695 = vadd.f32 %v3628, %v3629
    %3696 = vadd.xlane.f32.xlu0 %v3695
    %v3697 = vpop.xlane.xlu0 %3696
    %v3698 = vadd.f32 %v3630, %v3631
    %3699 = vadd.xlane.f32.xlu0 %v3698
    %v3700 = vpop.xlane.xlu0 %3699
    %v3701 = vadd.f32 %v3632, %v3633
    %3702 = vadd.xlane.f32.xlu0 %v3701
    %v3703 = vpop.xlane.xlu0 %3702
    %v3704 = vadd.f32 %v3634, %v3635
    %3705 = vadd.xlane.f32.xlu0 %v3704
    %v3706 = vpop.xlane.xlu0 %3705
    %v3707 = vadd.f32 %v3636, %v3637
    %3708 = vadd.xlane.f32.xlu0 %v3707
    %v3709 = vpop.xlane.xlu0 %3708
    %v3710 = vadd.f32 %v3638, %v3639
    %3711 = vadd.xlane.f32.xlu0 %v3710
    %v3712 = vpop.xlane.xlu0 %3711
    %v3713 = vadd.f32 %v3640, %v3641
    %3714 = vadd.xlane.f32.xlu0 %v3713
    %v3715 = vpop.xlane.xlu0 %3714
    %v3716 = vadd.f32 %v3642, %v3643
    %3717 = vadd.xlane.f32.xlu0 %v3716
    %v3718 = vpop.xlane.xlu0 %3717
    %v3719 = vadd.f32 %v3644, %v3645
    %3720 = vadd.xlane.f32.xlu0 %v3719
    %v3721 = vpop.xlane.xlu0 %3720
    %v3722 = vadd.f32 %v3646, %v3647
    %3723 = vadd.xlane.f32.xlu0 %v3722
    %v3724 = vpop.xlane.xlu0 %3723
    %v3725 = vadd.f32 %v3648, %v3649
    %3726 = vadd.xlane.f32.xlu0 %v3725
    %v3727 = vpop.xlane.xlu0 %3726
    %v3728 = vadd.f32 %v3650, %v3651
    %3729 = vadd.xlane.f32.xlu0 %v3728
    %v3730 = vpop.xlane.xlu0 %3729
    %v3731 = vadd.f32 %v3652, %v3653
    %3732 = vadd.xlane.f32.xlu0 %v3731
    %v3733 = vpop.xlane.xlu0 %3732
    %v3734 = vadd.f32 %v3654, %v3655
    %3735 = vadd.xlane.f32.xlu0 %v3734
    %v3736 = vpop.xlane.xlu0 %3735
    %v3737 = vadd.f32 %v3656, %v3657
    %3738 = vadd.xlane.f32.xlu0 %v3737
    %v3739 = vpop.xlane.xlu0 %3738
    %v3740 = vadd.f32 %v3658, %v3659
    %3741 = vadd.xlane.f32.xlu0 %v3740
    %v3742 = vpop.xlane.xlu0 %3741
    %v3743 = vadd.f32 %v3660, %v3661
    %3744 = vadd.xlane.f32.xlu0 %v3743
    %v3745 = vpop.xlane.xlu0 %3744
    %v3746 = vadd.f32 %v3662, %v3663
    %3747 = vadd.xlane.f32.xlu0 %v3746
    %v3748 = vpop.xlane.xlu0 %3747
    %v3749 = vadd.f32 %v3664, %v3665
    %3750 = vadd.xlane.f32.xlu0 %v3749
    %v3751 = vpop.xlane.xlu0 %3750
    %v3752 = vadd.f32 %v3666, %v3667
    %3753 = vadd.xlane.f32.xlu0 %v3752
    %v3754 = vpop.xlane.xlu0 %3753
    %v3755 = vadd.f32 %v3668, %v3669
    %3756 = vadd.xlane.f32.xlu0 %v3755
    %v3757 = vpop.xlane.xlu0 %3756
    %v3758 = vadd.f32 %v3670, %v3671
    %3759 = vadd.xlane.f32.xlu0 %v3758
    %v3760 = vpop.xlane.xlu0 %3759
    %v3761 = vadd.f32 %v3672, %v3673
    %3762 = vadd.xlane.f32.xlu0 %v3761
    %v3763 = vpop.xlane.xlu0 %3762
    %v3764 = vadd.f32 %v3674, %v3675
    %3765 = vadd.xlane.f32.xlu0 %v3764
    %v3766 = vpop.xlane.xlu0 %3765
    %v3767 = vadd.f32 %v3676, %v3677
    %3768 = vadd.xlane.f32.xlu0 %v3767
    %v3769 = vpop.xlane.xlu0 %3768
    %v3770 = vadd.f32 %v3678, %v3679
    %3771 = vadd.xlane.f32.xlu0 %v3770
    %v3772 = vpop.xlane.xlu0 %3771
    %v3773 = vadd.f32 %v3680, %v3681
    %3774 = vadd.xlane.f32.xlu0 %v3773
    %v3775 = vpop.xlane.xlu0 %3774
    %v3776 = vadd.f32 %v3682, %v3683
    %3777 = vadd.xlane.f32.xlu0 %v3776
    %v3778 = vpop.xlane.xlu0 %3777
    %v3779 = vadd.f32 %v3684, %v3685
    %3780 = vadd.xlane.f32.xlu0 %v3779
    %v3781 = vpop.xlane.xlu0 %3780
    %v3782 = vrot.slane %v2562, 4
    %v3783 = vrot.slane %v2563, 4
    %v3784 = vrot.slane %v2564, 4
    %v3785 = vrot.slane %v2565, 4
    %v3786 = vrot.slane %v2566, 4
    %v3787 = vrot.slane %v2567, 4
    %v3788 = vrot.slane %v2568, 4
    %v3789 = vrot.slane %v2569, 4
    %v3790 = vrot.slane %v2570, 4
    %v3791 = vrot.slane %v2571, 4
    %v3792 = vrot.slane %v2572, 4
    %v3793 = vrot.slane %v2573, 4
    %v3794 = vrot.slane %v2574, 4
    %v3795 = vrot.slane %v2575, 4
    %v3796 = vrot.slane %v2576, 4
    %v3797 = vrot.slane %v2577, 4
    %v3798 = vrot.slane %v2578, 4
    %v3799 = vrot.slane %v2579, 4
    %v3800 = vrot.slane %v2580, 4
    %v3801 = vrot.slane %v2581, 4
    %v3802 = vrot.slane %v2582, 4
    %v3803 = vrot.slane %v2583, 4
    %v3804 = vrot.slane %v2584, 4
    %v3805 = vrot.slane %v2585, 4
    %v3806 = vrot.slane %v2586, 4
    %v3807 = vrot.slane %v2587, 4
    %v3808 = vrot.slane %v2588, 4
    %v3809 = vrot.slane %v2589, 4
    %v3810 = vrot.slane %v2590, 4
    %v3811 = vrot.slane %v2591, 4
    %v3812 = vrot.slane %v2592, 4
    %v3813 = vrot.slane %v2593, 4
    %v3814 = vunpack.c.l.b16 %v3782
    %v3815 = vunpack.c.l.b16 %v3783
    %v3816 = vunpack.c.l.b16 %v3784
    %v3817 = vunpack.c.l.b16 %v3785
    %v3818 = vunpack.c.l.b16 %v3786
    %v3819 = vunpack.c.l.b16 %v3787
    %v3820 = vunpack.c.l.b16 %v3788
    %v3821 = vunpack.c.l.b16 %v3789
    %v3822 = vunpack.c.l.b16 %v3790
    %v3823 = vunpack.c.l.b16 %v3791
    %v3824 = vunpack.c.l.b16 %v3792
    %v3825 = vunpack.c.l.b16 %v3793
    %v3826 = vunpack.c.l.b16 %v3794
    %v3827 = vunpack.c.l.b16 %v3795
    %v3828 = vunpack.c.l.b16 %v3796
    %v3829 = vunpack.c.l.b16 %v3797
    %v3830 = vunpack.c.l.b16 %v3798
    %v3831 = vunpack.c.l.b16 %v3799
    %v3832 = vunpack.c.l.b16 %v3800
    %v3833 = vunpack.c.l.b16 %v3801
    %v3834 = vunpack.c.l.b16 %v3802
    %v3835 = vunpack.c.l.b16 %v3803
    %v3836 = vunpack.c.l.b16 %v3804
    %v3837 = vunpack.c.l.b16 %v3805
    %v3838 = vunpack.c.l.b16 %v3806
    %v3839 = vunpack.c.l.b16 %v3807
    %v3840 = vunpack.c.l.b16 %v3808
    %v3841 = vunpack.c.l.b16 %v3809
    %v3842 = vunpack.c.l.b16 %v3810
    %v3843 = vunpack.c.l.b16 %v3811
    %v3844 = vunpack.c.l.b16 %v3812
    %v3845 = vunpack.c.l.b16 %v3813
    %v3846 = vpack.c.b16 %v3815, %v3814
    %v3847 = vpack.c.b16 %v3817, %v3816
    %v3848 = vpack.c.b16 %v3819, %v3818
    %v3849 = vpack.c.b16 %v3821, %v3820
    %v3850 = vpack.c.b16 %v3823, %v3822
    %v3851 = vpack.c.b16 %v3825, %v3824
    %v3852 = vpack.c.b16 %v3827, %v3826
    %v3853 = vpack.c.b16 %v3829, %v3828
    %v3854 = vpack.c.b16 %v3831, %v3830
    %v3855 = vpack.c.b16 %v3833, %v3832
    %v3856 = vpack.c.b16 %v3835, %v3834
    %v3857 = vpack.c.b16 %v3837, %v3836
    %v3858 = vpack.c.b16 %v3839, %v3838
    %v3859 = vpack.c.b16 %v3841, %v3840
    %v3860 = vpack.c.b16 %v3843, %v3842
    %v3861 = vpack.c.b16 %v3845, %v3844
    %3878 = vmatpush.bf16.msra.mxu0 %v3853
    %3879 = vmatpush.bf16.msra.mxu0 %v3852
    %3880 = vmatpush.bf16.msra.mxu0 %v3851
    %3881 = vmatpush.bf16.msra.mxu0 %v3850
    %3882 = vmatpush.bf16.msra.mxu0 %v3849
    %3883 = vmatpush.bf16.msra.mxu0 %v3848
    %3884 = vmatpush.bf16.msra.mxu0 %v3847
    %3885 = vmatpush.bf16.msra.mxu0 %v3846
    %3886 = vmatmul.bf16.gmra.mxu0 %v3590
    %v3887 = vpop.f32.mrf.mxu0
    %v3888 = vadd.f32 0.0, %v3887
    %v3889 = vpop.f32.mrf.mxu0
    %v3890 = vadd.f32 0.0, %v3889
    %3891 = vmatmul.bf16.gmra.mxu0 %v3592
    %v3892 = vpop.f32.mrf.mxu0
    %v3893 = vadd.f32 0.0, %v3892
    %v3894 = vpop.f32.mrf.mxu0
    %v3895 = vadd.f32 0.0, %v3894
    %3896 = vmatmul.bf16.gmra.mxu0 %v3594
    %v3897 = vpop.f32.mrf.mxu0
    %v3898 = vadd.f32 0.0, %v3897
    %v3899 = vpop.f32.mrf.mxu0
    %v3900 = vadd.f32 0.0, %v3899
    %3901 = vmatmul.bf16.gmra.mxu0 %v3596
    %v3902 = vpop.f32.mrf.mxu0
    %v3903 = vadd.f32 0.0, %v3902
    %v3904 = vpop.f32.mrf.mxu0
    %v3905 = vadd.f32 0.0, %v3904
    %3906 = vmatmul.bf16.gmra.mxu0 %v3598
    %v3907 = vpop.f32.mrf.mxu0
    %v3908 = vadd.f32 0.0, %v3907
    %v3909 = vpop.f32.mrf.mxu0
    %v3910 = vadd.f32 0.0, %v3909
    %3911 = vmatmul.bf16.gmra.mxu0 %v3600
    %v3912 = vpop.f32.mrf.mxu0
    %v3913 = vadd.f32 0.0, %v3912
    %v3914 = vpop.f32.mrf.mxu0
    %v3915 = vadd.f32 0.0, %v3914
    %3916 = vmatmul.bf16.gmra.mxu0 %v3602
    %v3917 = vpop.f32.mrf.mxu0
    %v3918 = vadd.f32 0.0, %v3917
    %v3919 = vpop.f32.mrf.mxu0
    %v3920 = vadd.f32 0.0, %v3919
    %3921 = vmatmul.bf16.gmra.mxu0 %v3604
    %v3922 = vpop.f32.mrf.mxu0
    %v3923 = vadd.f32 0.0, %v3922
    %v3924 = vpop.f32.mrf.mxu0
    %v3925 = vadd.f32 0.0, %v3924
    %3926 = vmatmul.bf16.gmra.mxu0 %v3606
    %v3927 = vpop.f32.mrf.mxu0
    %v3928 = vadd.f32 0.0, %v3927
    %v3929 = vpop.f32.mrf.mxu0
    %v3930 = vadd.f32 0.0, %v3929
    %3931 = vmatmul.bf16.gmra.mxu0 %v3608
    %v3932 = vpop.f32.mrf.mxu0
    %v3933 = vadd.f32 0.0, %v3932
    %v3934 = vpop.f32.mrf.mxu0
    %v3935 = vadd.f32 0.0, %v3934
    %3936 = vmatmul.bf16.gmra.mxu0 %v3610
    %v3937 = vpop.f32.mrf.mxu0
    %v3938 = vadd.f32 0.0, %v3937
    %v3939 = vpop.f32.mrf.mxu0
    %v3940 = vadd.f32 0.0, %v3939
    %3941 = vmatmul.bf16.gmra.mxu0 %v3612
    %v3942 = vpop.f32.mrf.mxu0
    %v3943 = vadd.f32 0.0, %v3942
    %v3944 = vpop.f32.mrf.mxu0
    %v3945 = vadd.f32 0.0, %v3944
    %3946 = vmatmul.bf16.gmra.mxu0 %v3614
    %v3947 = vpop.f32.mrf.mxu0
    %v3948 = vadd.f32 0.0, %v3947
    %v3949 = vpop.f32.mrf.mxu0
    %v3950 = vadd.f32 0.0, %v3949
    %3951 = vmatmul.bf16.gmra.mxu0 %v3616
    %v3952 = vpop.f32.mrf.mxu0
    %v3953 = vadd.f32 0.0, %v3952
    %v3954 = vpop.f32.mrf.mxu0
    %v3955 = vadd.f32 0.0, %v3954
    %3956 = vmatmul.bf16.gmra.mxu0 %v3618
    %v3957 = vpop.f32.mrf.mxu0
    %v3958 = vadd.f32 0.0, %v3957
    %v3959 = vpop.f32.mrf.mxu0
    %v3960 = vadd.f32 0.0, %v3959
    %3961 = vmatmul.bf16.gmra.mxu0 %v3620
    %v3962 = vpop.f32.mrf.mxu0
    %v3963 = vadd.f32 0.0, %v3962
    %v3964 = vpop.f32.mrf.mxu0
    %v3965 = vadd.f32 0.0, %v3964
    %3966 = vdwg.mxu0
    %3967 = vmatpush.bf16.msra.mxu0 %v3861
    %3968 = vmatpush.bf16.msra.mxu0 %v3860
    %3969 = vmatpush.bf16.msra.mxu0 %v3859
    %3970 = vmatpush.bf16.msra.mxu0 %v3858
    %3971 = vmatpush.bf16.msra.mxu0 %v3857
    %3972 = vmatpush.bf16.msra.mxu0 %v3856
    %3973 = vmatpush.bf16.msra.mxu0 %v3855
    %3974 = vmatpush.bf16.msra.mxu0 %v3854
    %3975 = vmatmul.bf16.gmra.mxu0 %v3591
    %v3976 = vpop.f32.mrf.mxu0
    %v3977 = vadd.f32 %v3888, %v3976
    %v3978 = vpop.f32.mrf.mxu0
    %v3979 = vadd.f32 %v3890, %v3978
    %3980 = vmatmul.bf16.gmra.mxu0 %v3593
    %v3981 = vpop.f32.mrf.mxu0
    %v3982 = vadd.f32 %v3893, %v3981
    %v3983 = vpop.f32.mrf.mxu0
    %v3984 = vadd.f32 %v3895, %v3983
    %3985 = vmatmul.bf16.gmra.mxu0 %v3595
    %v3986 = vpop.f32.mrf.mxu0
    %v3987 = vadd.f32 %v3898, %v3986
    %v3988 = vpop.f32.mrf.mxu0
    %v3989 = vadd.f32 %v3900, %v3988
    %3990 = vmatmul.bf16.gmra.mxu0 %v3597
    %v3991 = vpop.f32.mrf.mxu0
    %v3992 = vadd.f32 %v3903, %v3991
    %v3993 = vpop.f32.mrf.mxu0
    %v3994 = vadd.f32 %v3905, %v3993
    %3995 = vmatmul.bf16.gmra.mxu0 %v3599
    %v3996 = vpop.f32.mrf.mxu0
    %v3997 = vadd.f32 %v3908, %v3996
    %v3998 = vpop.f32.mrf.mxu0
    %v3999 = vadd.f32 %v3910, %v3998
    %4000 = vmatmul.bf16.gmra.mxu0 %v3601
    %v4001 = vpop.f32.mrf.mxu0
    %v4002 = vadd.f32 %v3913, %v4001
    %v4003 = vpop.f32.mrf.mxu0
    %v4004 = vadd.f32 %v3915, %v4003
    %4005 = vmatmul.bf16.gmra.mxu0 %v3603
    %v4006 = vpop.f32.mrf.mxu0
    %v4007 = vadd.f32 %v3918, %v4006
    %v4008 = vpop.f32.mrf.mxu0
    %v4009 = vadd.f32 %v3920, %v4008
    %4010 = vmatmul.bf16.gmra.mxu0 %v3605
    %v4011 = vpop.f32.mrf.mxu0
    %v4012 = vadd.f32 %v3923, %v4011
    %v4013 = vpop.f32.mrf.mxu0
    %v4014 = vadd.f32 %v3925, %v4013
    %4015 = vmatmul.bf16.gmra.mxu0 %v3607
    %v4016 = vpop.f32.mrf.mxu0
    %v4017 = vadd.f32 %v3928, %v4016
    %v4018 = vpop.f32.mrf.mxu0
    %v4019 = vadd.f32 %v3930, %v4018
    %4020 = vmatmul.bf16.gmra.mxu0 %v3609
    %v4021 = vpop.f32.mrf.mxu0
    %v4022 = vadd.f32 %v3933, %v4021
    %v4023 = vpop.f32.mrf.mxu0
    %v4024 = vadd.f32 %v3935, %v4023
    %4025 = vmatmul.bf16.gmra.mxu0 %v3611
    %v4026 = vpop.f32.mrf.mxu0
    %v4027 = vadd.f32 %v3938, %v4026
    %v4028 = vpop.f32.mrf.mxu0
    %v4029 = vadd.f32 %v3940, %v4028
    %4030 = vmatmul.bf16.gmra.mxu0 %v3613
    %v4031 = vpop.f32.mrf.mxu0
    %v4032 = vadd.f32 %v3943, %v4031
    %v4033 = vpop.f32.mrf.mxu0
    %v4034 = vadd.f32 %v3945, %v4033
    %4035 = vmatmul.bf16.gmra.mxu0 %v3615
    %v4036 = vpop.f32.mrf.mxu0
    %v4037 = vadd.f32 %v3948, %v4036
    %v4038 = vpop.f32.mrf.mxu0
    %v4039 = vadd.f32 %v3950, %v4038
    %4040 = vmatmul.bf16.gmra.mxu0 %v3617
    %v4041 = vpop.f32.mrf.mxu0
    %v4042 = vadd.f32 %v3953, %v4041
    %v4043 = vpop.f32.mrf.mxu0
    %v4044 = vadd.f32 %v3955, %v4043
    %4045 = vmatmul.bf16.gmra.mxu0 %v3619
    %v4046 = vpop.f32.mrf.mxu0
    %v4047 = vadd.f32 %v3958, %v4046
    %v4048 = vpop.f32.mrf.mxu0
    %v4049 = vadd.f32 %v3960, %v4048
    %4050 = vmatmul.bf16.gmra.mxu0 %v3621
    %v4051 = vpop.f32.mrf.mxu0
    %v4052 = vadd.f32 %v3963, %v4051
    %v4053 = vpop.f32.mrf.mxu0
    %v4054 = vadd.f32 %v3965, %v4053
    %4055 = vdwg.mxu0
    %v4056 = vrcp.pop %v3688
    %v4057 = vrcp.pop %v3691
    %v4058 = vrcp.pop %v3694
    %v4059 = vrcp.pop %v3697
    %v4060 = vrcp.pop %v3700
    %v4061 = vrcp.pop %v3703
    %v4062 = vrcp.pop %v3706
    %v4063 = vrcp.pop %v3709
    %v4064 = vrcp.pop %v3712
    %v4065 = vrcp.pop %v3715
    %v4066 = vrcp.pop %v3718
    %v4067 = vrcp.pop %v3721
    %v4068 = vrcp.pop %v3724
    %v4069 = vrcp.pop %v3727
    %v4070 = vrcp.pop %v3730
    %v4071 = vrcp.pop %v3733
    %v4072 = vrcp.pop %v3736
    %v4073 = vrcp.pop %v3739
    %v4074 = vrcp.pop %v3742
    %v4075 = vrcp.pop %v3745
    %v4076 = vrcp.pop %v3748
    %v4077 = vrcp.pop %v3751
    %v4078 = vrcp.pop %v3754
    %v4079 = vrcp.pop %v3757
    %v4080 = vrcp.pop %v3760
    %v4081 = vrcp.pop %v3763
    %v4082 = vrcp.pop %v3766
    %v4083 = vrcp.pop %v3769
    %v4084 = vrcp.pop %v3772
    %v4085 = vrcp.pop %v3775
    %v4086 = vrcp.pop %v3778
    %v4087 = vrcp.pop %v3781
    %v4088 = vmul.f32 %v3977, %v4056
    %v4089 = vmul.f32 %v3979, %v4057
    %v4090 = vmul.f32 %v3982, %v4058
    %v4091 = vmul.f32 %v3984, %v4059
    %v4092 = vmul.f32 %v3987, %v4060
    %v4093 = vmul.f32 %v3989, %v4061
    %v4094 = vmul.f32 %v3992, %v4062
    %v4095 = vmul.f32 %v3994, %v4063
    %v4096 = vmul.f32 %v3997, %v4064
    %v4097 = vmul.f32 %v3999, %v4065
    %v4098 = vmul.f32 %v4002, %v4066
    %v4099 = vmul.f32 %v4004, %v4067
    %v4100 = vmul.f32 %v4007, %v4068
    %v4101 = vmul.f32 %v4009, %v4069
    %v4102 = vmul.f32 %v4012, %v4070
    %v4103 = vmul.f32 %v4014, %v4071
    %v4104 = vmul.f32 %v4017, %v4072
    %v4105 = vmul.f32 %v4019, %v4073
    %v4106 = vmul.f32 %v4022, %v4074
    %v4107 = vmul.f32 %v4024, %v4075
    %v4108 = vmul.f32 %v4027, %v4076
    %v4109 = vmul.f32 %v4029, %v4077
    %v4110 = vmul.f32 %v4032, %v4078
    %v4111 = vmul.f32 %v4034, %v4079
    %v4112 = vmul.f32 %v4037, %v4080
    %v4113 = vmul.f32 %v4039, %v4081
    %v4114 = vmul.f32 %v4042, %v4082
    %v4115 = vmul.f32 %v4044, %v4083
    %v4116 = vmul.f32 %v4047, %v4084
    %v4117 = vmul.f32 %v4049, %v4085
    %v4118 = vmul.f32 %v4052, %v4086
    %v4119 = vmul.f32 %v4054, %v4087
    %v4120 = vmax.f32 %v3134, %v3223
    %4121 = vmax.xlane.f32.xlu0 %v4120
    %v4122 = vpop.xlane.xlu0 %4121
    %v4123 = vmax.f32 %v3136, %v3225
    %4124 = vmax.xlane.f32.xlu0 %v4123
    %v4125 = vpop.xlane.xlu0 %4124
    %v4126 = vmax.f32 %v3139, %v3228
    %4127 = vmax.xlane.f32.xlu0 %v4126
    %v4128 = vpop.xlane.xlu0 %4127
    %v4129 = vmax.f32 %v3141, %v3230
    %4130 = vmax.xlane.f32.xlu0 %v4129
    %v4131 = vpop.xlane.xlu0 %4130
    %v4132 = vmax.f32 %v3144, %v3233
    %4133 = vmax.xlane.f32.xlu0 %v4132
    %v4134 = vpop.xlane.xlu0 %4133
    %v4135 = vmax.f32 %v3146, %v3235
    %4136 = vmax.xlane.f32.xlu0 %v4135
    %v4137 = vpop.xlane.xlu0 %4136
    %v4138 = vmax.f32 %v3149, %v3238
    %4139 = vmax.xlane.f32.xlu0 %v4138
    %v4140 = vpop.xlane.xlu0 %4139
    %v4141 = vmax.f32 %v3151, %v3240
    %4142 = vmax.xlane.f32.xlu0 %v4141
    %v4143 = vpop.xlane.xlu0 %4142
    %v4144 = vmax.f32 %v3154, %v3243
    %4145 = vmax.xlane.f32.xlu0 %v4144
    %v4146 = vpop.xlane.xlu0 %4145
    %v4147 = vmax.f32 %v3156, %v3245
    %4148 = vmax.xlane.f32.xlu0 %v4147
    %v4149 = vpop.xlane.xlu0 %4148
    %v4150 = vmax.f32 %v3159, %v3248
    %4151 = vmax.xlane.f32.xlu0 %v4150
    %v4152 = vpop.xlane.xlu0 %4151
    %v4153 = vmax.f32 %v3161, %v3250
    %4154 = vmax.xlane.f32.xlu0 %v4153
    %v4155 = vpop.xlane.xlu0 %4154
    %v4156 = vmax.f32 %v3164, %v3253
    %4157 = vmax.xlane.f32.xlu0 %v4156
    %v4158 = vpop.xlane.xlu0 %4157
    %v4159 = vmax.f32 %v3166, %v3255
    %4160 = vmax.xlane.f32.xlu0 %v4159
    %v4161 = vpop.xlane.xlu0 %4160
    %v4162 = vmax.f32 %v3169, %v3258
    %4163 = vmax.xlane.f32.xlu0 %v4162
    %v4164 = vpop.xlane.xlu0 %4163
    %v4165 = vmax.f32 %v3171, %v3260
    %4166 = vmax.xlane.f32.xlu0 %v4165
    %v4167 = vpop.xlane.xlu0 %4166
    %v4168 = vmax.f32 %v3174, %v3263
    %4169 = vmax.xlane.f32.xlu0 %v4168
    %v4170 = vpop.xlane.xlu0 %4169
    %v4171 = vmax.f32 %v3176, %v3265
    %4172 = vmax.xlane.f32.xlu0 %v4171
    %v4173 = vpop.xlane.xlu0 %4172
    %v4174 = vmax.f32 %v3179, %v3268
    %4175 = vmax.xlane.f32.xlu0 %v4174
    %v4176 = vpop.xlane.xlu0 %4175
    %v4177 = vmax.f32 %v3181, %v3270
    %4178 = vmax.xlane.f32.xlu0 %v4177
    %v4179 = vpop.xlane.xlu0 %4178
    %v4180 = vmax.f32 %v3184, %v3273
    %4181 = vmax.xlane.f32.xlu0 %v4180
    %v4182 = vpop.xlane.xlu0 %4181
    %v4183 = vmax.f32 %v3186, %v3275
    %4184 = vmax.xlane.f32.xlu0 %v4183
    %v4185 = vpop.xlane.xlu0 %4184
    %v4186 = vmax.f32 %v3189, %v3278
    %4187 = vmax.xlane.f32.xlu0 %v4186
    %v4188 = vpop.xlane.xlu0 %4187
    %v4189 = vmax.f32 %v3191, %v3280
    %4190 = vmax.xlane.f32.xlu0 %v4189
    %v4191 = vpop.xlane.xlu0 %4190
    %v4192 = vmax.f32 %v3194, %v3283
    %4193 = vmax.xlane.f32.xlu0 %v4192
    %v4194 = vpop.xlane.xlu0 %4193
    %v4195 = vmax.f32 %v3196, %v3285
    %4196 = vmax.xlane.f32.xlu0 %v4195
    %v4197 = vpop.xlane.xlu0 %4196
    %v4198 = vmax.f32 %v3199, %v3288
    %4199 = vmax.xlane.f32.xlu0 %v4198
    %v4200 = vpop.xlane.xlu0 %4199
    %v4201 = vmax.f32 %v3201, %v3290
    %4202 = vmax.xlane.f32.xlu0 %v4201
    %v4203 = vpop.xlane.xlu0 %4202
    %v4204 = vmax.f32 %v3204, %v3293
    %4205 = vmax.xlane.f32.xlu0 %v4204
    %v4206 = vpop.xlane.xlu0 %4205
    %v4207 = vmax.f32 %v3206, %v3295
    %4208 = vmax.xlane.f32.xlu0 %v4207
    %v4209 = vpop.xlane.xlu0 %4208
    %v4210 = vmax.f32 %v3209, %v3298
    %4211 = vmax.xlane.f32.xlu0 %v4210
    %v4212 = vpop.xlane.xlu0 %4211
    %v4213 = vmax.f32 %v3211, %v3300
    %4214 = vmax.xlane.f32.xlu0 %v4213
    %v4215 = vpop.xlane.xlu0 %4214
    %v4216 = vsub.f32 %v3134, %v4122
    %v4217 = vsub.f32 %v3223, %v4122
    %v4218 = vsub.f32 %v3136, %v4125
    %v4219 = vsub.f32 %v3225, %v4125
    %v4220 = vsub.f32 %v3139, %v4128
    %v4221 = vsub.f32 %v3228, %v4128
    %v4222 = vsub.f32 %v3141, %v4131
    %v4223 = vsub.f32 %v3230, %v4131
    %v4224 = vsub.f32 %v3144, %v4134
    %v4225 = vsub.f32 %v3233, %v4134
    %v4226 = vsub.f32 %v3146, %v4137
    %v4227 = vsub.f32 %v3235, %v4137
    %v4228 = vsub.f32 %v3149, %v4140
    %v4229 = vsub.f32 %v3238, %v4140
    %v4230 = vsub.f32 %v3151, %v4143
    %v4231 = vsub.f32 %v3240, %v4143
    %v4232 = vsub.f32 %v3154, %v4146
    %v4233 = vsub.f32 %v3243, %v4146
    %v4234 = vsub.f32 %v3156, %v4149
    %v4235 = vsub.f32 %v3245, %v4149
    %v4236 = vsub.f32 %v3159, %v4152
    %v4237 = vsub.f32 %v3248, %v4152
    %v4238 = vsub.f32 %v3161, %v4155
    %v4239 = vsub.f32 %v3250, %v4155
    %v4240 = vsub.f32 %v3164, %v4158
    %v4241 = vsub.f32 %v3253, %v4158
    %v4242 = vsub.f32 %v3166, %v4161
    %v4243 = vsub.f32 %v3255, %v4161
    %v4244 = vsub.f32 %v3169, %v4164
    %v4245 = vsub.f32 %v3258, %v4164
    %v4246 = vsub.f32 %v3171, %v4167
    %v4247 = vsub.f32 %v3260, %v4167
    %v4248 = vsub.f32 %v3174, %v4170
    %v4249 = vsub.f32 %v3263, %v4170
    %v4250 = vsub.f32 %v3176, %v4173
    %v4251 = vsub.f32 %v3265, %v4173
    %v4252 = vsub.f32 %v3179, %v4176
    %v4253 = vsub.f32 %v3268, %v4176
    %v4254 = vsub.f32 %v3181, %v4179
    %v4255 = vsub.f32 %v3270, %v4179
    %v4256 = vsub.f32 %v3184, %v4182
    %v4257 = vsub.f32 %v3273, %v4182
    %v4258 = vsub.f32 %v3186, %v4185
    %v4259 = vsub.f32 %v3275, %v4185
    %v4260 = vsub.f32 %v3189, %v4188
    %v4261 = vsub.f32 %v3278, %v4188
    %v4262 = vsub.f32 %v3191, %v4191
    %v4263 = vsub.f32 %v3280, %v4191
    %v4264 = vsub.f32 %v3194, %v4194
    %v4265 = vsub.f32 %v3283, %v4194
    %v4266 = vsub.f32 %v3196, %v4197
    %v4267 = vsub.f32 %v3285, %v4197
    %v4268 = vsub.f32 %v3199, %v4200
    %v4269 = vsub.f32 %v3288, %v4200
    %v4270 = vsub.f32 %v3201, %v4203
    %v4271 = vsub.f32 %v3290, %v4203
    %v4272 = vsub.f32 %v3204, %v4206
    %v4273 = vsub.f32 %v3293, %v4206
    %v4274 = vsub.f32 %v3206, %v4209
    %v4275 = vsub.f32 %v3295, %v4209
    %v4276 = vsub.f32 %v3209, %v4212
    %v4277 = vsub.f32 %v3298, %v4212
    %v4278 = vsub.f32 %v3211, %v4215
    %v4279 = vsub.f32 %v3300, %v4215
    %v4280 = vmul.f32 %v4216, 1.442695
    %v4281 = vpow.pop %v4280
    %v4282 = vmul.f32 %v4217, 1.442695
    %v4283 = vpow.pop %v4282
    %v4284 = vmul.f32 %v4218, 1.442695
    %v4285 = vpow.pop %v4284
    %v4286 = vmul.f32 %v4219, 1.442695
    %v4287 = vpow.pop %v4286
    %v4288 = vmul.f32 %v4220, 1.442695
    %v4289 = vpow.pop %v4288
    %v4290 = vmul.f32 %v4221, 1.442695
    %v4291 = vpow.pop %v4290
    %v4292 = vmul.f32 %v4222, 1.442695
    %v4293 = vpow.pop %v4292
    %v4294 = vmul.f32 %v4223, 1.442695
    %v4295 = vpow.pop %v4294
    %v4296 = vmul.f32 %v4224, 1.442695
    %v4297 = vpow.pop %v4296
    %v4298 = vmul.f32 %v4225, 1.442695
    %v4299 = vpow.pop %v4298
    %v4300 = vmul.f32 %v4226, 1.442695
    %v4301 = vpow.pop %v4300
    %v4302 = vmul.f32 %v4227, 1.442695
    %v4303 = vpow.pop %v4302
    %v4304 = vmul.f32 %v4228, 1.442695
    %v4305 = vpow.pop %v4304
    %v4306 = vmul.f32 %v4229, 1.442695
    %v4307 = vpow.pop %v4306
    %v4308 = vmul.f32 %v4230, 1.442695
    %v4309 = vpow.pop %v4308
    %v4310 = vmul.f32 %v4231, 1.442695
    %v4311 = vpow.pop %v4310
    %v4312 = vmul.f32 %v4232, 1.442695
    %v4313 = vpow.pop %v4312
    %v4314 = vmul.f32 %v4233, 1.442695
    %v4315 = vpow.pop %v4314
    %v4316 = vmul.f32 %v4234, 1.442695
    %v4317 = vpow.pop %v4316
    %v4318 = vmul.f32 %v4235, 1.442695
    %v4319 = vpow.pop %v4318
    %v4320 = vmul.f32 %v4236, 1.442695
    %v4321 = vpow.pop %v4320
    %v4322 = vmul.f32 %v4237, 1.442695
    %v4323 = vpow.pop %v4322
    %v4324 = vmul.f32 %v4238, 1.442695
    %v4325 = vpow.pop %v4324
    %v4326 = vmul.f32 %v4239, 1.442695
    %v4327 = vpow.pop %v4326
    %v4328 = vmul.f32 %v4240, 1.442695
    %v4329 = vpow.pop %v4328
    %v4330 = vmul.f32 %v4241, 1.442695
    %v4331 = vpow.pop %v4330
    %v4332 = vmul.f32 %v4242, 1.442695
    %v4333 = vpow.pop %v4332
    %v4334 = vmul.f32 %v4243, 1.442695
    %v4335 = vpow.pop %v4334
    %v4336 = vmul.f32 %v4244, 1.442695
    %v4337 = vpow.pop %v4336
    %v4338 = vmul.f32 %v4245, 1.442695
    %v4339 = vpow.pop %v4338
    %v4340 = vmul.f32 %v4246, 1.442695
    %v4341 = vpow.pop %v4340
    %v4342 = vmul.f32 %v4247, 1.442695
    %v4343 = vpow.pop %v4342
    %v4344 = vmul.f32 %v4248, 1.442695
    %v4345 = vpow.pop %v4344
    %v4346 = vmul.f32 %v4249, 1.442695
    %v4347 = vpow.pop %v4346
    %v4348 = vmul.f32 %v4250, 1.442695
    %v4349 = vpow.pop %v4348
    %v4350 = vmul.f32 %v4251, 1.442695
    %v4351 = vpow.pop %v4350
    %v4352 = vmul.f32 %v4252, 1.442695
    %v4353 = vpow.pop %v4352
    %v4354 = vmul.f32 %v4253, 1.442695
    %v4355 = vpow.pop %v4354
    %v4356 = vmul.f32 %v4254, 1.442695
    %v4357 = vpow.pop %v4356
    %v4358 = vmul.f32 %v4255, 1.442695
    %v4359 = vpow.pop %v4358
    %v4360 = vmul.f32 %v4256, 1.442695
    %v4361 = vpow.pop %v4360
    %v4362 = vmul.f32 %v4257, 1.442695
    %v4363 = vpow.pop %v4362
    %v4364 = vmul.f32 %v4258, 1.442695
    %v4365 = vpow.pop %v4364
    %v4366 = vmul.f32 %v4259, 1.442695
    %v4367 = vpow.pop %v4366
    %v4368 = vmul.f32 %v4260, 1.442695
    %v4369 = vpow.pop %v4368
    %v4370 = vmul.f32 %v4261, 1.442695
    %v4371 = vpow.pop %v4370
    %v4372 = vmul.f32 %v4262, 1.442695
    %v4373 = vpow.pop %v4372
    %v4374 = vmul.f32 %v4263, 1.442695
    %v4375 = vpow.pop %v4374
    %v4376 = vmul.f32 %v4264, 1.442695
    %v4377 = vpow.pop %v4376
    %v4378 = vmul.f32 %v4265, 1.442695
    %v4379 = vpow.pop %v4378
    %v4380 = vmul.f32 %v4266, 1.442695
    %v4381 = vpow.pop %v4380
    %v4382 = vmul.f32 %v4267, 1.442695
    %v4383 = vpow.pop %v4382
    %v4384 = vmul.f32 %v4268, 1.442695
    %v4385 = vpow.pop %v4384
    %v4386 = vmul.f32 %v4269, 1.442695
    %v4387 = vpow.pop %v4386
    %v4388 = vmul.f32 %v4270, 1.442695
    %v4389 = vpow.pop %v4388
    %v4390 = vmul.f32 %v4271, 1.442695
    %v4391 = vpow.pop %v4390
    %v4392 = vmul.f32 %v4272, 1.442695
    %v4393 = vpow.pop %v4392
    %v4394 = vmul.f32 %v4273, 1.442695
    %v4395 = vpow.pop %v4394
    %v4396 = vmul.f32 %v4274, 1.442695
    %v4397 = vpow.pop %v4396
    %v4398 = vmul.f32 %v4275, 1.442695
    %v4399 = vpow.pop %v4398
    %v4400 = vmul.f32 %v4276, 1.442695
    %v4401 = vpow.pop %v4400
    %v4402 = vmul.f32 %v4277, 1.442695
    %v4403 = vpow.pop %v4402
    %v4404 = vmul.f32 %v4278, 1.442695
    %v4405 = vpow.pop %v4404
    %v4406 = vmul.f32 %v4279, 1.442695
    %v4407 = vpow.pop %v4406
    %v4408 = vpack.c.bf16 %v4285, %v4281
    %v4409 = vpack.c.bf16 %v4287, %v4283
    %v4410 = vpack.c.bf16 %v4293, %v4289
    %v4411 = vpack.c.bf16 %v4295, %v4291
    %v4412 = vpack.c.bf16 %v4301, %v4297
    %v4413 = vpack.c.bf16 %v4303, %v4299
    %v4414 = vpack.c.bf16 %v4309, %v4305
    %v4415 = vpack.c.bf16 %v4311, %v4307
    %v4416 = vpack.c.bf16 %v4317, %v4313
    %v4417 = vpack.c.bf16 %v4319, %v4315
    %v4418 = vpack.c.bf16 %v4325, %v4321
    %v4419 = vpack.c.bf16 %v4327, %v4323
    %v4420 = vpack.c.bf16 %v4333, %v4329
    %v4421 = vpack.c.bf16 %v4335, %v4331
    %v4422 = vpack.c.bf16 %v4341, %v4337
    %v4423 = vpack.c.bf16 %v4343, %v4339
    %v4424 = vpack.c.bf16 %v4349, %v4345
    %v4425 = vpack.c.bf16 %v4351, %v4347
    %v4426 = vpack.c.bf16 %v4357, %v4353
    %v4427 = vpack.c.bf16 %v4359, %v4355
    %v4428 = vpack.c.bf16 %v4365, %v4361
    %v4429 = vpack.c.bf16 %v4367, %v4363
    %v4430 = vpack.c.bf16 %v4373, %v4369
    %v4431 = vpack.c.bf16 %v4375, %v4371
    %v4432 = vpack.c.bf16 %v4381, %v4377
    %v4433 = vpack.c.bf16 %v4383, %v4379
    %v4434 = vpack.c.bf16 %v4389, %v4385
    %v4435 = vpack.c.bf16 %v4391, %v4387
    %v4436 = vpack.c.bf16 %v4397, %v4393
    %v4437 = vpack.c.bf16 %v4399, %v4395
    %v4438 = vpack.c.bf16 %v4405, %v4401
    %v4439 = vpack.c.bf16 %v4407, %v4403
    %v4440 = vunpack.c.l.bf16 %v4408
    %v4441 = vunpack.c.l.bf16 %v4409
    %v4442 = vunpack.c.h.bf16 %v4408
    %v4443 = vunpack.c.h.bf16 %v4409
    %v4444 = vunpack.c.l.bf16 %v4410
    %v4445 = vunpack.c.l.bf16 %v4411
    %v4446 = vunpack.c.h.bf16 %v4410
    %v4447 = vunpack.c.h.bf16 %v4411
    %v4448 = vunpack.c.l.bf16 %v4412
    %v4449 = vunpack.c.l.bf16 %v4413
    %v4450 = vunpack.c.h.bf16 %v4412
    %v4451 = vunpack.c.h.bf16 %v4413
    %v4452 = vunpack.c.l.bf16 %v4414
    %v4453 = vunpack.c.l.bf16 %v4415
    %v4454 = vunpack.c.h.bf16 %v4414
    %v4455 = vunpack.c.h.bf16 %v4415
    %v4456 = vunpack.c.l.bf16 %v4416
    %v4457 = vunpack.c.l.bf16 %v4417
    %v4458 = vunpack.c.h.bf16 %v4416
    %v4459 = vunpack.c.h.bf16 %v4417
    %v4460 = vunpack.c.l.bf16 %v4418
    %v4461 = vunpack.c.l.bf16 %v4419
    %v4462 = vunpack.c.h.bf16 %v4418
    %v4463 = vunpack.c.h.bf16 %v4419
    %v4464 = vunpack.c.l.bf16 %v4420
    %v4465 = vunpack.c.l.bf16 %v4421
    %v4466 = vunpack.c.h.bf16 %v4420
    %v4467 = vunpack.c.h.bf16 %v4421
    %v4468 = vunpack.c.l.bf16 %v4422
    %v4469 = vunpack.c.l.bf16 %v4423
    %v4470 = vunpack.c.h.bf16 %v4422
    %v4471 = vunpack.c.h.bf16 %v4423
    %v4472 = vunpack.c.l.bf16 %v4424
    %v4473 = vunpack.c.l.bf16 %v4425
    %v4474 = vunpack.c.h.bf16 %v4424
    %v4475 = vunpack.c.h.bf16 %v4425
    %v4476 = vunpack.c.l.bf16 %v4426
    %v4477 = vunpack.c.l.bf16 %v4427
    %v4478 = vunpack.c.h.bf16 %v4426
    %v4479 = vunpack.c.h.bf16 %v4427
    %v4480 = vunpack.c.l.bf16 %v4428
    %v4481 = vunpack.c.l.bf16 %v4429
    %v4482 = vunpack.c.h.bf16 %v4428
    %v4483 = vunpack.c.h.bf16 %v4429
    %v4484 = vunpack.c.l.bf16 %v4430
    %v4485 = vunpack.c.l.bf16 %v4431
    %v4486 = vunpack.c.h.bf16 %v4430
    %v4487 = vunpack.c.h.bf16 %v4431
    %v4488 = vunpack.c.l.bf16 %v4432
    %v4489 = vunpack.c.l.bf16 %v4433
    %v4490 = vunpack.c.h.bf16 %v4432
    %v4491 = vunpack.c.h.bf16 %v4433
    %v4492 = vunpack.c.l.bf16 %v4434
    %v4493 = vunpack.c.l.bf16 %v4435
    %v4494 = vunpack.c.h.bf16 %v4434
    %v4495 = vunpack.c.h.bf16 %v4435
    %v4496 = vunpack.c.l.bf16 %v4436
    %v4497 = vunpack.c.l.bf16 %v4437
    %v4498 = vunpack.c.h.bf16 %v4436
    %v4499 = vunpack.c.h.bf16 %v4437
    %v4500 = vunpack.c.l.bf16 %v4438
    %v4501 = vunpack.c.l.bf16 %v4439
    %v4502 = vunpack.c.h.bf16 %v4438
    %v4503 = vunpack.c.h.bf16 %v4439
    %v4504 = vadd.f32 %v4440, %v4441
    %4505 = vadd.xlane.f32.xlu0 %v4504
    %v4506 = vpop.xlane.xlu0 %4505
    %v4507 = vadd.f32 %v4442, %v4443
    %4508 = vadd.xlane.f32.xlu0 %v4507
    %v4509 = vpop.xlane.xlu0 %4508
    %v4510 = vadd.f32 %v4444, %v4445
    %4511 = vadd.xlane.f32.xlu0 %v4510
    %v4512 = vpop.xlane.xlu0 %4511
    %v4513 = vadd.f32 %v4446, %v4447
    %4514 = vadd.xlane.f32.xlu0 %v4513
    %v4515 = vpop.xlane.xlu0 %4514
    %v4516 = vadd.f32 %v4448, %v4449
    %4517 = vadd.xlane.f32.xlu0 %v4516
    %v4518 = vpop.xlane.xlu0 %4517
    %v4519 = vadd.f32 %v4450, %v4451
    %4520 = vadd.xlane.f32.xlu0 %v4519
    %v4521 = vpop.xlane.xlu0 %4520
    %v4522 = vadd.f32 %v4452, %v4453
    %4523 = vadd.xlane.f32.xlu0 %v4522
    %v4524 = vpop.xlane.xlu0 %4523
    %v4525 = vadd.f32 %v4454, %v4455
    %4526 = vadd.xlane.f32.xlu0 %v4525
    %v4527 = vpop.xlane.xlu0 %4526
    %v4528 = vadd.f32 %v4456, %v4457
    %4529 = vadd.xlane.f32.xlu0 %v4528
    %v4530 = vpop.xlane.xlu0 %4529
    %v4531 = vadd.f32 %v4458, %v4459
    %4532 = vadd.xlane.f32.xlu0 %v4531
    %v4533 = vpop.xlane.xlu0 %4532
    %v4534 = vadd.f32 %v4460, %v4461
    %4535 = vadd.xlane.f32.xlu0 %v4534
    %v4536 = vpop.xlane.xlu0 %4535
    %v4537 = vadd.f32 %v4462, %v4463
    %4538 = vadd.xlane.f32.xlu0 %v4537
    %v4539 = vpop.xlane.xlu0 %4538
    %v4540 = vadd.f32 %v4464, %v4465
    %4541 = vadd.xlane.f32.xlu0 %v4540
    %v4542 = vpop.xlane.xlu0 %4541
    %v4543 = vadd.f32 %v4466, %v4467
    %4544 = vadd.xlane.f32.xlu0 %v4543
    %v4545 = vpop.xlane.xlu0 %4544
    %v4546 = vadd.f32 %v4468, %v4469
    %4547 = vadd.xlane.f32.xlu0 %v4546
    %v4548 = vpop.xlane.xlu0 %4547
    %v4549 = vadd.f32 %v4470, %v4471
    %4550 = vadd.xlane.f32.xlu0 %v4549
    %v4551 = vpop.xlane.xlu0 %4550
    %v4552 = vadd.f32 %v4472, %v4473
    %4553 = vadd.xlane.f32.xlu0 %v4552
    %v4554 = vpop.xlane.xlu0 %4553
    %v4555 = vadd.f32 %v4474, %v4475
    %4556 = vadd.xlane.f32.xlu0 %v4555
    %v4557 = vpop.xlane.xlu0 %4556
    %v4558 = vadd.f32 %v4476, %v4477
    %4559 = vadd.xlane.f32.xlu0 %v4558
    %v4560 = vpop.xlane.xlu0 %4559
    %v4561 = vadd.f32 %v4478, %v4479
    %4562 = vadd.xlane.f32.xlu0 %v4561
    %v4563 = vpop.xlane.xlu0 %4562
    %v4564 = vadd.f32 %v4480, %v4481
    %4565 = vadd.xlane.f32.xlu0 %v4564
    %v4566 = vpop.xlane.xlu0 %4565
    %v4567 = vadd.f32 %v4482, %v4483
    %4568 = vadd.xlane.f32.xlu0 %v4567
    %v4569 = vpop.xlane.xlu0 %4568
    %v4570 = vadd.f32 %v4484, %v4485
    %4571 = vadd.xlane.f32.xlu0 %v4570
    %v4572 = vpop.xlane.xlu0 %4571
    %v4573 = vadd.f32 %v4486, %v4487
    %4574 = vadd.xlane.f32.xlu0 %v4573
    %v4575 = vpop.xlane.xlu0 %4574
    %v4576 = vadd.f32 %v4488, %v4489
    %4577 = vadd.xlane.f32.xlu0 %v4576
    %v4578 = vpop.xlane.xlu0 %4577
    %v4579 = vadd.f32 %v4490, %v4491
    %4580 = vadd.xlane.f32.xlu0 %v4579
    %v4581 = vpop.xlane.xlu0 %4580
    %v4582 = vadd.f32 %v4492, %v4493
    %4583 = vadd.xlane.f32.xlu0 %v4582
    %v4584 = vpop.xlane.xlu0 %4583
    %v4585 = vadd.f32 %v4494, %v4495
    %4586 = vadd.xlane.f32.xlu0 %v4585
    %v4587 = vpop.xlane.xlu0 %4586
    %v4588 = vadd.f32 %v4496, %v4497
    %4589 = vadd.xlane.f32.xlu0 %v4588
    %v4590 = vpop.xlane.xlu0 %4589
    %v4591 = vadd.f32 %v4498, %v4499
    %4592 = vadd.xlane.f32.xlu0 %v4591
    %v4593 = vpop.xlane.xlu0 %4592
    %v4594 = vadd.f32 %v4500, %v4501
    %4595 = vadd.xlane.f32.xlu0 %v4594
    %v4596 = vpop.xlane.xlu0 %4595
    %v4597 = vadd.f32 %v4502, %v4503
    %4598 = vadd.xlane.f32.xlu0 %v4597
    %v4599 = vpop.xlane.xlu0 %4598
    %v4600 = vrot.slane %v2594, 4
    %v4601 = vrot.slane %v2595, 4
    %v4602 = vrot.slane %v2596, 4
    %v4603 = vrot.slane %v2597, 4
    %v4604 = vrot.slane %v2598, 4
    %v4605 = vrot.slane %v2599, 4
    %v4606 = vrot.slane %v2600, 4
    %v4607 = vrot.slane %v2601, 4
    %v4608 = vrot.slane %v2602, 4
    %v4609 = vrot.slane %v2603, 4
    %v4610 = vrot.slane %v2604, 4
    %v4611 = vrot.slane %v2605, 4
    %v4612 = vrot.slane %v2606, 4
    %v4613 = vrot.slane %v2607, 4
    %v4614 = vrot.slane %v2608, 4
    %v4615 = vrot.slane %v2609, 4
    %v4616 = vrot.slane %v2610, 4
    %v4617 = vrot.slane %v2611, 4
    %v4618 = vrot.slane %v2612, 4
    %v4619 = vrot.slane %v2613, 4
    %v4620 = vrot.slane %v2614, 4
    %v4621 = vrot.slane %v2615, 4
    %v4622 = vrot.slane %v2616, 4
    %v4623 = vrot.slane %v2617, 4
    %v4624 = vrot.slane %v2618, 4
    %v4625 = vrot.slane %v2619, 4
    %v4626 = vrot.slane %v2620, 4
    %v4627 = vrot.slane %v2621, 4
    %v4628 = vrot.slane %v2622, 4
    %v4629 = vrot.slane %v2623, 4
    %v4630 = vrot.slane %v2624, 4
    %v4631 = vrot.slane %v2625, 4
    %v4632 = vunpack.c.l.b16 %v4600
    %v4633 = vunpack.c.l.b16 %v4601
    %v4634 = vunpack.c.l.b16 %v4602
    %v4635 = vunpack.c.l.b16 %v4603
    %v4636 = vunpack.c.l.b16 %v4604
    %v4637 = vunpack.c.l.b16 %v4605
    %v4638 = vunpack.c.l.b16 %v4606
    %v4639 = vunpack.c.l.b16 %v4607
    %v4640 = vunpack.c.l.b16 %v4608
    %v4641 = vunpack.c.l.b16 %v4609
    %v4642 = vunpack.c.l.b16 %v4610
    %v4643 = vunpack.c.l.b16 %v4611
    %v4644 = vunpack.c.l.b16 %v4612
    %v4645 = vunpack.c.l.b16 %v4613
    %v4646 = vunpack.c.l.b16 %v4614
    %v4647 = vunpack.c.l.b16 %v4615
    %v4648 = vunpack.c.l.b16 %v4616
    %v4649 = vunpack.c.l.b16 %v4617
    %v4650 = vunpack.c.l.b16 %v4618
    %v4651 = vunpack.c.l.b16 %v4619
    %v4652 = vunpack.c.l.b16 %v4620
    %v4653 = vunpack.c.l.b16 %v4621
    %v4654 = vunpack.c.l.b16 %v4622
    %v4655 = vunpack.c.l.b16 %v4623
    %v4656 = vunpack.c.l.b16 %v4624
    %v4657 = vunpack.c.l.b16 %v4625
    %v4658 = vunpack.c.l.b16 %v4626
    %v4659 = vunpack.c.l.b16 %v4627
    %v4660 = vunpack.c.l.b16 %v4628
    %v4661 = vunpack.c.l.b16 %v4629
    %v4662 = vunpack.c.l.b16 %v4630
    %v4663 = vunpack.c.l.b16 %v4631
    %v4664 = vpack.c.b16 %v4633, %v4632
    %v4665 = vpack.c.b16 %v4635, %v4634
    %v4666 = vpack.c.b16 %v4637, %v4636
    %v4667 = vpack.c.b16 %v4639, %v4638
    %v4668 = vpack.c.b16 %v4641, %v4640
    %v4669 = vpack.c.b16 %v4643, %v4642
    %v4670 = vpack.c.b16 %v4645, %v4644
    %v4671 = vpack.c.b16 %v4647, %v4646
    %v4672 = vpack.c.b16 %v4649, %v4648
    %v4673 = vpack.c.b16 %v4651, %v4650
    %v4674 = vpack.c.b16 %v4653, %v4652
    %v4675 = vpack.c.b16 %v4655, %v4654
    %v4676 = vpack.c.b16 %v4657, %v4656
    %v4677 = vpack.c.b16 %v4659, %v4658
    %v4678 = vpack.c.b16 %v4661, %v4660
    %v4679 = vpack.c.b16 %v4663, %v4662
    %4696 = vmatpush.bf16.msra.mxu0 %v4671
    %4697 = vmatpush.bf16.msra.mxu0 %v4670
    %4698 = vmatpush.bf16.msra.mxu0 %v4669
    %4699 = vmatpush.bf16.msra.mxu0 %v4668
    %4700 = vmatpush.bf16.msra.mxu0 %v4667
    %4701 = vmatpush.bf16.msra.mxu0 %v4666
    %4702 = vmatpush.bf16.msra.mxu0 %v4665
    %4703 = vmatpush.bf16.msra.mxu0 %v4664
    %4704 = vmatmul.bf16.gmra.mxu0 %v4408
    %v4705 = vpop.f32.mrf.mxu0
    %v4706 = vadd.f32 0.0, %v4705
    %v4707 = vpop.f32.mrf.mxu0
    %v4708 = vadd.f32 0.0, %v4707
    %4709 = vmatmul.bf16.gmra.mxu0 %v4410
    %v4710 = vpop.f32.mrf.mxu0
    %v4711 = vadd.f32 0.0, %v4710
    %v4712 = vpop.f32.mrf.mxu0
    %v4713 = vadd.f32 0.0, %v4712
    %4714 = vmatmul.bf16.gmra.mxu0 %v4412
    %v4715 = vpop.f32.mrf.mxu0
    %v4716 = vadd.f32 0.0, %v4715
    %v4717 = vpop.f32.mrf.mxu0
    %v4718 = vadd.f32 0.0, %v4717
    %4719 = vmatmul.bf16.gmra.mxu0 %v4414
    %v4720 = vpop.f32.mrf.mxu0
    %v4721 = vadd.f32 0.0, %v4720
    %v4722 = vpop.f32.mrf.mxu0
    %v4723 = vadd.f32 0.0, %v4722
    %4724 = vmatmul.bf16.gmra.mxu0 %v4416
    %v4725 = vpop.f32.mrf.mxu0
    %v4726 = vadd.f32 0.0, %v4725
    %v4727 = vpop.f32.mrf.mxu0
    %v4728 = vadd.f32 0.0, %v4727
    %4729 = vmatmul.bf16.gmra.mxu0 %v4418
    %v4730 = vpop.f32.mrf.mxu0
    %v4731 = vadd.f32 0.0, %v4730
    %v4732 = vpop.f32.mrf.mxu0
    %v4733 = vadd.f32 0.0, %v4732
    %4734 = vmatmul.bf16.gmra.mxu0 %v4420
    %v4735 = vpop.f32.mrf.mxu0
    %v4736 = vadd.f32 0.0, %v4735
    %v4737 = vpop.f32.mrf.mxu0
    %v4738 = vadd.f32 0.0, %v4737
    %4739 = vmatmul.bf16.gmra.mxu0 %v4422
    %v4740 = vpop.f32.mrf.mxu0
    %v4741 = vadd.f32 0.0, %v4740
    %v4742 = vpop.f32.mrf.mxu0
    %v4743 = vadd.f32 0.0, %v4742
    %4744 = vmatmul.bf16.gmra.mxu0 %v4424
    %v4745 = vpop.f32.mrf.mxu0
    %v4746 = vadd.f32 0.0, %v4745
    %v4747 = vpop.f32.mrf.mxu0
    %v4748 = vadd.f32 0.0, %v4747
    %4749 = vmatmul.bf16.gmra.mxu0 %v4426
    %v4750 = vpop.f32.mrf.mxu0
    %v4751 = vadd.f32 0.0, %v4750
    %v4752 = vpop.f32.mrf.mxu0
    %v4753 = vadd.f32 0.0, %v4752
    %4754 = vmatmul.bf16.gmra.mxu0 %v4428
    %v4755 = vpop.f32.mrf.mxu0
    %v4756 = vadd.f32 0.0, %v4755
    %v4757 = vpop.f32.mrf.mxu0
    %v4758 = vadd.f32 0.0, %v4757
    %4759 = vmatmul.bf16.gmra.mxu0 %v4430
    %v4760 = vpop.f32.mrf.mxu0
    %v4761 = vadd.f32 0.0, %v4760
    %v4762 = vpop.f32.mrf.mxu0
    %v4763 = vadd.f32 0.0, %v4762
    %4764 = vmatmul.bf16.gmra.mxu0 %v4432
    %v4765 = vpop.f32.mrf.mxu0
    %v4766 = vadd.f32 0.0, %v4765
    %v4767 = vpop.f32.mrf.mxu0
    %v4768 = vadd.f32 0.0, %v4767
    %4769 = vmatmul.bf16.gmra.mxu0 %v4434
    %v4770 = vpop.f32.mrf.mxu0
    %v4771 = vadd.f32 0.0, %v4770
    %v4772 = vpop.f32.mrf.mxu0
    %v4773 = vadd.f32 0.0, %v4772
    %4774 = vmatmul.bf16.gmra.mxu0 %v4436
    %v4775 = vpop.f32.mrf.mxu0
    %v4776 = vadd.f32 0.0, %v4775
    %v4777 = vpop.f32.mrf.mxu0
    %v4778 = vadd.f32 0.0, %v4777
    %4779 = vmatmul.bf16.gmra.mxu0 %v4438
    %v4780 = vpop.f32.mrf.mxu0
    %v4781 = vadd.f32 0.0, %v4780
    %v4782 = vpop.f32.mrf.mxu0
    %v4783 = vadd.f32 0.0, %v4782
    %4784 = vdwg.mxu0
    %4785 = vmatpush.bf16.msra.mxu0 %v4679
    %4786 = vmatpush.bf16.msra.mxu0 %v4678
    %4787 = vmatpush.bf16.msra.mxu0 %v4677
    %4788 = vmatpush.bf16.msra.mxu0 %v4676
    %4789 = vmatpush.bf16.msra.mxu0 %v4675
    %4790 = vmatpush.bf16.msra.mxu0 %v4674
    %4791 = vmatpush.bf16.msra.mxu0 %v4673
    %4792 = vmatpush.bf16.msra.mxu0 %v4672
    %4793 = vmatmul.bf16.gmra.mxu0 %v4409
    %v4794 = vpop.f32.mrf.mxu0
    %v4795 = vadd.f32 %v4706, %v4794
    %v4796 = vpop.f32.mrf.mxu0
    %v4797 = vadd.f32 %v4708, %v4796
    %4798 = vmatmul.bf16.gmra.mxu0 %v4411
    %v4799 = vpop.f32.mrf.mxu0
    %v4800 = vadd.f32 %v4711, %v4799
    %v4801 = vpop.f32.mrf.mxu0
    %v4802 = vadd.f32 %v4713, %v4801
    %4803 = vmatmul.bf16.gmra.mxu0 %v4413
    %v4804 = vpop.f32.mrf.mxu0
    %v4805 = vadd.f32 %v4716, %v4804
    %v4806 = vpop.f32.mrf.mxu0
    %v4807 = vadd.f32 %v4718, %v4806
    %4808 = vmatmul.bf16.gmra.mxu0 %v4415
    %v4809 = vpop.f32.mrf.mxu0
    %v4810 = vadd.f32 %v4721, %v4809
    %v4811 = vpop.f32.mrf.mxu0
    %v4812 = vadd.f32 %v4723, %v4811
    %4813 = vmatmul.bf16.gmra.mxu0 %v4417
    %v4814 = vpop.f32.mrf.mxu0
    %v4815 = vadd.f32 %v4726, %v4814
    %v4816 = vpop.f32.mrf.mxu0
    %v4817 = vadd.f32 %v4728, %v4816
    %4818 = vmatmul.bf16.gmra.mxu0 %v4419
    %v4819 = vpop.f32.mrf.mxu0
    %v4820 = vadd.f32 %v4731, %v4819
    %v4821 = vpop.f32.mrf.mxu0
    %v4822 = vadd.f32 %v4733, %v4821
    %4823 = vmatmul.bf16.gmra.mxu0 %v4421
    %v4824 = vpop.f32.mrf.mxu0
    %v4825 = vadd.f32 %v4736, %v4824
    %v4826 = vpop.f32.mrf.mxu0
    %v4827 = vadd.f32 %v4738, %v4826
    %4828 = vmatmul.bf16.gmra.mxu0 %v4423
    %v4829 = vpop.f32.mrf.mxu0
    %v4830 = vadd.f32 %v4741, %v4829
    %v4831 = vpop.f32.mrf.mxu0
    %v4832 = vadd.f32 %v4743, %v4831
    %4833 = vmatmul.bf16.gmra.mxu0 %v4425
    %v4834 = vpop.f32.mrf.mxu0
    %v4835 = vadd.f32 %v4746, %v4834
    %v4836 = vpop.f32.mrf.mxu0
    %v4837 = vadd.f32 %v4748, %v4836
    %4838 = vmatmul.bf16.gmra.mxu0 %v4427
    %v4839 = vpop.f32.mrf.mxu0
    %v4840 = vadd.f32 %v4751, %v4839
    %v4841 = vpop.f32.mrf.mxu0
    %v4842 = vadd.f32 %v4753, %v4841
    %4843 = vmatmul.bf16.gmra.mxu0 %v4429
    %v4844 = vpop.f32.mrf.mxu0
    %v4845 = vadd.f32 %v4756, %v4844
    %v4846 = vpop.f32.mrf.mxu0
    %v4847 = vadd.f32 %v4758, %v4846
    %4848 = vmatmul.bf16.gmra.mxu0 %v4431
    %v4849 = vpop.f32.mrf.mxu0
    %v4850 = vadd.f32 %v4761, %v4849
    %v4851 = vpop.f32.mrf.mxu0
    %v4852 = vadd.f32 %v4763, %v4851
    %4853 = vmatmul.bf16.gmra.mxu0 %v4433
    %v4854 = vpop.f32.mrf.mxu0
    %v4855 = vadd.f32 %v4766, %v4854
    %v4856 = vpop.f32.mrf.mxu0
    %v4857 = vadd.f32 %v4768, %v4856
    %4858 = vmatmul.bf16.gmra.mxu0 %v4435
    %v4859 = vpop.f32.mrf.mxu0
    %v4860 = vadd.f32 %v4771, %v4859
    %v4861 = vpop.f32.mrf.mxu0
    %v4862 = vadd.f32 %v4773, %v4861
    %4863 = vmatmul.bf16.gmra.mxu0 %v4437
    %v4864 = vpop.f32.mrf.mxu0
    %v4865 = vadd.f32 %v4776, %v4864
    %v4866 = vpop.f32.mrf.mxu0
    %v4867 = vadd.f32 %v4778, %v4866
    %4868 = vmatmul.bf16.gmra.mxu0 %v4439
    %v4869 = vpop.f32.mrf.mxu0
    %v4870 = vadd.f32 %v4781, %v4869
    %v4871 = vpop.f32.mrf.mxu0
    %v4872 = vadd.f32 %v4783, %v4871
    %4873 = vdwg.mxu0
    %v4874 = vrcp.pop %v4506
    %v4875 = vrcp.pop %v4509
    %v4876 = vrcp.pop %v4512
    %v4877 = vrcp.pop %v4515
    %v4878 = vrcp.pop %v4518
    %v4879 = vrcp.pop %v4521
    %v4880 = vrcp.pop %v4524
    %v4881 = vrcp.pop %v4527
    %v4882 = vrcp.pop %v4530
    %v4883 = vrcp.pop %v4533
    %v4884 = vrcp.pop %v4536
    %v4885 = vrcp.pop %v4539
    %v4886 = vrcp.pop %v4542
    %v4887 = vrcp.pop %v4545
    %v4888 = vrcp.pop %v4548
    %v4889 = vrcp.pop %v4551
    %v4890 = vrcp.pop %v4554
    %v4891 = vrcp.pop %v4557
    %v4892 = vrcp.pop %v4560
    %v4893 = vrcp.pop %v4563
    %v4894 = vrcp.pop %v4566
    %v4895 = vrcp.pop %v4569
    %v4896 = vrcp.pop %v4572
    %v4897 = vrcp.pop %v4575
    %v4898 = vrcp.pop %v4578
    %v4899 = vrcp.pop %v4581
    %v4900 = vrcp.pop %v4584
    %v4901 = vrcp.pop %v4587
    %v4902 = vrcp.pop %v4590
    %v4903 = vrcp.pop %v4593
    %v4904 = vrcp.pop %v4596
    %v4905 = vrcp.pop %v4599
    %v4906 = vmul.f32 %v4795, %v4874
    %v4907 = vmul.f32 %v4797, %v4875
    %v4908 = vmul.f32 %v4800, %v4876
    %v4909 = vmul.f32 %v4802, %v4877
    %v4910 = vmul.f32 %v4805, %v4878
    %v4911 = vmul.f32 %v4807, %v4879
    %v4912 = vmul.f32 %v4810, %v4880
    %v4913 = vmul.f32 %v4812, %v4881
    %v4914 = vmul.f32 %v4815, %v4882
    %v4915 = vmul.f32 %v4817, %v4883
    %v4916 = vmul.f32 %v4820, %v4884
    %v4917 = vmul.f32 %v4822, %v4885
    %v4918 = vmul.f32 %v4825, %v4886
    %v4919 = vmul.f32 %v4827, %v4887
    %v4920 = vmul.f32 %v4830, %v4888
    %v4921 = vmul.f32 %v4832, %v4889
    %v4922 = vmul.f32 %v4835, %v4890
    %v4923 = vmul.f32 %v4837, %v4891
    %v4924 = vmul.f32 %v4840, %v4892
    %v4925 = vmul.f32 %v4842, %v4893
    %v4926 = vmul.f32 %v4845, %v4894
    %v4927 = vmul.f32 %v4847, %v4895
    %v4928 = vmul.f32 %v4850, %v4896
    %v4929 = vmul.f32 %v4852, %v4897
    %v4930 = vmul.f32 %v4855, %v4898
    %v4931 = vmul.f32 %v4857, %v4899
    %v4932 = vmul.f32 %v4860, %v4900
    %v4933 = vmul.f32 %v4862, %v4901
    %v4934 = vmul.f32 %v4865, %v4902
    %v4935 = vmul.f32 %v4867, %v4903
    %v4936 = vmul.f32 %v4870, %v4904
    %v4937 = vmul.f32 %v4872, %v4905
    %v4938 = vpack.c.bf16 %v4089, %v4088
    %v4939 = vpack.c.bf16 %v4091, %v4090
    %v4940 = vpack.c.bf16 %v4093, %v4092
    %v4941 = vpack.c.bf16 %v4095, %v4094
    %v4942 = vpack.c.bf16 %v4097, %v4096
    %v4943 = vpack.c.bf16 %v4099, %v4098
    %v4944 = vpack.c.bf16 %v4101, %v4100
    %v4945 = vpack.c.bf16 %v4103, %v4102
    %v4946 = vpack.c.bf16 %v4105, %v4104
    %v4947 = vpack.c.bf16 %v4107, %v4106
    %v4948 = vpack.c.bf16 %v4109, %v4108
    %v4949 = vpack.c.bf16 %v4111, %v4110
    %v4950 = vpack.c.bf16 %v4113, %v4112
    %v4951 = vpack.c.bf16 %v4115, %v4114
    %v4952 = vpack.c.bf16 %v4117, %v4116
    %v4953 = vpack.c.bf16 %v4119, %v4118
    %v4954 = vpack.c.bf16 %v4907, %v4906
    %v4955 = vpack.c.bf16 %v4909, %v4908
    %v4956 = vpack.c.bf16 %v4911, %v4910
    %v4957 = vpack.c.bf16 %v4913, %v4912
    %v4958 = vpack.c.bf16 %v4915, %v4914
    %v4959 = vpack.c.bf16 %v4917, %v4916
    %v4960 = vpack.c.bf16 %v4919, %v4918
    %v4961 = vpack.c.bf16 %v4921, %v4920
    %v4962 = vpack.c.bf16 %v4923, %v4922
    %v4963 = vpack.c.bf16 %v4925, %v4924
    %v4964 = vpack.c.bf16 %v4927, %v4926
    %v4965 = vpack.c.bf16 %v4929, %v4928
    %v4966 = vpack.c.bf16 %v4931, %v4930
    %v4967 = vpack.c.bf16 %v4933, %v4932
    %v4968 = vpack.c.bf16 %v4935, %v4934
    %v4969 = vpack.c.bf16 %v4937, %v4936
    %v4970 = vld [vmem:[#allocation5] sm:$0xf]
    %v4971 = vld [vmem:[#allocation5 + $0x4] sm:$0xf]
    %v4972 = vld [vmem:[#allocation5 + $0x8] sm:$0xf]
    %v4973 = vld [vmem:[#allocation5 + $0xc] sm:$0xf]
    %v4974 = vld [vmem:[#allocation5 + $0x10] sm:$0xf]
    %v4975 = vld [vmem:[#allocation5 + $0x14] sm:$0xf]
    %v4976 = vld [vmem:[#allocation5 + $0x18] sm:$0xf]
    %v4977 = vld [vmem:[#allocation5 + $0x1c] sm:$0xf]
    %v4978 = vld [vmem:[#allocation5 + $0x20] sm:$0xf]
    %v4979 = vld [vmem:[#allocation5 + $0x24] sm:$0xf]
    %v4980 = vld [vmem:[#allocation5 + $0x28] sm:$0xf]
    %v4981 = vld [vmem:[#allocation5 + $0x2c] sm:$0xf]
    %v4982 = vld [vmem:[#allocation5 + $0x30] sm:$0xf]
    %v4983 = vld [vmem:[#allocation5 + $0x34] sm:$0xf]
    %v4984 = vld [vmem:[#allocation5 + $0x38] sm:$0xf]
    %v4985 = vld [vmem:[#allocation5 + $0x3c] sm:$0xf]
    %v4986 = vperm.slane %v92, 2
    %v5003 = vunpack.c.l.b16 %v4970
    %v5004 = vunpack.c.l.b16 %v4971
    %v5005 = vunpack.c.l.b16 %v4972
    %v5006 = vunpack.c.l.b16 %v4973
    %v5007 = vunpack.c.l.b16 %v4974
    %v5008 = vunpack.c.l.b16 %v4975
    %v5009 = vunpack.c.l.b16 %v4976
    %v5010 = vunpack.c.l.b16 %v4977
    %v5011 = vunpack.c.l.b16 %v4978
    %v5012 = vunpack.c.l.b16 %v4979
    %v5013 = vunpack.c.l.b16 %v4980
    %v5014 = vunpack.c.l.b16 %v4981
    %v5015 = vunpack.c.l.b16 %v4982
    %v5016 = vunpack.c.l.b16 %v4983
    %v5017 = vunpack.c.l.b16 %v4984
    %v5018 = vunpack.c.l.b16 %v4985
    %v5019 = vpack.c.b16 %v5004, %v5003
    %v5020 = vpack.c.b16 %v5006, %v5005
    %v5021 = vpack.c.b16 %v5008, %v5007
    %v5022 = vpack.c.b16 %v5010, %v5009
    %v5023 = vpack.c.b16 %v5012, %v5011
    %v5024 = vpack.c.b16 %v5014, %v5013
    %v5025 = vpack.c.b16 %v5016, %v5015
    %v5026 = vpack.c.b16 %v5018, %v5017
    %5035 = vmatpush.bf16.msra.mxu0 %v5026
    %5036 = vmatpush.bf16.msra.mxu0 %v5025
    %5037 = vmatpush.bf16.msra.mxu0 %v5024
    %5038 = vmatpush.bf16.msra.mxu0 %v5023
    %5039 = vmatpush.bf16.msra.mxu0 %v5022
    %5040 = vmatpush.bf16.msra.mxu0 %v5021
    %5041 = vmatpush.bf16.msra.mxu0 %v5020
    %5042 = vmatpush.bf16.msra.mxu0 %v5019
    %5043 = vmatmul.bf16.gmra.mxu0 %v4938
    %v5044 = vpop.f32.mrf.mxu0
    %v5045 = vadd.f32 %v4986, %v5044
    %v5046 = vpop.f32.mrf.mxu0
    %v5047 = vadd.f32 %v4986, %v5046
    %5048 = vmatmul.bf16.gmra.mxu0 %v4939
    %v5049 = vpop.f32.mrf.mxu0
    %v5050 = vadd.f32 %v4986, %v5049
    %v5051 = vpop.f32.mrf.mxu0
    %v5052 = vadd.f32 %v4986, %v5051
    %5053 = vmatmul.bf16.gmra.mxu0 %v4940
    %v5054 = vpop.f32.mrf.mxu0
    %v5055 = vadd.f32 %v4986, %v5054
    %v5056 = vpop.f32.mrf.mxu0
    %v5057 = vadd.f32 %v4986, %v5056
    %5058 = vmatmul.bf16.gmra.mxu0 %v4941
    %v5059 = vpop.f32.mrf.mxu0
    %v5060 = vadd.f32 %v4986, %v5059
    %v5061 = vpop.f32.mrf.mxu0
    %v5062 = vadd.f32 %v4986, %v5061
    %5063 = vmatmul.bf16.gmra.mxu0 %v4942
    %v5064 = vpop.f32.mrf.mxu0
    %v5065 = vadd.f32 %v4986, %v5064
    %v5066 = vpop.f32.mrf.mxu0
    %v5067 = vadd.f32 %v4986, %v5066
    %5068 = vmatmul.bf16.gmra.mxu0 %v4943
    %v5069 = vpop.f32.mrf.mxu0
    %v5070 = vadd.f32 %v4986, %v5069
    %v5071 = vpop.f32.mrf.mxu0
    %v5072 = vadd.f32 %v4986, %v5071
    %5073 = vmatmul.bf16.gmra.mxu0 %v4944
    %v5074 = vpop.f32.mrf.mxu0
    %v5075 = vadd.f32 %v4986, %v5074
    %v5076 = vpop.f32.mrf.mxu0
    %v5077 = vadd.f32 %v4986, %v5076
    %5078 = vmatmul.bf16.gmra.mxu0 %v4945
    %v5079 = vpop.f32.mrf.mxu0
    %v5080 = vadd.f32 %v4986, %v5079
    %v5081 = vpop.f32.mrf.mxu0
    %v5082 = vadd.f32 %v4986, %v5081
    %5083 = vmatmul.bf16.gmra.mxu0 %v4946
    %v5084 = vpop.f32.mrf.mxu0
    %v5085 = vadd.f32 %v4986, %v5084
    %v5086 = vpop.f32.mrf.mxu0
    %v5087 = vadd.f32 %v4986, %v5086
    %5088 = vmatmul.bf16.gmra.mxu0 %v4947
    %v5089 = vpop.f32.mrf.mxu0
    %v5090 = vadd.f32 %v4986, %v5089
    %v5091 = vpop.f32.mrf.mxu0
    %v5092 = vadd.f32 %v4986, %v5091
    %5093 = vmatmul.bf16.gmra.mxu0 %v4948
    %v5094 = vpop.f32.mrf.mxu0
    %v5095 = vadd.f32 %v4986, %v5094
    %v5096 = vpop.f32.mrf.mxu0
    %v5097 = vadd.f32 %v4986, %v5096
    %5098 = vmatmul.bf16.gmra.mxu0 %v4949
    %v5099 = vpop.f32.mrf.mxu0
    %v5100 = vadd.f32 %v4986, %v5099
    %v5101 = vpop.f32.mrf.mxu0
    %v5102 = vadd.f32 %v4986, %v5101
    %5103 = vmatmul.bf16.gmra.mxu0 %v4950
    %v5104 = vpop.f32.mrf.mxu0
    %v5105 = vadd.f32 %v4986, %v5104
    %v5106 = vpop.f32.mrf.mxu0
    %v5107 = vadd.f32 %v4986, %v5106
    %5108 = vmatmul.bf16.gmra.mxu0 %v4951
    %v5109 = vpop.f32.mrf.mxu0
    %v5110 = vadd.f32 %v4986, %v5109
    %v5111 = vpop.f32.mrf.mxu0
    %v5112 = vadd.f32 %v4986, %v5111
    %5113 = vmatmul.bf16.gmra.mxu0 %v4952
    %v5114 = vpop.f32.mrf.mxu0
    %v5115 = vadd.f32 %v4986, %v5114
    %v5116 = vpop.f32.mrf.mxu0
    %v5117 = vadd.f32 %v4986, %v5116
    %5118 = vmatmul.bf16.gmra.mxu0 %v4953
    %v5119 = vpop.f32.mrf.mxu0
    %v5120 = vadd.f32 %v4986, %v5119
    %v5121 = vpop.f32.mrf.mxu0
    %v5122 = vadd.f32 %v4986, %v5121
    %5123 = vmatmul.bf16.gmra.mxu0 %v4954
    %v5124 = vpop.f32.mrf.mxu0
    %v5125 = vadd.f32 %v4986, %v5124
    %v5126 = vpop.f32.mrf.mxu0
    %v5127 = vadd.f32 %v4986, %v5126
    %5128 = vmatmul.bf16.gmra.mxu0 %v4955
    %v5129 = vpop.f32.mrf.mxu0
    %v5130 = vadd.f32 %v4986, %v5129
    %v5131 = vpop.f32.mrf.mxu0
    %v5132 = vadd.f32 %v4986, %v5131
    %5133 = vmatmul.bf16.gmra.mxu0 %v4956
    %v5134 = vpop.f32.mrf.mxu0
    %v5135 = vadd.f32 %v4986, %v5134
    %v5136 = vpop.f32.mrf.mxu0
    %v5137 = vadd.f32 %v4986, %v5136
    %5138 = vmatmul.bf16.gmra.mxu0 %v4957
    %v5139 = vpop.f32.mrf.mxu0
    %v5140 = vadd.f32 %v4986, %v5139
    %v5141 = vpop.f32.mrf.mxu0
    %v5142 = vadd.f32 %v4986, %v5141
    %5143 = vmatmul.bf16.gmra.mxu0 %v4958
    %v5144 = vpop.f32.mrf.mxu0
    %v5145 = vadd.f32 %v4986, %v5144
    %v5146 = vpop.f32.mrf.mxu0
    %v5147 = vadd.f32 %v4986, %v5146
    %5148 = vmatmul.bf16.gmra.mxu0 %v4959
    %v5149 = vpop.f32.mrf.mxu0
    %v5150 = vadd.f32 %v4986, %v5149
    %v5151 = vpop.f32.mrf.mxu0
    %v5152 = vadd.f32 %v4986, %v5151
    %5153 = vmatmul.bf16.gmra.mxu0 %v4960
    %v5154 = vpop.f32.mrf.mxu0
    %v5155 = vadd.f32 %v4986, %v5154
    %v5156 = vpop.f32.mrf.mxu0
    %v5157 = vadd.f32 %v4986, %v5156
    %5158 = vmatmul.bf16.gmra.mxu0 %v4961
    %v5159 = vpop.f32.mrf.mxu0
    %v5160 = vadd.f32 %v4986, %v5159
    %v5161 = vpop.f32.mrf.mxu0
    %v5162 = vadd.f32 %v4986, %v5161
    %5163 = vmatmul.bf16.gmra.mxu0 %v4962
    %v5164 = vpop.f32.mrf.mxu0
    %v5165 = vadd.f32 %v4986, %v5164
    %v5166 = vpop.f32.mrf.mxu0
    %v5167 = vadd.f32 %v4986, %v5166
    %5168 = vmatmul.bf16.gmra.mxu0 %v4963
    %v5169 = vpop.f32.mrf.mxu0
    %v5170 = vadd.f32 %v4986, %v5169
    %v5171 = vpop.f32.mrf.mxu0
    %v5172 = vadd.f32 %v4986, %v5171
    %5173 = vmatmul.bf16.gmra.mxu0 %v4964
    %v5174 = vpop.f32.mrf.mxu0
    %v5175 = vadd.f32 %v4986, %v5174
    %v5176 = vpop.f32.mrf.mxu0
    %v5177 = vadd.f32 %v4986, %v5176
    %5178 = vmatmul.bf16.gmra.mxu0 %v4965
    %v5179 = vpop.f32.mrf.mxu0
    %v5180 = vadd.f32 %v4986, %v5179
    %v5181 = vpop.f32.mrf.mxu0
    %v5182 = vadd.f32 %v4986, %v5181
    %5183 = vmatmul.bf16.gmra.mxu0 %v4966
    %v5184 = vpop.f32.mrf.mxu0
    %v5185 = vadd.f32 %v4986, %v5184
    %v5186 = vpop.f32.mrf.mxu0
    %v5187 = vadd.f32 %v4986, %v5186
    %5188 = vmatmul.bf16.gmra.mxu0 %v4967
    %v5189 = vpop.f32.mrf.mxu0
    %v5190 = vadd.f32 %v4986, %v5189
    %v5191 = vpop.f32.mrf.mxu0
    %v5192 = vadd.f32 %v4986, %v5191
    %5193 = vmatmul.bf16.gmra.mxu0 %v4968
    %v5194 = vpop.f32.mrf.mxu0
    %v5195 = vadd.f32 %v4986, %v5194
    %v5196 = vpop.f32.mrf.mxu0
    %v5197 = vadd.f32 %v4986, %v5196
    %5198 = vmatmul.bf16.gmra.mxu0 %v4969
    %v5199 = vpop.f32.mrf.mxu0
    %v5200 = vadd.f32 %v4986, %v5199
    %v5201 = vpop.f32.mrf.mxu0
    %v5202 = vadd.f32 %v4986, %v5201
    %5203 = vdwg.mxu0
    %5204 = vadd.xlane.f32.xlu0 %v5045
    %v5205 = vpop.xlane.xlu0 %5204
    %5206 = vadd.xlane.f32.xlu0 %v5047
    %v5207 = vpop.xlane.xlu0 %5206
    %5208 = vadd.xlane.f32.xlu0 %v5050
    %v5209 = vpop.xlane.xlu0 %5208
    %5210 = vadd.xlane.f32.xlu0 %v5052
    %v5211 = vpop.xlane.xlu0 %5210
    %5212 = vadd.xlane.f32.xlu0 %v5055
    %v5213 = vpop.xlane.xlu0 %5212
    %5214 = vadd.xlane.f32.xlu0 %v5057
    %v5215 = vpop.xlane.xlu0 %5214
    %5216 = vadd.xlane.f32.xlu0 %v5060
    %v5217 = vpop.xlane.xlu0 %5216
    %5218 = vadd.xlane.f32.xlu0 %v5062
    %v5219 = vpop.xlane.xlu0 %5218
    %5220 = vadd.xlane.f32.xlu0 %v5065
    %v5221 = vpop.xlane.xlu0 %5220
    %5222 = vadd.xlane.f32.xlu0 %v5067
    %v5223 = vpop.xlane.xlu0 %5222
    %5224 = vadd.xlane.f32.xlu0 %v5070
    %v5225 = vpop.xlane.xlu0 %5224
    %5226 = vadd.xlane.f32.xlu0 %v5072
    %v5227 = vpop.xlane.xlu0 %5226
    %5228 = vadd.xlane.f32.xlu0 %v5075
    %v5229 = vpop.xlane.xlu0 %5228
    %5230 = vadd.xlane.f32.xlu0 %v5077
    %v5231 = vpop.xlane.xlu0 %5230
    %5232 = vadd.xlane.f32.xlu0 %v5080
    %v5233 = vpop.xlane.xlu0 %5232
    %5234 = vadd.xlane.f32.xlu0 %v5082
    %v5235 = vpop.xlane.xlu0 %5234
    %5236 = vadd.xlane.f32.xlu0 %v5085
    %v5237 = vpop.xlane.xlu0 %5236
    %5238 = vadd.xlane.f32.xlu0 %v5087
    %v5239 = vpop.xlane.xlu0 %5238
    %5240 = vadd.xlane.f32.xlu0 %v5090
    %v5241 = vpop.xlane.xlu0 %5240
    %5242 = vadd.xlane.f32.xlu0 %v5092
    %v5243 = vpop.xlane.xlu0 %5242
    %5244 = vadd.xlane.f32.xlu0 %v5095
    %v5245 = vpop.xlane.xlu0 %5244
    %5246 = vadd.xlane.f32.xlu0 %v5097
    %v5247 = vpop.xlane.xlu0 %5246
    %5248 = vadd.xlane.f32.xlu0 %v5100
    %v5249 = vpop.xlane.xlu0 %5248
    %5250 = vadd.xlane.f32.xlu0 %v5102
    %v5251 = vpop.xlane.xlu0 %5250
    %5252 = vadd.xlane.f32.xlu0 %v5105
    %v5253 = vpop.xlane.xlu0 %5252
    %5254 = vadd.xlane.f32.xlu0 %v5107
    %v5255 = vpop.xlane.xlu0 %5254
    %5256 = vadd.xlane.f32.xlu0 %v5110
    %v5257 = vpop.xlane.xlu0 %5256
    %5258 = vadd.xlane.f32.xlu0 %v5112
    %v5259 = vpop.xlane.xlu0 %5258
    %5260 = vadd.xlane.f32.xlu0 %v5115
    %v5261 = vpop.xlane.xlu0 %5260
    %5262 = vadd.xlane.f32.xlu0 %v5117
    %v5263 = vpop.xlane.xlu0 %5262
    %5264 = vadd.xlane.f32.xlu0 %v5120
    %v5265 = vpop.xlane.xlu0 %5264
    %5266 = vadd.xlane.f32.xlu0 %v5122
    %v5267 = vpop.xlane.xlu0 %5266
    %5268 = vadd.xlane.f32.xlu0 %v5125
    %v5269 = vpop.xlane.xlu0 %5268
    %5270 = vadd.xlane.f32.xlu0 %v5127
    %v5271 = vpop.xlane.xlu0 %5270
    %5272 = vadd.xlane.f32.xlu0 %v5130
    %v5273 = vpop.xlane.xlu0 %5272
    %5274 = vadd.xlane.f32.xlu0 %v5132
    %v5275 = vpop.xlane.xlu0 %5274
    %5276 = vadd.xlane.f32.xlu0 %v5135
    %v5277 = vpop.xlane.xlu0 %5276
    %5278 = vadd.xlane.f32.xlu0 %v5137
    %v5279 = vpop.xlane.xlu0 %5278
    %5280 = vadd.xlane.f32.xlu0 %v5140
    %v5281 = vpop.xlane.xlu0 %5280
    %5282 = vadd.xlane.f32.xlu0 %v5142
    %v5283 = vpop.xlane.xlu0 %5282
    %5284 = vadd.xlane.f32.xlu0 %v5145
    %v5285 = vpop.xlane.xlu0 %5284
    %5286 = vadd.xlane.f32.xlu0 %v5147
    %v5287 = vpop.xlane.xlu0 %5286
    %5288 = vadd.xlane.f32.xlu0 %v5150
    %v5289 = vpop.xlane.xlu0 %5288
    %5290 = vadd.xlane.f32.xlu0 %v5152
    %v5291 = vpop.xlane.xlu0 %5290
    %5292 = vadd.xlane.f32.xlu0 %v5155
    %v5293 = vpop.xlane.xlu0 %5292
    %5294 = vadd.xlane.f32.xlu0 %v5157
    %v5295 = vpop.xlane.xlu0 %5294
    %5296 = vadd.xlane.f32.xlu0 %v5160
    %v5297 = vpop.xlane.xlu0 %5296
    %5298 = vadd.xlane.f32.xlu0 %v5162
    %v5299 = vpop.xlane.xlu0 %5298
    %5300 = vadd.xlane.f32.xlu0 %v5165
    %v5301 = vpop.xlane.xlu0 %5300
    %5302 = vadd.xlane.f32.xlu0 %v5167
    %v5303 = vpop.xlane.xlu0 %5302
    %5304 = vadd.xlane.f32.xlu0 %v5170
    %v5305 = vpop.xlane.xlu0 %5304
    %5306 = vadd.xlane.f32.xlu0 %v5172
    %v5307 = vpop.xlane.xlu0 %5306
    %5308 = vadd.xlane.f32.xlu0 %v5175
    %v5309 = vpop.xlane.xlu0 %5308
    %5310 = vadd.xlane.f32.xlu0 %v5177
    %v5311 = vpop.xlane.xlu0 %5310
    %5312 = vadd.xlane.f32.xlu0 %v5180
    %v5313 = vpop.xlane.xlu0 %5312
    %5314 = vadd.xlane.f32.xlu0 %v5182
    %v5315 = vpop.xlane.xlu0 %5314
    %5316 = vadd.xlane.f32.xlu0 %v5185
    %v5317 = vpop.xlane.xlu0 %5316
    %5318 = vadd.xlane.f32.xlu0 %v5187
    %v5319 = vpop.xlane.xlu0 %5318
    %5320 = vadd.xlane.f32.xlu0 %v5190
    %v5321 = vpop.xlane.xlu0 %5320
    %5322 = vadd.xlane.f32.xlu0 %v5192
    %v5323 = vpop.xlane.xlu0 %5322
    %5324 = vadd.xlane.f32.xlu0 %v5195
    %v5325 = vpop.xlane.xlu0 %5324
    %5326 = vadd.xlane.f32.xlu0 %v5197
    %v5327 = vpop.xlane.xlu0 %5326
    %5328 = vadd.xlane.f32.xlu0 %v5200
    %v5329 = vpop.xlane.xlu0 %5328
    %5330 = vadd.xlane.f32.xlu0 %v5202
    %v5331 = vpop.xlane.xlu0 %5330
    %v5332 = vmul.f32 %v5205, %v621
    %v5333 = vmul.f32 %v5207, %v621
    %v5334 = vmul.f32 %v5209, %v621
    %v5335 = vmul.f32 %v5211, %v621
    %v5336 = vmul.f32 %v5213, %v621
    %v5337 = vmul.f32 %v5215, %v621
    %v5338 = vmul.f32 %v5217, %v621
    %v5339 = vmul.f32 %v5219, %v621
    %v5340 = vmul.f32 %v5221, %v621
    %v5341 = vmul.f32 %v5223, %v621
    %v5342 = vmul.f32 %v5225, %v621
    %v5343 = vmul.f32 %v5227, %v621
    %v5344 = vmul.f32 %v5229, %v621
    %v5345 = vmul.f32 %v5231, %v621
    %v5346 = vmul.f32 %v5233, %v621
    %v5347 = vmul.f32 %v5235, %v621
    %v5348 = vmul.f32 %v5237, %v621
    %v5349 = vmul.f32 %v5239, %v621
    %v5350 = vmul.f32 %v5241, %v621
    %v5351 = vmul.f32 %v5243, %v621
    %v5352 = vmul.f32 %v5245, %v621
    %v5353 = vmul.f32 %v5247, %v621
    %v5354 = vmul.f32 %v5249, %v621
    %v5355 = vmul.f32 %v5251, %v621
    %v5356 = vmul.f32 %v5253, %v621
    %v5357 = vmul.f32 %v5255, %v621
    %v5358 = vmul.f32 %v5257, %v621
    %v5359 = vmul.f32 %v5259, %v621
    %v5360 = vmul.f32 %v5261, %v621
    %v5361 = vmul.f32 %v5263, %v621
    %v5362 = vmul.f32 %v5265, %v621
    %v5363 = vmul.f32 %v5267, %v621
    %v5364 = vmul.f32 %v5269, %v621
    %v5365 = vmul.f32 %v5271, %v621
    %v5366 = vmul.f32 %v5273, %v621
    %v5367 = vmul.f32 %v5275, %v621
    %v5368 = vmul.f32 %v5277, %v621
    %v5369 = vmul.f32 %v5279, %v621
    %v5370 = vmul.f32 %v5281, %v621
    %v5371 = vmul.f32 %v5283, %v621
    %v5372 = vmul.f32 %v5285, %v621
    %v5373 = vmul.f32 %v5287, %v621
    %v5374 = vmul.f32 %v5289, %v621
    %v5375 = vmul.f32 %v5291, %v621
    %v5376 = vmul.f32 %v5293, %v621
    %v5377 = vmul.f32 %v5295, %v621
    %v5378 = vmul.f32 %v5297, %v621
    %v5379 = vmul.f32 %v5299, %v621
    %v5380 = vmul.f32 %v5301, %v621
    %v5381 = vmul.f32 %v5303, %v621
    %v5382 = vmul.f32 %v5305, %v621
    %v5383 = vmul.f32 %v5307, %v621
    %v5384 = vmul.f32 %v5309, %v621
    %v5385 = vmul.f32 %v5311, %v621
    %v5386 = vmul.f32 %v5313, %v621
    %v5387 = vmul.f32 %v5315, %v621
    %v5388 = vmul.f32 %v5317, %v621
    %v5389 = vmul.f32 %v5319, %v621
    %v5390 = vmul.f32 %v5321, %v621
    %v5391 = vmul.f32 %v5323, %v621
    %v5392 = vmul.f32 %v5325, %v621
    %v5393 = vmul.f32 %v5327, %v621
    %v5394 = vmul.f32 %v5329, %v621
    %v5395 = vmul.f32 %v5331, %v621
    %v5396 = vsub.f32 %v5045, %v5332
    %v5397 = vsub.f32 %v5047, %v5333
    %v5398 = vsub.f32 %v5050, %v5334
    %v5399 = vsub.f32 %v5052, %v5335
    %v5400 = vsub.f32 %v5055, %v5336
    %v5401 = vsub.f32 %v5057, %v5337
    %v5402 = vsub.f32 %v5060, %v5338
    %v5403 = vsub.f32 %v5062, %v5339
    %v5404 = vsub.f32 %v5065, %v5340
    %v5405 = vsub.f32 %v5067, %v5341
    %v5406 = vsub.f32 %v5070, %v5342
    %v5407 = vsub.f32 %v5072, %v5343
    %v5408 = vsub.f32 %v5075, %v5344
    %v5409 = vsub.f32 %v5077, %v5345
    %v5410 = vsub.f32 %v5080, %v5346
    %v5411 = vsub.f32 %v5082, %v5347
    %v5412 = vsub.f32 %v5085, %v5348
    %v5413 = vsub.f32 %v5087, %v5349
    %v5414 = vsub.f32 %v5090, %v5350
    %v5415 = vsub.f32 %v5092, %v5351
    %v5416 = vsub.f32 %v5095, %v5352
    %v5417 = vsub.f32 %v5097, %v5353
    %v5418 = vsub.f32 %v5100, %v5354
    %v5419 = vsub.f32 %v5102, %v5355
    %v5420 = vsub.f32 %v5105, %v5356
    %v5421 = vsub.f32 %v5107, %v5357
    %v5422 = vsub.f32 %v5110, %v5358
    %v5423 = vsub.f32 %v5112, %v5359
    %v5424 = vsub.f32 %v5115, %v5360
    %v5425 = vsub.f32 %v5117, %v5361
    %v5426 = vsub.f32 %v5120, %v5362
    %v5427 = vsub.f32 %v5122, %v5363
    %v5428 = vsub.f32 %v5125, %v5364
    %v5429 = vsub.f32 %v5127, %v5365
    %v5430 = vsub.f32 %v5130, %v5366
    %v5431 = vsub.f32 %v5132, %v5367
    %v5432 = vsub.f32 %v5135, %v5368
    %v5433 = vsub.f32 %v5137, %v5369
    %v5434 = vsub.f32 %v5140, %v5370
    %v5435 = vsub.f32 %v5142, %v5371
    %v5436 = vsub.f32 %v5145, %v5372
    %v5437 = vsub.f32 %v5147, %v5373
    %v5438 = vsub.f32 %v5150, %v5374
    %v5439 = vsub.f32 %v5152, %v5375
    %v5440 = vsub.f32 %v5155, %v5376
    %v5441 = vsub.f32 %v5157, %v5377
    %v5442 = vsub.f32 %v5160, %v5378
    %v5443 = vsub.f32 %v5162, %v5379
    %v5444 = vsub.f32 %v5165, %v5380
    %v5445 = vsub.f32 %v5167, %v5381
    %v5446 = vsub.f32 %v5170, %v5382
    %v5447 = vsub.f32 %v5172, %v5383
    %v5448 = vsub.f32 %v5175, %v5384
    %v5449 = vsub.f32 %v5177, %v5385
    %v5450 = vsub.f32 %v5180, %v5386
    %v5451 = vsub.f32 %v5182, %v5387
    %v5452 = vsub.f32 %v5185, %v5388
    %v5453 = vsub.f32 %v5187, %v5389
    %v5454 = vsub.f32 %v5190, %v5390
    %v5455 = vsub.f32 %v5192, %v5391
    %v5456 = vsub.f32 %v5195, %v5392
    %v5457 = vsub.f32 %v5197, %v5393
    %v5458 = vsub.f32 %v5200, %v5394
    %v5459 = vsub.f32 %v5202, %v5395
    %v5460 = vmul.f32 %v5396, %v5396
    %v5461 = vmul.f32 %v5397, %v5397
    %v5462 = vmul.f32 %v5398, %v5398
    %v5463 = vmul.f32 %v5399, %v5399
    %v5464 = vmul.f32 %v5400, %v5400
    %v5465 = vmul.f32 %v5401, %v5401
    %v5466 = vmul.f32 %v5402, %v5402
    %v5467 = vmul.f32 %v5403, %v5403
    %v5468 = vmul.f32 %v5404, %v5404
    %v5469 = vmul.f32 %v5405, %v5405
    %v5470 = vmul.f32 %v5406, %v5406
    %v5471 = vmul.f32 %v5407, %v5407
    %v5472 = vmul.f32 %v5408, %v5408
    %v5473 = vmul.f32 %v5409, %v5409
    %v5474 = vmul.f32 %v5410, %v5410
    %v5475 = vmul.f32 %v5411, %v5411
    %v5476 = vmul.f32 %v5412, %v5412
    %v5477 = vmul.f32 %v5413, %v5413
    %v5478 = vmul.f32 %v5414, %v5414
    %v5479 = vmul.f32 %v5415, %v5415
    %v5480 = vmul.f32 %v5416, %v5416
    %v5481 = vmul.f32 %v5417, %v5417
    %v5482 = vmul.f32 %v5418, %v5418
    %v5483 = vmul.f32 %v5419, %v5419
    %v5484 = vmul.f32 %v5420, %v5420
    %v5485 = vmul.f32 %v5421, %v5421
    %v5486 = vmul.f32 %v5422, %v5422
    %v5487 = vmul.f32 %v5423, %v5423
    %v5488 = vmul.f32 %v5424, %v5424
    %v5489 = vmul.f32 %v5425, %v5425
    %v5490 = vmul.f32 %v5426, %v5426
    %v5491 = vmul.f32 %v5427, %v5427
    %v5492 = vmul.f32 %v5428, %v5428
    %v5493 = vmul.f32 %v5429, %v5429
    %v5494 = vmul.f32 %v5430, %v5430
    %v5495 = vmul.f32 %v5431, %v5431
    %v5496 = vmul.f32 %v5432, %v5432
    %v5497 = vmul.f32 %v5433, %v5433
    %v5498 = vmul.f32 %v5434, %v5434
    %v5499 = vmul.f32 %v5435, %v5435
    %v5500 = vmul.f32 %v5436, %v5436
    %v5501 = vmul.f32 %v5437, %v5437
    %v5502 = vmul.f32 %v5438, %v5438
    %v5503 = vmul.f32 %v5439, %v5439
    %v5504 = vmul.f32 %v5440, %v5440
    %v5505 = vmul.f32 %v5441, %v5441
    %v5506 = vmul.f32 %v5442, %v5442
    %v5507 = vmul.f32 %v5443, %v5443
    %v5508 = vmul.f32 %v5444, %v5444
    %v5509 = vmul.f32 %v5445, %v5445
    %v5510 = vmul.f32 %v5446, %v5446
    %v5511 = vmul.f32 %v5447, %v5447
    %v5512 = vmul.f32 %v5448, %v5448
    %v5513 = vmul.f32 %v5449, %v5449
    %v5514 = vmul.f32 %v5450, %v5450
    %v5515 = vmul.f32 %v5451, %v5451
    %v5516 = vmul.f32 %v5452, %v5452
    %v5517 = vmul.f32 %v5453, %v5453
    %v5518 = vmul.f32 %v5454, %v5454
    %v5519 = vmul.f32 %v5455, %v5455
    %v5520 = vmul.f32 %v5456, %v5456
    %v5521 = vmul.f32 %v5457, %v5457
    %v5522 = vmul.f32 %v5458, %v5458
    %v5523 = vmul.f32 %v5459, %v5459
    %5524 = vadd.xlane.f32.xlu0 %v5460
    %v5525 = vpop.xlane.xlu0 %5524
    %5526 = vadd.xlane.f32.xlu0 %v5461
    %v5527 = vpop.xlane.xlu0 %5526
    %5528 = vadd.xlane.f32.xlu0 %v5462
    %v5529 = vpop.xlane.xlu0 %5528
    %5530 = vadd.xlane.f32.xlu0 %v5463
    %v5531 = vpop.xlane.xlu0 %5530
    %5532 = vadd.xlane.f32.xlu0 %v5464
    %v5533 = vpop.xlane.xlu0 %5532
    %5534 = vadd.xlane.f32.xlu0 %v5465
    %v5535 = vpop.xlane.xlu0 %5534
    %5536 = vadd.xlane.f32.xlu0 %v5466
    %v5537 = vpop.xlane.xlu0 %5536
    %5538 = vadd.xlane.f32.xlu0 %v5467
    %v5539 = vpop.xlane.xlu0 %5538
    %5540 = vadd.xlane.f32.xlu0 %v5468
    %v5541 = vpop.xlane.xlu0 %5540
    %5542 = vadd.xlane.f32.xlu0 %v5469
    %v5543 = vpop.xlane.xlu0 %5542
    %5544 = vadd.xlane.f32.xlu0 %v5470
    %v5545 = vpop.xlane.xlu0 %5544
    %5546 = vadd.xlane.f32.xlu0 %v5471
    %v5547 = vpop.xlane.xlu0 %5546
    %5548 = vadd.xlane.f32.xlu0 %v5472
    %v5549 = vpop.xlane.xlu0 %5548
    %5550 = vadd.xlane.f32.xlu0 %v5473
    %v5551 = vpop.xlane.xlu0 %5550
    %5552 = vadd.xlane.f32.xlu0 %v5474
    %v5553 = vpop.xlane.xlu0 %5552
    %5554 = vadd.xlane.f32.xlu0 %v5475
    %v5555 = vpop.xlane.xlu0 %5554
    %5556 = vadd.xlane.f32.xlu0 %v5476
    %v5557 = vpop.xlane.xlu0 %5556
    %5558 = vadd.xlane.f32.xlu0 %v5477
    %v5559 = vpop.xlane.xlu0 %5558
    %5560 = vadd.xlane.f32.xlu0 %v5478
    %v5561 = vpop.xlane.xlu0 %5560
    %5562 = vadd.xlane.f32.xlu0 %v5479
    %v5563 = vpop.xlane.xlu0 %5562
    %5564 = vadd.xlane.f32.xlu0 %v5480
    %v5565 = vpop.xlane.xlu0 %5564
    %5566 = vadd.xlane.f32.xlu0 %v5481
    %v5567 = vpop.xlane.xlu0 %5566
    %5568 = vadd.xlane.f32.xlu0 %v5482
    %v5569 = vpop.xlane.xlu0 %5568
    %5570 = vadd.xlane.f32.xlu0 %v5483
    %v5571 = vpop.xlane.xlu0 %5570
    %5572 = vadd.xlane.f32.xlu0 %v5484
    %v5573 = vpop.xlane.xlu0 %5572
    %5574 = vadd.xlane.f32.xlu0 %v5485
    %v5575 = vpop.xlane.xlu0 %5574
    %5576 = vadd.xlane.f32.xlu0 %v5486
    %v5577 = vpop.xlane.xlu0 %5576
    %5578 = vadd.xlane.f32.xlu0 %v5487
    %v5579 = vpop.xlane.xlu0 %5578
    %5580 = vadd.xlane.f32.xlu0 %v5488
    %v5581 = vpop.xlane.xlu0 %5580
    %5582 = vadd.xlane.f32.xlu0 %v5489
    %v5583 = vpop.xlane.xlu0 %5582
    %5584 = vadd.xlane.f32.xlu0 %v5490
    %v5585 = vpop.xlane.xlu0 %5584
    %5586 = vadd.xlane.f32.xlu0 %v5491
    %v5587 = vpop.xlane.xlu0 %5586
    %5588 = vadd.xlane.f32.xlu0 %v5492
    %v5589 = vpop.xlane.xlu0 %5588
    %5590 = vadd.xlane.f32.xlu0 %v5493
    %v5591 = vpop.xlane.xlu0 %5590
    %5592 = vadd.xlane.f32.xlu0 %v5494
    %v5593 = vpop.xlane.xlu0 %5592
    %5594 = vadd.xlane.f32.xlu0 %v5495
    %v5595 = vpop.xlane.xlu0 %5594
    %5596 = vadd.xlane.f32.xlu0 %v5496
    %v5597 = vpop.xlane.xlu0 %5596
    %5598 = vadd.xlane.f32.xlu0 %v5497
    %v5599 = vpop.xlane.xlu0 %5598
    %5600 = vadd.xlane.f32.xlu0 %v5498
    %v5601 = vpop.xlane.xlu0 %5600
    %5602 = vadd.xlane.f32.xlu0 %v5499
    %v5603 = vpop.xlane.xlu0 %5602
    %5604 = vadd.xlane.f32.xlu0 %v5500
    %v5605 = vpop.xlane.xlu0 %5604
    %5606 = vadd.xlane.f32.xlu0 %v5501
    %v5607 = vpop.xlane.xlu0 %5606
    %5608 = vadd.xlane.f32.xlu0 %v5502
    %v5609 = vpop.xlane.xlu0 %5608
    %5610 = vadd.xlane.f32.xlu0 %v5503
    %v5611 = vpop.xlane.xlu0 %5610
    %5612 = vadd.xlane.f32.xlu0 %v5504
    %v5613 = vpop.xlane.xlu0 %5612
    %5614 = vadd.xlane.f32.xlu0 %v5505
    %v5615 = vpop.xlane.xlu0 %5614
    %5616 = vadd.xlane.f32.xlu0 %v5506
    %v5617 = vpop.xlane.xlu0 %5616
    %5618 = vadd.xlane.f32.xlu0 %v5507
    %v5619 = vpop.xlane.xlu0 %5618
    %5620 = vadd.xlane.f32.xlu0 %v5508
    %v5621 = vpop.xlane.xlu0 %5620
    %5622 = vadd.xlane.f32.xlu0 %v5509
    %v5623 = vpop.xlane.xlu0 %5622
    %5624 = vadd.xlane.f32.xlu0 %v5510
    %v5625 = vpop.xlane.xlu0 %5624
    %5626 = vadd.xlane.f32.xlu0 %v5511
    %v5627 = vpop.xlane.xlu0 %5626
    %5628 = vadd.xlane.f32.xlu0 %v5512
    %v5629 = vpop.xlane.xlu0 %5628
    %5630 = vadd.xlane.f32.xlu0 %v5513
    %v5631 = vpop.xlane.xlu0 %5630
    %5632 = vadd.xlane.f32.xlu0 %v5514
    %v5633 = vpop.xlane.xlu0 %5632
    %5634 = vadd.xlane.f32.xlu0 %v5515
    %v5635 = vpop.xlane.xlu0 %5634
    %5636 = vadd.xlane.f32.xlu0 %v5516
    %v5637 = vpop.xlane.xlu0 %5636
    %5638 = vadd.xlane.f32.xlu0 %v5517
    %v5639 = vpop.xlane.xlu0 %5638
    %5640 = vadd.xlane.f32.xlu0 %v5518
    %v5641 = vpop.xlane.xlu0 %5640
    %5642 = vadd.xlane.f32.xlu0 %v5519
    %v5643 = vpop.xlane.xlu0 %5642
    %5644 = vadd.xlane.f32.xlu0 %v5520
    %v5645 = vpop.xlane.xlu0 %5644
    %5646 = vadd.xlane.f32.xlu0 %v5521
    %v5647 = vpop.xlane.xlu0 %5646
    %5648 = vadd.xlane.f32.xlu0 %v5522
    %v5649 = vpop.xlane.xlu0 %5648
    %5650 = vadd.xlane.f32.xlu0 %v5523
    %v5651 = vpop.xlane.xlu0 %5650
    %v5652 = vmul.f32 %v5525, %v621
    %v5653 = vmul.f32 %v5527, %v621
    %v5654 = vmul.f32 %v5529, %v621
    %v5655 = vmul.f32 %v5531, %v621
    %v5656 = vmul.f32 %v5533, %v621
    %v5657 = vmul.f32 %v5535, %v621
    %v5658 = vmul.f32 %v5537, %v621
    %v5659 = vmul.f32 %v5539, %v621
    %v5660 = vmul.f32 %v5541, %v621
    %v5661 = vmul.f32 %v5543, %v621
    %v5662 = vmul.f32 %v5545, %v621
    %v5663 = vmul.f32 %v5547, %v621
    %v5664 = vmul.f32 %v5549, %v621
    %v5665 = vmul.f32 %v5551, %v621
    %v5666 = vmul.f32 %v5553, %v621
    %v5667 = vmul.f32 %v5555, %v621
    %v5668 = vmul.f32 %v5557, %v621
    %v5669 = vmul.f32 %v5559, %v621
    %v5670 = vmul.f32 %v5561, %v621
    %v5671 = vmul.f32 %v5563, %v621
    %v5672 = vmul.f32 %v5565, %v621
    %v5673 = vmul.f32 %v5567, %v621
    %v5674 = vmul.f32 %v5569, %v621
    %v5675 = vmul.f32 %v5571, %v621
    %v5676 = vmul.f32 %v5573, %v621
    %v5677 = vmul.f32 %v5575, %v621
    %v5678 = vmul.f32 %v5577, %v621
    %v5679 = vmul.f32 %v5579, %v621
    %v5680 = vmul.f32 %v5581, %v621
    %v5681 = vmul.f32 %v5583, %v621
    %v5682 = vmul.f32 %v5585, %v621
    %v5683 = vmul.f32 %v5587, %v621
    %v5684 = vmul.f32 %v5589, %v621
    %v5685 = vmul.f32 %v5591, %v621
    %v5686 = vmul.f32 %v5593, %v621
    %v5687 = vmul.f32 %v5595, %v621
    %v5688 = vmul.f32 %v5597, %v621
    %v5689 = vmul.f32 %v5599, %v621
    %v5690 = vmul.f32 %v5601, %v621
    %v5691 = vmul.f32 %v5603, %v621
    %v5692 = vmul.f32 %v5605, %v621
    %v5693 = vmul.f32 %v5607, %v621
    %v5694 = vmul.f32 %v5609, %v621
    %v5695 = vmul.f32 %v5611, %v621
    %v5696 = vmul.f32 %v5613, %v621
    %v5697 = vmul.f32 %v5615, %v621
    %v5698 = vmul.f32 %v5617, %v621
    %v5699 = vmul.f32 %v5619, %v621
    %v5700 = vmul.f32 %v5621, %v621
    %v5701 = vmul.f32 %v5623, %v621
    %v5702 = vmul.f32 %v5625, %v621
    %v5703 = vmul.f32 %v5627, %v621
    %v5704 = vmul.f32 %v5629, %v621
    %v5705 = vmul.f32 %v5631, %v621
    %v5706 = vmul.f32 %v5633, %v621
    %v5707 = vmul.f32 %v5635, %v621
    %v5708 = vmul.f32 %v5637, %v621
    %v5709 = vmul.f32 %v5639, %v621
    %v5710 = vmul.f32 %v5641, %v621
    %v5711 = vmul.f32 %v5643, %v621
    %v5712 = vmul.f32 %v5645, %v621
    %v5713 = vmul.f32 %v5647, %v621
    %v5714 = vmul.f32 %v5649, %v621
    %v5715 = vmul.f32 %v5651, %v621
    %v5716 = vadd.f32 %v5652, 1e-06
    %v5717 = vadd.f32 %v5653, 1e-06
    %v5718 = vadd.f32 %v5654, 1e-06
    %v5719 = vadd.f32 %v5655, 1e-06
    %v5720 = vadd.f32 %v5656, 1e-06
    %v5721 = vadd.f32 %v5657, 1e-06
    %v5722 = vadd.f32 %v5658, 1e-06
    %v5723 = vadd.f32 %v5659, 1e-06
    %v5724 = vadd.f32 %v5660, 1e-06
    %v5725 = vadd.f32 %v5661, 1e-06
    %v5726 = vadd.f32 %v5662, 1e-06
    %v5727 = vadd.f32 %v5663, 1e-06
    %v5728 = vadd.f32 %v5664, 1e-06
    %v5729 = vadd.f32 %v5665, 1e-06
    %v5730 = vadd.f32 %v5666, 1e-06
    %v5731 = vadd.f32 %v5667, 1e-06
    %v5732 = vadd.f32 %v5668, 1e-06
    %v5733 = vadd.f32 %v5669, 1e-06
    %v5734 = vadd.f32 %v5670, 1e-06
    %v5735 = vadd.f32 %v5671, 1e-06
    %v5736 = vadd.f32 %v5672, 1e-06
    %v5737 = vadd.f32 %v5673, 1e-06
    %v5738 = vadd.f32 %v5674, 1e-06
    %v5739 = vadd.f32 %v5675, 1e-06
    %v5740 = vadd.f32 %v5676, 1e-06
    %v5741 = vadd.f32 %v5677, 1e-06
    %v5742 = vadd.f32 %v5678, 1e-06
    %v5743 = vadd.f32 %v5679, 1e-06
    %v5744 = vadd.f32 %v5680, 1e-06
    %v5745 = vadd.f32 %v5681, 1e-06
    %v5746 = vadd.f32 %v5682, 1e-06
    %v5747 = vadd.f32 %v5683, 1e-06
    %v5748 = vadd.f32 %v5684, 1e-06
    %v5749 = vadd.f32 %v5685, 1e-06
    %v5750 = vadd.f32 %v5686, 1e-06
    %v5751 = vadd.f32 %v5687, 1e-06
    %v5752 = vadd.f32 %v5688, 1e-06
    %v5753 = vadd.f32 %v5689, 1e-06
    %v5754 = vadd.f32 %v5690, 1e-06
    %v5755 = vadd.f32 %v5691, 1e-06
    %v5756 = vadd.f32 %v5692, 1e-06
    %v5757 = vadd.f32 %v5693, 1e-06
    %v5758 = vadd.f32 %v5694, 1e-06
    %v5759 = vadd.f32 %v5695, 1e-06
    %v5760 = vadd.f32 %v5696, 1e-06
    %v5761 = vadd.f32 %v5697, 1e-06
    %v5762 = vadd.f32 %v5698, 1e-06
    %v5763 = vadd.f32 %v5699, 1e-06
    %v5764 = vadd.f32 %v5700, 1e-06
    %v5765 = vadd.f32 %v5701, 1e-06
    %v5766 = vadd.f32 %v5702, 1e-06
    %v5767 = vadd.f32 %v5703, 1e-06
    %v5768 = vadd.f32 %v5704, 1e-06
    %v5769 = vadd.f32 %v5705, 1e-06
    %v5770 = vadd.f32 %v5706, 1e-06
    %v5771 = vadd.f32 %v5707, 1e-06
    %v5772 = vadd.f32 %v5708, 1e-06
    %v5773 = vadd.f32 %v5709, 1e-06
    %v5774 = vadd.f32 %v5710, 1e-06
    %v5775 = vadd.f32 %v5711, 1e-06
    %v5776 = vadd.f32 %v5712, 1e-06
    %v5777 = vadd.f32 %v5713, 1e-06
    %v5778 = vadd.f32 %v5714, 1e-06
    %v5779 = vadd.f32 %v5715, 1e-06
    %v5780 = vrsqrt.pop %v5716
    %v5781 = vmul.f32 %v5780, %v5716
    %v5782 = vmul.f32 %v5781, %v5780
    %v5783 = vmul.f32 0.5, %v5782
    %v5784 = vsub.f32 1.5, %v5783
    %v5785 = vmul.f32 %v5780, %v5784
    %vm5786 = vweird.f32 %v5716
    %vm5787 = vweird.f32 %v5780
    %vm5788 = vmor %vm5786, %vm5787
    %v5789 = vsel %vm5788, %v5780, %v5785
    %v5790 = vrsqrt.pop %v5717
    %v5791 = vmul.f32 %v5790, %v5717
    %v5792 = vmul.f32 %v5791, %v5790
    %v5793 = vmul.f32 0.5, %v5792
    %v5794 = vsub.f32 1.5, %v5793
    %v5795 = vmul.f32 %v5790, %v5794
    %vm5796 = vweird.f32 %v5717
    %vm5797 = vweird.f32 %v5790
    %vm5798 = vmor %vm5796, %vm5797
    %v5799 = vsel %vm5798, %v5790, %v5795
    %v5800 = vrsqrt.pop %v5718
    %v5801 = vmul.f32 %v5800, %v5718
    %v5802 = vmul.f32 %v5801, %v5800
    %v5803 = vmul.f32 0.5, %v5802
    %v5804 = vsub.f32 1.5, %v5803
    %v5805 = vmul.f32 %v5800, %v5804
    %vm5806 = vweird.f32 %v5718
    %vm5807 = vweird.f32 %v5800
    %vm5808 = vmor %vm5806, %vm5807
    %v5809 = vsel %vm5808, %v5800, %v5805
    %v5810 = vrsqrt.pop %v5719
    %v5811 = vmul.f32 %v5810, %v5719
    %v5812 = vmul.f32 %v5811, %v5810
    %v5813 = vmul.f32 0.5, %v5812
    %v5814 = vsub.f32 1.5, %v5813
    %v5815 = vmul.f32 %v5810, %v5814
    %vm5816 = vweird.f32 %v5719
    %vm5817 = vweird.f32 %v5810
    %vm5818 = vmor %vm5816, %vm5817
    %v5819 = vsel %vm5818, %v5810, %v5815
    %v5820 = vrsqrt.pop %v5720
    %v5821 = vmul.f32 %v5820, %v5720
    %v5822 = vmul.f32 %v5821, %v5820
    %v5823 = vmul.f32 0.5, %v5822
    %v5824 = vsub.f32 1.5, %v5823
    %v5825 = vmul.f32 %v5820, %v5824
    %vm5826 = vweird.f32 %v5720
    %vm5827 = vweird.f32 %v5820
    %vm5828 = vmor %vm5826, %vm5827
    %v5829 = vsel %vm5828, %v5820, %v5825
    %v5830 = vrsqrt.pop %v5721
    %v5831 = vmul.f32 %v5830, %v5721
    %v5832 = vmul.f32 %v5831, %v5830
    %v5833 = vmul.f32 0.5, %v5832
    %v5834 = vsub.f32 1.5, %v5833
    %v5835 = vmul.f32 %v5830, %v5834
    %vm5836 = vweird.f32 %v5721
    %vm5837 = vweird.f32 %v5830
    %vm5838 = vmor %vm5836, %vm5837
    %v5839 = vsel %vm5838, %v5830, %v5835
    %v5840 = vrsqrt.pop %v5722
    %v5841 = vmul.f32 %v5840, %v5722
    %v5842 = vmul.f32 %v5841, %v5840
    %v5843 = vmul.f32 0.5, %v5842
    %v5844 = vsub.f32 1.5, %v5843
    %v5845 = vmul.f32 %v5840, %v5844
    %vm5846 = vweird.f32 %v5722
    %vm5847 = vweird.f32 %v5840
    %vm5848 = vmor %vm5846, %vm5847
    %v5849 = vsel %vm5848, %v5840, %v5845
    %v5850 = vrsqrt.pop %v5723
    %v5851 = vmul.f32 %v5850, %v5723
    %v5852 = vmul.f32 %v5851, %v5850
    %v5853 = vmul.f32 0.5, %v5852
    %v5854 = vsub.f32 1.5, %v5853
    %v5855 = vmul.f32 %v5850, %v5854
    %vm5856 = vweird.f32 %v5723
    %vm5857 = vweird.f32 %v5850
    %vm5858 = vmor %vm5856, %vm5857
    %v5859 = vsel %vm5858, %v5850, %v5855
    %v5860 = vrsqrt.pop %v5724
    %v5861 = vmul.f32 %v5860, %v5724
    %v5862 = vmul.f32 %v5861, %v5860
    %v5863 = vmul.f32 0.5, %v5862
    %v5864 = vsub.f32 1.5, %v5863
    %v5865 = vmul.f32 %v5860, %v5864
    %vm5866 = vweird.f32 %v5724
    %vm5867 = vweird.f32 %v5860
    %vm5868 = vmor %vm5866, %vm5867
    %v5869 = vsel %vm5868, %v5860, %v5865
    %v5870 = vrsqrt.pop %v5725
    %v5871 = vmul.f32 %v5870, %v5725
    %v5872 = vmul.f32 %v5871, %v5870
    %v5873 = vmul.f32 0.5, %v5872
    %v5874 = vsub.f32 1.5, %v5873
    %v5875 = vmul.f32 %v5870, %v5874
    %vm5876 = vweird.f32 %v5725
    %vm5877 = vweird.f32 %v5870
    %vm5878 = vmor %vm5876, %vm5877
    %v5879 = vsel %vm5878, %v5870, %v5875
    %v5880 = vrsqrt.pop %v5726
    %v5881 = vmul.f32 %v5880, %v5726
    %v5882 = vmul.f32 %v5881, %v5880
    %v5883 = vmul.f32 0.5, %v5882
    %v5884 = vsub.f32 1.5, %v5883
    %v5885 = vmul.f32 %v5880, %v5884
    %vm5886 = vweird.f32 %v5726
    %vm5887 = vweird.f32 %v5880
    %vm5888 = vmor %vm5886, %vm5887
    %v5889 = vsel %vm5888, %v5880, %v5885
    %v5890 = vrsqrt.pop %v5727
    %v5891 = vmul.f32 %v5890, %v5727
    %v5892 = vmul.f32 %v5891, %v5890
    %v5893 = vmul.f32 0.5, %v5892
    %v5894 = vsub.f32 1.5, %v5893
    %v5895 = vmul.f32 %v5890, %v5894
    %vm5896 = vweird.f32 %v5727
    %vm5897 = vweird.f32 %v5890
    %vm5898 = vmor %vm5896, %vm5897
    %v5899 = vsel %vm5898, %v5890, %v5895
    %v5900 = vrsqrt.pop %v5728
    %v5901 = vmul.f32 %v5900, %v5728
    %v5902 = vmul.f32 %v5901, %v5900
    %v5903 = vmul.f32 0.5, %v5902
    %v5904 = vsub.f32 1.5, %v5903
    %v5905 = vmul.f32 %v5900, %v5904
    %vm5906 = vweird.f32 %v5728
    %vm5907 = vweird.f32 %v5900
    %vm5908 = vmor %vm5906, %vm5907
    %v5909 = vsel %vm5908, %v5900, %v5905
    %v5910 = vrsqrt.pop %v5729
    %v5911 = vmul.f32 %v5910, %v5729
    %v5912 = vmul.f32 %v5911, %v5910
    %v5913 = vmul.f32 0.5, %v5912
    %v5914 = vsub.f32 1.5, %v5913
    %v5915 = vmul.f32 %v5910, %v5914
    %vm5916 = vweird.f32 %v5729
    %vm5917 = vweird.f32 %v5910
    %vm5918 = vmor %vm5916, %vm5917
    %v5919 = vsel %vm5918, %v5910, %v5915
    %v5920 = vrsqrt.pop %v5730
    %v5921 = vmul.f32 %v5920, %v5730
    %v5922 = vmul.f32 %v5921, %v5920
    %v5923 = vmul.f32 0.5, %v5922
    %v5924 = vsub.f32 1.5, %v5923
    %v5925 = vmul.f32 %v5920, %v5924
    %vm5926 = vweird.f32 %v5730
    %vm5927 = vweird.f32 %v5920
    %vm5928 = vmor %vm5926, %vm5927
    %v5929 = vsel %vm5928, %v5920, %v5925
    %v5930 = vrsqrt.pop %v5731
    %v5931 = vmul.f32 %v5930, %v5731
    %v5932 = vmul.f32 %v5931, %v5930
    %v5933 = vmul.f32 0.5, %v5932
    %v5934 = vsub.f32 1.5, %v5933
    %v5935 = vmul.f32 %v5930, %v5934
    %vm5936 = vweird.f32 %v5731
    %vm5937 = vweird.f32 %v5930
    %vm5938 = vmor %vm5936, %vm5937
    %v5939 = vsel %vm5938, %v5930, %v5935
    %v5940 = vrsqrt.pop %v5732
    %v5941 = vmul.f32 %v5940, %v5732
    %v5942 = vmul.f32 %v5941, %v5940
    %v5943 = vmul.f32 0.5, %v5942
    %v5944 = vsub.f32 1.5, %v5943
    %v5945 = vmul.f32 %v5940, %v5944
    %vm5946 = vweird.f32 %v5732
    %vm5947 = vweird.f32 %v5940
    %vm5948 = vmor %vm5946, %vm5947
    %v5949 = vsel %vm5948, %v5940, %v5945
    %v5950 = vrsqrt.pop %v5733
    %v5951 = vmul.f32 %v5950, %v5733
    %v5952 = vmul.f32 %v5951, %v5950
    %v5953 = vmul.f32 0.5, %v5952
    %v5954 = vsub.f32 1.5, %v5953
    %v5955 = vmul.f32 %v5950, %v5954
    %vm5956 = vweird.f32 %v5733
    %vm5957 = vweird.f32 %v5950
    %vm5958 = vmor %vm5956, %vm5957
    %v5959 = vsel %vm5958, %v5950, %v5955
    %v5960 = vrsqrt.pop %v5734
    %v5961 = vmul.f32 %v5960, %v5734
    %v5962 = vmul.f32 %v5961, %v5960
    %v5963 = vmul.f32 0.5, %v5962
    %v5964 = vsub.f32 1.5, %v5963
    %v5965 = vmul.f32 %v5960, %v5964
    %vm5966 = vweird.f32 %v5734
    %vm5967 = vweird.f32 %v5960
    %vm5968 = vmor %vm5966, %vm5967
    %v5969 = vsel %vm5968, %v5960, %v5965
    %v5970 = vrsqrt.pop %v5735
    %v5971 = vmul.f32 %v5970, %v5735
    %v5972 = vmul.f32 %v5971, %v5970
    %v5973 = vmul.f32 0.5, %v5972
    %v5974 = vsub.f32 1.5, %v5973
    %v5975 = vmul.f32 %v5970, %v5974
    %vm5976 = vweird.f32 %v5735
    %vm5977 = vweird.f32 %v5970
    %vm5978 = vmor %vm5976, %vm5977
    %v5979 = vsel %vm5978, %v5970, %v5975
    %v5980 = vrsqrt.pop %v5736
    %v5981 = vmul.f32 %v5980, %v5736
    %v5982 = vmul.f32 %v5981, %v5980
    %v5983 = vmul.f32 0.5, %v5982
    %v5984 = vsub.f32 1.5, %v5983
    %v5985 = vmul.f32 %v5980, %v5984
    %vm5986 = vweird.f32 %v5736
    %vm5987 = vweird.f32 %v5980
    %vm5988 = vmor %vm5986, %vm5987
    %v5989 = vsel %vm5988, %v5980, %v5985
    %v5990 = vrsqrt.pop %v5737
    %v5991 = vmul.f32 %v5990, %v5737
    %v5992 = vmul.f32 %v5991, %v5990
    %v5993 = vmul.f32 0.5, %v5992
    %v5994 = vsub.f32 1.5, %v5993
    %v5995 = vmul.f32 %v5990, %v5994
    %vm5996 = vweird.f32 %v5737
    %vm5997 = vweird.f32 %v5990
    %vm5998 = vmor %vm5996, %vm5997
    %v5999 = vsel %vm5998, %v5990, %v5995
    %v6000 = vrsqrt.pop %v5738
    %v6001 = vmul.f32 %v6000, %v5738
    %v6002 = vmul.f32 %v6001, %v6000
    %v6003 = vmul.f32 0.5, %v6002
    %v6004 = vsub.f32 1.5, %v6003
    %v6005 = vmul.f32 %v6000, %v6004
    %vm6006 = vweird.f32 %v5738
    %vm6007 = vweird.f32 %v6000
    %vm6008 = vmor %vm6006, %vm6007
    %v6009 = vsel %vm6008, %v6000, %v6005
    %v6010 = vrsqrt.pop %v5739
    %v6011 = vmul.f32 %v6010, %v5739
    %v6012 = vmul.f32 %v6011, %v6010
    %v6013 = vmul.f32 0.5, %v6012
    %v6014 = vsub.f32 1.5, %v6013
    %v6015 = vmul.f32 %v6010, %v6014
    %vm6016 = vweird.f32 %v5739
    %vm6017 = vweird.f32 %v6010
    %vm6018 = vmor %vm6016, %vm6017
    %v6019 = vsel %vm6018, %v6010, %v6015
    %v6020 = vrsqrt.pop %v5740
    %v6021 = vmul.f32 %v6020, %v5740
    %v6022 = vmul.f32 %v6021, %v6020
    %v6023 = vmul.f32 0.5, %v6022
    %v6024 = vsub.f32 1.5, %v6023
    %v6025 = vmul.f32 %v6020, %v6024
    %vm6026 = vweird.f32 %v5740
    %vm6027 = vweird.f32 %v6020
    %vm6028 = vmor %vm6026, %vm6027
    %v6029 = vsel %vm6028, %v6020, %v6025
    %v6030 = vrsqrt.pop %v5741
    %v6031 = vmul.f32 %v6030, %v5741
    %v6032 = vmul.f32 %v6031, %v6030
    %v6033 = vmul.f32 0.5, %v6032
    %v6034 = vsub.f32 1.5, %v6033
    %v6035 = vmul.f32 %v6030, %v6034
    %vm6036 = vweird.f32 %v5741
    %vm6037 = vweird.f32 %v6030
    %vm6038 = vmor %vm6036, %vm6037
    %v6039 = vsel %vm6038, %v6030, %v6035
    %v6040 = vrsqrt.pop %v5742
    %v6041 = vmul.f32 %v6040, %v5742
    %v6042 = vmul.f32 %v6041, %v6040
    %v6043 = vmul.f32 0.5, %v6042
    %v6044 = vsub.f32 1.5, %v6043
    %v6045 = vmul.f32 %v6040, %v6044
    %vm6046 = vweird.f32 %v5742
    %vm6047 = vweird.f32 %v6040
    %vm6048 = vmor %vm6046, %vm6047
    %v6049 = vsel %vm6048, %v6040, %v6045
    %v6050 = vrsqrt.pop %v5743
    %v6051 = vmul.f32 %v6050, %v5743
    %v6052 = vmul.f32 %v6051, %v6050
    %v6053 = vmul.f32 0.5, %v6052
    %v6054 = vsub.f32 1.5, %v6053
    %v6055 = vmul.f32 %v6050, %v6054
    %vm6056 = vweird.f32 %v5743
    %vm6057 = vweird.f32 %v6050
    %vm6058 = vmor %vm6056, %vm6057
    %v6059 = vsel %vm6058, %v6050, %v6055
    %v6060 = vrsqrt.pop %v5744
    %v6061 = vmul.f32 %v6060, %v5744
    %v6062 = vmul.f32 %v6061, %v6060
    %v6063 = vmul.f32 0.5, %v6062
    %v6064 = vsub.f32 1.5, %v6063
    %v6065 = vmul.f32 %v6060, %v6064
    %vm6066 = vweird.f32 %v5744
    %vm6067 = vweird.f32 %v6060
    %vm6068 = vmor %vm6066, %vm6067
    %v6069 = vsel %vm6068, %v6060, %v6065
    %v6070 = vrsqrt.pop %v5745
    %v6071 = vmul.f32 %v6070, %v5745
    %v6072 = vmul.f32 %v6071, %v6070
    %v6073 = vmul.f32 0.5, %v6072
    %v6074 = vsub.f32 1.5, %v6073
    %v6075 = vmul.f32 %v6070, %v6074
    %vm6076 = vweird.f32 %v5745
    %vm6077 = vweird.f32 %v6070
    %vm6078 = vmor %vm6076, %vm6077
    %v6079 = vsel %vm6078, %v6070, %v6075
    %v6080 = vrsqrt.pop %v5746
    %v6081 = vmul.f32 %v6080, %v5746
    %v6082 = vmul.f32 %v6081, %v6080
    %v6083 = vmul.f32 0.5, %v6082
    %v6084 = vsub.f32 1.5, %v6083
    %v6085 = vmul.f32 %v6080, %v6084
    %vm6086 = vweird.f32 %v5746
    %vm6087 = vweird.f32 %v6080
    %vm6088 = vmor %vm6086, %vm6087
    %v6089 = vsel %vm6088, %v6080, %v6085
    %v6090 = vrsqrt.pop %v5747
    %v6091 = vmul.f32 %v6090, %v5747
    %v6092 = vmul.f32 %v6091, %v6090
    %v6093 = vmul.f32 0.5, %v6092
    %v6094 = vsub.f32 1.5, %v6093
    %v6095 = vmul.f32 %v6090, %v6094
    %vm6096 = vweird.f32 %v5747
    %vm6097 = vweird.f32 %v6090
    %vm6098 = vmor %vm6096, %vm6097
    %v6099 = vsel %vm6098, %v6090, %v6095
    %v6100 = vrsqrt.pop %v5748
    %v6101 = vmul.f32 %v6100, %v5748
    %v6102 = vmul.f32 %v6101, %v6100
    %v6103 = vmul.f32 0.5, %v6102
    %v6104 = vsub.f32 1.5, %v6103
    %v6105 = vmul.f32 %v6100, %v6104
    %vm6106 = vweird.f32 %v5748
    %vm6107 = vweird.f32 %v6100
    %vm6108 = vmor %vm6106, %vm6107
    %v6109 = vsel %vm6108, %v6100, %v6105
    %v6110 = vrsqrt.pop %v5749
    %v6111 = vmul.f32 %v6110, %v5749
    %v6112 = vmul.f32 %v6111, %v6110
    %v6113 = vmul.f32 0.5, %v6112
    %v6114 = vsub.f32 1.5, %v6113
    %v6115 = vmul.f32 %v6110, %v6114
    %vm6116 = vweird.f32 %v5749
    %vm6117 = vweird.f32 %v6110
    %vm6118 = vmor %vm6116, %vm6117
    %v6119 = vsel %vm6118, %v6110, %v6115
    %v6120 = vrsqrt.pop %v5750
    %v6121 = vmul.f32 %v6120, %v5750
    %v6122 = vmul.f32 %v6121, %v6120
    %v6123 = vmul.f32 0.5, %v6122
    %v6124 = vsub.f32 1.5, %v6123
    %v6125 = vmul.f32 %v6120, %v6124
    %vm6126 = vweird.f32 %v5750
    %vm6127 = vweird.f32 %v6120
    %vm6128 = vmor %vm6126, %vm6127
    %v6129 = vsel %vm6128, %v6120, %v6125
    %v6130 = vrsqrt.pop %v5751
    %v6131 = vmul.f32 %v6130, %v5751
    %v6132 = vmul.f32 %v6131, %v6130
    %v6133 = vmul.f32 0.5, %v6132
    %v6134 = vsub.f32 1.5, %v6133
    %v6135 = vmul.f32 %v6130, %v6134
    %vm6136 = vweird.f32 %v5751
    %vm6137 = vweird.f32 %v6130
    %vm6138 = vmor %vm6136, %vm6137
    %v6139 = vsel %vm6138, %v6130, %v6135
    %v6140 = vrsqrt.pop %v5752
    %v6141 = vmul.f32 %v6140, %v5752
    %v6142 = vmul.f32 %v6141, %v6140
    %v6143 = vmul.f32 0.5, %v6142
    %v6144 = vsub.f32 1.5, %v6143
    %v6145 = vmul.f32 %v6140, %v6144
    %vm6146 = vweird.f32 %v5752
    %vm6147 = vweird.f32 %v6140
    %vm6148 = vmor %vm6146, %vm6147
    %v6149 = vsel %vm6148, %v6140, %v6145
    %v6150 = vrsqrt.pop %v5753
    %v6151 = vmul.f32 %v6150, %v5753
    %v6152 = vmul.f32 %v6151, %v6150
    %v6153 = vmul.f32 0.5, %v6152
    %v6154 = vsub.f32 1.5, %v6153
    %v6155 = vmul.f32 %v6150, %v6154
    %vm6156 = vweird.f32 %v5753
    %vm6157 = vweird.f32 %v6150
    %vm6158 = vmor %vm6156, %vm6157
    %v6159 = vsel %vm6158, %v6150, %v6155
    %v6160 = vrsqrt.pop %v5754
    %v6161 = vmul.f32 %v6160, %v5754
    %v6162 = vmul.f32 %v6161, %v6160
    %v6163 = vmul.f32 0.5, %v6162
    %v6164 = vsub.f32 1.5, %v6163
    %v6165 = vmul.f32 %v6160, %v6164
    %vm6166 = vweird.f32 %v5754
    %vm6167 = vweird.f32 %v6160
    %vm6168 = vmor %vm6166, %vm6167
    %v6169 = vsel %vm6168, %v6160, %v6165
    %v6170 = vrsqrt.pop %v5755
    %v6171 = vmul.f32 %v6170, %v5755
    %v6172 = vmul.f32 %v6171, %v6170
    %v6173 = vmul.f32 0.5, %v6172
    %v6174 = vsub.f32 1.5, %v6173
    %v6175 = vmul.f32 %v6170, %v6174
    %vm6176 = vweird.f32 %v5755
    %vm6177 = vweird.f32 %v6170
    %vm6178 = vmor %vm6176, %vm6177
    %v6179 = vsel %vm6178, %v6170, %v6175
    %v6180 = vrsqrt.pop %v5756
    %v6181 = vmul.f32 %v6180, %v5756
    %v6182 = vmul.f32 %v6181, %v6180
    %v6183 = vmul.f32 0.5, %v6182
    %v6184 = vsub.f32 1.5, %v6183
    %v6185 = vmul.f32 %v6180, %v6184
    %vm6186 = vweird.f32 %v5756
    %vm6187 = vweird.f32 %v6180
    %vm6188 = vmor %vm6186, %vm6187
    %v6189 = vsel %vm6188, %v6180, %v6185
    %v6190 = vrsqrt.pop %v5757
    %v6191 = vmul.f32 %v6190, %v5757
    %v6192 = vmul.f32 %v6191, %v6190
    %v6193 = vmul.f32 0.5, %v6192
    %v6194 = vsub.f32 1.5, %v6193
    %v6195 = vmul.f32 %v6190, %v6194
    %vm6196 = vweird.f32 %v5757
    %vm6197 = vweird.f32 %v6190
    %vm6198 = vmor %vm6196, %vm6197
    %v6199 = vsel %vm6198, %v6190, %v6195
    %v6200 = vrsqrt.pop %v5758
    %v6201 = vmul.f32 %v6200, %v5758
    %v6202 = vmul.f32 %v6201, %v6200
    %v6203 = vmul.f32 0.5, %v6202
    %v6204 = vsub.f32 1.5, %v6203
    %v6205 = vmul.f32 %v6200, %v6204
    %vm6206 = vweird.f32 %v5758
    %vm6207 = vweird.f32 %v6200
    %vm6208 = vmor %vm6206, %vm6207
    %v6209 = vsel %vm6208, %v6200, %v6205
    %v6210 = vrsqrt.pop %v5759
    %v6211 = vmul.f32 %v6210, %v5759
    %v6212 = vmul.f32 %v6211, %v6210
    %v6213 = vmul.f32 0.5, %v6212
    %v6214 = vsub.f32 1.5, %v6213
    %v6215 = vmul.f32 %v6210, %v6214
    %vm6216 = vweird.f32 %v5759
    %vm6217 = vweird.f32 %v6210
    %vm6218 = vmor %vm6216, %vm6217
    %v6219 = vsel %vm6218, %v6210, %v6215
    %v6220 = vrsqrt.pop %v5760
    %v6221 = vmul.f32 %v6220, %v5760
    %v6222 = vmul.f32 %v6221, %v6220
    %v6223 = vmul.f32 0.5, %v6222
    %v6224 = vsub.f32 1.5, %v6223
    %v6225 = vmul.f32 %v6220, %v6224
    %vm6226 = vweird.f32 %v5760
    %vm6227 = vweird.f32 %v6220
    %vm6228 = vmor %vm6226, %vm6227
    %v6229 = vsel %vm6228, %v6220, %v6225
    %v6230 = vrsqrt.pop %v5761
    %v6231 = vmul.f32 %v6230, %v5761
    %v6232 = vmul.f32 %v6231, %v6230
    %v6233 = vmul.f32 0.5, %v6232
    %v6234 = vsub.f32 1.5, %v6233
    %v6235 = vmul.f32 %v6230, %v6234
    %vm6236 = vweird.f32 %v5761
    %vm6237 = vweird.f32 %v6230
    %vm6238 = vmor %vm6236, %vm6237
    %v6239 = vsel %vm6238, %v6230, %v6235
    %v6240 = vrsqrt.pop %v5762
    %v6241 = vmul.f32 %v6240, %v5762
    %v6242 = vmul.f32 %v6241, %v6240
    %v6243 = vmul.f32 0.5, %v6242
    %v6244 = vsub.f32 1.5, %v6243
    %v6245 = vmul.f32 %v6240, %v6244
    %vm6246 = vweird.f32 %v5762
    %vm6247 = vweird.f32 %v6240
    %vm6248 = vmor %vm6246, %vm6247
    %v6249 = vsel %vm6248, %v6240, %v6245
    %v6250 = vrsqrt.pop %v5763
    %v6251 = vmul.f32 %v6250, %v5763
    %v6252 = vmul.f32 %v6251, %v6250
    %v6253 = vmul.f32 0.5, %v6252
    %v6254 = vsub.f32 1.5, %v6253
    %v6255 = vmul.f32 %v6250, %v6254
    %vm6256 = vweird.f32 %v5763
    %vm6257 = vweird.f32 %v6250
    %vm6258 = vmor %vm6256, %vm6257
    %v6259 = vsel %vm6258, %v6250, %v6255
    %v6260 = vrsqrt.pop %v5764
    %v6261 = vmul.f32 %v6260, %v5764
    %v6262 = vmul.f32 %v6261, %v6260
    %v6263 = vmul.f32 0.5, %v6262
    %v6264 = vsub.f32 1.5, %v6263
    %v6265 = vmul.f32 %v6260, %v6264
    %vm6266 = vweird.f32 %v5764
    %vm6267 = vweird.f32 %v6260
    %vm6268 = vmor %vm6266, %vm6267
    %v6269 = vsel %vm6268, %v6260, %v6265
    %v6270 = vrsqrt.pop %v5765
    %v6271 = vmul.f32 %v6270, %v5765
    %v6272 = vmul.f32 %v6271, %v6270
    %v6273 = vmul.f32 0.5, %v6272
    %v6274 = vsub.f32 1.5, %v6273
    %v6275 = vmul.f32 %v6270, %v6274
    %vm6276 = vweird.f32 %v5765
    %vm6277 = vweird.f32 %v6270
    %vm6278 = vmor %vm6276, %vm6277
    %v6279 = vsel %vm6278, %v6270, %v6275
    %v6280 = vrsqrt.pop %v5766
    %v6281 = vmul.f32 %v6280, %v5766
    %v6282 = vmul.f32 %v6281, %v6280
    %v6283 = vmul.f32 0.5, %v6282
    %v6284 = vsub.f32 1.5, %v6283
    %v6285 = vmul.f32 %v6280, %v6284
    %vm6286 = vweird.f32 %v5766
    %vm6287 = vweird.f32 %v6280
    %vm6288 = vmor %vm6286, %vm6287
    %v6289 = vsel %vm6288, %v6280, %v6285
    %v6290 = vrsqrt.pop %v5767
    %v6291 = vmul.f32 %v6290, %v5767
    %v6292 = vmul.f32 %v6291, %v6290
    %v6293 = vmul.f32 0.5, %v6292
    %v6294 = vsub.f32 1.5, %v6293
    %v6295 = vmul.f32 %v6290, %v6294
    %vm6296 = vweird.f32 %v5767
    %vm6297 = vweird.f32 %v6290
    %vm6298 = vmor %vm6296, %vm6297
    %v6299 = vsel %vm6298, %v6290, %v6295
    %v6300 = vrsqrt.pop %v5768
    %v6301 = vmul.f32 %v6300, %v5768
    %v6302 = vmul.f32 %v6301, %v6300
    %v6303 = vmul.f32 0.5, %v6302
    %v6304 = vsub.f32 1.5, %v6303
    %v6305 = vmul.f32 %v6300, %v6304
    %vm6306 = vweird.f32 %v5768
    %vm6307 = vweird.f32 %v6300
    %vm6308 = vmor %vm6306, %vm6307
    %v6309 = vsel %vm6308, %v6300, %v6305
    %v6310 = vrsqrt.pop %v5769
    %v6311 = vmul.f32 %v6310, %v5769
    %v6312 = vmul.f32 %v6311, %v6310
    %v6313 = vmul.f32 0.5, %v6312
    %v6314 = vsub.f32 1.5, %v6313
    %v6315 = vmul.f32 %v6310, %v6314
    %vm6316 = vweird.f32 %v5769
    %vm6317 = vweird.f32 %v6310
    %vm6318 = vmor %vm6316, %vm6317
    %v6319 = vsel %vm6318, %v6310, %v6315
    %v6320 = vrsqrt.pop %v5770
    %v6321 = vmul.f32 %v6320, %v5770
    %v6322 = vmul.f32 %v6321, %v6320
    %v6323 = vmul.f32 0.5, %v6322
    %v6324 = vsub.f32 1.5, %v6323
    %v6325 = vmul.f32 %v6320, %v6324
    %vm6326 = vweird.f32 %v5770
    %vm6327 = vweird.f32 %v6320
    %vm6328 = vmor %vm6326, %vm6327
    %v6329 = vsel %vm6328, %v6320, %v6325
    %v6330 = vrsqrt.pop %v5771
    %v6331 = vmul.f32 %v6330, %v5771
    %v6332 = vmul.f32 %v6331, %v6330
    %v6333 = vmul.f32 0.5, %v6332
    %v6334 = vsub.f32 1.5, %v6333
    %v6335 = vmul.f32 %v6330, %v6334
    %vm6336 = vweird.f32 %v5771
    %vm6337 = vweird.f32 %v6330
    %vm6338 = vmor %vm6336, %vm6337
    %v6339 = vsel %vm6338, %v6330, %v6335
    %v6340 = vrsqrt.pop %v5772
    %v6341 = vmul.f32 %v6340, %v5772
    %v6342 = vmul.f32 %v6341, %v6340
    %v6343 = vmul.f32 0.5, %v6342
    %v6344 = vsub.f32 1.5, %v6343
    %v6345 = vmul.f32 %v6340, %v6344
    %vm6346 = vweird.f32 %v5772
    %vm6347 = vweird.f32 %v6340
    %vm6348 = vmor %vm6346, %vm6347
    %v6349 = vsel %vm6348, %v6340, %v6345
    %v6350 = vrsqrt.pop %v5773
    %v6351 = vmul.f32 %v6350, %v5773
    %v6352 = vmul.f32 %v6351, %v6350
    %v6353 = vmul.f32 0.5, %v6352
    %v6354 = vsub.f32 1.5, %v6353
    %v6355 = vmul.f32 %v6350, %v6354
    %vm6356 = vweird.f32 %v5773
    %vm6357 = vweird.f32 %v6350
    %vm6358 = vmor %vm6356, %vm6357
    %v6359 = vsel %vm6358, %v6350, %v6355
    %v6360 = vrsqrt.pop %v5774
    %v6361 = vmul.f32 %v6360, %v5774
    %v6362 = vmul.f32 %v6361, %v6360
    %v6363 = vmul.f32 0.5, %v6362
    %v6364 = vsub.f32 1.5, %v6363
    %v6365 = vmul.f32 %v6360, %v6364
    %vm6366 = vweird.f32 %v5774
    %vm6367 = vweird.f32 %v6360
    %vm6368 = vmor %vm6366, %vm6367
    %v6369 = vsel %vm6368, %v6360, %v6365
    %v6370 = vrsqrt.pop %v5775
    %v6371 = vmul.f32 %v6370, %v5775
    %v6372 = vmul.f32 %v6371, %v6370
    %v6373 = vmul.f32 0.5, %v6372
    %v6374 = vsub.f32 1.5, %v6373
    %v6375 = vmul.f32 %v6370, %v6374
    %vm6376 = vweird.f32 %v5775
    %vm6377 = vweird.f32 %v6370
    %vm6378 = vmor %vm6376, %vm6377
    %v6379 = vsel %vm6378, %v6370, %v6375
    %v6380 = vrsqrt.pop %v5776
    %v6381 = vmul.f32 %v6380, %v5776
    %v6382 = vmul.f32 %v6381, %v6380
    %v6383 = vmul.f32 0.5, %v6382
    %v6384 = vsub.f32 1.5, %v6383
    %v6385 = vmul.f32 %v6380, %v6384
    %vm6386 = vweird.f32 %v5776
    %vm6387 = vweird.f32 %v6380
    %vm6388 = vmor %vm6386, %vm6387
    %v6389 = vsel %vm6388, %v6380, %v6385
    %v6390 = vrsqrt.pop %v5777
    %v6391 = vmul.f32 %v6390, %v5777
    %v6392 = vmul.f32 %v6391, %v6390
    %v6393 = vmul.f32 0.5, %v6392
    %v6394 = vsub.f32 1.5, %v6393
    %v6395 = vmul.f32 %v6390, %v6394
    %vm6396 = vweird.f32 %v5777
    %vm6397 = vweird.f32 %v6390
    %vm6398 = vmor %vm6396, %vm6397
    %v6399 = vsel %vm6398, %v6390, %v6395
    %v6400 = vrsqrt.pop %v5778
    %v6401 = vmul.f32 %v6400, %v5778
    %v6402 = vmul.f32 %v6401, %v6400
    %v6403 = vmul.f32 0.5, %v6402
    %v6404 = vsub.f32 1.5, %v6403
    %v6405 = vmul.f32 %v6400, %v6404
    %vm6406 = vweird.f32 %v5778
    %vm6407 = vweird.f32 %v6400
    %vm6408 = vmor %vm6406, %vm6407
    %v6409 = vsel %vm6408, %v6400, %v6405
    %v6410 = vrsqrt.pop %v5779
    %v6411 = vmul.f32 %v6410, %v5779
    %v6412 = vmul.f32 %v6411, %v6410
    %v6413 = vmul.f32 0.5, %v6412
    %v6414 = vsub.f32 1.5, %v6413
    %v6415 = vmul.f32 %v6410, %v6414
    %vm6416 = vweird.f32 %v5779
    %vm6417 = vweird.f32 %v6410
    %vm6418 = vmor %vm6416, %vm6417
    %v6419 = vsel %vm6418, %v6410, %v6415
    %v6420 = vmul.f32 %v5396, %v5789
    %v6421 = vmul.f32 %v5397, %v5799
    %v6422 = vmul.f32 %v5398, %v5809
    %v6423 = vmul.f32 %v5399, %v5819
    %v6424 = vmul.f32 %v5400, %v5829
    %v6425 = vmul.f32 %v5401, %v5839
    %v6426 = vmul.f32 %v5402, %v5849
    %v6427 = vmul.f32 %v5403, %v5859
    %v6428 = vmul.f32 %v5404, %v5869
    %v6429 = vmul.f32 %v5405, %v5879
    %v6430 = vmul.f32 %v5406, %v5889
    %v6431 = vmul.f32 %v5407, %v5899
    %v6432 = vmul.f32 %v5408, %v5909
    %v6433 = vmul.f32 %v5409, %v5919
    %v6434 = vmul.f32 %v5410, %v5929
    %v6435 = vmul.f32 %v5411, %v5939
    %v6436 = vmul.f32 %v5412, %v5949
    %v6437 = vmul.f32 %v5413, %v5959
    %v6438 = vmul.f32 %v5414, %v5969
    %v6439 = vmul.f32 %v5415, %v5979
    %v6440 = vmul.f32 %v5416, %v5989
    %v6441 = vmul.f32 %v5417, %v5999
    %v6442 = vmul.f32 %v5418, %v6009
    %v6443 = vmul.f32 %v5419, %v6019
    %v6444 = vmul.f32 %v5420, %v6029
    %v6445 = vmul.f32 %v5421, %v6039
    %v6446 = vmul.f32 %v5422, %v6049
    %v6447 = vmul.f32 %v5423, %v6059
    %v6448 = vmul.f32 %v5424, %v6069
    %v6449 = vmul.f32 %v5425, %v6079
    %v6450 = vmul.f32 %v5426, %v6089
    %v6451 = vmul.f32 %v5427, %v6099
    %v6452 = vmul.f32 %v5428, %v6109
    %v6453 = vmul.f32 %v5429, %v6119
    %v6454 = vmul.f32 %v5430, %v6129
    %v6455 = vmul.f32 %v5431, %v6139
    %v6456 = vmul.f32 %v5432, %v6149
    %v6457 = vmul.f32 %v5433, %v6159
    %v6458 = vmul.f32 %v5434, %v6169
    %v6459 = vmul.f32 %v5435, %v6179
    %v6460 = vmul.f32 %v5436, %v6189
    %v6461 = vmul.f32 %v5437, %v6199
    %v6462 = vmul.f32 %v5438, %v6209
    %v6463 = vmul.f32 %v5439, %v6219
    %v6464 = vmul.f32 %v5440, %v6229
    %v6465 = vmul.f32 %v5441, %v6239
    %v6466 = vmul.f32 %v5442, %v6249
    %v6467 = vmul.f32 %v5443, %v6259
    %v6468 = vmul.f32 %v5444, %v6269
    %v6469 = vmul.f32 %v5445, %v6279
    %v6470 = vmul.f32 %v5446, %v6289
    %v6471 = vmul.f32 %v5447, %v6299
    %v6472 = vmul.f32 %v5448, %v6309
    %v6473 = vmul.f32 %v5449, %v6319
    %v6474 = vmul.f32 %v5450, %v6329
    %v6475 = vmul.f32 %v5451, %v6339
    %v6476 = vmul.f32 %v5452, %v6349
    %v6477 = vmul.f32 %v5453, %v6359
    %v6478 = vmul.f32 %v5454, %v6369
    %v6479 = vmul.f32 %v5455, %v6379
    %v6480 = vmul.f32 %v5456, %v6389
    %v6481 = vmul.f32 %v5457, %v6399
    %v6482 = vmul.f32 %v5458, %v6409
    %v6483 = vmul.f32 %v5459, %v6419
    %v6484 = vpack.c.bf16 %v6421, %v6420
    %v6485 = vpack.c.bf16 %v6423, %v6422
    %v6486 = vpack.c.bf16 %v6425, %v6424
    %v6487 = vpack.c.bf16 %v6427, %v6426
    %v6488 = vpack.c.bf16 %v6429, %v6428
    %v6489 = vpack.c.bf16 %v6431, %v6430
    %v6490 = vpack.c.bf16 %v6433, %v6432
    %v6491 = vpack.c.bf16 %v6435, %v6434
    %v6492 = vpack.c.bf16 %v6437, %v6436
    %v6493 = vpack.c.bf16 %v6439, %v6438
    %v6494 = vpack.c.bf16 %v6441, %v6440
    %v6495 = vpack.c.bf16 %v6443, %v6442
    %v6496 = vpack.c.bf16 %v6445, %v6444
    %v6497 = vpack.c.bf16 %v6447, %v6446
    %v6498 = vpack.c.bf16 %v6449, %v6448
    %v6499 = vpack.c.bf16 %v6451, %v6450
    %v6500 = vpack.c.bf16 %v6453, %v6452
    %v6501 = vpack.c.bf16 %v6455, %v6454
    %v6502 = vpack.c.bf16 %v6457, %v6456
    %v6503 = vpack.c.bf16 %v6459, %v6458
    %v6504 = vpack.c.bf16 %v6461, %v6460
    %v6505 = vpack.c.bf16 %v6463, %v6462
    %v6506 = vpack.c.bf16 %v6465, %v6464
    %v6507 = vpack.c.bf16 %v6467, %v6466
    %v6508 = vpack.c.bf16 %v6469, %v6468
    %v6509 = vpack.c.bf16 %v6471, %v6470
    %v6510 = vpack.c.bf16 %v6473, %v6472
    %v6511 = vpack.c.bf16 %v6475, %v6474
    %v6512 = vpack.c.bf16 %v6477, %v6476
    %v6513 = vpack.c.bf16 %v6479, %v6478
    %v6514 = vpack.c.bf16 %v6481, %v6480
    %v6515 = vpack.c.bf16 %v6483, %v6482
    %v6516 = vld [vmem:[#allocation7] sm:$0xf]
    %v6517 = vld [vmem:[#allocation7 + $0x4] sm:$0xf]
    %v6518 = vld [vmem:[#allocation7 + $0x8] sm:$0xf]
    %v6519 = vld [vmem:[#allocation7 + $0xc] sm:$0xf]
    %v6520 = vld [vmem:[#allocation7 + $0x10] sm:$0xf]
    %v6521 = vld [vmem:[#allocation7 + $0x14] sm:$0xf]
    %v6522 = vld [vmem:[#allocation7 + $0x18] sm:$0xf]
    %v6523 = vld [vmem:[#allocation7 + $0x1c] sm:$0xf]
    %v6524 = vld [vmem:[#allocation7 + $0x20] sm:$0xf]
    %v6525 = vld [vmem:[#allocation7 + $0x24] sm:$0xf]
    %v6526 = vld [vmem:[#allocation7 + $0x28] sm:$0xf]
    %v6527 = vld [vmem:[#allocation7 + $0x2c] sm:$0xf]
    %v6528 = vld [vmem:[#allocation7 + $0x30] sm:$0xf]
    %v6529 = vld [vmem:[#allocation7 + $0x34] sm:$0xf]
    %v6530 = vld [vmem:[#allocation7 + $0x38] sm:$0xf]
    %v6531 = vld [vmem:[#allocation7 + $0x3c] sm:$0xf]
    %v6532 = vperm.slane %v92, 3
    %v6549 = vunpack.c.l.b16 %v6516
    %v6550 = vunpack.c.l.b16 %v6517
    %v6551 = vunpack.c.l.b16 %v6518
    %v6552 = vunpack.c.l.b16 %v6519
    %v6553 = vunpack.c.l.b16 %v6520
    %v6554 = vunpack.c.l.b16 %v6521
    %v6555 = vunpack.c.l.b16 %v6522
    %v6556 = vunpack.c.l.b16 %v6523
    %v6557 = vunpack.c.l.b16 %v6524
    %v6558 = vunpack.c.l.b16 %v6525
    %v6559 = vunpack.c.l.b16 %v6526
    %v6560 = vunpack.c.l.b16 %v6527
    %v6561 = vunpack.c.l.b16 %v6528
    %v6562 = vunpack.c.l.b16 %v6529
    %v6563 = vunpack.c.l.b16 %v6530
    %v6564 = vunpack.c.l.b16 %v6531
    %v6565 = vpack.c.b16 %v6550, %v6549
    %v6566 = vpack.c.b16 %v6552, %v6551
    %v6567 = vpack.c.b16 %v6554, %v6553
    %v6568 = vpack.c.b16 %v6556, %v6555
    %v6569 = vpack.c.b16 %v6558, %v6557
    %v6570 = vpack.c.b16 %v6560, %v6559
    %v6571 = vpack.c.b16 %v6562, %v6561
    %v6572 = vpack.c.b16 %v6564, %v6563
    %6581 = vmatpush.bf16.msra.mxu0 %v6572
    %6582 = vmatpush.bf16.msra.mxu0 %v6571
    %6583 = vmatpush.bf16.msra.mxu0 %v6570
    %6584 = vmatpush.bf16.msra.mxu0 %v6569
    %6585 = vmatpush.bf16.msra.mxu0 %v6568
    %6586 = vmatpush.bf16.msra.mxu0 %v6567
    %6587 = vmatpush.bf16.msra.mxu0 %v6566
    %6588 = vmatpush.bf16.msra.mxu0 %v6565
    %6589 = vmatmul.bf16.gmra.mxu0 %v6484
    %v6590 = vpop.f32.mrf.mxu0
    %v6591 = vadd.f32 %v6532, %v6590
    %v6592 = vpop.f32.mrf.mxu0
    %v6593 = vadd.f32 %v6532, %v6592
    %6594 = vmatmul.bf16.gmra.mxu0 %v6485
    %v6595 = vpop.f32.mrf.mxu0
    %v6596 = vadd.f32 %v6532, %v6595
    %v6597 = vpop.f32.mrf.mxu0
    %v6598 = vadd.f32 %v6532, %v6597
    %6599 = vmatmul.bf16.gmra.mxu0 %v6486
    %v6600 = vpop.f32.mrf.mxu0
    %v6601 = vadd.f32 %v6532, %v6600
    %v6602 = vpop.f32.mrf.mxu0
    %v6603 = vadd.f32 %v6532, %v6602
    %6604 = vmatmul.bf16.gmra.mxu0 %v6487
    %v6605 = vpop.f32.mrf.mxu0
    %v6606 = vadd.f32 %v6532, %v6605
    %v6607 = vpop.f32.mrf.mxu0
    %v6608 = vadd.f32 %v6532, %v6607
    %6609 = vmatmul.bf16.gmra.mxu0 %v6488
    %v6610 = vpop.f32.mrf.mxu0
    %v6611 = vadd.f32 %v6532, %v6610
    %v6612 = vpop.f32.mrf.mxu0
    %v6613 = vadd.f32 %v6532, %v6612
    %6614 = vmatmul.bf16.gmra.mxu0 %v6489
    %v6615 = vpop.f32.mrf.mxu0
    %v6616 = vadd.f32 %v6532, %v6615
    %v6617 = vpop.f32.mrf.mxu0
    %v6618 = vadd.f32 %v6532, %v6617
    %6619 = vmatmul.bf16.gmra.mxu0 %v6490
    %v6620 = vpop.f32.mrf.mxu0
    %v6621 = vadd.f32 %v6532, %v6620
    %v6622 = vpop.f32.mrf.mxu0
    %v6623 = vadd.f32 %v6532, %v6622
    %6624 = vmatmul.bf16.gmra.mxu0 %v6491
    %v6625 = vpop.f32.mrf.mxu0
    %v6626 = vadd.f32 %v6532, %v6625
    %v6627 = vpop.f32.mrf.mxu0
    %v6628 = vadd.f32 %v6532, %v6627
    %6629 = vmatmul.bf16.gmra.mxu0 %v6492
    %v6630 = vpop.f32.mrf.mxu0
    %v6631 = vadd.f32 %v6532, %v6630
    %v6632 = vpop.f32.mrf.mxu0
    %v6633 = vadd.f32 %v6532, %v6632
    %6634 = vmatmul.bf16.gmra.mxu0 %v6493
    %v6635 = vpop.f32.mrf.mxu0
    %v6636 = vadd.f32 %v6532, %v6635
    %v6637 = vpop.f32.mrf.mxu0
    %v6638 = vadd.f32 %v6532, %v6637
    %6639 = vmatmul.bf16.gmra.mxu0 %v6494
    %v6640 = vpop.f32.mrf.mxu0
    %v6641 = vadd.f32 %v6532, %v6640
    %v6642 = vpop.f32.mrf.mxu0
    %v6643 = vadd.f32 %v6532, %v6642
    %6644 = vmatmul.bf16.gmra.mxu0 %v6495
    %v6645 = vpop.f32.mrf.mxu0
    %v6646 = vadd.f32 %v6532, %v6645
    %v6647 = vpop.f32.mrf.mxu0
    %v6648 = vadd.f32 %v6532, %v6647
    %6649 = vmatmul.bf16.gmra.mxu0 %v6496
    %v6650 = vpop.f32.mrf.mxu0
    %v6651 = vadd.f32 %v6532, %v6650
    %v6652 = vpop.f32.mrf.mxu0
    %v6653 = vadd.f32 %v6532, %v6652
    %6654 = vmatmul.bf16.gmra.mxu0 %v6497
    %v6655 = vpop.f32.mrf.mxu0
    %v6656 = vadd.f32 %v6532, %v6655
    %v6657 = vpop.f32.mrf.mxu0
    %v6658 = vadd.f32 %v6532, %v6657
    %6659 = vmatmul.bf16.gmra.mxu0 %v6498
    %v6660 = vpop.f32.mrf.mxu0
    %v6661 = vadd.f32 %v6532, %v6660
    %v6662 = vpop.f32.mrf.mxu0
    %v6663 = vadd.f32 %v6532, %v6662
    %6664 = vmatmul.bf16.gmra.mxu0 %v6499
    %v6665 = vpop.f32.mrf.mxu0
    %v6666 = vadd.f32 %v6532, %v6665
    %v6667 = vpop.f32.mrf.mxu0
    %v6668 = vadd.f32 %v6532, %v6667
    %6669 = vmatmul.bf16.gmra.mxu0 %v6500
    %v6670 = vpop.f32.mrf.mxu0
    %v6671 = vadd.f32 %v6532, %v6670
    %v6672 = vpop.f32.mrf.mxu0
    %v6673 = vadd.f32 %v6532, %v6672
    %6674 = vmatmul.bf16.gmra.mxu0 %v6501
    %v6675 = vpop.f32.mrf.mxu0
    %v6676 = vadd.f32 %v6532, %v6675
    %v6677 = vpop.f32.mrf.mxu0
    %v6678 = vadd.f32 %v6532, %v6677
    %6679 = vmatmul.bf16.gmra.mxu0 %v6502
    %v6680 = vpop.f32.mrf.mxu0
    %v6681 = vadd.f32 %v6532, %v6680
    %v6682 = vpop.f32.mrf.mxu0
    %v6683 = vadd.f32 %v6532, %v6682
    %6684 = vmatmul.bf16.gmra.mxu0 %v6503
    %v6685 = vpop.f32.mrf.mxu0
    %v6686 = vadd.f32 %v6532, %v6685
    %v6687 = vpop.f32.mrf.mxu0
    %v6688 = vadd.f32 %v6532, %v6687
    %6689 = vmatmul.bf16.gmra.mxu0 %v6504
    %v6690 = vpop.f32.mrf.mxu0
    %v6691 = vadd.f32 %v6532, %v6690
    %v6692 = vpop.f32.mrf.mxu0
    %v6693 = vadd.f32 %v6532, %v6692
    %6694 = vmatmul.bf16.gmra.mxu0 %v6505
    %v6695 = vpop.f32.mrf.mxu0
    %v6696 = vadd.f32 %v6532, %v6695
    %v6697 = vpop.f32.mrf.mxu0
    %v6698 = vadd.f32 %v6532, %v6697
    %6699 = vmatmul.bf16.gmra.mxu0 %v6506
    %v6700 = vpop.f32.mrf.mxu0
    %v6701 = vadd.f32 %v6532, %v6700
    %v6702 = vpop.f32.mrf.mxu0
    %v6703 = vadd.f32 %v6532, %v6702
    %6704 = vmatmul.bf16.gmra.mxu0 %v6507
    %v6705 = vpop.f32.mrf.mxu0
    %v6706 = vadd.f32 %v6532, %v6705
    %v6707 = vpop.f32.mrf.mxu0
    %v6708 = vadd.f32 %v6532, %v6707
    %6709 = vmatmul.bf16.gmra.mxu0 %v6508
    %v6710 = vpop.f32.mrf.mxu0
    %v6711 = vadd.f32 %v6532, %v6710
    %v6712 = vpop.f32.mrf.mxu0
    %v6713 = vadd.f32 %v6532, %v6712
    %6714 = vmatmul.bf16.gmra.mxu0 %v6509
    %v6715 = vpop.f32.mrf.mxu0
    %v6716 = vadd.f32 %v6532, %v6715
    %v6717 = vpop.f32.mrf.mxu0
    %v6718 = vadd.f32 %v6532, %v6717
    %6719 = vmatmul.bf16.gmra.mxu0 %v6510
    %v6720 = vpop.f32.mrf.mxu0
    %v6721 = vadd.f32 %v6532, %v6720
    %v6722 = vpop.f32.mrf.mxu0
    %v6723 = vadd.f32 %v6532, %v6722
    %6724 = vmatmul.bf16.gmra.mxu0 %v6511
    %v6725 = vpop.f32.mrf.mxu0
    %v6726 = vadd.f32 %v6532, %v6725
    %v6727 = vpop.f32.mrf.mxu0
    %v6728 = vadd.f32 %v6532, %v6727
    %6729 = vmatmul.bf16.gmra.mxu0 %v6512
    %v6730 = vpop.f32.mrf.mxu0
    %v6731 = vadd.f32 %v6532, %v6730
    %v6732 = vpop.f32.mrf.mxu0
    %v6733 = vadd.f32 %v6532, %v6732
    %6734 = vmatmul.bf16.gmra.mxu0 %v6513
    %v6735 = vpop.f32.mrf.mxu0
    %v6736 = vadd.f32 %v6532, %v6735
    %v6737 = vpop.f32.mrf.mxu0
    %v6738 = vadd.f32 %v6532, %v6737
    %6739 = vmatmul.bf16.gmra.mxu0 %v6514
    %v6740 = vpop.f32.mrf.mxu0
    %v6741 = vadd.f32 %v6532, %v6740
    %v6742 = vpop.f32.mrf.mxu0
    %v6743 = vadd.f32 %v6532, %v6742
    %6744 = vmatmul.bf16.gmra.mxu0 %v6515
    %v6745 = vpop.f32.mrf.mxu0
    %v6746 = vadd.f32 %v6532, %v6745
    %v6747 = vpop.f32.mrf.mxu0
    %v6748 = vadd.f32 %v6532, %v6747
    %6749 = vdwg.mxu0
    %v6750 = vpack.c.bf16 %v6591, %v6591
    %v6751 = vpack.c.bf16 %v6593, %v6593
    %v6752 = vpack.c.bf16 %v6596, %v6596
    %v6753 = vpack.c.bf16 %v6598, %v6598
    %v6754 = vpack.c.bf16 %v6601, %v6601
    %v6755 = vpack.c.bf16 %v6603, %v6603
    %v6756 = vpack.c.bf16 %v6606, %v6606
    %v6757 = vpack.c.bf16 %v6608, %v6608
    %v6758 = vpack.c.bf16 %v6611, %v6611
    %v6759 = vpack.c.bf16 %v6613, %v6613
    %v6760 = vpack.c.bf16 %v6616, %v6616
    %v6761 = vpack.c.bf16 %v6618, %v6618
    %v6762 = vpack.c.bf16 %v6621, %v6621
    %v6763 = vpack.c.bf16 %v6623, %v6623
    %v6764 = vpack.c.bf16 %v6626, %v6626
    %v6765 = vpack.c.bf16 %v6628, %v6628
    %v6766 = vpack.c.bf16 %v6631, %v6631
    %v6767 = vpack.c.bf16 %v6633, %v6633
    %v6768 = vpack.c.bf16 %v6636, %v6636
    %v6769 = vpack.c.bf16 %v6638, %v6638
    %v6770 = vpack.c.bf16 %v6641, %v6641
    %v6771 = vpack.c.bf16 %v6643, %v6643
    %v6772 = vpack.c.bf16 %v6646, %v6646
    %v6773 = vpack.c.bf16 %v6648, %v6648
    %v6774 = vpack.c.bf16 %v6651, %v6651
    %v6775 = vpack.c.bf16 %v6653, %v6653
    %v6776 = vpack.c.bf16 %v6656, %v6656
    %v6777 = vpack.c.bf16 %v6658, %v6658
    %v6778 = vpack.c.bf16 %v6661, %v6661
    %v6779 = vpack.c.bf16 %v6663, %v6663
    %v6780 = vpack.c.bf16 %v6666, %v6666
    %v6781 = vpack.c.bf16 %v6668, %v6668
    %v6782 = vpack.c.bf16 %v6671, %v6671
    %v6783 = vpack.c.bf16 %v6673, %v6673
    %v6784 = vpack.c.bf16 %v6676, %v6676
    %v6785 = vpack.c.bf16 %v6678, %v6678
    %v6786 = vpack.c.bf16 %v6681, %v6681
    %v6787 = vpack.c.bf16 %v6683, %v6683
    %v6788 = vpack.c.bf16 %v6686, %v6686
    %v6789 = vpack.c.bf16 %v6688, %v6688
    %v6790 = vpack.c.bf16 %v6691, %v6691
    %v6791 = vpack.c.bf16 %v6693, %v6693
    %v6792 = vpack.c.bf16 %v6696, %v6696
    %v6793 = vpack.c.bf16 %v6698, %v6698
    %v6794 = vpack.c.bf16 %v6701, %v6701
    %v6795 = vpack.c.bf16 %v6703, %v6703
    %v6796 = vpack.c.bf16 %v6706, %v6706
    %v6797 = vpack.c.bf16 %v6708, %v6708
    %v6798 = vpack.c.bf16 %v6711, %v6711
    %v6799 = vpack.c.bf16 %v6713, %v6713
    %v6800 = vpack.c.bf16 %v6716, %v6716
    %v6801 = vpack.c.bf16 %v6718, %v6718
    %v6802 = vpack.c.bf16 %v6721, %v6721
    %v6803 = vpack.c.bf16 %v6723, %v6723
    %v6804 = vpack.c.bf16 %v6726, %v6726
    %v6805 = vpack.c.bf16 %v6728, %v6728
    %v6806 = vpack.c.bf16 %v6731, %v6731
    %v6807 = vpack.c.bf16 %v6733, %v6733
    %v6808 = vpack.c.bf16 %v6736, %v6736
    %v6809 = vpack.c.bf16 %v6738, %v6738
    %v6810 = vpack.c.bf16 %v6741, %v6741
    %v6811 = vpack.c.bf16 %v6743, %v6743
    %v6812 = vpack.c.bf16 %v6746, %v6746
    %v6813 = vpack.c.bf16 %v6748, %v6748
    %6814 = vst [vmem:[#allocation10] sm:$0xf] %v6750
    %6815 = vst [vmem:[#allocation10 + $0x4] sm:$0xf] %v6751
    %6816 = vst [vmem:[#allocation10 + $0x8] sm:$0xf] %v6752
    %6817 = vst [vmem:[#allocation10 + $0xc] sm:$0xf] %v6753
    %6818 = vst [vmem:[#allocation10 + $0x10] sm:$0xf] %v6754
    %6819 = vst [vmem:[#allocation10 + $0x14] sm:$0xf] %v6755
    %6820 = vst [vmem:[#allocation10 + $0x18] sm:$0xf] %v6756
    %6821 = vst [vmem:[#allocation10 + $0x1c] sm:$0xf] %v6757
    %6822 = vst [vmem:[#allocation10 + $0x20] sm:$0xf] %v6758
    %6823 = vst [vmem:[#allocation10 + $0x24] sm:$0xf] %v6759
    %6824 = vst [vmem:[#allocation10 + $0x28] sm:$0xf] %v6760
    %6825 = vst [vmem:[#allocation10 + $0x2c] sm:$0xf] %v6761
    %6826 = vst [vmem:[#allocation10 + $0x30] sm:$0xf] %v6762
    %6827 = vst [vmem:[#allocation10 + $0x34] sm:$0xf] %v6763
    %6828 = vst [vmem:[#allocation10 + $0x38] sm:$0xf] %v6764
    %6829 = vst [vmem:[#allocation10 + $0x3c] sm:$0xf] %v6765
    %6830 = vst [vmem:[#allocation10 + $0x40] sm:$0xf] %v6766
    %6831 = vst [vmem:[#allocation10 + $0x44] sm:$0xf] %v6767
    %6832 = vst [vmem:[#allocation10 + $0x48] sm:$0xf] %v6768
    %6833 = vst [vmem:[#allocation10 + $0x4c] sm:$0xf] %v6769
    %6834 = vst [vmem:[#allocation10 + $0x50] sm:$0xf] %v6770
    %6835 = vst [vmem:[#allocation10 + $0x54] sm:$0xf] %v6771
    %6836 = vst [vmem:[#allocation10 + $0x58] sm:$0xf] %v6772
    %6837 = vst [vmem:[#allocation10 + $0x5c] sm:$0xf] %v6773
    %6838 = vst [vmem:[#allocation10 + $0x60] sm:$0xf] %v6774
    %6839 = vst [vmem:[#allocation10 + $0x64] sm:$0xf] %v6775
    %6840 = vst [vmem:[#allocation10 + $0x68] sm:$0xf] %v6776
    %6841 = vst [vmem:[#allocation10 + $0x6c] sm:$0xf] %v6777
    %6842 = vst [vmem:[#allocation10 + $0x70] sm:$0xf] %v6778
    %6843 = vst [vmem:[#allocation10 + $0x74] sm:$0xf] %v6779
    %6844 = vst [vmem:[#allocation10 + $0x78] sm:$0xf] %v6780
    %6845 = vst [vmem:[#allocation10 + $0x7c] sm:$0xf] %v6781
    %6846 = vst [vmem:[#allocation10 + $0x80] sm:$0xf] %v6782
    %6847 = vst [vmem:[#allocation10 + $0x84] sm:$0xf] %v6783
    %6848 = vst [vmem:[#allocation10 + $0x88] sm:$0xf] %v6784
    %6849 = vst [vmem:[#allocation10 + $0x8c] sm:$0xf] %v6785
    %6850 = vst [vmem:[#allocation10 + $0x90] sm:$0xf] %v6786
    %6851 = vst [vmem:[#allocation10 + $0x94] sm:$0xf] %v6787
    %6852 = vst [vmem:[#allocation10 + $0x98] sm:$0xf] %v6788
    %6853 = vst [vmem:[#allocation10 + $0x9c] sm:$0xf] %v6789
    %6854 = vst [vmem:[#allocation10 + $0xa0] sm:$0xf] %v6790
    %6855 = vst [vmem:[#allocation10 + $0xa4] sm:$0xf] %v6791
    %6856 = vst [vmem:[#allocation10 + $0xa8] sm:$0xf] %v6792
    %6857 = vst [vmem:[#allocation10 + $0xac] sm:$0xf] %v6793
    %6858 = vst [vmem:[#allocation10 + $0xb0] sm:$0xf] %v6794
    %6859 = vst [vmem:[#allocation10 + $0xb4] sm:$0xf] %v6795
    %6860 = vst [vmem:[#allocation10 + $0xb8] sm:$0xf] %v6796
    %6861 = vst [vmem:[#allocation10 + $0xbc] sm:$0xf] %v6797
    %6862 = vst [vmem:[#allocation10 + $0xc0] sm:$0xf] %v6798
    %6863 = vst [vmem:[#allocation10 + $0xc4] sm:$0xf] %v6799
    %6864 = vst [vmem:[#allocation10 + $0xc8] sm:$0xf] %v6800
    %6865 = vst [vmem:[#allocation10 + $0xcc] sm:$0xf] %v6801
    %6866 = vst [vmem:[#allocation10 + $0xd0] sm:$0xf] %v6802
    %6867 = vst [vmem:[#allocation10 + $0xd4] sm:$0xf] %v6803
    %6868 = vst [vmem:[#allocation10 + $0xd8] sm:$0xf] %v6804
    %6869 = vst [vmem:[#allocation10 + $0xdc] sm:$0xf] %v6805
    %6870 = vst [vmem:[#allocation10 + $0xe0] sm:$0xf] %v6806
    %6871 = vst [vmem:[#allocation10 + $0xe4] sm:$0xf] %v6807
    %6872 = vst [vmem:[#allocation10 + $0xe8] sm:$0xf] %v6808
    %6873 = vst [vmem:[#allocation10 + $0xec] sm:$0xf] %v6809
    %6874 = vst [vmem:[#allocation10 + $0xf0] sm:$0xf] %v6810
    %6875 = vst [vmem:[#allocation10 + $0xf4] sm:$0xf] %v6811
    %6876 = vst [vmem:[#allocation10 + $0xf8] sm:$0xf] %v6812
    %6877 = vst [vmem:[#allocation10 + $0xfc] sm:$0xf] %v6813
    // Predicated region
    $region50: #{tpu_custom_call.1} parent=1 // pred_check
      _
    $region51: #{tpu_custom_call.1} parent=1 // pred_check_branch
      %6879 = sbr.rel (0) target = $region53
    $region52: #{tpu_custom_call.1} parent=1 // pred_region
      %6881 = vsyncadd [#allocation4], 0
      %s6882 = sshll.u32 [#allocation10], 4
      %s6883 = int_to_ptr.vmem [resolvable:$true] %s6882
      %s6884 = sshll.u32 %s8, 4
      %s6885 = int_to_ptr.hbm [resolvable:$true] %s6884
      %6890 = dma.vmem_to_hbm [thread:$0]  %s6883, 4096, %s6885, [#allocation4], 64, 64, 4
    $region53: #{tpu_custom_call.1} parent=1 // pred_fallthru
      _
    // Predicated region
    $region54: #{tpu_custom_call.1} parent=1 // pred_check
      _
    $region55: #{tpu_custom_call.1} parent=1 // pred_check_branch
      %6892 = sbr.rel (0) target = $region57
    $region56: #{tpu_custom_call.1} parent=1 // pred_region
      %6894 = dma.done [#allocation4], 4096
    $region57: #{tpu_custom_call.1} parent=1 // pred_fallthru
      _
    %6895 = vsyncpa [#allocation3], 1
    %6896 = vsyncpa [#allocation6], 1
    %6897 = vsyncpa [#allocation9], 1
    %6898 = vsyncpa [#allocation4], 1

</llo_original>
